<compile_context>
chip_gen: v5e
topology: v5e:2x2
jax: 0.10.0
libtpu: 0.0.40
codegen_flags: <defaults>
</compile_context>

<pallas_src>
import jax
import jax.numpy as jnp
from jax import lax
from jax.experimental import pallas as pl
from jax.experimental.pallas import tpu as pltpu

# ---- static sizes implied by the module (fc1 expects 50*50*16 features) ----
B = 2            # batch
C_IN = 3         # conv in channels
C_OUT = 16       # conv out channels
H = W = 100      # input spatial (pool/2 -> 50, so 50*50*16 = 40000 features)
HP = WP = 50     # pooled spatial
K = C_OUT * HP * WP          # 40000
TK = 8192                    # fc1 K-tile (multiple of 128)
NK = 5                       # number of K tiles
KPAD = TK * NK               # 40960 (K zero-padded up to a multiple of TK)
HID = 128                    # fc1 hidden size


# --------------------------- kernel 1: conv + relu + maxpool ----------------
def conv_relu_pool_kernel(xpad_ref, w_ref, b_ref, out_ref, sh_ref):
    # xpad_ref: (C_IN, H+2, W+2) VMEM   | w_ref: (C_OUT, 27) SMEM
    # b_ref: (C_OUT,) SMEM              | out_ref: (C_OUT, HP, WP) VMEM
    # sh_ref: (27, H, W) f32 VMEM scratch (aligned staged shifted windows)

    # Stage all 27 shifted 3x3 windows once per batch (the only misaligned
    # slices); everything after this reuses aligned VMEM loads across the
    # 16 output channels.
    for ci in range(C_IN):
        for ki in range(3):
            for kj in range(3):
                sh_ref[ci * 9 + ki * 3 + kj] = xpad_ref[ci, pl.ds(ki, H), pl.ds(kj, W)]

    # 2x2 max-pool 0/1 selection matrices, built once per batch (used as MXU matmuls
    # to avoid strided lane access).
    wi = lax.broadcasted_iota(jnp.int32, (W, WP), 0)
    qi = lax.broadcasted_iota(jnp.int32, (W, WP), 1)
    s_even = (wi == 2 * qi).astype(jnp.float32)       # picks cols 0,2,4,...
    s_odd = (wi == 2 * qi + 1).astype(jnp.float32)    # picks cols 1,3,5,...
    ri = lax.broadcasted_iota(jnp.int32, (HP, H), 0)
    hi = lax.broadcasted_iota(jnp.int32, (HP, H), 1)
    r_even = (hi == 2 * ri).astype(jnp.float32)
    r_odd = (hi == 2 * ri + 1).astype(jnp.float32)

    def body(co, carry):
        # 3x3 conv for output channel `co`: 27 scalar-broadcast FMAs on the VPU.
        acc = jnp.full((H, W), b_ref[co], dtype=jnp.float32)
        for idx in range(27):
            acc = acc + w_ref[co, idx] * sh_ref[idx]
        t = jnp.maximum(acc, 0.0)                      # ReLU

        # width pool then height pool (exact 2x2 max-pool for even H, W).
        tw = jnp.maximum(
            jnp.dot(t, s_even, preferred_element_type=jnp.float32),
            jnp.dot(t, s_odd, preferred_element_type=jnp.float32),
        )                                              # (H, WP)
        out_ref[co] = jnp.maximum(
            jnp.dot(r_even, tw, preferred_element_type=jnp.float32),
            jnp.dot(r_odd, tw, preferred_element_type=jnp.float32),
        )                                              # (HP, WP)
        return carry

    lax.fori_loop(0, C_OUT, body, 0)


def conv_relu_pool(xpad, conv_w2d, conv_b):
    return pl.pallas_call(
        conv_relu_pool_kernel,
        out_shape=jax.ShapeDtypeStruct((B, C_OUT, HP, WP), jnp.float32),
        grid=(B,),
        in_specs=[
            pl.BlockSpec((None, C_IN, H + 2, W + 2), lambda b: (b, 0, 0, 0)),
            pl.BlockSpec(memory_space=pltpu.MemorySpace.SMEM),
            pl.BlockSpec(memory_space=pltpu.MemorySpace.SMEM),
        ],
        out_specs=pl.BlockSpec((None, C_OUT, HP, WP), lambda b: (b, 0, 0, 0)),
        scratch_shapes=[pltpu.VMEM((27, H, W), jnp.float32)],
        compiler_params=pltpu.CompilerParams(dimension_semantics=("parallel",)),
    )(xpad, conv_w2d, conv_b)


# --------------------------- kernel 2: fc1 -> relu -> fc2 -> sigmoid --------
def fc_head_kernel(x_ref, w1_ref, b1_ref, w2_ref, b2_ref, o_ref, acc_ref):
    # x_ref: (B, TK) f32, w1_ref: (TK, HID) bf16, b1_ref: (1, HID) f32,
    # w2_ref: (1, HID) f32, b2_ref: (1, 1) f32, o_ref: (B, 1) f32,
    # acc_ref: (B, HID) f32 scratch.
    k = pl.program_id(0)

    @pl.when(k == 0)
    def _init():
        acc_ref[...] = jnp.zeros_like(acc_ref)

    # bf16 x bf16 MXU matmul, f32 accumulation (w1 streamed from HBM in bf16).
    acc_ref[...] += jnp.dot(x_ref[...].astype(jnp.bfloat16), w1_ref[...],
                            preferred_element_type=jnp.float32)

    @pl.when(k == pl.num_programs(0) - 1)
    def _finalize():
        h = jnp.maximum(acc_ref[...] + b1_ref[...], 0.0)     # fc1 + ReLU (f32)
        # TODO(synk): nn.Dropout implemented as identity (eval/inference mode).
        logits = jnp.sum(h * w2_ref[...], axis=1, keepdims=True) + b2_ref[...]
        o_ref[...] = jax.nn.sigmoid(logits)


def fc_head(feat_pad, w1_pad_bf16, b1, w2, b2):
    return pl.pallas_call(
        fc_head_kernel,
        out_shape=jax.ShapeDtypeStruct((B, 1), jnp.float32),
        grid=(NK,),
        in_specs=[
            pl.BlockSpec((B, TK), lambda k: (0, k)),
            pl.BlockSpec((TK, HID), lambda k: (k, 0)),
            pl.BlockSpec((1, HID), lambda k: (0, 0)),
            pl.BlockSpec((1, HID), lambda k: (0, 0)),
            pl.BlockSpec((1, 1), lambda k: (0, 0)),
        ],
        out_specs=pl.BlockSpec((B, 1), lambda k: (0, 0)),
        scratch_shapes=[pltpu.VMEM((B, HID), jnp.float32)],
        compiler_params=pltpu.CompilerParams(dimension_semantics=("arbitrary",)),
    )(feat_pad, w1_pad_bf16, b1, w2, b2)


# --------------------------- param prep (runs ONCE, outside jit) -------------
def prepare_params(params):
    """Hoists all weight reshapes / padding / bf16 casts out of the forward."""
    return {
        "conv_w2d": params["conv_w"].reshape(C_OUT, C_IN * 9),
        "conv_b": params["conv_b"],
        # pre-pad K -> KPAD (exact: zero rows) and pre-cast to bf16 once.
        "fc1_w_pad": jnp.pad(params["fc1_w"], ((0, KPAD - K), (0, 0))
                             ).astype(jnp.bfloat16),
        "fc1_b": params["fc1_b"].reshape(1, HID),
        "fc2_w": params["fc2_w"],                   # (1, HID)
        "fc2_b": params["fc2_b"].reshape(1, 1),
    }


# --------------------------- full forward -----------------------------------
@jax.jit
def net1_forward(x, prep):
    # conv1 + relu + maxpool (grid over batch only)
    xpad = jnp.pad(x, ((0, 0), (0, 0), (1, 1), (1, 1)))
    pooled = conv_relu_pool(xpad, prep["conv_w2d"], prep["conv_b"])
    # x.reshape(-1, 50*50*16)  (channel-major flatten of NCHW, like torch) — free reshape
    feat = pooled.reshape(B, K)
    # zero-pad K -> KPAD so the fc1 K-tile is a multiple of 128 (exact; tiny copy)
    feat_pad = jnp.pad(feat, ((0, 0), (0, KPAD - K)))
    return fc_head(feat_pad, prep["fc1_w_pad"], prep["fc1_b"],
                   prep["fc2_w"], prep["fc2_b"])


# --------------------------- pure-JAX reference ------------------------------
def reference_forward(x, params):
    y = lax.conv_general_dilated(
        x, params["conv_w"], window_strides=(1, 1), padding="SAME",
        dimension_numbers=("NCHW", "OIHW", "NCHW"))
    y = y + params["conv_b"][None, :, None, None]
    y = jnp.maximum(y, 0.0)
    y = lax.reduce_window(y, -jnp.inf, lax.max,
                          (1, 1, 2, 2), (1, 1, 2, 2), "VALID")
    f = y.reshape(x.shape[0], -1)
    h = jnp.maximum(f @ params["fc1_w"] + params["fc1_b"], 0.0)
    return jax.nn.sigmoid(h @ params["fc2_w"].T + params["fc2_b"])


# --------------------------- parameter init (deterministic) ------------------
def init_params(key):
    k = jax.random.split(key, 6)
    return {
        "conv_w": 0.1 * jax.random.normal(k[0], (C_OUT, C_IN, 3, 3), jnp.float32),
        "conv_b": 0.1 * jax.random.normal(k[1], (C_OUT,), jnp.float32),
        # stored as (K, HID) = fc1.weight.T so forward is feat @ fc1_w + fc1_b
        "fc1_w": jax.random.normal(k[2], (K, HID), jnp.float32) / jnp.sqrt(K),
        "fc1_b": 0.1 * jax.random.normal(k[3], (HID,), jnp.float32),
        "fc2_w": jax.random.normal(k[4], (1, HID), jnp.float32) / jnp.sqrt(HID),
        "fc2_b": 0.1 * jax.random.normal(k[5], (1,), jnp.float32),
    }


if __name__ == "__main__":
    root = jax.random.PRNGKey(0)
    kx, kp = jax.random.split(root)
    params = init_params(kp)
    prep = prepare_params(params)          # pad + bf16 cast done once, outside jit
    x = jax.random.normal(kx, (B, C_IN, H, W), jnp.float32)

    out = jax.block_until_ready(net1_forward(x, prep))

    ref = reference_forward(x, params)
    assert out.shape == (B, 1), out.shape
    # tolerance accounts for bf16 quantization of fc1 weights/activations in the kernel
    assert jnp.allclose(out, ref, atol=1e-2, rtol=1e-2), (out, ref)

    print("KERNEL_OK")
</pallas_src>

<mosaic_0001>
module attributes {stable_mosaic.version = 11 : i64} {
  func.func @conv_relu_pool_kernel(%arg0: i32, %arg1: memref<1x3x102x102xf32, #tpu.memory_space<vmem>>, %arg2: memref<16x27xf32, #tpu.memory_space<smem>>, %arg3: memref<16xf32, #tpu.memory_space<smem>>, %arg4: memref<1x16x50x50xf32, #tpu.memory_space<vmem>>, %arg5: memref<27x100x100xf32, #tpu.memory_space<vmem>>) attributes {dimension_semantics = [#tpu.dimension_semantics<parallel>], iteration_bounds = array<i64: 2>, scalar_prefetch = 0 : i64, scratch_operands = 1 : i64, tpu.core_type = #tpu.core_type<tc>, window_params = [{transform_indices = @transform_0, window_bounds = array<i64: 1, 3, 102, 102>}, {transform_indices = @transform_1, window_bounds = array<i64: 16, 27>}, {transform_indices = @transform_2, window_bounds = array<i64: 16>}, {transform_indices = @transform_3, window_bounds = array<i64: 1, 16, 50, 50>}]} {
    %c0 = arith.constant 0 : index
    %c0_0 = arith.constant 0 : index
    %c0_1 = arith.constant 0 : index
    %c0_2 = arith.constant 0 : index
    %0 = vector.load %arg1[%c0, %c0_0, %c0_1, %c0_2] : memref<1x3x102x102xf32, #tpu.memory_space<vmem>>, vector<1x1x100x100xf32>
    %1 = vector.shape_cast %0 : vector<1x1x100x100xf32> to vector<100x100xf32>
    %c0_3 = arith.constant 0 : index
    %c0_4 = arith.constant 0 : index
    %c0_5 = arith.constant 0 : index
    %2 = vector.load %arg5[%c0_3, %c0_4, %c0_5] : memref<27x100x100xf32, #tpu.memory_space<vmem>>, vector<1x100x100xf32>
    %3 = vector.shape_cast %2 : vector<1x100x100xf32> to vector<100x100xf32>
    %4 = vector.shape_cast %1 : vector<100x100xf32> to vector<1x100x100xf32>
    tpu.vector_store %arg5[%c0_3, %c0_4, %c0_5], %4 {strides = array<i32>} : memref<27x100x100xf32, #tpu.memory_space<vmem>>, vector<1x100x100xf32>,
    %c0_6 = arith.constant 0 : index
    %c0_7 = arith.constant 0 : index
    %c0_8 = arith.constant 0 : index
    %c1 = arith.constant 1 : index
    %5 = vector.load %arg1[%c0_6, %c0_7, %c0_8, %c1] : memref<1x3x102x102xf32, #tpu.memory_space<vmem>>, vector<1x1x100x100xf32>
    %6 = vector.shape_cast %5 : vector<1x1x100x100xf32> to vector<100x100xf32>
    %c1_9 = arith.constant 1 : index
    %c0_10 = arith.constant 0 : index
    %c0_11 = arith.constant 0 : index
    %7 = vector.load %arg5[%c1_9, %c0_10, %c0_11] : memref<27x100x100xf32, #tpu.memory_space<vmem>>, vector<1x100x100xf32>
    %8 = vector.shape_cast %7 : vector<1x100x100xf32> to vector<100x100xf32>
    %9 = vector.shape_cast %6 : vector<100x100xf32> to vector<1x100x100xf32>
    tpu.vector_store %arg5[%c1_9, %c0_10, %c0_11], %9 {strides = array<i32>} : memref<27x100x100xf32, #tpu.memory_space<vmem>>, vector<1x100x100xf32>,
    %c0_12 = arith.constant 0 : index
    %c0_13 = arith.constant 0 : index
    %c0_14 = arith.constant 0 : index
    %c2 = arith.constant 2 : index
    %10 = vector.load %arg1[%c0_12, %c0_13, %c0_14, %c2] : memref<1x3x102x102xf32, #tpu.memory_space<vmem>>, vector<1x1x100x100xf32>
    %11 = vector.shape_cast %10 : vector<1x1x100x100xf32> to vector<100x100xf32>
    %c2_15 = arith.constant 2 : index
    %c0_16 = arith.constant 0 : index
    %c0_17 = arith.constant 0 : index
    %12 = vector.load %arg5[%c2_15, %c0_16, %c0_17] : memref<27x100x100xf32, #tpu.memory_space<vmem>>, vector<1x100x100xf32>
    %13 = vector.shape_cast %12 : vector<1x100x100xf32> to vector<100x100xf32>
    %14 = vector.shape_cast %11 : vector<100x100xf32> to vector<1x100x100xf32>
    tpu.vector_store %arg5[%c2_15, %c0_16, %c0_17], %14 {strides = array<i32>} : memref<27x100x100xf32, #tpu.memory_space<vmem>>, vector<1x100x100xf32>,
    %c0_18 = arith.constant 0 : index
    %c0_19 = arith.constant 0 : index
    %c1_20 = arith.constant 1 : index
    %c0_21 = arith.constant 0 : index
    %15 = vector.load %arg1[%c0_18, %c0_19, %c1_20, %c0_21] : memref<1x3x102x102xf32, #tpu.memory_space<vmem>>, vector<1x1x100x100xf32>
    %16 = vector.shape_cast %15 : vector<1x1x100x100xf32> to vector<100x100xf32>
    %c3 = arith.constant 3 : index
    %c0_22 = arith.constant 0 : index
    %c0_23 = arith.constant 0 : index
    %17 = vector.load %arg5[%c3, %c0_22, %c0_23] : memref<27x100x100xf32, #tpu.memory_space<vmem>>, vector<1x100x100xf32>
    %18 = vector.shape_cast %17 : vector<1x100x100xf32> to vector<100x100xf32>
    %19 = vector.shape_cast %16 : vector<100x100xf32> to vector<1x100x100xf32>
    tpu.vector_store %arg5[%c3, %c0_22, %c0_23], %19 {strides = array<i32>} : memref<27x100x100xf32, #tpu.memory_space<vmem>>, vector<1x100x100xf32>,
    %c0_24 = arith.constant 0 : index
    %c0_25 = arith.constant 0 : index
    %c1_26 = arith.constant 1 : index
    %c1_27 = arith.constant 1 : index
    %20 = vector.load %arg1[%c0_24, %c0_25, %c1_26, %c1_27] : memref<1x3x102x102xf32, #tpu.memory_space<vmem>>, vector<1x1x100x100xf32>
    %21 = vector.shape_cast %20 : vector<1x1x100x100xf32> to vector<100x100xf32>
    %c4 = arith.constant 4 : index
    %c0_28 = arith.constant 0 : index
    %c0_29 = arith.constant 0 : index
    %22 = vector.load %arg5[%c4, %c0_28, %c0_29] : memref<27x100x100xf32, #tpu.memory_space<vmem>>, vector<1x100x100xf32>
    %23 = vector.shape_cast %22 : vector<1x100x100xf32> to vector<100x100xf32>
    %24 = vector.shape_cast %21 : vector<100x100xf32> to vector<1x100x100xf32>
    tpu.vector_store %arg5[%c4, %c0_28, %c0_29], %24 {strides = array<i32>} : memref<27x100x100xf32, #tpu.memory_space<vmem>>, vector<1x100x100xf32>,
    %c0_30 = arith.constant 0 : index
    %c0_31 = arith.constant 0 : index
    %c1_32 = arith.constant 1 : index
    %c2_33 = arith.constant 2 : index
    %25 = vector.load %arg1[%c0_30, %c0_31, %c1_32, %c2_33] : memref<1x3x102x102xf32, #tpu.memory_space<vmem>>, vector<1x1x100x100xf32>
    %26 = vector.shape_cast %25 : vector<1x1x100x100xf32> to vector<100x100xf32>
    %c5 = arith.constant 5 : index
    %c0_34 = arith.constant 0 : index
    %c0_35 = arith.constant 0 : index
    %27 = vector.load %arg5[%c5, %c0_34, %c0_35] : memref<27x100x100xf32, #tpu.memory_space<vmem>>, vector<1x100x100xf32>
    %28 = vector.shape_cast %27 : vector<1x100x100xf32> to vector<100x100xf32>
    %29 = vector.shape_cast %26 : vector<100x100xf32> to vector<1x100x100xf32>
    tpu.vector_store %arg5[%c5, %c0_34, %c0_35], %29 {strides = array<i32>} : memref<27x100x100xf32, #tpu.memory_space<vmem>>, vector<1x100x100xf32>,
    %c0_36 = arith.constant 0 : index
    %c0_37 = arith.constant 0 : index
    %c2_38 = arith.constant 2 : index
    %c0_39 = arith.constant 0 : index
    %30 = vector.load %arg1[%c0_36, %c0_37, %c2_38, %c0_39] : memref<1x3x102x102xf32, #tpu.memory_space<vmem>>, vector<1x1x100x100xf32>
    %31 = vector.shape_cast %30 : vector<1x1x100x100xf32> to vector<100x100xf32>
    %c6 = arith.constant 6 : index
    %c0_40 = arith.constant 0 : index
    %c0_41 = arith.constant 0 : index
    %32 = vector.load %arg5[%c6, %c0_40, %c0_41] : memref<27x100x100xf32, #tpu.memory_space<vmem>>, vector<1x100x100xf32>
    %33 = vector.shape_cast %32 : vector<1x100x100xf32> to vector<100x100xf32>
    %34 = vector.shape_cast %31 : vector<100x100xf32> to vector<1x100x100xf32>
    tpu.vector_store %arg5[%c6, %c0_40, %c0_41], %34 {strides = array<i32>} : memref<27x100x100xf32, #tpu.memory_space<vmem>>, vector<1x100x100xf32>,
    %c0_42 = arith.constant 0 : index
    %c0_43 = arith.constant 0 : index
    %c2_44 = arith.constant 2 : index
    %c1_45 = arith.constant 1 : index
    %35 = vector.load %arg1[%c0_42, %c0_43, %c2_44, %c1_45] : memref<1x3x102x102xf32, #tpu.memory_space<vmem>>, vector<1x1x100x100xf32>
    %36 = vector.shape_cast %35 : vector<1x1x100x100xf32> to vector<100x100xf32>
    %c7 = arith.constant 7 : index
    %c0_46 = arith.constant 0 : index
    %c0_47 = arith.constant 0 : index
    %37 = vector.load %arg5[%c7, %c0_46, %c0_47] : memref<27x100x100xf32, #tpu.memory_space<vmem>>, vector<1x100x100xf32>
    %38 = vector.shape_cast %37 : vector<1x100x100xf32> to vector<100x100xf32>
    %39 = vector.shape_cast %36 : vector<100x100xf32> to vector<1x100x100xf32>
    tpu.vector_store %arg5[%c7, %c0_46, %c0_47], %39 {strides = array<i32>} : memref<27x100x100xf32, #tpu.memory_space<vmem>>, vector<1x100x100xf32>,
    %c0_48 = arith.constant 0 : index
    %c0_49 = arith.constant 0 : index
    %c2_50 = arith.constant 2 : index
    %c2_51 = arith.constant 2 : index
    %40 = vector.load %arg1[%c0_48, %c0_49, %c2_50, %c2_51] : memref<1x3x102x102xf32, #tpu.memory_space<vmem>>, vector<1x1x100x100xf32>
    %41 = vector.shape_cast %40 : vector<1x1x100x100xf32> to vector<100x100xf32>
    %c8 = arith.constant 8 : index
    %c0_52 = arith.constant 0 : index
    %c0_53 = arith.constant 0 : index
    %42 = vector.load %arg5[%c8, %c0_52, %c0_53] : memref<27x100x100xf32, #tpu.memory_space<vmem>>, vector<1x100x100xf32>
    %43 = vector.shape_cast %42 : vector<1x100x100xf32> to vector<100x100xf32>
    %44 = vector.shape_cast %41 : vector<100x100xf32> to vector<1x100x100xf32>
    tpu.vector_store %arg5[%c8, %c0_52, %c0_53], %44 {strides = array<i32>} : memref<27x100x100xf32, #tpu.memory_space<vmem>>, vector<1x100x100xf32>,
    %c0_54 = arith.constant 0 : index
    %c1_55 = arith.constant 1 : index
    %c0_56 = arith.constant 0 : index
    %c0_57 = arith.constant 0 : index
    %45 = vector.load %arg1[%c0_54, %c1_55, %c0_56, %c0_57] : memref<1x3x102x102xf32, #tpu.memory_space<vmem>>, vector<1x1x100x100xf32>
    %46 = vector.shape_cast %45 : vector<1x1x100x100xf32> to vector<100x100xf32>
    %c9 = arith.constant 9 : index
    %c0_58 = arith.constant 0 : index
    %c0_59 = arith.constant 0 : index
    %47 = vector.load %arg5[%c9, %c0_58, %c0_59] : memref<27x100x100xf32, #tpu.memory_space<vmem>>, vector<1x100x100xf32>
    %48 = vector.shape_cast %47 : vector<1x100x100xf32> to vector<100x100xf32>
    %49 = vector.shape_cast %46 : vector<100x100xf32> to vector<1x100x100xf32>
    tpu.vector_store %arg5[%c9, %c0_58, %c0_59], %49 {strides = array<i32>} : memref<27x100x100xf32, #tpu.memory_space<vmem>>, vector<1x100x100xf32>,
    %c0_60 = arith.constant 0 : index
    %c1_61 = arith.constant 1 : index
    %c0_62 = arith.constant 0 : index
    %c1_63 = arith.constant 1 : index
    %50 = vector.load %arg1[%c0_60, %c1_61, %c0_62, %c1_63] : memref<1x3x102x102xf32, #tpu.memory_space<vmem>>, vector<1x1x100x100xf32>
    %51 = vector.shape_cast %50 : vector<1x1x100x100xf32> to vector<100x100xf32>
    %c10 = arith.constant 10 : index
    %c0_64 = arith.constant 0 : index
    %c0_65 = arith.constant 0 : index
    %52 = vector.load %arg5[%c10, %c0_64, %c0_65] : memref<27x100x100xf32, #tpu.memory_space<vmem>>, vector<1x100x100xf32>
    %53 = vector.shape_cast %52 : vector<1x100x100xf32> to vector<100x100xf32>
    %54 = vector.shape_cast %51 : vector<100x100xf32> to vector<1x100x100xf32>
    tpu.vector_store %arg5[%c10, %c0_64, %c0_65], %54 {strides = array<i32>} : memref<27x100x100xf32, #tpu.memory_space<vmem>>, vector<1x100x100xf32>,
    %c0_66 = arith.constant 0 : index
    %c1_67 = arith.constant 1 : index
    %c0_68 = arith.constant 0 : index
    %c2_69 = arith.constant 2 : index
    %55 = vector.load %arg1[%c0_66, %c1_67, %c0_68, %c2_69] : memref<1x3x102x102xf32, #tpu.memory_space<vmem>>, vector<1x1x100x100xf32>
    %56 = vector.shape_cast %55 : vector<1x1x100x100xf32> to vector<100x100xf32>
    %c11 = arith.constant 11 : index
    %c0_70 = arith.constant 0 : index
    %c0_71 = arith.constant 0 : index
    %57 = vector.load %arg5[%c11, %c0_70, %c0_71] : memref<27x100x100xf32, #tpu.memory_space<vmem>>, vector<1x100x100xf32>
    %58 = vector.shape_cast %57 : vector<1x100x100xf32> to vector<100x100xf32>
    %59 = vector.shape_cast %56 : vector<100x100xf32> to vector<1x100x100xf32>
    tpu.vector_store %arg5[%c11, %c0_70, %c0_71], %59 {strides = array<i32>} : memref<27x100x100xf32, #tpu.memory_space<vmem>>, vector<1x100x100xf32>,
    %c0_72 = arith.constant 0 : index
    %c1_73 = arith.constant 1 : index
    %c1_74 = arith.constant 1 : index
    %c0_75 = arith.constant 0 : index
    %60 = vector.load %arg1[%c0_72, %c1_73, %c1_74, %c0_75] : memref<1x3x102x102xf32, #tpu.memory_space<vmem>>, vector<1x1x100x100xf32>
    %61 = vector.shape_cast %60 : vector<1x1x100x100xf32> to vector<100x100xf32>
    %c12 = arith.constant 12 : index
    %c0_76 = arith.constant 0 : index
    %c0_77 = arith.constant 0 : index
    %62 = vector.load %arg5[%c12, %c0_76, %c0_77] : memref<27x100x100xf32, #tpu.memory_space<vmem>>, vector<1x100x100xf32>
    %63 = vector.shape_cast %62 : vector<1x100x100xf32> to vector<100x100xf32>
    %64 = vector.shape_cast %61 : vector<100x100xf32> to vector<1x100x100xf32>
    tpu.vector_store %arg5[%c12, %c0_76, %c0_77], %64 {strides = array<i32>} : memref<27x100x100xf32, #tpu.memory_space<vmem>>, vector<1x100x100xf32>,
    %c0_78 = arith.constant 0 : index
    %c1_79 = arith.constant 1 : index
    %c1_80 = arith.constant 1 : index
    %c1_81 = arith.constant 1 : index
    %65 = vector.load %arg1[%c0_78, %c1_79, %c1_80, %c1_81] : memref<1x3x102x102xf32, #tpu.memory_space<vmem>>, vector<1x1x100x100xf32>
    %66 = vector.shape_cast %65 : vector<1x1x100x100xf32> to vector<100x100xf32>
    %c13 = arith.constant 13 : index
    %c0_82 = arith.constant 0 : index
    %c0_83 = arith.constant 0 : index
    %67 = vector.load %arg5[%c13, %c0_82, %c0_83] : memref<27x100x100xf32, #tpu.memory_space<vmem>>, vector<1x100x100xf32>
    %68 = vector.shape_cast %67 : vector<1x100x100xf32> to vector<100x100xf32>
    %69 = vector.shape_cast %66 : vector<100x100xf32> to vector<1x100x100xf32>
    tpu.vector_store %arg5[%c13, %c0_82, %c0_83], %69 {strides = array<i32>} : memref<27x100x100xf32, #tpu.memory_space<vmem>>, vector<1x100x100xf32>,
    %c0_84 = arith.constant 0 : index
    %c1_85 = arith.constant 1 : index
    %c1_86 = arith.constant 1 : index
    %c2_87 = arith.constant 2 : index
    %70 = vector.load %arg1[%c0_84, %c1_85, %c1_86, %c2_87] : memref<1x3x102x102xf32, #tpu.memory_space<vmem>>, vector<1x1x100x100xf32>
    %71 = vector.shape_cast %70 : vector<1x1x100x100xf32> to vector<100x100xf32>
    %c14 = arith.constant 14 : index
    %c0_88 = arith.constant 0 : index
    %c0_89 = arith.constant 0 : index
    %72 = vector.load %arg5[%c14, %c0_88, %c0_89] : memref<27x100x100xf32, #tpu.memory_space<vmem>>, vector<1x100x100xf32>
    %73 = vector.shape_cast %72 : vector<1x100x100xf32> to vector<100x100xf32>
    %74 = vector.shape_cast %71 : vector<100x100xf32> to vector<1x100x100xf32>
    tpu.vector_store %arg5[%c14, %c0_88, %c0_89], %74 {strides = array<i32>} : memref<27x100x100xf32, #tpu.memory_space<vmem>>, vector<1x100x100xf32>,
    %c0_90 = arith.constant 0 : index
    %c1_91 = arith.constant 1 : index
    %c2_92 = arith.constant 2 : index
    %c0_93 = arith.constant 0 : index
    %75 = vector.load %arg1[%c0_90, %c1_91, %c2_92, %c0_93] : memref<1x3x102x102xf32, #tpu.memory_space<vmem>>, vector<1x1x100x100xf32>
    %76 = vector.shape_cast %75 : vector<1x1x100x100xf32> to vector<100x100xf32>
    %c15 = arith.constant 15 : index
    %c0_94 = arith.constant 0 : index
    %c0_95 = arith.constant 0 : index
    %77 = vector.load %arg5[%c15, %c0_94, %c0_95] : memref<27x100x100xf32, #tpu.memory_space<vmem>>, vector<1x100x100xf32>
    %78 = vector.shape_cast %77 : vector<1x100x100xf32> to vector<100x100xf32>
    %79 = vector.shape_cast %76 : vector<100x100xf32> to vector<1x100x100xf32>
    tpu.vector_store %arg5[%c15, %c0_94, %c0_95], %79 {strides = array<i32>} : memref<27x100x100xf32, #tpu.memory_space<vmem>>, vector<1x100x100xf32>,
    %c0_96 = arith.constant 0 : index
    %c1_97 = arith.constant 1 : index
    %c2_98 = arith.constant 2 : index
    %c1_99 = arith.constant 1 : index
    %80 = vector.load %arg1[%c0_96, %c1_97, %c2_98, %c1_99] : memref<1x3x102x102xf32, #tpu.memory_space<vmem>>, vector<1x1x100x100xf32>
    %81 = vector.shape_cast %80 : vector<1x1x100x100xf32> to vector<100x100xf32>
    %c16 = arith.constant 16 : index
    %c0_100 = arith.constant 0 : index
    %c0_101 = arith.constant 0 : index
    %82 = vector.load %arg5[%c16, %c0_100, %c0_101] : memref<27x100x100xf32, #tpu.memory_space<vmem>>, vector<1x100x100xf32>
    %83 = vector.shape_cast %82 : vector<1x100x100xf32> to vector<100x100xf32>
    %84 = vector.shape_cast %81 : vector<100x100xf32> to vector<1x100x100xf32>
    tpu.vector_store %arg5[%c16, %c0_100, %c0_101], %84 {strides = array<i32>} : memref<27x100x100xf32, #tpu.memory_space<vmem>>, vector<1x100x100xf32>,
    %c0_102 = arith.constant 0 : index
    %c1_103 = arith.constant 1 : index
    %c2_104 = arith.constant 2 : index
    %c2_105 = arith.constant 2 : index
    %85 = vector.load %arg1[%c0_102, %c1_103, %c2_104, %c2_105] : memref<1x3x102x102xf32, #tpu.memory_space<vmem>>, vector<1x1x100x100xf32>
    %86 = vector.shape_cast %85 : vector<1x1x100x100xf32> to vector<100x100xf32>
    %c17 = arith.constant 17 : index
    %c0_106 = arith.constant 0 : index
    %c0_107 = arith.constant 0 : index
    %87 = vector.load %arg5[%c17, %c0_106, %c0_107] : memref<27x100x100xf32, #tpu.memory_space<vmem>>, vector<1x100x100xf32>
    %88 = vector.shape_cast %87 : vector<1x100x100xf32> to vector<100x100xf32>
    %89 = vector.shape_cast %86 : vector<100x100xf32> to vector<1x100x100xf32>
    tpu.vector_store %arg5[%c17, %c0_106, %c0_107], %89 {strides = array<i32>} : memref<27x100x100xf32, #tpu.memory_space<vmem>>, vector<1x100x100xf32>,
    %c0_108 = arith.constant 0 : index
    %c2_109 = arith.constant 2 : index
    %c0_110 = arith.constant 0 : index
    %c0_111 = arith.constant 0 : index
    %90 = vector.load %arg1[%c0_108, %c2_109, %c0_110, %c0_111] : memref<1x3x102x102xf32, #tpu.memory_space<vmem>>, vector<1x1x100x100xf32>
    %91 = vector.shape_cast %90 : vector<1x1x100x100xf32> to vector<100x100xf32>
    %c18 = arith.constant 18 : index
    %c0_112 = arith.constant 0 : index
    %c0_113 = arith.constant 0 : index
    %92 = vector.load %arg5[%c18, %c0_112, %c0_113] : memref<27x100x100xf32, #tpu.memory_space<vmem>>, vector<1x100x100xf32>
    %93 = vector.shape_cast %92 : vector<1x100x100xf32> to vector<100x100xf32>
    %94 = vector.shape_cast %91 : vector<100x100xf32> to vector<1x100x100xf32>
    tpu.vector_store %arg5[%c18, %c0_112, %c0_113], %94 {strides = array<i32>} : memref<27x100x100xf32, #tpu.memory_space<vmem>>, vector<1x100x100xf32>,
    %c0_114 = arith.constant 0 : index
    %c2_115 = arith.constant 2 : index
    %c0_116 = arith.constant 0 : index
    %c1_117 = arith.constant 1 : index
    %95 = vector.load %arg1[%c0_114, %c2_115, %c0_116, %c1_117] : memref<1x3x102x102xf32, #tpu.memory_space<vmem>>, vector<1x1x100x100xf32>
    %96 = vector.shape_cast %95 : vector<1x1x100x100xf32> to vector<100x100xf32>
    %c19 = arith.constant 19 : index
    %c0_118 = arith.constant 0 : index
    %c0_119 = arith.constant 0 : index
    %97 = vector.load %arg5[%c19, %c0_118, %c0_119] : memref<27x100x100xf32, #tpu.memory_space<vmem>>, vector<1x100x100xf32>
    %98 = vector.shape_cast %97 : vector<1x100x100xf32> to vector<100x100xf32>
    %99 = vector.shape_cast %96 : vector<100x100xf32> to vector<1x100x100xf32>
    tpu.vector_store %arg5[%c19, %c0_118, %c0_119], %99 {strides = array<i32>} : memref<27x100x100xf32, #tpu.memory_space<vmem>>, vector<1x100x100xf32>,
    %c0_120 = arith.constant 0 : index
    %c2_121 = arith.constant 2 : index
    %c0_122 = arith.constant 0 : index
    %c2_123 = arith.constant 2 : index
    %100 = vector.load %arg1[%c0_120, %c2_121, %c0_122, %c2_123] : memref<1x3x102x102xf32, #tpu.memory_space<vmem>>, vector<1x1x100x100xf32>
    %101 = vector.shape_cast %100 : vector<1x1x100x100xf32> to vector<100x100xf32>
    %c20 = arith.constant 20 : index
    %c0_124 = arith.constant 0 : index
    %c0_125 = arith.constant 0 : index
    %102 = vector.load %arg5[%c20, %c0_124, %c0_125] : memref<27x100x100xf32, #tpu.memory_space<vmem>>, vector<1x100x100xf32>
    %103 = vector.shape_cast %102 : vector<1x100x100xf32> to vector<100x100xf32>
    %104 = vector.shape_cast %101 : vector<100x100xf32> to vector<1x100x100xf32>
    tpu.vector_store %arg5[%c20, %c0_124, %c0_125], %104 {strides = array<i32>} : memref<27x100x100xf32, #tpu.memory_space<vmem>>, vector<1x100x100xf32>,
    %c0_126 = arith.constant 0 : index
    %c2_127 = arith.constant 2 : index
    %c1_128 = arith.constant 1 : index
    %c0_129 = arith.constant 0 : index
    %105 = vector.load %arg1[%c0_126, %c2_127, %c1_128, %c0_129] : memref<1x3x102x102xf32, #tpu.memory_space<vmem>>, vector<1x1x100x100xf32>
    %106 = vector.shape_cast %105 : vector<1x1x100x100xf32> to vector<100x100xf32>
    %c21 = arith.constant 21 : index
    %c0_130 = arith.constant 0 : index
    %c0_131 = arith.constant 0 : index
    %107 = vector.load %arg5[%c21, %c0_130, %c0_131] : memref<27x100x100xf32, #tpu.memory_space<vmem>>, vector<1x100x100xf32>
    %108 = vector.shape_cast %107 : vector<1x100x100xf32> to vector<100x100xf32>
    %109 = vector.shape_cast %106 : vector<100x100xf32> to vector<1x100x100xf32>
    tpu.vector_store %arg5[%c21, %c0_130, %c0_131], %109 {strides = array<i32>} : memref<27x100x100xf32, #tpu.memory_space<vmem>>, vector<1x100x100xf32>,
    %c0_132 = arith.constant 0 : index
    %c2_133 = arith.constant 2 : index
    %c1_134 = arith.constant 1 : index
    %c1_135 = arith.constant 1 : index
    %110 = vector.load %arg1[%c0_132, %c2_133, %c1_134, %c1_135] : memref<1x3x102x102xf32, #tpu.memory_space<vmem>>, vector<1x1x100x100xf32>
    %111 = vector.shape_cast %110 : vector<1x1x100x100xf32> to vector<100x100xf32>
    %c22 = arith.constant 22 : index
    %c0_136 = arith.constant 0 : index
    %c0_137 = arith.constant 0 : index
    %112 = vector.load %arg5[%c22, %c0_136, %c0_137] : memref<27x100x100xf32, #tpu.memory_space<vmem>>, vector<1x100x100xf32>
    %113 = vector.shape_cast %112 : vector<1x100x100xf32> to vector<100x100xf32>
    %114 = vector.shape_cast %111 : vector<100x100xf32> to vector<1x100x100xf32>
    tpu.vector_store %arg5[%c22, %c0_136, %c0_137], %114 {strides = array<i32>} : memref<27x100x100xf32, #tpu.memory_space<vmem>>, vector<1x100x100xf32>,
    %c0_138 = arith.constant 0 : index
    %c2_139 = arith.constant 2 : index
    %c1_140 = arith.constant 1 : index
    %c2_141 = arith.constant 2 : index
    %115 = vector.load %arg1[%c0_138, %c2_139, %c1_140, %c2_141] : memref<1x3x102x102xf32, #tpu.memory_space<vmem>>, vector<1x1x100x100xf32>
    %116 = vector.shape_cast %115 : vector<1x1x100x100xf32> to vector<100x100xf32>
    %c23 = arith.constant 23 : index
    %c0_142 = arith.constant 0 : index
    %c0_143 = arith.constant 0 : index
    %117 = vector.load %arg5[%c23, %c0_142, %c0_143] : memref<27x100x100xf32, #tpu.memory_space<vmem>>, vector<1x100x100xf32>
    %118 = vector.shape_cast %117 : vector<1x100x100xf32> to vector<100x100xf32>
    %119 = vector.shape_cast %116 : vector<100x100xf32> to vector<1x100x100xf32>
    tpu.vector_store %arg5[%c23, %c0_142, %c0_143], %119 {strides = array<i32>} : memref<27x100x100xf32, #tpu.memory_space<vmem>>, vector<1x100x100xf32>,
    %c0_144 = arith.constant 0 : index
    %c2_145 = arith.constant 2 : index
    %c2_146 = arith.constant 2 : index
    %c0_147 = arith.constant 0 : index
    %120 = vector.load %arg1[%c0_144, %c2_145, %c2_146, %c0_147] : memref<1x3x102x102xf32, #tpu.memory_space<vmem>>, vector<1x1x100x100xf32>
    %121 = vector.shape_cast %120 : vector<1x1x100x100xf32> to vector<100x100xf32>
    %c24 = arith.constant 24 : index
    %c0_148 = arith.constant 0 : index
    %c0_149 = arith.constant 0 : index
    %122 = vector.load %arg5[%c24, %c0_148, %c0_149] : memref<27x100x100xf32, #tpu.memory_space<vmem>>, vector<1x100x100xf32>
    %123 = vector.shape_cast %122 : vector<1x100x100xf32> to vector<100x100xf32>
    %124 = vector.shape_cast %121 : vector<100x100xf32> to vector<1x100x100xf32>
    tpu.vector_store %arg5[%c24, %c0_148, %c0_149], %124 {strides = array<i32>} : memref<27x100x100xf32, #tpu.memory_space<vmem>>, vector<1x100x100xf32>,
    %c0_150 = arith.constant 0 : index
    %c2_151 = arith.constant 2 : index
    %c2_152 = arith.constant 2 : index
    %c1_153 = arith.constant 1 : index
    %125 = vector.load %arg1[%c0_150, %c2_151, %c2_152, %c1_153] : memref<1x3x102x102xf32, #tpu.memory_space<vmem>>, vector<1x1x100x100xf32>
    %126 = vector.shape_cast %125 : vector<1x1x100x100xf32> to vector<100x100xf32>
    %c25 = arith.constant 25 : index
    %c0_154 = arith.constant 0 : index
    %c0_155 = arith.constant 0 : index
    %127 = vector.load %arg5[%c25, %c0_154, %c0_155] : memref<27x100x100xf32, #tpu.memory_space<vmem>>, vector<1x100x100xf32>
    %128 = vector.shape_cast %127 : vector<1x100x100xf32> to vector<100x100xf32>
    %129 = vector.shape_cast %126 : vector<100x100xf32> to vector<1x100x100xf32>
    tpu.vector_store %arg5[%c25, %c0_154, %c0_155], %129 {strides = array<i32>} : memref<27x100x100xf32, #tpu.memory_space<vmem>>, vector<1x100x100xf32>,
    %c0_156 = arith.constant 0 : index
    %c2_157 = arith.constant 2 : index
    %c2_158 = arith.constant 2 : index
    %c2_159 = arith.constant 2 : index
    %130 = vector.load %arg1[%c0_156, %c2_157, %c2_158, %c2_159] : memref<1x3x102x102xf32, #tpu.memory_space<vmem>>, vector<1x1x100x100xf32>
    %131 = vector.shape_cast %130 : vector<1x1x100x100xf32> to vector<100x100xf32>
    %c26 = arith.constant 26 : index
    %c0_160 = arith.constant 0 : index
    %c0_161 = arith.constant 0 : index
    %132 = vector.load %arg5[%c26, %c0_160, %c0_161] : memref<27x100x100xf32, #tpu.memory_space<vmem>>, vector<1x100x100xf32>
    %133 = vector.shape_cast %132 : vector<1x100x100xf32> to vector<100x100xf32>
    %134 = vector.shape_cast %131 : vector<100x100xf32> to vector<1x100x100xf32>
    tpu.vector_store %arg5[%c26, %c0_160, %c0_161], %134 {strides = array<i32>} : memref<27x100x100xf32, #tpu.memory_space<vmem>>, vector<1x100x100xf32>,
    %135 = tpu.iota {dimensions = array<i32: 0>} : vector<100x50xi32>
    %136 = tpu.iota {dimensions = array<i32: 1>} : vector<100x50xi32>
    %c2_i32 = arith.constant 2 : i32
    %137 = vector.broadcast %c2_i32 : i32 to vector<100x50xi32>
    %138 = arith.muli %137, %136 : vector<100x50xi32>
    %139 = arith.cmpi eq, %135, %138 : vector<100x50xi32>
    %140 = arith.extui %139 : vector<100x50xi1> to vector<100x50xi32>
    %141 = arith.sitofp %140 : vector<100x50xi32> to vector<100x50xf32>
    %c2_i32_162 = arith.constant 2 : i32
    %142 = vector.broadcast %c2_i32_162 : i32 to vector<100x50xi32>
    %143 = arith.muli %142, %136 : vector<100x50xi32>
    %c1_i32 = arith.constant 1 : i32
    %144 = vector.broadcast %c1_i32 : i32 to vector<100x50xi32>
    %145 = arith.addi %143, %144 : vector<100x50xi32>
    %146 = arith.cmpi eq, %135, %145 : vector<100x50xi32>
    %147 = arith.extui %146 : vector<100x50xi1> to vector<100x50xi32>
    %148 = arith.sitofp %147 : vector<100x50xi32> to vector<100x50xf32>
    %149 = tpu.iota {dimensions = array<i32: 0>} : vector<50x100xi32>
    %150 = tpu.iota {dimensions = array<i32: 1>} : vector<50x100xi32>
    %c2_i32_163 = arith.constant 2 : i32
    %151 = vector.broadcast %c2_i32_163 : i32 to vector<50x100xi32>
    %152 = arith.muli %151, %149 : vector<50x100xi32>
    %153 = arith.cmpi eq, %150, %152 : vector<50x100xi32>
    %154 = arith.extui %153 : vector<50x100xi1> to vector<50x100xi32>
    %155 = arith.sitofp %154 : vector<50x100xi32> to vector<50x100xf32>
    %c2_i32_164 = arith.constant 2 : i32
    %156 = vector.broadcast %c2_i32_164 : i32 to vector<50x100xi32>
    %157 = arith.muli %156, %149 : vector<50x100xi32>
    %c1_i32_165 = arith.constant 1 : i32
    %158 = vector.broadcast %c1_i32_165 : i32 to vector<50x100xi32>
    %159 = arith.addi %157, %158 : vector<50x100xi32>
    %160 = arith.cmpi eq, %150, %159 : vector<50x100xi32>
    %161 = arith.extui %160 : vector<50x100xi1> to vector<50x100xi32>
    %162 = arith.sitofp %161 : vector<50x100xi32> to vector<50x100xf32>
    %c0_i32 = arith.constant 0 : i32
    %c16_i32 = arith.constant 16 : i32
    %163 = arith.addi %c0_i32, %c16_i32 : i32
    %c1_i32_166 = arith.constant 1 : i32
    scf.for %arg6 = %c0_i32 to %163 step %c1_i32_166  : i32 {
      %164 = arith.index_cast %arg6 : i32 to index
      %165 = memref.load %arg3[%164] : memref<16xf32, #tpu.memory_space<smem>>
      %166 = vector.broadcast %165 : f32 to vector<100x100xf32>
      %167 = arith.index_cast %arg6 : i32 to index
      %c0_168 = arith.constant 0 : index
      %168 = memref.load %arg2[%167, %c0_168] : memref<16x27xf32, #tpu.memory_space<smem>>
      %c0_169 = arith.constant 0 : index
      %c0_170 = arith.constant 0 : index
      %c0_171 = arith.constant 0 : index
      %169 = vector.load %arg5[%c0_169, %c0_170, %c0_171] : memref<27x100x100xf32, #tpu.memory_space<vmem>>, vector<1x100x100xf32>
      %170 = vector.shape_cast %169 : vector<1x100x100xf32> to vector<100x100xf32>
      %171 = vector.broadcast %168 : f32 to vector<100x100xf32>
      %172 = arith.mulf %171, %170 : vector<100x100xf32>
      %173 = arith.addf %166, %172 : vector<100x100xf32>
      %174 = arith.index_cast %arg6 : i32 to index
      %c1_172 = arith.constant 1 : index
      %175 = memref.load %arg2[%174, %c1_172] : memref<16x27xf32, #tpu.memory_space<smem>>
      %c1_173 = arith.constant 1 : index
      %c0_174 = arith.constant 0 : index
      %c0_175 = arith.constant 0 : index
      %176 = vector.load %arg5[%c1_173, %c0_174, %c0_175] : memref<27x100x100xf32, #tpu.memory_space<vmem>>, vector<1x100x100xf32>
      %177 = vector.shape_cast %176 : vector<1x100x100xf32> to vector<100x100xf32>
      %178 = vector.broadcast %175 : f32 to vector<100x100xf32>
      %179 = arith.mulf %178, %177 : vector<100x100xf32>
      %180 = arith.addf %173, %179 : vector<100x100xf32>
      %181 = arith.index_cast %arg6 : i32 to index
      %c2_176 = arith.constant 2 : index
      %182 = memref.load %arg2[%181, %c2_176] : memref<16x27xf32, #tpu.memory_space<smem>>
      %c2_177 = arith.constant 2 : index
      %c0_178 = arith.constant 0 : index
      %c0_179 = arith.constant 0 : index
      %183 = vector.load %arg5[%c2_177, %c0_178, %c0_179] : memref<27x100x100xf32, #tpu.memory_space<vmem>>, vector<1x100x100xf32>
      %184 = vector.shape_cast %183 : vector<1x100x100xf32> to vector<100x100xf32>
      %185 = vector.broadcast %182 : f32 to vector<100x100xf32>
      %186 = arith.mulf %185, %184 : vector<100x100xf32>
      %187 = arith.addf %180, %186 : vector<100x100xf32>
      %188 = arith.index_cast %arg6 : i32 to index
      %c3_180 = arith.constant 3 : index
      %189 = memref.load %arg2[%188, %c3_180] : memref<16x27xf32, #tpu.memory_space<smem>>
      %c3_181 = arith.constant 3 : index
      %c0_182 = arith.constant 0 : index
      %c0_183 = arith.constant 0 : index
      %190 = vector.load %arg5[%c3_181, %c0_182, %c0_183] : memref<27x100x100xf32, #tpu.memory_space<vmem>>, vector<1x100x100xf32>
      %191 = vector.shape_cast %190 : vector<1x100x100xf32> to vector<100x100xf32>
      %192 = vector.broadcast %189 : f32 to vector<100x100xf32>
      %193 = arith.mulf %192, %191 : vector<100x100xf32>
      %194 = arith.addf %187, %193 : vector<100x100xf32>
      %195 = arith.index_cast %arg6 : i32 to index
      %c4_184 = arith.constant 4 : index
      %196 = memref.load %arg2[%195, %c4_184] : memref<16x27xf32, #tpu.memory_space<smem>>
      %c4_185 = arith.constant 4 : index
      %c0_186 = arith.constant 0 : index
      %c0_187 = arith.constant 0 : index
      %197 = vector.load %arg5[%c4_185, %c0_186, %c0_187] : memref<27x100x100xf32, #tpu.memory_space<vmem>>, vector<1x100x100xf32>
      %198 = vector.shape_cast %197 : vector<1x100x100xf32> to vector<100x100xf32>
      %199 = vector.broadcast %196 : f32 to vector<100x100xf32>
      %200 = arith.mulf %199, %198 : vector<100x100xf32>
      %201 = arith.addf %194, %200 : vector<100x100xf32>
      %202 = arith.index_cast %arg6 : i32 to index
      %c5_188 = arith.constant 5 : index
      %203 = memref.load %arg2[%202, %c5_188] : memref<16x27xf32, #tpu.memory_space<smem>>
      %c5_189 = arith.constant 5 : index
      %c0_190 = arith.constant 0 : index
      %c0_191 = arith.constant 0 : index
      %204 = vector.load %arg5[%c5_189, %c0_190, %c0_191] : memref<27x100x100xf32, #tpu.memory_space<vmem>>, vector<1x100x100xf32>
      %205 = vector.shape_cast %204 : vector<1x100x100xf32> to vector<100x100xf32>
      %206 = vector.broadcast %203 : f32 to vector<100x100xf32>
      %207 = arith.mulf %206, %205 : vector<100x100xf32>
      %208 = arith.addf %201, %207 : vector<100x100xf32>
      %209 = arith.index_cast %arg6 : i32 to index
      %c6_192 = arith.constant 6 : index
      %210 = memref.load %arg2[%209, %c6_192] : memref<16x27xf32, #tpu.memory_space<smem>>
      %c6_193 = arith.constant 6 : index
      %c0_194 = arith.constant 0 : index
      %c0_195 = arith.constant 0 : index
      %211 = vector.load %arg5[%c6_193, %c0_194, %c0_195] : memref<27x100x100xf32, #tpu.memory_space<vmem>>, vector<1x100x100xf32>
      %212 = vector.shape_cast %211 : vector<1x100x100xf32> to vector<100x100xf32>
      %213 = vector.broadcast %210 : f32 to vector<100x100xf32>
      %214 = arith.mulf %213, %212 : vector<100x100xf32>
      %215 = arith.addf %208, %214 : vector<100x100xf32>
      %216 = arith.index_cast %arg6 : i32 to index
      %c7_196 = arith.constant 7 : index
      %217 = memref.load %arg2[%216, %c7_196] : memref<16x27xf32, #tpu.memory_space<smem>>
      %c7_197 = arith.constant 7 : index
      %c0_198 = arith.constant 0 : index
      %c0_199 = arith.constant 0 : index
      %218 = vector.load %arg5[%c7_197, %c0_198, %c0_199] : memref<27x100x100xf32, #tpu.memory_space<vmem>>, vector<1x100x100xf32>
      %219 = vector.shape_cast %218 : vector<1x100x100xf32> to vector<100x100xf32>
      %220 = vector.broadcast %217 : f32 to vector<100x100xf32>
      %221 = arith.mulf %220, %219 : vector<100x100xf32>
      %222 = arith.addf %215, %221 : vector<100x100xf32>
      %223 = arith.index_cast %arg6 : i32 to index
      %c8_200 = arith.constant 8 : index
      %224 = memref.load %arg2[%223, %c8_200] : memref<16x27xf32, #tpu.memory_space<smem>>
      %c8_201 = arith.constant 8 : index
      %c0_202 = arith.constant 0 : index
      %c0_203 = arith.constant 0 : index
      %225 = vector.load %arg5[%c8_201, %c0_202, %c0_203] : memref<27x100x100xf32, #tpu.memory_space<vmem>>, vector<1x100x100xf32>
      %226 = vector.shape_cast %225 : vector<1x100x100xf32> to vector<100x100xf32>
      %227 = vector.broadcast %224 : f32 to vector<100x100xf32>
      %228 = arith.mulf %227, %226 : vector<100x100xf32>
      %229 = arith.addf %222, %228 : vector<100x100xf32>
      %230 = arith.index_cast %arg6 : i32 to index
      %c9_204 = arith.constant 9 : index
      %231 = memref.load %arg2[%230, %c9_204] : memref<16x27xf32, #tpu.memory_space<smem>>
      %c9_205 = arith.constant 9 : index
      %c0_206 = arith.constant 0 : index
      %c0_207 = arith.constant 0 : index
      %232 = vector.load %arg5[%c9_205, %c0_206, %c0_207] : memref<27x100x100xf32, #tpu.memory_space<vmem>>, vector<1x100x100xf32>
      %233 = vector.shape_cast %232 : vector<1x100x100xf32> to vector<100x100xf32>
      %234 = vector.broadcast %231 : f32 to vector<100x100xf32>
      %235 = arith.mulf %234, %233 : vector<100x100xf32>
      %236 = arith.addf %229, %235 : vector<100x100xf32>
      %237 = arith.index_cast %arg6 : i32 to index
      %c10_208 = arith.constant 10 : index
      %238 = memref.load %arg2[%237, %c10_208] : memref<16x27xf32, #tpu.memory_space<smem>>
      %c10_209 = arith.constant 10 : index
      %c0_210 = arith.constant 0 : index
      %c0_211 = arith.constant 0 : index
      %239 = vector.load %arg5[%c10_209, %c0_210, %c0_211] : memref<27x100x100xf32, #tpu.memory_space<vmem>>, vector<1x100x100xf32>
      %240 = vector.shape_cast %239 : vector<1x100x100xf32> to vector<100x100xf32>
      %241 = vector.broadcast %238 : f32 to vector<100x100xf32>
      %242 = arith.mulf %241, %240 : vector<100x100xf32>
      %243 = arith.addf %236, %242 : vector<100x100xf32>
      %244 = arith.index_cast %arg6 : i32 to index
      %c11_212 = arith.constant 11 : index
      %245 = memref.load %arg2[%244, %c11_212] : memref<16x27xf32, #tpu.memory_space<smem>>
      %c11_213 = arith.constant 11 : index
      %c0_214 = arith.constant 0 : index
      %c0_215 = arith.constant 0 : index
      %246 = vector.load %arg5[%c11_213, %c0_214, %c0_215] : memref<27x100x100xf32, #tpu.memory_space<vmem>>, vector<1x100x100xf32>
      %247 = vector.shape_cast %246 : vector<1x100x100xf32> to vector<100x100xf32>
      %248 = vector.broadcast %245 : f32 to vector<100x100xf32>
      %249 = arith.mulf %248, %247 : vector<100x100xf32>
      %250 = arith.addf %243, %249 : vector<100x100xf32>
      %251 = arith.index_cast %arg6 : i32 to index
      %c12_216 = arith.constant 12 : index
      %252 = memref.load %arg2[%251, %c12_216] : memref<16x27xf32, #tpu.memory_space<smem>>
      %c12_217 = arith.constant 12 : index
      %c0_218 = arith.constant 0 : index
      %c0_219 = arith.constant 0 : index
      %253 = vector.load %arg5[%c12_217, %c0_218, %c0_219] : memref<27x100x100xf32, #tpu.memory_space<vmem>>, vector<1x100x100xf32>
      %254 = vector.shape_cast %253 : vector<1x100x100xf32> to vector<100x100xf32>
      %255 = vector.broadcast %252 : f32 to vector<100x100xf32>
      %256 = arith.mulf %255, %254 : vector<100x100xf32>
      %257 = arith.addf %250, %256 : vector<100x100xf32>
      %258 = arith.index_cast %arg6 : i32 to index
      %c13_220 = arith.constant 13 : index
      %259 = memref.load %arg2[%258, %c13_220] : memref<16x27xf32, #tpu.memory_space<smem>>
      %c13_221 = arith.constant 13 : index
      %c0_222 = arith.constant 0 : index
      %c0_223 = arith.constant 0 : index
      %260 = vector.load %arg5[%c13_221, %c0_222, %c0_223] : memref<27x100x100xf32, #tpu.memory_space<vmem>>, vector<1x100x100xf32>
      %261 = vector.shape_cast %260 : vector<1x100x100xf32> to vector<100x100xf32>
      %262 = vector.broadcast %259 : f32 to vector<100x100xf32>
      %263 = arith.mulf %262, %261 : vector<100x100xf32>
      %264 = arith.addf %257, %263 : vector<100x100xf32>
      %265 = arith.index_cast %arg6 : i32 to index
      %c14_224 = arith.constant 14 : index
      %266 = memref.load %arg2[%265, %c14_224] : memref<16x27xf32, #tpu.memory_space<smem>>
      %c14_225 = arith.constant 14 : index
      %c0_226 = arith.constant 0 : index
      %c0_227 = arith.constant 0 : index
      %267 = vector.load %arg5[%c14_225, %c0_226, %c0_227] : memref<27x100x100xf32, #tpu.memory_space<vmem>>, vector<1x100x100xf32>
      %268 = vector.shape_cast %267 : vector<1x100x100xf32> to vector<100x100xf32>
      %269 = vector.broadcast %266 : f32 to vector<100x100xf32>
      %270 = arith.mulf %269, %268 : vector<100x100xf32>
      %271 = arith.addf %264, %270 : vector<100x100xf32>
      %272 = arith.index_cast %arg6 : i32 to index
      %c15_228 = arith.constant 15 : index
      %273 = memref.load %arg2[%272, %c15_228] : memref<16x27xf32, #tpu.memory_space<smem>>
      %c15_229 = arith.constant 15 : index
      %c0_230 = arith.constant 0 : index
      %c0_231 = arith.constant 0 : index
      %274 = vector.load %arg5[%c15_229, %c0_230, %c0_231] : memref<27x100x100xf32, #tpu.memory_space<vmem>>, vector<1x100x100xf32>
      %275 = vector.shape_cast %274 : vector<1x100x100xf32> to vector<100x100xf32>
      %276 = vector.broadcast %273 : f32 to vector<100x100xf32>
      %277 = arith.mulf %276, %275 : vector<100x100xf32>
      %278 = arith.addf %271, %277 : vector<100x100xf32>
      %279 = arith.index_cast %arg6 : i32 to index
      %c16_232 = arith.constant 16 : index
      %280 = memref.load %arg2[%279, %c16_232] : memref<16x27xf32, #tpu.memory_space<smem>>
      %c16_233 = arith.constant 16 : index
      %c0_234 = arith.constant 0 : index
      %c0_235 = arith.constant 0 : index
      %281 = vector.load %arg5[%c16_233, %c0_234, %c0_235] : memref<27x100x100xf32, #tpu.memory_space<vmem>>, vector<1x100x100xf32>
      %282 = vector.shape_cast %281 : vector<1x100x100xf32> to vector<100x100xf32>
      %283 = vector.broadcast %280 : f32 to vector<100x100xf32>
      %284 = arith.mulf %283, %282 : vector<100x100xf32>
      %285 = arith.addf %278, %284 : vector<100x100xf32>
      %286 = arith.index_cast %arg6 : i32 to index
      %c17_236 = arith.constant 17 : index
      %287 = memref.load %arg2[%286, %c17_236] : memref<16x27xf32, #tpu.memory_space<smem>>
      %c17_237 = arith.constant 17 : index
      %c0_238 = arith.constant 0 : index
      %c0_239 = arith.constant 0 : index
      %288 = vector.load %arg5[%c17_237, %c0_238, %c0_239] : memref<27x100x100xf32, #tpu.memory_space<vmem>>, vector<1x100x100xf32>
      %289 = vector.shape_cast %288 : vector<1x100x100xf32> to vector<100x100xf32>
      %290 = vector.broadcast %287 : f32 to vector<100x100xf32>
      %291 = arith.mulf %290, %289 : vector<100x100xf32>
      %292 = arith.addf %285, %291 : vector<100x100xf32>
      %293 = arith.index_cast %arg6 : i32 to index
      %c18_240 = arith.constant 18 : index
      %294 = memref.load %arg2[%293, %c18_240] : memref<16x27xf32, #tpu.memory_space<smem>>
      %c18_241 = arith.constant 18 : index
      %c0_242 = arith.constant 0 : index
      %c0_243 = arith.constant 0 : index
      %295 = vector.load %arg5[%c18_241, %c0_242, %c0_243] : memref<27x100x100xf32, #tpu.memory_space<vmem>>, vector<1x100x100xf32>
      %296 = vector.shape_cast %295 : vector<1x100x100xf32> to vector<100x100xf32>
      %297 = vector.broadcast %294 : f32 to vector<100x100xf32>
      %298 = arith.mulf %297, %296 : vector<100x100xf32>
      %299 = arith.addf %292, %298 : vector<100x100xf32>
      %300 = arith.index_cast %arg6 : i32 to index
      %c19_244 = arith.constant 19 : index
      %301 = memref.load %arg2[%300, %c19_244] : memref<16x27xf32, #tpu.memory_space<smem>>
      %c19_245 = arith.constant 19 : index
      %c0_246 = arith.constant 0 : index
      %c0_247 = arith.constant 0 : index
      %302 = vector.load %arg5[%c19_245, %c0_246, %c0_247] : memref<27x100x100xf32, #tpu.memory_space<vmem>>, vector<1x100x100xf32>
      %303 = vector.shape_cast %302 : vector<1x100x100xf32> to vector<100x100xf32>
      %304 = vector.broadcast %301 : f32 to vector<100x100xf32>
      %305 = arith.mulf %304, %303 : vector<100x100xf32>
      %306 = arith.addf %299, %305 : vector<100x100xf32>
      %307 = arith.index_cast %arg6 : i32 to index
      %c20_248 = arith.constant 20 : index
      %308 = memref.load %arg2[%307, %c20_248] : memref<16x27xf32, #tpu.memory_space<smem>>
      %c20_249 = arith.constant 20 : index
      %c0_250 = arith.constant 0 : index
      %c0_251 = arith.constant 0 : index
      %309 = vector.load %arg5[%c20_249, %c0_250, %c0_251] : memref<27x100x100xf32, #tpu.memory_space<vmem>>, vector<1x100x100xf32>
      %310 = vector.shape_cast %309 : vector<1x100x100xf32> to vector<100x100xf32>
      %311 = vector.broadcast %308 : f32 to vector<100x100xf32>
      %312 = arith.mulf %311, %310 : vector<100x100xf32>
      %313 = arith.addf %306, %312 : vector<100x100xf32>
      %314 = arith.index_cast %arg6 : i32 to index
      %c21_252 = arith.constant 21 : index
      %315 = memref.load %arg2[%314, %c21_252] : memref<16x27xf32, #tpu.memory_space<smem>>
      %c21_253 = arith.constant 21 : index
      %c0_254 = arith.constant 0 : index
      %c0_255 = arith.constant 0 : index
      %316 = vector.load %arg5[%c21_253, %c0_254, %c0_255] : memref<27x100x100xf32, #tpu.memory_space<vmem>>, vector<1x100x100xf32>
      %317 = vector.shape_cast %316 : vector<1x100x100xf32> to vector<100x100xf32>
      %318 = vector.broadcast %315 : f32 to vector<100x100xf32>
      %319 = arith.mulf %318, %317 : vector<100x100xf32>
      %320 = arith.addf %313, %319 : vector<100x100xf32>
      %321 = arith.index_cast %arg6 : i32 to index
      %c22_256 = arith.constant 22 : index
      %322 = memref.load %arg2[%321, %c22_256] : memref<16x27xf32, #tpu.memory_space<smem>>
      %c22_257 = arith.constant 22 : index
      %c0_258 = arith.constant 0 : index
      %c0_259 = arith.constant 0 : index
      %323 = vector.load %arg5[%c22_257, %c0_258, %c0_259] : memref<27x100x100xf32, #tpu.memory_space<vmem>>, vector<1x100x100xf32>
      %324 = vector.shape_cast %323 : vector<1x100x100xf32> to vector<100x100xf32>
      %325 = vector.broadcast %322 : f32 to vector<100x100xf32>
      %326 = arith.mulf %325, %324 : vector<100x100xf32>
      %327 = arith.addf %320, %326 : vector<100x100xf32>
      %328 = arith.index_cast %arg6 : i32 to index
      %c23_260 = arith.constant 23 : index
      %329 = memref.load %arg2[%328, %c23_260] : memref<16x27xf32, #tpu.memory_space<smem>>
      %c23_261 = arith.constant 23 : index
      %c0_262 = arith.constant 0 : index
      %c0_263 = arith.constant 0 : index
      %330 = vector.load %arg5[%c23_261, %c0_262, %c0_263] : memref<27x100x100xf32, #tpu.memory_space<vmem>>, vector<1x100x100xf32>
      %331 = vector.shape_cast %330 : vector<1x100x100xf32> to vector<100x100xf32>
      %332 = vector.broadcast %329 : f32 to vector<100x100xf32>
      %333 = arith.mulf %332, %331 : vector<100x100xf32>
      %334 = arith.addf %327, %333 : vector<100x100xf32>
      %335 = arith.index_cast %arg6 : i32 to index
      %c24_264 = arith.constant 24 : index
      %336 = memref.load %arg2[%335, %c24_264] : memref<16x27xf32, #tpu.memory_space<smem>>
      %c24_265 = arith.constant 24 : index
      %c0_266 = arith.constant 0 : index
      %c0_267 = arith.constant 0 : index
      %337 = vector.load %arg5[%c24_265, %c0_266, %c0_267] : memref<27x100x100xf32, #tpu.memory_space<vmem>>, vector<1x100x100xf32>
      %338 = vector.shape_cast %337 : vector<1x100x100xf32> to vector<100x100xf32>
      %339 = vector.broadcast %336 : f32 to vector<100x100xf32>
      %340 = arith.mulf %339, %338 : vector<100x100xf32>
      %341 = arith.addf %334, %340 : vector<100x100xf32>
      %342 = arith.index_cast %arg6 : i32 to index
      %c25_268 = arith.constant 25 : index
      %343 = memref.load %arg2[%342, %c25_268] : memref<16x27xf32, #tpu.memory_space<smem>>
      %c25_269 = arith.constant 25 : index
      %c0_270 = arith.constant 0 : index
      %c0_271 = arith.constant 0 : index
      %344 = vector.load %arg5[%c25_269, %c0_270, %c0_271] : memref<27x100x100xf32, #tpu.memory_space<vmem>>, vector<1x100x100xf32>
      %345 = vector.shape_cast %344 : vector<1x100x100xf32> to vector<100x100xf32>
      %346 = vector.broadcast %343 : f32 to vector<100x100xf32>
      %347 = arith.mulf %346, %345 : vector<100x100xf32>
      %348 = arith.addf %341, %347 : vector<100x100xf32>
      %349 = arith.index_cast %arg6 : i32 to index
      %c26_272 = arith.constant 26 : index
      %350 = memref.load %arg2[%349, %c26_272] : memref<16x27xf32, #tpu.memory_space<smem>>
      %c26_273 = arith.constant 26 : index
      %c0_274 = arith.constant 0 : index
      %c0_275 = arith.constant 0 : index
      %351 = vector.load %arg5[%c26_273, %c0_274, %c0_275] : memref<27x100x100xf32, #tpu.memory_space<vmem>>, vector<1x100x100xf32>
      %352 = vector.shape_cast %351 : vector<1x100x100xf32> to vector<100x100xf32>
      %353 = vector.broadcast %350 : f32 to vector<100x100xf32>
      %354 = arith.mulf %353, %352 : vector<100x100xf32>
      %355 = arith.addf %348, %354 : vector<100x100xf32>
      %cst = arith.constant 0.000000e+00 : f32
      %356 = vector.broadcast %cst : f32 to vector<100x100xf32>
      %357 = arith.maximumf %355, %356 : vector<100x100xf32>
      %cst_276 = arith.constant dense<0.000000e+00> : vector<100x50xf32>
      %358 = tpu.matmul %357, %141, %cst_276 {dimension_numbers = #tpu.dot_dimension_numbers<[1], [0], [0], [1], [0, 0, 1, 1], [], []>} : vector<100x100xf32>, vector<100x50xf32>, vector<100x50xf32> -> vector<100x50xf32>
      %cst_277 = arith.constant dense<0.000000e+00> : vector<100x50xf32>
      %359 = tpu.matmul %357, %148, %cst_277 {dimension_numbers = #tpu.dot_dimension_numbers<[1], [0], [0], [1], [0, 0, 1, 1], [], []>} : vector<100x100xf32>, vector<100x50xf32>, vector<100x50xf32> -> vector<100x50xf32>
      %360 = arith.maximumf %358, %359 : vector<100x50xf32>
      %cst_278 = arith.constant dense<0.000000e+00> : vector<50x50xf32>
      %361 = tpu.matmul %155, %360, %cst_278 {dimension_numbers = #tpu.dot_dimension_numbers<[1], [0], [0], [1], [0, 0, 1, 1], [], []>} : vector<50x100xf32>, vector<100x50xf32>, vector<50x50xf32> -> vector<50x50xf32>
      %cst_279 = arith.constant dense<0.000000e+00> : vector<50x50xf32>
      %362 = tpu.matmul %162, %360, %cst_279 {dimension_numbers = #tpu.dot_dimension_numbers<[1], [0], [0], [1], [0, 0, 1, 1], [], []>} : vector<50x100xf32>, vector<100x50xf32>, vector<50x50xf32> -> vector<50x50xf32>
      %363 = arith.maximumf %361, %362 : vector<50x50xf32>
      %c0_280 = arith.constant 0 : index
      %364 = arith.index_cast %arg6 : i32 to index
      %c0_281 = arith.constant 0 : index
      %c0_282 = arith.constant 0 : index
      %365 = vector.load %arg4[%c0_280, %364, %c0_281, %c0_282] : memref<1x16x50x50xf32, #tpu.memory_space<vmem>>, vector<1x1x50x50xf32>
      %366 = vector.shape_cast %365 : vector<1x1x50x50xf32> to vector<50x50xf32>
      %367 = vector.shape_cast %363 : vector<50x50xf32> to vector<1x1x50x50xf32>
      tpu.vector_store %arg4[%c0_280, %364, %c0_281, %c0_282], %367 {strides = array<i32>} : memref<1x16x50x50xf32, #tpu.memory_space<vmem>>, vector<1x1x50x50xf32>,
    }
    %c16_i32_167 = arith.constant 16 : i32
    return
  }
  func.func @transform_0(%arg0: i32) -> (i32, i32, i32, i32) {
    %c0_i32 = arith.constant 0 : i32
    %c0_i32_0 = arith.constant 0 : i32
    %c0_i32_1 = arith.constant 0 : i32
    %c0_i32_2 = arith.constant 0 : i32
    return %arg0, %c0_i32, %c0_i32_0, %c0_i32_1 : i32, i32, i32, i32
  }
  func.func @transform_1(%arg0: i32) -> (i32, i32) {
    %c0_i32 = arith.constant 0 : i32
    %c0_i32_0 = arith.constant 0 : i32
    %c0_i32_1 = arith.constant 0 : i32
    return %c0_i32, %c0_i32_0 : i32, i32
  }
  func.func @transform_2(%arg0: i32) -> i32 {
    %c0_i32 = arith.constant 0 : i32
    %c0_i32_0 = arith.constant 0 : i32
    return %c0_i32 : i32
  }
  func.func @transform_3(%arg0: i32) -> (i32, i32, i32, i32) {
    %c0_i32 = arith.constant 0 : i32
    %c0_i32_0 = arith.constant 0 : i32
    %c0_i32_1 = arith.constant 0 : i32
    %c0_i32_2 = arith.constant 0 : i32
    return %arg0, %c0_i32, %c0_i32_0, %c0_i32_1 : i32, i32, i32, i32
  }
}

module attributes {stable_mosaic.version = 11 : i64} {
  func.func @fc_head_kernel(%arg0: i32, %arg1: memref<2x8192xf32, #tpu.memory_space<vmem>>, %arg2: memref<8192x128xbf16, #tpu.memory_space<vmem>>, %arg3: memref<1x128xf32, #tpu.memory_space<vmem>>, %arg4: memref<1x128xf32, #tpu.memory_space<vmem>>, %arg5: memref<1x1xf32, #tpu.memory_space<vmem>>, %arg6: memref<2x1xf32, #tpu.memory_space<vmem>>, %arg7: memref<2x128xf32, #tpu.memory_space<vmem>>) attributes {dimension_semantics = [#tpu.dimension_semantics<arbitrary>], iteration_bounds = array<i64: 5>, scalar_prefetch = 0 : i64, scratch_operands = 1 : i64, tpu.core_type = #tpu.core_type<tc>, window_params = [{transform_indices = @transform_0, window_bounds = array<i64: 2, 8192>}, {transform_indices = @transform_1, window_bounds = array<i64: 8192, 128>}, {pipeline_mode = #tpu.pipeline_mode<synchronous>, transform_indices = @transform_2, window_bounds = array<i64: 1, 128>}, {pipeline_mode = #tpu.pipeline_mode<synchronous>, transform_indices = @transform_3, window_bounds = array<i64: 1, 128>}, {pipeline_mode = #tpu.pipeline_mode<synchronous>, transform_indices = @transform_4, window_bounds = array<i64: 1, 1>}, {pipeline_mode = #tpu.pipeline_mode<synchronous>, transform_indices = @transform_5, window_bounds = array<i64: 2, 1>}]} {
    %c0_i32 = arith.constant 0 : i32
    %0 = arith.cmpi eq, %arg0, %c0_i32 : i32
    %1 = arith.extui %0 : i1 to i32
    %c0_i32_0 = arith.constant 0 : i32
    %2 = arith.cmpi ne, %1, %c0_i32_0 : i32
    scf.if %2 {
      %cst_9 = arith.constant 0.000000e+00 : f32
      %13 = vector.broadcast %cst_9 : f32 to vector<2x128xf32>
      %c0_10 = arith.constant 0 : index
      %c0_11 = arith.constant 0 : index
      %14 = vector.load %arg7[%c0_10, %c0_11] : memref<2x128xf32, #tpu.memory_space<vmem>>, vector<2x128xf32>
      tpu.vector_store %arg7[%c0_10, %c0_11], %13 {strides = array<i32>} : memref<2x128xf32, #tpu.memory_space<vmem>>, vector<2x128xf32>,
    } else {
    }
    %c0 = arith.constant 0 : index
    %c0_1 = arith.constant 0 : index
    %3 = vector.load %arg7[%c0, %c0_1] : memref<2x128xf32, #tpu.memory_space<vmem>>, vector<2x128xf32>
    %c0_2 = arith.constant 0 : index
    %c0_3 = arith.constant 0 : index
    %4 = vector.load %arg1[%c0_2, %c0_3] : memref<2x8192xf32, #tpu.memory_space<vmem>>, vector<2x8192xf32>
    %5 = arith.truncf %4 : vector<2x8192xf32> to vector<2x8192xbf16>
    %c0_4 = arith.constant 0 : index
    %c0_5 = arith.constant 0 : index
    %6 = vector.load %arg2[%c0_4, %c0_5] : memref<8192x128xbf16, #tpu.memory_space<vmem>>, vector<8192x128xbf16>
    %cst = arith.constant dense<0.000000e+00> : vector<2x128xf32>
    %7 = tpu.matmul %5, %6, %cst {dimension_numbers = #tpu.dot_dimension_numbers<[1], [0], [0], [1], [0, 0, 1, 1], [], []>} : vector<2x8192xbf16>, vector<8192x128xbf16>, vector<2x128xf32> -> vector<2x128xf32>
    %8 = arith.addf %3, %7 : vector<2x128xf32>
    %c0_6 = arith.constant 0 : index
    %c0_7 = arith.constant 0 : index
    %9 = vector.load %arg7[%c0_6, %c0_7] : memref<2x128xf32, #tpu.memory_space<vmem>>, vector<2x128xf32>
    tpu.vector_store %arg7[%c0_6, %c0_7], %8 {strides = array<i32>} : memref<2x128xf32, #tpu.memory_space<vmem>>, vector<2x128xf32>,
    %c4_i32 = arith.constant 4 : i32
    %10 = arith.cmpi eq, %arg0, %c4_i32 : i32
    %11 = arith.extui %10 : i1 to i32
    %c0_i32_8 = arith.constant 0 : i32
    %12 = arith.cmpi ne, %11, %c0_i32_8 : i32
    scf.if %12 {
      %c0_9 = arith.constant 0 : index
      %c0_10 = arith.constant 0 : index
      %13 = vector.load %arg7[%c0_9, %c0_10] : memref<2x128xf32, #tpu.memory_space<vmem>>, vector<2x128xf32>
      %c0_11 = arith.constant 0 : index
      %c0_12 = arith.constant 0 : index
      %14 = vector.load %arg3[%c0_11, %c0_12] : memref<1x128xf32, #tpu.memory_space<vmem>>, vector<1x128xf32>
      %15 = vector.broadcast %14 : vector<1x128xf32> to vector<2x128xf32>
      %16 = arith.addf %13, %15 : vector<2x128xf32>
      %cst_13 = arith.constant 0.000000e+00 : f32
      %17 = vector.broadcast %cst_13 : f32 to vector<2x128xf32>
      %18 = arith.maximumf %16, %17 : vector<2x128xf32>
      %c0_14 = arith.constant 0 : index
      %c0_15 = arith.constant 0 : index
      %19 = vector.load %arg4[%c0_14, %c0_15] : memref<1x128xf32, #tpu.memory_space<vmem>>, vector<1x128xf32>
      %20 = vector.broadcast %19 : vector<1x128xf32> to vector<2x128xf32>
      %21 = arith.mulf %18, %20 : vector<2x128xf32>
      %cst_16 = arith.constant dense<0.000000e+00> : vector<2xf32>
      %22 = vector.multi_reduction <add>, %21, %cst_16 [1] : vector<2x128xf32> to vector<2xf32>
      %23 = vector.shape_cast %22 : vector<2xf32> to vector<2x1xf32>
      %c0_17 = arith.constant 0 : index
      %c0_18 = arith.constant 0 : index
      %24 = vector.load %arg5[%c0_17, %c0_18] : memref<1x1xf32, #tpu.memory_space<vmem>>, vector<1x1xf32>
      %25 = vector.broadcast %24 : vector<1x1xf32> to vector<2x1xf32>
      %26 = arith.addf %23, %25 : vector<2x1xf32>
      %27 = arith.negf %26 : vector<2x1xf32>
      %28 = math.exp %27 : vector<2x1xf32>
      %cst_19 = arith.constant 1.000000e+00 : f32
      %29 = vector.broadcast %cst_19 : f32 to vector<2x1xf32>
      %30 = arith.addf %29, %28 : vector<2x1xf32>
      %31 = arith.divf %29, %30 : vector<2x1xf32>
      %c0_20 = arith.constant 0 : index
      %c0_21 = arith.constant 0 : index
      %32 = vector.load %arg6[%c0_20, %c0_21] : memref<2x1xf32, #tpu.memory_space<vmem>>, vector<2x1xf32>
      tpu.vector_store %arg6[%c0_20, %c0_21], %31 {strides = array<i32>} : memref<2x1xf32, #tpu.memory_space<vmem>>, vector<2x1xf32>,
    } else {
    }
    return
  }
  func.func @transform_0(%arg0: i32) -> (i32, i32) {
    %c0_i32 = arith.constant 0 : i32
    %c0_i32_0 = arith.constant 0 : i32
    return %c0_i32, %arg0 : i32, i32
  }
  func.func @transform_1(%arg0: i32) -> (i32, i32) {
    %c0_i32 = arith.constant 0 : i32
    %c0_i32_0 = arith.constant 0 : i32
    return %arg0, %c0_i32 : i32, i32
  }
  func.func @transform_2(%arg0: i32) -> (i32, i32) {
    %c0_i32 = arith.constant 0 : i32
    %c0_i32_0 = arith.constant 0 : i32
    %c0_i32_1 = arith.constant 0 : i32
    return %c0_i32, %c0_i32_0 : i32, i32
  }
  func.func @transform_3(%arg0: i32) -> (i32, i32) {
    %c0_i32 = arith.constant 0 : i32
    %c0_i32_0 = arith.constant 0 : i32
    %c0_i32_1 = arith.constant 0 : i32
    return %c0_i32, %c0_i32_0 : i32, i32
  }
  func.func @transform_4(%arg0: i32) -> (i32, i32) {
    %c0_i32 = arith.constant 0 : i32
    %c0_i32_0 = arith.constant 0 : i32
    %c0_i32_1 = arith.constant 0 : i32
    return %c0_i32, %c0_i32_0 : i32, i32
  }
  func.func @transform_5(%arg0: i32) -> (i32, i32) {
    %c0_i32 = arith.constant 0 : i32
    %c0_i32_0 = arith.constant 0 : i32
    %c0_i32_1 = arith.constant 0 : i32
    return %c0_i32, %c0_i32_0 : i32, i32
  }
}

</mosaic_0001>

<llo_original>
// kernel: net1_forward.2
$region0: #{net1_forward.2}
  #allocation0 [shape = 'u32[]', space=smem, size = 0x4, offset = 0x4, fixed_abs, tag = 'smem constant byte address 0x4 - core index']
  #allocation1 [shape = 'u32[72,128]{1,0:T(1,128)}', space=vmem, size = 0x9000, scoped, tag = 'internal scratch']
  #allocation2 [shape = 'f32[27,100,100]{2,1,0:T(8,128)}', space=vmem, size = 0x15f000, scoped, tag = 'scratch operand']
  %s0 = inlined_call_operand.vmem [shape: f32[2,3,102,102], index: 0, kind: input, shape index: {}]
  %s1 = inlined_call_operand.hbm [shape: f32[16,27], index: 1, kind: input, shape index: {}]
  %s2 = inlined_call_operand.hbm [shape: f32[16], index: 2, kind: input, shape index: {}]
  %s3 = inlined_call_operand.vmem [shape: f32[2,16,50,50], index: 3, kind: output, shape index: {}]
  %s4 = sld [smem:[#allocation0]]
  $region60: #{net1_forward.2} parent=0
    _
  %s6 = ssub.s32 1, %s4
  %s7 = scalar_select 0, %s6, %s4
  $region1: #{net1_forward.2} parent=0
    #allocation3 [shape = 'u8[8192]{0}', space=smem, size = 0x2000, scoped, tag = 'input window, operand 1, single buffered']
    #allocation4 [shape = 's32[2]{0}', space=sflag, size = 0x8, scoped, tag = 'scoped memory for net1_forward.2']
    #allocation5 [shape = 'u8[512]{0}', space=smem, size = 0x200, scoped, tag = 'input window, operand 2, single buffered']
    #allocation6 [shape = 's32[1]{0}', space=sflag, size = 0x4, scoped, tag = 'scoped memory for net1_forward.2']
    %8 = vsyncpa [#allocation4], 0
    %9 = vsyncpa [#allocation6], 0
    loop: start=0, step=1, limit=4
    $region2: #{net1_forward.2} parent=1 // loop_pre_header
      _
    $region3: #{net1_forward.2} parent=1 // loop_header
      %s11 = sphi 0, %s15
      %p12 = scmp.ge.s32.totalorder %s11, 4
      %s21 = sphi 0, %s23
      %s24 = sphi 0, %s21
      %s25 = sphi 0, %s24
      %s41 = sphi 0, %s25
      %s45 = sphi 0, %s45
      %s47 = sphi 0, %s45
      %s48 = sphi 0, %s47
      %s62 = sphi 0, %s48
      %s66 = sphi 0, %s66
      %s68 = sphi 0, %s66
      %s69 = sphi 0, %s68
      %s83 = sphi 0, %s69
      %s89 = sphi 0, %s91
      %s92 = sphi 0, %s89
      %s93 = sphi 0, %s92
      %s109 = sphi 0, %s93
    $region4: #{net1_forward.2} parent=1 // loop_header_branch
      %14 = sbr.rel (%p12) target = $region8
    $region5: #{net1_forward.2} parent=1 // loop_body
      %s16 = ssub.s32 %s11, 1
      %s17 = ssub.s32 %s11, 2
      %s18 = sadd.s32 %s11, 1
      %s19 = ssub.s32 %s11, %s18
      %p20 = scmp.eq.s32.totalorder %s19, 0
      %s22 = sadd.s32 %s21, 1
      %s23 = scalar_select %p20, %s21, %s22
      %p26 = pneg %p20
      %p27 = scmp.eq.s32.totalorder %s11, 1
      %p28 = por %p26, %p27
      %p29 = scmp.ne.s32.totalorder %s21, %s24
      %p30 = scmp.eq.s32.totalorder %s11, 0
      %p31 = por %p29, %p30
      %p32 = scmp.ne.s32.totalorder %s21, %s24
      %p33 = scmp.eq.s32.totalorder %s16, 1
      %p34 = por %p32, %p33
      %p35 = scmp.ne.s32.totalorder %s24, %s25
      %p36 = scmp.eq.s32.totalorder %s16, 0
      %p37 = por %p35, %p36
      %p38 = scmp.ne.s32.totalorder %s24, %s25
      %p39 = scmp.eq.s32.totalorder %s17, 1
      %p40 = por %p38, %p39
      %p42 = scmp.ne.s32.totalorder %s25, %s41
      %p43 = scmp.eq.s32.totalorder %s17, 0
      %p44 = por %p42, %p43
      %s46 = sadd.s32 %s45, 1
      %p49 = scmp.eq.s32.totalorder %s11, 1
      %p50 = scmp.ne.s32.totalorder %s45, %s47
      %p51 = scmp.eq.s32.totalorder %s11, 0
      %p52 = por %p50, %p51
      %p53 = scmp.ne.s32.totalorder %s45, %s47
      %p54 = scmp.eq.s32.totalorder %s16, 1
      %p55 = por %p53, %p54
      %p56 = scmp.ne.s32.totalorder %s47, %s48
      %p57 = scmp.eq.s32.totalorder %s16, 0
      %p58 = por %p56, %p57
      %p59 = scmp.ne.s32.totalorder %s47, %s48
      %p60 = scmp.eq.s32.totalorder %s17, 1
      %p61 = por %p59, %p60
      %p63 = scmp.ne.s32.totalorder %s48, %s62
      %p64 = scmp.eq.s32.totalorder %s17, 0
      %p65 = por %p63, %p64
      %s67 = sadd.s32 %s66, 1
      %p70 = scmp.eq.s32.totalorder %s11, 1
      %p71 = scmp.ne.s32.totalorder %s66, %s68
      %p72 = scmp.eq.s32.totalorder %s11, 0
      %p73 = por %p71, %p72
      %p74 = scmp.ne.s32.totalorder %s66, %s68
      %p75 = scmp.eq.s32.totalorder %s16, 1
      %p76 = por %p74, %p75
      %p77 = scmp.ne.s32.totalorder %s68, %s69
      %p78 = scmp.eq.s32.totalorder %s16, 0
      %p79 = por %p77, %p78
      %p80 = scmp.ne.s32.totalorder %s68, %s69
      %p81 = scmp.eq.s32.totalorder %s17, 1
      %p82 = por %p80, %p81
      %p84 = scmp.ne.s32.totalorder %s69, %s83
      %p85 = scmp.eq.s32.totalorder %s17, 0
      %p86 = por %p84, %p85
      %s87 = ssub.s32 %s11, %s18
      %p88 = scmp.eq.s32.totalorder %s87, 0
      %s90 = sadd.s32 %s89, 1
      %s91 = scalar_select %p88, %s89, %s90
      %p94 = pneg %p88
      %p95 = scmp.eq.s32.totalorder %s11, 1
      %p96 = por %p94, %p95
      %p97 = scmp.ne.s32.totalorder %s89, %s92
      %p98 = scmp.eq.s32.totalorder %s11, 0
      %p99 = por %p97, %p98
      %p100 = scmp.ne.s32.totalorder %s89, %s92
      %p101 = scmp.eq.s32.totalorder %s16, 1
      %p102 = por %p100, %p101
      %p103 = scmp.ne.s32.totalorder %s92, %s93
      %p104 = scmp.eq.s32.totalorder %s16, 0
      %p105 = por %p103, %p104
      %p106 = scmp.ne.s32.totalorder %s92, %s93
      %p107 = scmp.eq.s32.totalorder %s17, 1
      %p108 = por %p106, %p107
      %p110 = scmp.ne.s32.totalorder %s93, %s109
      %p111 = scmp.eq.s32.totalorder %s17, 0
      %p112 = por %p110, %p111
      %p113 = scmp.le.s32.totalorder 1, %s11
      %p114 = scmp.lt.s32.totalorder %s11, 3
      %p115 = pnand %p113, %p114
      %p116 = pneg %p115
      // Predicated region
      $region9: #{net1_forward.2} parent=5 // pred_check
        _
      $region10: #{net1_forward.2} parent=5 // pred_check_branch
        %118 = sbr.rel (%p115) target = $region12
      $region11: #{net1_forward.2} parent=5 // pred_region
        %s119 = ssub.s32 %s11, 1
        // Predicated region
        $region13: #{net1_forward.2} parent=11 // pred_check
          %p120 = pneg %p58
        $region14: #{net1_forward.2} parent=11 // pred_check_branch
          %122 = sbr.rel (%p120) target = $region16
        $region15: #{net1_forward.2} parent=11 // pred_region
          %124 = vsyncadd [#allocation4], 0
          %s125 = sshll.u32 %s1, 4
          %s126 = int_to_ptr.hbm [resolvable:$true] %s125
          %131 = dma.hbm_to_smem %s126, 256, [#allocation3], [#allocation4], 128, 128, 8
        $region16: #{net1_forward.2} parent=11 // pred_fallthru
          _
        // Predicated region
        $region17: #{net1_forward.2} parent=11 // pred_check
          %p132 = pneg %p79
        $region18: #{net1_forward.2} parent=11 // pred_check_branch
          %134 = sbr.rel (%p132) target = $region20
        $region19: #{net1_forward.2} parent=11 // pred_region
          %136 = vsyncadd [#allocation6], 0
          %s138 = sshll.u32 %s2, 4
          %s139 = int_to_ptr.hbm [resolvable:$true] %s138
          %141 = dma.hbm_to_smem %s139, 16, [#allocation5], [#allocation6]
        $region20: #{net1_forward.2} parent=11 // pred_fallthru
          _
      $region12: #{net1_forward.2} parent=5 // pred_fallthru
        _
      %p142 = scmp.lt.s32.totalorder %s11, 2
      // Predicated region
      $region21: #{net1_forward.2} parent=5 // pred_check
        %p143 = pneg %p142
      $region22: #{net1_forward.2} parent=5 // pred_check_branch
        %145 = sbr.rel (%p143) target = $region24
      $region23: #{net1_forward.2} parent=5 // pred_region
        // Predicated region
        $region25: #{net1_forward.2} parent=23 // pred_check
          %p146 = pneg %p31
        $region26: #{net1_forward.2} parent=23 // pred_check_branch
          %148 = sbr.rel (%p146) target = $region28
        $region27: #{net1_forward.2} parent=23 // pred_region
          %p149 = scmp.lt.s32.totalorder %s11, 1
          %s150 = scalar_select %p149, %s11, 1
          %s151 = smul.addr %s150, 39
          %s152 = smul.addr %s151, 8
          %s153 = scalar_lea.vmem %s0, %s152
        $region28: #{net1_forward.2} parent=23 // pred_fallthru
          _
      $region24: #{net1_forward.2} parent=5 // pred_fallthru
        _
      %p154 = scmp.le.s32.totalorder 1, %s11
      %p155 = scmp.lt.s32.totalorder %s11, 3
      %p156 = pnand %p154, %p155
      %p157 = pneg %p156
      // Predicated region
      $region29: #{net1_forward.2} parent=5 // pred_check
        _
      $region30: #{net1_forward.2} parent=5 // pred_check_branch
        %159 = sbr.rel (%p156) target = $region32
      $region31: #{net1_forward.2} parent=5 // pred_region
        %s160 = ssub.s32 %s11, 1
        // Predicated region
        $region33: #{net1_forward.2} parent=31 // pred_check
          %p161 = pneg %p58
        $region34: #{net1_forward.2} parent=31 // pred_check_branch
          %163 = sbr.rel (%p161) target = $region36
        $region35: #{net1_forward.2} parent=31 // pred_region
          %165 = dma.done [#allocation4], 256
        $region36: #{net1_forward.2} parent=31 // pred_fallthru
          _
        // Predicated region
        $region37: #{net1_forward.2} parent=31 // pred_check
          %p166 = pneg %p79
        $region38: #{net1_forward.2} parent=31 // pred_check_branch
          %168 = sbr.rel (%p166) target = $region40
        $region39: #{net1_forward.2} parent=31 // pred_region
          %170 = dma.done [#allocation6], 16
        $region40: #{net1_forward.2} parent=31 // pred_fallthru
          _
        %171 = sfence
        %p172 = scmp.lt.s32.totalorder %s16, 1
        %s173 = scalar_select %p172, %s16, 1
        %s174 = smul.addr %s173, 39
        %s175 = smul.addr %s174, 8
        %s176 = scalar_lea.vmem %s0, %s175
        %p177 = pneg %p37
        %p178 = pneg %p34
        %p179 = pneg %p58
        %p180 = pneg %p55
        %p181 = pneg %p79
        %p182 = pneg %p76
        %p183 = pneg %p105
        %p184 = pneg %p102
        %p185 = scmp.lt.s32.totalorder %s16, 1
        %s186 = scalar_select %p185, %s16, 1
        %s187 = smul.addr %s186, 112
        %s188 = smul.addr %s187, 8
        %s189 = scalar_lea.vmem %s3, %s188
        %p190 = scmp.lt.s32.totalorder %s16, 1
        %s191 = scalar_select %p190, %s16, 1
        %s192 = smul.addr %s191, 39
        %s193 = smul.addr %s192, 8
        %s194 = scalar_lea.vmem %s0, %s193
        %p195 = scmp.lt.s32.totalorder %s16, 1
        %s196 = scalar_select %p195, %s16, 1
        %s197 = smul.addr %s196, 112
        %s198 = smul.addr %s197, 8
        %s199 = scalar_lea.vmem %s3, %s198
        %v200 = vld [vmem:[%s194] sm:$0xff]
        %v201 = vld [vmem:[%s194 + $0x8] sm:$0xff]
        %v202 = vld [vmem:[%s194 + $0x10] sm:$0xff]
        %v203 = vld [vmem:[%s194 + $0x18] sm:$0xff]
        %v204 = vld [vmem:[%s194 + $0x20] sm:$0xff]
        %v205 = vld [vmem:[%s194 + $0x28] sm:$0xff]
        %v206 = vld [vmem:[%s194 + $0x30] sm:$0xff]
        %v207 = vld [vmem:[%s194 + $0x38] sm:$0xff]
        %v208 = vld [vmem:[%s194 + $0x40] sm:$0xff]
        %v209 = vld [vmem:[%s194 + $0x48] sm:$0xff]
        %v210 = vld [vmem:[%s194 + $0x50] sm:$0xff]
        %v211 = vld [vmem:[%s194 + $0x58] sm:$0xff]
        %v212 = vld [vmem:[%s194 + $0x60] sm:$0xf]
        %vm213 = vcmask 818176
        %214 = vst.msk [vmem:[#allocation2] sm:$0xff] %vm213, %v200
        %215 = vst.msk [vmem:[#allocation2 + $0x8] sm:$0xff] %vm213, %v201
        %216 = vst.msk [vmem:[#allocation2 + $0x10] sm:$0xff] %vm213, %v202
        %217 = vst.msk [vmem:[#allocation2 + $0x18] sm:$0xff] %vm213, %v203
        %218 = vst.msk [vmem:[#allocation2 + $0x20] sm:$0xff] %vm213, %v204
        %219 = vst.msk [vmem:[#allocation2 + $0x28] sm:$0xff] %vm213, %v205
        %220 = vst.msk [vmem:[#allocation2 + $0x30] sm:$0xff] %vm213, %v206
        %221 = vst.msk [vmem:[#allocation2 + $0x38] sm:$0xff] %vm213, %v207
        %222 = vst.msk [vmem:[#allocation2 + $0x40] sm:$0xff] %vm213, %v208
        %223 = vst.msk [vmem:[#allocation2 + $0x48] sm:$0xff] %vm213, %v209
        %224 = vst.msk [vmem:[#allocation2 + $0x50] sm:$0xff] %vm213, %v210
        %225 = vst.msk [vmem:[#allocation2 + $0x58] sm:$0xff] %vm213, %v211
        %vm226 = vcmask 814080
        %227 = vst.msk [vmem:[#allocation2 + $0x60] sm:$0xf] %vm226, %v212
        %v228 = vld [vmem:[%s194] sm:$0xff]
        %v229 = vld [vmem:[%s194 + $0x8] sm:$0xff]
        %v230 = vld [vmem:[%s194 + $0x10] sm:$0xff]
        %v231 = vld [vmem:[%s194 + $0x18] sm:$0xff]
        %v232 = vld [vmem:[%s194 + $0x20] sm:$0xff]
        %v233 = vld [vmem:[%s194 + $0x28] sm:$0xff]
        %v234 = vld [vmem:[%s194 + $0x30] sm:$0xff]
        %v235 = vld [vmem:[%s194 + $0x38] sm:$0xff]
        %v236 = vld [vmem:[%s194 + $0x40] sm:$0xff]
        %v237 = vld [vmem:[%s194 + $0x48] sm:$0xff]
        %v238 = vld [vmem:[%s194 + $0x50] sm:$0xff]
        %v239 = vld [vmem:[%s194 + $0x58] sm:$0xff]
        %v240 = vld [vmem:[%s194 + $0x60] sm:$0xf]
        %254 = vrot.lane.b32.xlu0 %v228, 127
        %v255 = vpop.permute.xlu0 %254
        %256 = vrot.lane.b32.xlu0 %v229, 127
        %v257 = vpop.permute.xlu0 %256
        %258 = vrot.lane.b32.xlu0 %v230, 127
        %v259 = vpop.permute.xlu0 %258
        %260 = vrot.lane.b32.xlu0 %v231, 127
        %v261 = vpop.permute.xlu0 %260
        %262 = vrot.lane.b32.xlu0 %v232, 127
        %v263 = vpop.permute.xlu0 %262
        %264 = vrot.lane.b32.xlu0 %v233, 127
        %v265 = vpop.permute.xlu0 %264
        %266 = vrot.lane.b32.xlu0 %v234, 127
        %v267 = vpop.permute.xlu0 %266
        %268 = vrot.lane.b32.xlu0 %v235, 127
        %v269 = vpop.permute.xlu0 %268
        %270 = vrot.lane.b32.xlu0 %v236, 127
        %v271 = vpop.permute.xlu0 %270
        %272 = vrot.lane.b32.xlu0 %v237, 127
        %v273 = vpop.permute.xlu0 %272
        %274 = vrot.lane.b32.xlu0 %v238, 127
        %v275 = vpop.permute.xlu0 %274
        %276 = vrot.lane.b32.xlu0 %v239, 127
        %v277 = vpop.permute.xlu0 %276
        %278 = vrot.lane.b32.xlu0 %v240, 127
        %v279 = vpop.permute.xlu0 %278
        %s293 = scalar_lea.vmem [#allocation2], 104
        %294 = vst.msk [vmem:[%s293] sm:$0xff] %vm213, %v255
        %295 = vst.msk [vmem:[%s293 + $0x8] sm:$0xff] %vm213, %v257
        %296 = vst.msk [vmem:[%s293 + $0x10] sm:$0xff] %vm213, %v259
        %297 = vst.msk [vmem:[%s293 + $0x18] sm:$0xff] %vm213, %v261
        %298 = vst.msk [vmem:[%s293 + $0x20] sm:$0xff] %vm213, %v263
        %299 = vst.msk [vmem:[%s293 + $0x28] sm:$0xff] %vm213, %v265
        %300 = vst.msk [vmem:[%s293 + $0x30] sm:$0xff] %vm213, %v267
        %301 = vst.msk [vmem:[%s293 + $0x38] sm:$0xff] %vm213, %v269
        %302 = vst.msk [vmem:[%s293 + $0x40] sm:$0xff] %vm213, %v271
        %303 = vst.msk [vmem:[%s293 + $0x48] sm:$0xff] %vm213, %v273
        %304 = vst.msk [vmem:[%s293 + $0x50] sm:$0xff] %vm213, %v275
        %305 = vst.msk [vmem:[%s293 + $0x58] sm:$0xff] %vm213, %v277
        %306 = vst.msk [vmem:[%s293 + $0x60] sm:$0xf] %vm226, %v279
        %v307 = vld [vmem:[%s194] sm:$0xff]
        %v308 = vld [vmem:[%s194 + $0x8] sm:$0xff]
        %v309 = vld [vmem:[%s194 + $0x10] sm:$0xff]
        %v310 = vld [vmem:[%s194 + $0x18] sm:$0xff]
        %v311 = vld [vmem:[%s194 + $0x20] sm:$0xff]
        %v312 = vld [vmem:[%s194 + $0x28] sm:$0xff]
        %v313 = vld [vmem:[%s194 + $0x30] sm:$0xff]
        %v314 = vld [vmem:[%s194 + $0x38] sm:$0xff]
        %v315 = vld [vmem:[%s194 + $0x40] sm:$0xff]
        %v316 = vld [vmem:[%s194 + $0x48] sm:$0xff]
        %v317 = vld [vmem:[%s194 + $0x50] sm:$0xff]
        %v318 = vld [vmem:[%s194 + $0x58] sm:$0xff]
        %v319 = vld [vmem:[%s194 + $0x60] sm:$0xf]
        %333 = vrot.lane.b32.xlu0 %v307, 126
        %v334 = vpop.permute.xlu0 %333
        %335 = vrot.lane.b32.xlu0 %v308, 126
        %v336 = vpop.permute.xlu0 %335
        %337 = vrot.lane.b32.xlu0 %v309, 126
        %v338 = vpop.permute.xlu0 %337
        %339 = vrot.lane.b32.xlu0 %v310, 126
        %v340 = vpop.permute.xlu0 %339
        %341 = vrot.lane.b32.xlu0 %v311, 126
        %v342 = vpop.permute.xlu0 %341
        %343 = vrot.lane.b32.xlu0 %v312, 126
        %v344 = vpop.permute.xlu0 %343
        %345 = vrot.lane.b32.xlu0 %v313, 126
        %v346 = vpop.permute.xlu0 %345
        %347 = vrot.lane.b32.xlu0 %v314, 126
        %v348 = vpop.permute.xlu0 %347
        %349 = vrot.lane.b32.xlu0 %v315, 126
        %v350 = vpop.permute.xlu0 %349
        %351 = vrot.lane.b32.xlu0 %v316, 126
        %v352 = vpop.permute.xlu0 %351
        %353 = vrot.lane.b32.xlu0 %v317, 126
        %v354 = vpop.permute.xlu0 %353
        %355 = vrot.lane.b32.xlu0 %v318, 126
        %v356 = vpop.permute.xlu0 %355
        %357 = vrot.lane.b32.xlu0 %v319, 126
        %v358 = vpop.permute.xlu0 %357
        %s372 = scalar_lea.vmem [#allocation2], 208
        %373 = vst.msk [vmem:[%s372] sm:$0xff] %vm213, %v334
        %374 = vst.msk [vmem:[%s372 + $0x8] sm:$0xff] %vm213, %v336
        %375 = vst.msk [vmem:[%s372 + $0x10] sm:$0xff] %vm213, %v338
        %376 = vst.msk [vmem:[%s372 + $0x18] sm:$0xff] %vm213, %v340
        %377 = vst.msk [vmem:[%s372 + $0x20] sm:$0xff] %vm213, %v342
        %378 = vst.msk [vmem:[%s372 + $0x28] sm:$0xff] %vm213, %v344
        %379 = vst.msk [vmem:[%s372 + $0x30] sm:$0xff] %vm213, %v346
        %380 = vst.msk [vmem:[%s372 + $0x38] sm:$0xff] %vm213, %v348
        %381 = vst.msk [vmem:[%s372 + $0x40] sm:$0xff] %vm213, %v350
        %382 = vst.msk [vmem:[%s372 + $0x48] sm:$0xff] %vm213, %v352
        %383 = vst.msk [vmem:[%s372 + $0x50] sm:$0xff] %vm213, %v354
        %384 = vst.msk [vmem:[%s372 + $0x58] sm:$0xff] %vm213, %v356
        %385 = vst.msk [vmem:[%s372 + $0x60] sm:$0xf] %vm226, %v358
        %v386 = vld [vmem:[%s194 + $0x1] sm:$0xff]
        %v387 = vld [vmem:[%s194 + $0x9] sm:$0xff]
        %v388 = vld [vmem:[%s194 + $0x11] sm:$0xff]
        %v389 = vld [vmem:[%s194 + $0x19] sm:$0xff]
        %v390 = vld [vmem:[%s194 + $0x21] sm:$0xff]
        %v391 = vld [vmem:[%s194 + $0x29] sm:$0xff]
        %v392 = vld [vmem:[%s194 + $0x31] sm:$0xff]
        %v393 = vld [vmem:[%s194 + $0x39] sm:$0xff]
        %v394 = vld [vmem:[%s194 + $0x41] sm:$0xff]
        %v395 = vld [vmem:[%s194 + $0x49] sm:$0xff]
        %v396 = vld [vmem:[%s194 + $0x51] sm:$0xff]
        %v397 = vld [vmem:[%s194 + $0x59] sm:$0xff]
        %v398 = vld [vmem:[%s194 + $0x61] sm:$0xf]
        %s399 = scalar_lea.vmem [#allocation2], 312
        %400 = vst.msk [vmem:[%s399] sm:$0xff] %vm213, %v386
        %401 = vst.msk [vmem:[%s399 + $0x8] sm:$0xff] %vm213, %v387
        %402 = vst.msk [vmem:[%s399 + $0x10] sm:$0xff] %vm213, %v388
        %403 = vst.msk [vmem:[%s399 + $0x18] sm:$0xff] %vm213, %v389
        %404 = vst.msk [vmem:[%s399 + $0x20] sm:$0xff] %vm213, %v390
        %405 = vst.msk [vmem:[%s399 + $0x28] sm:$0xff] %vm213, %v391
        %406 = vst.msk [vmem:[%s399 + $0x30] sm:$0xff] %vm213, %v392
        %407 = vst.msk [vmem:[%s399 + $0x38] sm:$0xff] %vm213, %v393
        %408 = vst.msk [vmem:[%s399 + $0x40] sm:$0xff] %vm213, %v394
        %409 = vst.msk [vmem:[%s399 + $0x48] sm:$0xff] %vm213, %v395
        %410 = vst.msk [vmem:[%s399 + $0x50] sm:$0xff] %vm213, %v396
        %411 = vst.msk [vmem:[%s399 + $0x58] sm:$0xff] %vm213, %v397
        %412 = vst.msk [vmem:[%s399 + $0x60] sm:$0xf] %vm226, %v398
        %v413 = vld [vmem:[%s194 + $0x1] sm:$0xff]
        %v414 = vld [vmem:[%s194 + $0x9] sm:$0xff]
        %v415 = vld [vmem:[%s194 + $0x11] sm:$0xff]
        %v416 = vld [vmem:[%s194 + $0x19] sm:$0xff]
        %v417 = vld [vmem:[%s194 + $0x21] sm:$0xff]
        %v418 = vld [vmem:[%s194 + $0x29] sm:$0xff]
        %v419 = vld [vmem:[%s194 + $0x31] sm:$0xff]
        %v420 = vld [vmem:[%s194 + $0x39] sm:$0xff]
        %v421 = vld [vmem:[%s194 + $0x41] sm:$0xff]
        %v422 = vld [vmem:[%s194 + $0x49] sm:$0xff]
        %v423 = vld [vmem:[%s194 + $0x51] sm:$0xff]
        %v424 = vld [vmem:[%s194 + $0x59] sm:$0xff]
        %v425 = vld [vmem:[%s194 + $0x61] sm:$0xf]
        %439 = vrot.lane.b32.xlu0 %v413, 127
        %v440 = vpop.permute.xlu0 %439
        %441 = vrot.lane.b32.xlu0 %v414, 127
        %v442 = vpop.permute.xlu0 %441
        %443 = vrot.lane.b32.xlu0 %v415, 127
        %v444 = vpop.permute.xlu0 %443
        %445 = vrot.lane.b32.xlu0 %v416, 127
        %v446 = vpop.permute.xlu0 %445
        %447 = vrot.lane.b32.xlu0 %v417, 127
        %v448 = vpop.permute.xlu0 %447
        %449 = vrot.lane.b32.xlu0 %v418, 127
        %v450 = vpop.permute.xlu0 %449
        %451 = vrot.lane.b32.xlu0 %v419, 127
        %v452 = vpop.permute.xlu0 %451
        %453 = vrot.lane.b32.xlu0 %v420, 127
        %v454 = vpop.permute.xlu0 %453
        %455 = vrot.lane.b32.xlu0 %v421, 127
        %v456 = vpop.permute.xlu0 %455
        %457 = vrot.lane.b32.xlu0 %v422, 127
        %v458 = vpop.permute.xlu0 %457
        %459 = vrot.lane.b32.xlu0 %v423, 127
        %v460 = vpop.permute.xlu0 %459
        %461 = vrot.lane.b32.xlu0 %v424, 127
        %v462 = vpop.permute.xlu0 %461
        %463 = vrot.lane.b32.xlu0 %v425, 127
        %v464 = vpop.permute.xlu0 %463
        %s478 = scalar_lea.vmem [#allocation2], 416
        %479 = vst.msk [vmem:[%s478] sm:$0xff] %vm213, %v440
        %480 = vst.msk [vmem:[%s478 + $0x8] sm:$0xff] %vm213, %v442
        %481 = vst.msk [vmem:[%s478 + $0x10] sm:$0xff] %vm213, %v444
        %482 = vst.msk [vmem:[%s478 + $0x18] sm:$0xff] %vm213, %v446
        %483 = vst.msk [vmem:[%s478 + $0x20] sm:$0xff] %vm213, %v448
        %484 = vst.msk [vmem:[%s478 + $0x28] sm:$0xff] %vm213, %v450
        %485 = vst.msk [vmem:[%s478 + $0x30] sm:$0xff] %vm213, %v452
        %486 = vst.msk [vmem:[%s478 + $0x38] sm:$0xff] %vm213, %v454
        %487 = vst.msk [vmem:[%s478 + $0x40] sm:$0xff] %vm213, %v456
        %488 = vst.msk [vmem:[%s478 + $0x48] sm:$0xff] %vm213, %v458
        %489 = vst.msk [vmem:[%s478 + $0x50] sm:$0xff] %vm213, %v460
        %490 = vst.msk [vmem:[%s478 + $0x58] sm:$0xff] %vm213, %v462
        %491 = vst.msk [vmem:[%s478 + $0x60] sm:$0xf] %vm226, %v464
        %v492 = vld [vmem:[%s194 + $0x1] sm:$0xff]
        %v493 = vld [vmem:[%s194 + $0x9] sm:$0xff]
        %v494 = vld [vmem:[%s194 + $0x11] sm:$0xff]
        %v495 = vld [vmem:[%s194 + $0x19] sm:$0xff]
        %v496 = vld [vmem:[%s194 + $0x21] sm:$0xff]
        %v497 = vld [vmem:[%s194 + $0x29] sm:$0xff]
        %v498 = vld [vmem:[%s194 + $0x31] sm:$0xff]
        %v499 = vld [vmem:[%s194 + $0x39] sm:$0xff]
        %v500 = vld [vmem:[%s194 + $0x41] sm:$0xff]
        %v501 = vld [vmem:[%s194 + $0x49] sm:$0xff]
        %v502 = vld [vmem:[%s194 + $0x51] sm:$0xff]
        %v503 = vld [vmem:[%s194 + $0x59] sm:$0xff]
        %v504 = vld [vmem:[%s194 + $0x61] sm:$0xf]
        %518 = vrot.lane.b32.xlu0 %v492, 126
        %v519 = vpop.permute.xlu0 %518
        %520 = vrot.lane.b32.xlu0 %v493, 126
        %v521 = vpop.permute.xlu0 %520
        %522 = vrot.lane.b32.xlu0 %v494, 126
        %v523 = vpop.permute.xlu0 %522
        %524 = vrot.lane.b32.xlu0 %v495, 126
        %v525 = vpop.permute.xlu0 %524
        %526 = vrot.lane.b32.xlu0 %v496, 126
        %v527 = vpop.permute.xlu0 %526
        %528 = vrot.lane.b32.xlu0 %v497, 126
        %v529 = vpop.permute.xlu0 %528
        %530 = vrot.lane.b32.xlu0 %v498, 126
        %v531 = vpop.permute.xlu0 %530
        %532 = vrot.lane.b32.xlu0 %v499, 126
        %v533 = vpop.permute.xlu0 %532
        %534 = vrot.lane.b32.xlu0 %v500, 126
        %v535 = vpop.permute.xlu0 %534
        %536 = vrot.lane.b32.xlu0 %v501, 126
        %v537 = vpop.permute.xlu0 %536
        %538 = vrot.lane.b32.xlu0 %v502, 126
        %v539 = vpop.permute.xlu0 %538
        %540 = vrot.lane.b32.xlu0 %v503, 126
        %v541 = vpop.permute.xlu0 %540
        %542 = vrot.lane.b32.xlu0 %v504, 126
        %v543 = vpop.permute.xlu0 %542
        %s557 = scalar_lea.vmem [#allocation2], 520
        %558 = vst.msk [vmem:[%s557] sm:$0xff] %vm213, %v519
        %559 = vst.msk [vmem:[%s557 + $0x8] sm:$0xff] %vm213, %v521
        %560 = vst.msk [vmem:[%s557 + $0x10] sm:$0xff] %vm213, %v523
        %561 = vst.msk [vmem:[%s557 + $0x18] sm:$0xff] %vm213, %v525
        %562 = vst.msk [vmem:[%s557 + $0x20] sm:$0xff] %vm213, %v527
        %563 = vst.msk [vmem:[%s557 + $0x28] sm:$0xff] %vm213, %v529
        %564 = vst.msk [vmem:[%s557 + $0x30] sm:$0xff] %vm213, %v531
        %565 = vst.msk [vmem:[%s557 + $0x38] sm:$0xff] %vm213, %v533
        %566 = vst.msk [vmem:[%s557 + $0x40] sm:$0xff] %vm213, %v535
        %567 = vst.msk [vmem:[%s557 + $0x48] sm:$0xff] %vm213, %v537
        %568 = vst.msk [vmem:[%s557 + $0x50] sm:$0xff] %vm213, %v539
        %569 = vst.msk [vmem:[%s557 + $0x58] sm:$0xff] %vm213, %v541
        %570 = vst.msk [vmem:[%s557 + $0x60] sm:$0xf] %vm226, %v543
        %v571 = vld [vmem:[%s194 + $0x2] sm:$0xff]
        %v572 = vld [vmem:[%s194 + $0xa] sm:$0xff]
        %v573 = vld [vmem:[%s194 + $0x12] sm:$0xff]
        %v574 = vld [vmem:[%s194 + $0x1a] sm:$0xff]
        %v575 = vld [vmem:[%s194 + $0x22] sm:$0xff]
        %v576 = vld [vmem:[%s194 + $0x2a] sm:$0xff]
        %v577 = vld [vmem:[%s194 + $0x32] sm:$0xff]
        %v578 = vld [vmem:[%s194 + $0x3a] sm:$0xff]
        %v579 = vld [vmem:[%s194 + $0x42] sm:$0xff]
        %v580 = vld [vmem:[%s194 + $0x4a] sm:$0xff]
        %v581 = vld [vmem:[%s194 + $0x52] sm:$0xff]
        %v582 = vld [vmem:[%s194 + $0x5a] sm:$0xff]
        %v583 = vld [vmem:[%s194 + $0x62] sm:$0xf]
        %s584 = scalar_lea.vmem [#allocation2], 624
        %585 = vst.msk [vmem:[%s584] sm:$0xff] %vm213, %v571
        %586 = vst.msk [vmem:[%s584 + $0x8] sm:$0xff] %vm213, %v572
        %587 = vst.msk [vmem:[%s584 + $0x10] sm:$0xff] %vm213, %v573
        %588 = vst.msk [vmem:[%s584 + $0x18] sm:$0xff] %vm213, %v574
        %589 = vst.msk [vmem:[%s584 + $0x20] sm:$0xff] %vm213, %v575
        %590 = vst.msk [vmem:[%s584 + $0x28] sm:$0xff] %vm213, %v576
        %591 = vst.msk [vmem:[%s584 + $0x30] sm:$0xff] %vm213, %v577
        %592 = vst.msk [vmem:[%s584 + $0x38] sm:$0xff] %vm213, %v578
        %593 = vst.msk [vmem:[%s584 + $0x40] sm:$0xff] %vm213, %v579
        %594 = vst.msk [vmem:[%s584 + $0x48] sm:$0xff] %vm213, %v580
        %595 = vst.msk [vmem:[%s584 + $0x50] sm:$0xff] %vm213, %v581
        %596 = vst.msk [vmem:[%s584 + $0x58] sm:$0xff] %vm213, %v582
        %597 = vst.msk [vmem:[%s584 + $0x60] sm:$0xf] %vm226, %v583
        %v598 = vld [vmem:[%s194 + $0x2] sm:$0xff]
        %v599 = vld [vmem:[%s194 + $0xa] sm:$0xff]
        %v600 = vld [vmem:[%s194 + $0x12] sm:$0xff]
        %v601 = vld [vmem:[%s194 + $0x1a] sm:$0xff]
        %v602 = vld [vmem:[%s194 + $0x22] sm:$0xff]
        %v603 = vld [vmem:[%s194 + $0x2a] sm:$0xff]
        %v604 = vld [vmem:[%s194 + $0x32] sm:$0xff]
        %v605 = vld [vmem:[%s194 + $0x3a] sm:$0xff]
        %v606 = vld [vmem:[%s194 + $0x42] sm:$0xff]
        %v607 = vld [vmem:[%s194 + $0x4a] sm:$0xff]
        %v608 = vld [vmem:[%s194 + $0x52] sm:$0xff]
        %v609 = vld [vmem:[%s194 + $0x5a] sm:$0xff]
        %v610 = vld [vmem:[%s194 + $0x62] sm:$0xf]
        %624 = vrot.lane.b32.xlu0 %v598, 127
        %v625 = vpop.permute.xlu0 %624
        %626 = vrot.lane.b32.xlu0 %v599, 127
        %v627 = vpop.permute.xlu0 %626
        %628 = vrot.lane.b32.xlu0 %v600, 127
        %v629 = vpop.permute.xlu0 %628
        %630 = vrot.lane.b32.xlu0 %v601, 127
        %v631 = vpop.permute.xlu0 %630
        %632 = vrot.lane.b32.xlu0 %v602, 127
        %v633 = vpop.permute.xlu0 %632
        %634 = vrot.lane.b32.xlu0 %v603, 127
        %v635 = vpop.permute.xlu0 %634
        %636 = vrot.lane.b32.xlu0 %v604, 127
        %v637 = vpop.permute.xlu0 %636
        %638 = vrot.lane.b32.xlu0 %v605, 127
        %v639 = vpop.permute.xlu0 %638
        %640 = vrot.lane.b32.xlu0 %v606, 127
        %v641 = vpop.permute.xlu0 %640
        %642 = vrot.lane.b32.xlu0 %v607, 127
        %v643 = vpop.permute.xlu0 %642
        %644 = vrot.lane.b32.xlu0 %v608, 127
        %v645 = vpop.permute.xlu0 %644
        %646 = vrot.lane.b32.xlu0 %v609, 127
        %v647 = vpop.permute.xlu0 %646
        %648 = vrot.lane.b32.xlu0 %v610, 127
        %v649 = vpop.permute.xlu0 %648
        %s663 = scalar_lea.vmem [#allocation2], 728
        %664 = vst.msk [vmem:[%s663] sm:$0xff] %vm213, %v625
        %665 = vst.msk [vmem:[%s663 + $0x8] sm:$0xff] %vm213, %v627
        %666 = vst.msk [vmem:[%s663 + $0x10] sm:$0xff] %vm213, %v629
        %667 = vst.msk [vmem:[%s663 + $0x18] sm:$0xff] %vm213, %v631
        %668 = vst.msk [vmem:[%s663 + $0x20] sm:$0xff] %vm213, %v633
        %669 = vst.msk [vmem:[%s663 + $0x28] sm:$0xff] %vm213, %v635
        %670 = vst.msk [vmem:[%s663 + $0x30] sm:$0xff] %vm213, %v637
        %671 = vst.msk [vmem:[%s663 + $0x38] sm:$0xff] %vm213, %v639
        %672 = vst.msk [vmem:[%s663 + $0x40] sm:$0xff] %vm213, %v641
        %673 = vst.msk [vmem:[%s663 + $0x48] sm:$0xff] %vm213, %v643
        %674 = vst.msk [vmem:[%s663 + $0x50] sm:$0xff] %vm213, %v645
        %675 = vst.msk [vmem:[%s663 + $0x58] sm:$0xff] %vm213, %v647
        %676 = vst.msk [vmem:[%s663 + $0x60] sm:$0xf] %vm226, %v649
        %v677 = vld [vmem:[%s194 + $0x2] sm:$0xff]
        %v678 = vld [vmem:[%s194 + $0xa] sm:$0xff]
        %v679 = vld [vmem:[%s194 + $0x12] sm:$0xff]
        %v680 = vld [vmem:[%s194 + $0x1a] sm:$0xff]
        %v681 = vld [vmem:[%s194 + $0x22] sm:$0xff]
        %v682 = vld [vmem:[%s194 + $0x2a] sm:$0xff]
        %v683 = vld [vmem:[%s194 + $0x32] sm:$0xff]
        %v684 = vld [vmem:[%s194 + $0x3a] sm:$0xff]
        %v685 = vld [vmem:[%s194 + $0x42] sm:$0xff]
        %v686 = vld [vmem:[%s194 + $0x4a] sm:$0xff]
        %v687 = vld [vmem:[%s194 + $0x52] sm:$0xff]
        %v688 = vld [vmem:[%s194 + $0x5a] sm:$0xff]
        %v689 = vld [vmem:[%s194 + $0x62] sm:$0xf]
        %703 = vrot.lane.b32.xlu0 %v677, 126
        %v704 = vpop.permute.xlu0 %703
        %705 = vrot.lane.b32.xlu0 %v678, 126
        %v706 = vpop.permute.xlu0 %705
        %707 = vrot.lane.b32.xlu0 %v679, 126
        %v708 = vpop.permute.xlu0 %707
        %709 = vrot.lane.b32.xlu0 %v680, 126
        %v710 = vpop.permute.xlu0 %709
        %711 = vrot.lane.b32.xlu0 %v681, 126
        %v712 = vpop.permute.xlu0 %711
        %713 = vrot.lane.b32.xlu0 %v682, 126
        %v714 = vpop.permute.xlu0 %713
        %715 = vrot.lane.b32.xlu0 %v683, 126
        %v716 = vpop.permute.xlu0 %715
        %717 = vrot.lane.b32.xlu0 %v684, 126
        %v718 = vpop.permute.xlu0 %717
        %719 = vrot.lane.b32.xlu0 %v685, 126
        %v720 = vpop.permute.xlu0 %719
        %721 = vrot.lane.b32.xlu0 %v686, 126
        %v722 = vpop.permute.xlu0 %721
        %723 = vrot.lane.b32.xlu0 %v687, 126
        %v724 = vpop.permute.xlu0 %723
        %725 = vrot.lane.b32.xlu0 %v688, 126
        %v726 = vpop.permute.xlu0 %725
        %727 = vrot.lane.b32.xlu0 %v689, 126
        %v728 = vpop.permute.xlu0 %727
        %s742 = scalar_lea.vmem [#allocation2], 832
        %743 = vst.msk [vmem:[%s742] sm:$0xff] %vm213, %v704
        %744 = vst.msk [vmem:[%s742 + $0x8] sm:$0xff] %vm213, %v706
        %745 = vst.msk [vmem:[%s742 + $0x10] sm:$0xff] %vm213, %v708
        %746 = vst.msk [vmem:[%s742 + $0x18] sm:$0xff] %vm213, %v710
        %747 = vst.msk [vmem:[%s742 + $0x20] sm:$0xff] %vm213, %v712
        %748 = vst.msk [vmem:[%s742 + $0x28] sm:$0xff] %vm213, %v714
        %749 = vst.msk [vmem:[%s742 + $0x30] sm:$0xff] %vm213, %v716
        %750 = vst.msk [vmem:[%s742 + $0x38] sm:$0xff] %vm213, %v718
        %751 = vst.msk [vmem:[%s742 + $0x40] sm:$0xff] %vm213, %v720
        %752 = vst.msk [vmem:[%s742 + $0x48] sm:$0xff] %vm213, %v722
        %753 = vst.msk [vmem:[%s742 + $0x50] sm:$0xff] %vm213, %v724
        %754 = vst.msk [vmem:[%s742 + $0x58] sm:$0xff] %vm213, %v726
        %755 = vst.msk [vmem:[%s742 + $0x60] sm:$0xf] %vm226, %v728
        %s756 = scalar_lea.vmem %s194, 104
        %v757 = vld [vmem:[%s756] sm:$0xff]
        %v758 = vld [vmem:[%s756 + $0x8] sm:$0xff]
        %v759 = vld [vmem:[%s756 + $0x10] sm:$0xff]
        %v760 = vld [vmem:[%s756 + $0x18] sm:$0xff]
        %v761 = vld [vmem:[%s756 + $0x20] sm:$0xff]
        %v762 = vld [vmem:[%s756 + $0x28] sm:$0xff]
        %v763 = vld [vmem:[%s756 + $0x30] sm:$0xff]
        %v764 = vld [vmem:[%s756 + $0x38] sm:$0xff]
        %v765 = vld [vmem:[%s756 + $0x40] sm:$0xff]
        %v766 = vld [vmem:[%s756 + $0x48] sm:$0xff]
        %v767 = vld [vmem:[%s756 + $0x50] sm:$0xff]
        %v768 = vld [vmem:[%s756 + $0x58] sm:$0xff]
        %v769 = vld [vmem:[%s756 + $0x60] sm:$0xf]
        %s770 = scalar_lea.vmem [#allocation2], 936
        %771 = vst.msk [vmem:[%s770] sm:$0xff] %vm213, %v757
        %772 = vst.msk [vmem:[%s770 + $0x8] sm:$0xff] %vm213, %v758
        %773 = vst.msk [vmem:[%s770 + $0x10] sm:$0xff] %vm213, %v759
        %774 = vst.msk [vmem:[%s770 + $0x18] sm:$0xff] %vm213, %v760
        %775 = vst.msk [vmem:[%s770 + $0x20] sm:$0xff] %vm213, %v761
        %776 = vst.msk [vmem:[%s770 + $0x28] sm:$0xff] %vm213, %v762
        %777 = vst.msk [vmem:[%s770 + $0x30] sm:$0xff] %vm213, %v763
        %778 = vst.msk [vmem:[%s770 + $0x38] sm:$0xff] %vm213, %v764
        %779 = vst.msk [vmem:[%s770 + $0x40] sm:$0xff] %vm213, %v765
        %780 = vst.msk [vmem:[%s770 + $0x48] sm:$0xff] %vm213, %v766
        %781 = vst.msk [vmem:[%s770 + $0x50] sm:$0xff] %vm213, %v767
        %782 = vst.msk [vmem:[%s770 + $0x58] sm:$0xff] %vm213, %v768
        %783 = vst.msk [vmem:[%s770 + $0x60] sm:$0xf] %vm226, %v769
        %v784 = vld [vmem:[%s756] sm:$0xff]
        %v785 = vld [vmem:[%s756 + $0x8] sm:$0xff]
        %v786 = vld [vmem:[%s756 + $0x10] sm:$0xff]
        %v787 = vld [vmem:[%s756 + $0x18] sm:$0xff]
        %v788 = vld [vmem:[%s756 + $0x20] sm:$0xff]
        %v789 = vld [vmem:[%s756 + $0x28] sm:$0xff]
        %v790 = vld [vmem:[%s756 + $0x30] sm:$0xff]
        %v791 = vld [vmem:[%s756 + $0x38] sm:$0xff]
        %v792 = vld [vmem:[%s756 + $0x40] sm:$0xff]
        %v793 = vld [vmem:[%s756 + $0x48] sm:$0xff]
        %v794 = vld [vmem:[%s756 + $0x50] sm:$0xff]
        %v795 = vld [vmem:[%s756 + $0x58] sm:$0xff]
        %v796 = vld [vmem:[%s756 + $0x60] sm:$0xf]
        %810 = vrot.lane.b32.xlu0 %v784, 127
        %v811 = vpop.permute.xlu0 %810
        %812 = vrot.lane.b32.xlu0 %v785, 127
        %v813 = vpop.permute.xlu0 %812
        %814 = vrot.lane.b32.xlu0 %v786, 127
        %v815 = vpop.permute.xlu0 %814
        %816 = vrot.lane.b32.xlu0 %v787, 127
        %v817 = vpop.permute.xlu0 %816
        %818 = vrot.lane.b32.xlu0 %v788, 127
        %v819 = vpop.permute.xlu0 %818
        %820 = vrot.lane.b32.xlu0 %v789, 127
        %v821 = vpop.permute.xlu0 %820
        %822 = vrot.lane.b32.xlu0 %v790, 127
        %v823 = vpop.permute.xlu0 %822
        %824 = vrot.lane.b32.xlu0 %v791, 127
        %v825 = vpop.permute.xlu0 %824
        %826 = vrot.lane.b32.xlu0 %v792, 127
        %v827 = vpop.permute.xlu0 %826
        %828 = vrot.lane.b32.xlu0 %v793, 127
        %v829 = vpop.permute.xlu0 %828
        %830 = vrot.lane.b32.xlu0 %v794, 127
        %v831 = vpop.permute.xlu0 %830
        %832 = vrot.lane.b32.xlu0 %v795, 127
        %v833 = vpop.permute.xlu0 %832
        %834 = vrot.lane.b32.xlu0 %v796, 127
        %v835 = vpop.permute.xlu0 %834
        %s849 = scalar_lea.vmem [#allocation2], 1040
        %850 = vst.msk [vmem:[%s849] sm:$0xff] %vm213, %v811
        %851 = vst.msk [vmem:[%s849 + $0x8] sm:$0xff] %vm213, %v813
        %852 = vst.msk [vmem:[%s849 + $0x10] sm:$0xff] %vm213, %v815
        %853 = vst.msk [vmem:[%s849 + $0x18] sm:$0xff] %vm213, %v817
        %854 = vst.msk [vmem:[%s849 + $0x20] sm:$0xff] %vm213, %v819
        %855 = vst.msk [vmem:[%s849 + $0x28] sm:$0xff] %vm213, %v821
        %856 = vst.msk [vmem:[%s849 + $0x30] sm:$0xff] %vm213, %v823
        %857 = vst.msk [vmem:[%s849 + $0x38] sm:$0xff] %vm213, %v825
        %858 = vst.msk [vmem:[%s849 + $0x40] sm:$0xff] %vm213, %v827
        %859 = vst.msk [vmem:[%s849 + $0x48] sm:$0xff] %vm213, %v829
        %860 = vst.msk [vmem:[%s849 + $0x50] sm:$0xff] %vm213, %v831
        %861 = vst.msk [vmem:[%s849 + $0x58] sm:$0xff] %vm213, %v833
        %862 = vst.msk [vmem:[%s849 + $0x60] sm:$0xf] %vm226, %v835
        %v863 = vld [vmem:[%s756] sm:$0xff]
        %v864 = vld [vmem:[%s756 + $0x8] sm:$0xff]
        %v865 = vld [vmem:[%s756 + $0x10] sm:$0xff]
        %v866 = vld [vmem:[%s756 + $0x18] sm:$0xff]
        %v867 = vld [vmem:[%s756 + $0x20] sm:$0xff]
        %v868 = vld [vmem:[%s756 + $0x28] sm:$0xff]
        %v869 = vld [vmem:[%s756 + $0x30] sm:$0xff]
        %v870 = vld [vmem:[%s756 + $0x38] sm:$0xff]
        %v871 = vld [vmem:[%s756 + $0x40] sm:$0xff]
        %v872 = vld [vmem:[%s756 + $0x48] sm:$0xff]
        %v873 = vld [vmem:[%s756 + $0x50] sm:$0xff]
        %v874 = vld [vmem:[%s756 + $0x58] sm:$0xff]
        %v875 = vld [vmem:[%s756 + $0x60] sm:$0xf]
        %889 = vrot.lane.b32.xlu0 %v863, 126
        %v890 = vpop.permute.xlu0 %889
        %891 = vrot.lane.b32.xlu0 %v864, 126
        %v892 = vpop.permute.xlu0 %891
        %893 = vrot.lane.b32.xlu0 %v865, 126
        %v894 = vpop.permute.xlu0 %893
        %895 = vrot.lane.b32.xlu0 %v866, 126
        %v896 = vpop.permute.xlu0 %895
        %897 = vrot.lane.b32.xlu0 %v867, 126
        %v898 = vpop.permute.xlu0 %897
        %899 = vrot.lane.b32.xlu0 %v868, 126
        %v900 = vpop.permute.xlu0 %899
        %901 = vrot.lane.b32.xlu0 %v869, 126
        %v902 = vpop.permute.xlu0 %901
        %903 = vrot.lane.b32.xlu0 %v870, 126
        %v904 = vpop.permute.xlu0 %903
        %905 = vrot.lane.b32.xlu0 %v871, 126
        %v906 = vpop.permute.xlu0 %905
        %907 = vrot.lane.b32.xlu0 %v872, 126
        %v908 = vpop.permute.xlu0 %907
        %909 = vrot.lane.b32.xlu0 %v873, 126
        %v910 = vpop.permute.xlu0 %909
        %911 = vrot.lane.b32.xlu0 %v874, 126
        %v912 = vpop.permute.xlu0 %911
        %913 = vrot.lane.b32.xlu0 %v875, 126
        %v914 = vpop.permute.xlu0 %913
        %s928 = scalar_lea.vmem [#allocation2], 1144
        %929 = vst.msk [vmem:[%s928] sm:$0xff] %vm213, %v890
        %930 = vst.msk [vmem:[%s928 + $0x8] sm:$0xff] %vm213, %v892
        %931 = vst.msk [vmem:[%s928 + $0x10] sm:$0xff] %vm213, %v894
        %932 = vst.msk [vmem:[%s928 + $0x18] sm:$0xff] %vm213, %v896
        %933 = vst.msk [vmem:[%s928 + $0x20] sm:$0xff] %vm213, %v898
        %934 = vst.msk [vmem:[%s928 + $0x28] sm:$0xff] %vm213, %v900
        %935 = vst.msk [vmem:[%s928 + $0x30] sm:$0xff] %vm213, %v902
        %936 = vst.msk [vmem:[%s928 + $0x38] sm:$0xff] %vm213, %v904
        %937 = vst.msk [vmem:[%s928 + $0x40] sm:$0xff] %vm213, %v906
        %938 = vst.msk [vmem:[%s928 + $0x48] sm:$0xff] %vm213, %v908
        %939 = vst.msk [vmem:[%s928 + $0x50] sm:$0xff] %vm213, %v910
        %940 = vst.msk [vmem:[%s928 + $0x58] sm:$0xff] %vm213, %v912
        %941 = vst.msk [vmem:[%s928 + $0x60] sm:$0xf] %vm226, %v914
        %v942 = vld [vmem:[%s756 + $0x1] sm:$0xff]
        %v943 = vld [vmem:[%s756 + $0x9] sm:$0xff]
        %v944 = vld [vmem:[%s756 + $0x11] sm:$0xff]
        %v945 = vld [vmem:[%s756 + $0x19] sm:$0xff]
        %v946 = vld [vmem:[%s756 + $0x21] sm:$0xff]
        %v947 = vld [vmem:[%s756 + $0x29] sm:$0xff]
        %v948 = vld [vmem:[%s756 + $0x31] sm:$0xff]
        %v949 = vld [vmem:[%s756 + $0x39] sm:$0xff]
        %v950 = vld [vmem:[%s756 + $0x41] sm:$0xff]
        %v951 = vld [vmem:[%s756 + $0x49] sm:$0xff]
        %v952 = vld [vmem:[%s756 + $0x51] sm:$0xff]
        %v953 = vld [vmem:[%s756 + $0x59] sm:$0xff]
        %v954 = vld [vmem:[%s756 + $0x61] sm:$0xf]
        %s955 = scalar_lea.vmem [#allocation2], 1248
        %956 = vst.msk [vmem:[%s955] sm:$0xff] %vm213, %v942
        %957 = vst.msk [vmem:[%s955 + $0x8] sm:$0xff] %vm213, %v943
        %958 = vst.msk [vmem:[%s955 + $0x10] sm:$0xff] %vm213, %v944
        %959 = vst.msk [vmem:[%s955 + $0x18] sm:$0xff] %vm213, %v945
        %960 = vst.msk [vmem:[%s955 + $0x20] sm:$0xff] %vm213, %v946
        %961 = vst.msk [vmem:[%s955 + $0x28] sm:$0xff] %vm213, %v947
        %962 = vst.msk [vmem:[%s955 + $0x30] sm:$0xff] %vm213, %v948
        %963 = vst.msk [vmem:[%s955 + $0x38] sm:$0xff] %vm213, %v949
        %964 = vst.msk [vmem:[%s955 + $0x40] sm:$0xff] %vm213, %v950
        %965 = vst.msk [vmem:[%s955 + $0x48] sm:$0xff] %vm213, %v951
        %966 = vst.msk [vmem:[%s955 + $0x50] sm:$0xff] %vm213, %v952
        %967 = vst.msk [vmem:[%s955 + $0x58] sm:$0xff] %vm213, %v953
        %968 = vst.msk [vmem:[%s955 + $0x60] sm:$0xf] %vm226, %v954
        %v969 = vld [vmem:[%s756 + $0x1] sm:$0xff]
        %v970 = vld [vmem:[%s756 + $0x9] sm:$0xff]
        %v971 = vld [vmem:[%s756 + $0x11] sm:$0xff]
        %v972 = vld [vmem:[%s756 + $0x19] sm:$0xff]
        %v973 = vld [vmem:[%s756 + $0x21] sm:$0xff]
        %v974 = vld [vmem:[%s756 + $0x29] sm:$0xff]
        %v975 = vld [vmem:[%s756 + $0x31] sm:$0xff]
        %v976 = vld [vmem:[%s756 + $0x39] sm:$0xff]
        %v977 = vld [vmem:[%s756 + $0x41] sm:$0xff]
        %v978 = vld [vmem:[%s756 + $0x49] sm:$0xff]
        %v979 = vld [vmem:[%s756 + $0x51] sm:$0xff]
        %v980 = vld [vmem:[%s756 + $0x59] sm:$0xff]
        %v981 = vld [vmem:[%s756 + $0x61] sm:$0xf]
        %995 = vrot.lane.b32.xlu0 %v969, 127
        %v996 = vpop.permute.xlu0 %995
        %997 = vrot.lane.b32.xlu0 %v970, 127
        %v998 = vpop.permute.xlu0 %997
        %999 = vrot.lane.b32.xlu0 %v971, 127
        %v1000 = vpop.permute.xlu0 %999
        %1001 = vrot.lane.b32.xlu0 %v972, 127
        %v1002 = vpop.permute.xlu0 %1001
        %1003 = vrot.lane.b32.xlu0 %v973, 127
        %v1004 = vpop.permute.xlu0 %1003
        %1005 = vrot.lane.b32.xlu0 %v974, 127
        %v1006 = vpop.permute.xlu0 %1005
        %1007 = vrot.lane.b32.xlu0 %v975, 127
        %v1008 = vpop.permute.xlu0 %1007
        %1009 = vrot.lane.b32.xlu0 %v976, 127
        %v1010 = vpop.permute.xlu0 %1009
        %1011 = vrot.lane.b32.xlu0 %v977, 127
        %v1012 = vpop.permute.xlu0 %1011
        %1013 = vrot.lane.b32.xlu0 %v978, 127
        %v1014 = vpop.permute.xlu0 %1013
        %1015 = vrot.lane.b32.xlu0 %v979, 127
        %v1016 = vpop.permute.xlu0 %1015
        %1017 = vrot.lane.b32.xlu0 %v980, 127
        %v1018 = vpop.permute.xlu0 %1017
        %1019 = vrot.lane.b32.xlu0 %v981, 127
        %v1020 = vpop.permute.xlu0 %1019
        %s1034 = scalar_lea.vmem [#allocation2], 1352
        %1035 = vst.msk [vmem:[%s1034] sm:$0xff] %vm213, %v996
        %1036 = vst.msk [vmem:[%s1034 + $0x8] sm:$0xff] %vm213, %v998
        %1037 = vst.msk [vmem:[%s1034 + $0x10] sm:$0xff] %vm213, %v1000
        %1038 = vst.msk [vmem:[%s1034 + $0x18] sm:$0xff] %vm213, %v1002
        %1039 = vst.msk [vmem:[%s1034 + $0x20] sm:$0xff] %vm213, %v1004
        %1040 = vst.msk [vmem:[%s1034 + $0x28] sm:$0xff] %vm213, %v1006
        %1041 = vst.msk [vmem:[%s1034 + $0x30] sm:$0xff] %vm213, %v1008
        %1042 = vst.msk [vmem:[%s1034 + $0x38] sm:$0xff] %vm213, %v1010
        %1043 = vst.msk [vmem:[%s1034 + $0x40] sm:$0xff] %vm213, %v1012
        %1044 = vst.msk [vmem:[%s1034 + $0x48] sm:$0xff] %vm213, %v1014
        %1045 = vst.msk [vmem:[%s1034 + $0x50] sm:$0xff] %vm213, %v1016
        %1046 = vst.msk [vmem:[%s1034 + $0x58] sm:$0xff] %vm213, %v1018
        %1047 = vst.msk [vmem:[%s1034 + $0x60] sm:$0xf] %vm226, %v1020
        %v1048 = vld [vmem:[%s756 + $0x1] sm:$0xff]
        %v1049 = vld [vmem:[%s756 + $0x9] sm:$0xff]
        %v1050 = vld [vmem:[%s756 + $0x11] sm:$0xff]
        %v1051 = vld [vmem:[%s756 + $0x19] sm:$0xff]
        %v1052 = vld [vmem:[%s756 + $0x21] sm:$0xff]
        %v1053 = vld [vmem:[%s756 + $0x29] sm:$0xff]
        %v1054 = vld [vmem:[%s756 + $0x31] sm:$0xff]
        %v1055 = vld [vmem:[%s756 + $0x39] sm:$0xff]
        %v1056 = vld [vmem:[%s756 + $0x41] sm:$0xff]
        %v1057 = vld [vmem:[%s756 + $0x49] sm:$0xff]
        %v1058 = vld [vmem:[%s756 + $0x51] sm:$0xff]
        %v1059 = vld [vmem:[%s756 + $0x59] sm:$0xff]
        %v1060 = vld [vmem:[%s756 + $0x61] sm:$0xf]
        %1074 = vrot.lane.b32.xlu0 %v1048, 126
        %v1075 = vpop.permute.xlu0 %1074
        %1076 = vrot.lane.b32.xlu0 %v1049, 126
        %v1077 = vpop.permute.xlu0 %1076
        %1078 = vrot.lane.b32.xlu0 %v1050, 126
        %v1079 = vpop.permute.xlu0 %1078
        %1080 = vrot.lane.b32.xlu0 %v1051, 126
        %v1081 = vpop.permute.xlu0 %1080
        %1082 = vrot.lane.b32.xlu0 %v1052, 126
        %v1083 = vpop.permute.xlu0 %1082
        %1084 = vrot.lane.b32.xlu0 %v1053, 126
        %v1085 = vpop.permute.xlu0 %1084
        %1086 = vrot.lane.b32.xlu0 %v1054, 126
        %v1087 = vpop.permute.xlu0 %1086
        %1088 = vrot.lane.b32.xlu0 %v1055, 126
        %v1089 = vpop.permute.xlu0 %1088
        %1090 = vrot.lane.b32.xlu0 %v1056, 126
        %v1091 = vpop.permute.xlu0 %1090
        %1092 = vrot.lane.b32.xlu0 %v1057, 126
        %v1093 = vpop.permute.xlu0 %1092
        %1094 = vrot.lane.b32.xlu0 %v1058, 126
        %v1095 = vpop.permute.xlu0 %1094
        %1096 = vrot.lane.b32.xlu0 %v1059, 126
        %v1097 = vpop.permute.xlu0 %1096
        %1098 = vrot.lane.b32.xlu0 %v1060, 126
        %v1099 = vpop.permute.xlu0 %1098
        %s1113 = scalar_lea.vmem [#allocation2], 1456
        %1114 = vst.msk [vmem:[%s1113] sm:$0xff] %vm213, %v1075
        %1115 = vst.msk [vmem:[%s1113 + $0x8] sm:$0xff] %vm213, %v1077
        %1116 = vst.msk [vmem:[%s1113 + $0x10] sm:$0xff] %vm213, %v1079
        %1117 = vst.msk [vmem:[%s1113 + $0x18] sm:$0xff] %vm213, %v1081
        %1118 = vst.msk [vmem:[%s1113 + $0x20] sm:$0xff] %vm213, %v1083
        %1119 = vst.msk [vmem:[%s1113 + $0x28] sm:$0xff] %vm213, %v1085
        %1120 = vst.msk [vmem:[%s1113 + $0x30] sm:$0xff] %vm213, %v1087
        %1121 = vst.msk [vmem:[%s1113 + $0x38] sm:$0xff] %vm213, %v1089
        %1122 = vst.msk [vmem:[%s1113 + $0x40] sm:$0xff] %vm213, %v1091
        %1123 = vst.msk [vmem:[%s1113 + $0x48] sm:$0xff] %vm213, %v1093
        %1124 = vst.msk [vmem:[%s1113 + $0x50] sm:$0xff] %vm213, %v1095
        %1125 = vst.msk [vmem:[%s1113 + $0x58] sm:$0xff] %vm213, %v1097
        %1126 = vst.msk [vmem:[%s1113 + $0x60] sm:$0xf] %vm226, %v1099
        %v1127 = vld [vmem:[%s756 + $0x2] sm:$0xff]
        %v1128 = vld [vmem:[%s756 + $0xa] sm:$0xff]
        %v1129 = vld [vmem:[%s756 + $0x12] sm:$0xff]
        %v1130 = vld [vmem:[%s756 + $0x1a] sm:$0xff]
        %v1131 = vld [vmem:[%s756 + $0x22] sm:$0xff]
        %v1132 = vld [vmem:[%s756 + $0x2a] sm:$0xff]
        %v1133 = vld [vmem:[%s756 + $0x32] sm:$0xff]
        %v1134 = vld [vmem:[%s756 + $0x3a] sm:$0xff]
        %v1135 = vld [vmem:[%s756 + $0x42] sm:$0xff]
        %v1136 = vld [vmem:[%s756 + $0x4a] sm:$0xff]
        %v1137 = vld [vmem:[%s756 + $0x52] sm:$0xff]
        %v1138 = vld [vmem:[%s756 + $0x5a] sm:$0xff]
        %v1139 = vld [vmem:[%s756 + $0x62] sm:$0xf]
        %s1140 = scalar_lea.vmem [#allocation2], 1560
        %1141 = vst.msk [vmem:[%s1140] sm:$0xff] %vm213, %v1127
        %1142 = vst.msk [vmem:[%s1140 + $0x8] sm:$0xff] %vm213, %v1128
        %1143 = vst.msk [vmem:[%s1140 + $0x10] sm:$0xff] %vm213, %v1129
        %1144 = vst.msk [vmem:[%s1140 + $0x18] sm:$0xff] %vm213, %v1130
        %1145 = vst.msk [vmem:[%s1140 + $0x20] sm:$0xff] %vm213, %v1131
        %1146 = vst.msk [vmem:[%s1140 + $0x28] sm:$0xff] %vm213, %v1132
        %1147 = vst.msk [vmem:[%s1140 + $0x30] sm:$0xff] %vm213, %v1133
        %1148 = vst.msk [vmem:[%s1140 + $0x38] sm:$0xff] %vm213, %v1134
        %1149 = vst.msk [vmem:[%s1140 + $0x40] sm:$0xff] %vm213, %v1135
        %1150 = vst.msk [vmem:[%s1140 + $0x48] sm:$0xff] %vm213, %v1136
        %1151 = vst.msk [vmem:[%s1140 + $0x50] sm:$0xff] %vm213, %v1137
        %1152 = vst.msk [vmem:[%s1140 + $0x58] sm:$0xff] %vm213, %v1138
        %1153 = vst.msk [vmem:[%s1140 + $0x60] sm:$0xf] %vm226, %v1139
        %v1154 = vld [vmem:[%s756 + $0x2] sm:$0xff]
        %v1155 = vld [vmem:[%s756 + $0xa] sm:$0xff]
        %v1156 = vld [vmem:[%s756 + $0x12] sm:$0xff]
        %v1157 = vld [vmem:[%s756 + $0x1a] sm:$0xff]
        %v1158 = vld [vmem:[%s756 + $0x22] sm:$0xff]
        %v1159 = vld [vmem:[%s756 + $0x2a] sm:$0xff]
        %v1160 = vld [vmem:[%s756 + $0x32] sm:$0xff]
        %v1161 = vld [vmem:[%s756 + $0x3a] sm:$0xff]
        %v1162 = vld [vmem:[%s756 + $0x42] sm:$0xff]
        %v1163 = vld [vmem:[%s756 + $0x4a] sm:$0xff]
        %v1164 = vld [vmem:[%s756 + $0x52] sm:$0xff]
        %v1165 = vld [vmem:[%s756 + $0x5a] sm:$0xff]
        %v1166 = vld [vmem:[%s756 + $0x62] sm:$0xf]
        %1180 = vrot.lane.b32.xlu0 %v1154, 127
        %v1181 = vpop.permute.xlu0 %1180
        %1182 = vrot.lane.b32.xlu0 %v1155, 127
        %v1183 = vpop.permute.xlu0 %1182
        %1184 = vrot.lane.b32.xlu0 %v1156, 127
        %v1185 = vpop.permute.xlu0 %1184
        %1186 = vrot.lane.b32.xlu0 %v1157, 127
        %v1187 = vpop.permute.xlu0 %1186
        %1188 = vrot.lane.b32.xlu0 %v1158, 127
        %v1189 = vpop.permute.xlu0 %1188
        %1190 = vrot.lane.b32.xlu0 %v1159, 127
        %v1191 = vpop.permute.xlu0 %1190
        %1192 = vrot.lane.b32.xlu0 %v1160, 127
        %v1193 = vpop.permute.xlu0 %1192
        %1194 = vrot.lane.b32.xlu0 %v1161, 127
        %v1195 = vpop.permute.xlu0 %1194
        %1196 = vrot.lane.b32.xlu0 %v1162, 127
        %v1197 = vpop.permute.xlu0 %1196
        %1198 = vrot.lane.b32.xlu0 %v1163, 127
        %v1199 = vpop.permute.xlu0 %1198
        %1200 = vrot.lane.b32.xlu0 %v1164, 127
        %v1201 = vpop.permute.xlu0 %1200
        %1202 = vrot.lane.b32.xlu0 %v1165, 127
        %v1203 = vpop.permute.xlu0 %1202
        %1204 = vrot.lane.b32.xlu0 %v1166, 127
        %v1205 = vpop.permute.xlu0 %1204
        %s1219 = scalar_lea.vmem [#allocation2], 1664
        %1220 = vst.msk [vmem:[%s1219] sm:$0xff] %vm213, %v1181
        %1221 = vst.msk [vmem:[%s1219 + $0x8] sm:$0xff] %vm213, %v1183
        %1222 = vst.msk [vmem:[%s1219 + $0x10] sm:$0xff] %vm213, %v1185
        %1223 = vst.msk [vmem:[%s1219 + $0x18] sm:$0xff] %vm213, %v1187
        %1224 = vst.msk [vmem:[%s1219 + $0x20] sm:$0xff] %vm213, %v1189
        %1225 = vst.msk [vmem:[%s1219 + $0x28] sm:$0xff] %vm213, %v1191
        %1226 = vst.msk [vmem:[%s1219 + $0x30] sm:$0xff] %vm213, %v1193
        %1227 = vst.msk [vmem:[%s1219 + $0x38] sm:$0xff] %vm213, %v1195
        %1228 = vst.msk [vmem:[%s1219 + $0x40] sm:$0xff] %vm213, %v1197
        %1229 = vst.msk [vmem:[%s1219 + $0x48] sm:$0xff] %vm213, %v1199
        %1230 = vst.msk [vmem:[%s1219 + $0x50] sm:$0xff] %vm213, %v1201
        %1231 = vst.msk [vmem:[%s1219 + $0x58] sm:$0xff] %vm213, %v1203
        %1232 = vst.msk [vmem:[%s1219 + $0x60] sm:$0xf] %vm226, %v1205
        %v1233 = vld [vmem:[%s756 + $0x2] sm:$0xff]
        %v1234 = vld [vmem:[%s756 + $0xa] sm:$0xff]
        %v1235 = vld [vmem:[%s756 + $0x12] sm:$0xff]
        %v1236 = vld [vmem:[%s756 + $0x1a] sm:$0xff]
        %v1237 = vld [vmem:[%s756 + $0x22] sm:$0xff]
        %v1238 = vld [vmem:[%s756 + $0x2a] sm:$0xff]
        %v1239 = vld [vmem:[%s756 + $0x32] sm:$0xff]
        %v1240 = vld [vmem:[%s756 + $0x3a] sm:$0xff]
        %v1241 = vld [vmem:[%s756 + $0x42] sm:$0xff]
        %v1242 = vld [vmem:[%s756 + $0x4a] sm:$0xff]
        %v1243 = vld [vmem:[%s756 + $0x52] sm:$0xff]
        %v1244 = vld [vmem:[%s756 + $0x5a] sm:$0xff]
        %v1245 = vld [vmem:[%s756 + $0x62] sm:$0xf]
        %1259 = vrot.lane.b32.xlu0 %v1233, 126
        %v1260 = vpop.permute.xlu0 %1259
        %1261 = vrot.lane.b32.xlu0 %v1234, 126
        %v1262 = vpop.permute.xlu0 %1261
        %1263 = vrot.lane.b32.xlu0 %v1235, 126
        %v1264 = vpop.permute.xlu0 %1263
        %1265 = vrot.lane.b32.xlu0 %v1236, 126
        %v1266 = vpop.permute.xlu0 %1265
        %1267 = vrot.lane.b32.xlu0 %v1237, 126
        %v1268 = vpop.permute.xlu0 %1267
        %1269 = vrot.lane.b32.xlu0 %v1238, 126
        %v1270 = vpop.permute.xlu0 %1269
        %1271 = vrot.lane.b32.xlu0 %v1239, 126
        %v1272 = vpop.permute.xlu0 %1271
        %1273 = vrot.lane.b32.xlu0 %v1240, 126
        %v1274 = vpop.permute.xlu0 %1273
        %1275 = vrot.lane.b32.xlu0 %v1241, 126
        %v1276 = vpop.permute.xlu0 %1275
        %1277 = vrot.lane.b32.xlu0 %v1242, 126
        %v1278 = vpop.permute.xlu0 %1277
        %1279 = vrot.lane.b32.xlu0 %v1243, 126
        %v1280 = vpop.permute.xlu0 %1279
        %1281 = vrot.lane.b32.xlu0 %v1244, 126
        %v1282 = vpop.permute.xlu0 %1281
        %1283 = vrot.lane.b32.xlu0 %v1245, 126
        %v1284 = vpop.permute.xlu0 %1283
        %s1298 = scalar_lea.vmem [#allocation2], 1768
        %1299 = vst.msk [vmem:[%s1298] sm:$0xff] %vm213, %v1260
        %1300 = vst.msk [vmem:[%s1298 + $0x8] sm:$0xff] %vm213, %v1262
        %1301 = vst.msk [vmem:[%s1298 + $0x10] sm:$0xff] %vm213, %v1264
        %1302 = vst.msk [vmem:[%s1298 + $0x18] sm:$0xff] %vm213, %v1266
        %1303 = vst.msk [vmem:[%s1298 + $0x20] sm:$0xff] %vm213, %v1268
        %1304 = vst.msk [vmem:[%s1298 + $0x28] sm:$0xff] %vm213, %v1270
        %1305 = vst.msk [vmem:[%s1298 + $0x30] sm:$0xff] %vm213, %v1272
        %1306 = vst.msk [vmem:[%s1298 + $0x38] sm:$0xff] %vm213, %v1274
        %1307 = vst.msk [vmem:[%s1298 + $0x40] sm:$0xff] %vm213, %v1276
        %1308 = vst.msk [vmem:[%s1298 + $0x48] sm:$0xff] %vm213, %v1278
        %1309 = vst.msk [vmem:[%s1298 + $0x50] sm:$0xff] %vm213, %v1280
        %1310 = vst.msk [vmem:[%s1298 + $0x58] sm:$0xff] %vm213, %v1282
        %1311 = vst.msk [vmem:[%s1298 + $0x60] sm:$0xf] %vm226, %v1284
        %s1312 = scalar_lea.vmem %s194, 208
        %v1313 = vld [vmem:[%s1312] sm:$0xff]
        %v1314 = vld [vmem:[%s1312 + $0x8] sm:$0xff]
        %v1315 = vld [vmem:[%s1312 + $0x10] sm:$0xff]
        %v1316 = vld [vmem:[%s1312 + $0x18] sm:$0xff]
        %v1317 = vld [vmem:[%s1312 + $0x20] sm:$0xff]
        %v1318 = vld [vmem:[%s1312 + $0x28] sm:$0xff]
        %v1319 = vld [vmem:[%s1312 + $0x30] sm:$0xff]
        %v1320 = vld [vmem:[%s1312 + $0x38] sm:$0xff]
        %v1321 = vld [vmem:[%s1312 + $0x40] sm:$0xff]
        %v1322 = vld [vmem:[%s1312 + $0x48] sm:$0xff]
        %v1323 = vld [vmem:[%s1312 + $0x50] sm:$0xff]
        %v1324 = vld [vmem:[%s1312 + $0x58] sm:$0xff]
        %v1325 = vld [vmem:[%s1312 + $0x60] sm:$0xf]
        %s1326 = scalar_lea.vmem [#allocation2], 1872
        %1327 = vst.msk [vmem:[%s1326] sm:$0xff] %vm213, %v1313
        %1328 = vst.msk [vmem:[%s1326 + $0x8] sm:$0xff] %vm213, %v1314
        %1329 = vst.msk [vmem:[%s1326 + $0x10] sm:$0xff] %vm213, %v1315
        %1330 = vst.msk [vmem:[%s1326 + $0x18] sm:$0xff] %vm213, %v1316
        %1331 = vst.msk [vmem:[%s1326 + $0x20] sm:$0xff] %vm213, %v1317
        %1332 = vst.msk [vmem:[%s1326 + $0x28] sm:$0xff] %vm213, %v1318
        %1333 = vst.msk [vmem:[%s1326 + $0x30] sm:$0xff] %vm213, %v1319
        %1334 = vst.msk [vmem:[%s1326 + $0x38] sm:$0xff] %vm213, %v1320
        %1335 = vst.msk [vmem:[%s1326 + $0x40] sm:$0xff] %vm213, %v1321
        %1336 = vst.msk [vmem:[%s1326 + $0x48] sm:$0xff] %vm213, %v1322
        %1337 = vst.msk [vmem:[%s1326 + $0x50] sm:$0xff] %vm213, %v1323
        %1338 = vst.msk [vmem:[%s1326 + $0x58] sm:$0xff] %vm213, %v1324
        %1339 = vst.msk [vmem:[%s1326 + $0x60] sm:$0xf] %vm226, %v1325
        %v1340 = vld [vmem:[%s1312] sm:$0xff]
        %v1341 = vld [vmem:[%s1312 + $0x8] sm:$0xff]
        %v1342 = vld [vmem:[%s1312 + $0x10] sm:$0xff]
        %v1343 = vld [vmem:[%s1312 + $0x18] sm:$0xff]
        %v1344 = vld [vmem:[%s1312 + $0x20] sm:$0xff]
        %v1345 = vld [vmem:[%s1312 + $0x28] sm:$0xff]
        %v1346 = vld [vmem:[%s1312 + $0x30] sm:$0xff]
        %v1347 = vld [vmem:[%s1312 + $0x38] sm:$0xff]
        %v1348 = vld [vmem:[%s1312 + $0x40] sm:$0xff]
        %v1349 = vld [vmem:[%s1312 + $0x48] sm:$0xff]
        %v1350 = vld [vmem:[%s1312 + $0x50] sm:$0xff]
        %v1351 = vld [vmem:[%s1312 + $0x58] sm:$0xff]
        %v1352 = vld [vmem:[%s1312 + $0x60] sm:$0xf]
        %1366 = vrot.lane.b32.xlu0 %v1340, 127
        %v1367 = vpop.permute.xlu0 %1366
        %1368 = vrot.lane.b32.xlu0 %v1341, 127
        %v1369 = vpop.permute.xlu0 %1368
        %1370 = vrot.lane.b32.xlu0 %v1342, 127
        %v1371 = vpop.permute.xlu0 %1370
        %1372 = vrot.lane.b32.xlu0 %v1343, 127
        %v1373 = vpop.permute.xlu0 %1372
        %1374 = vrot.lane.b32.xlu0 %v1344, 127
        %v1375 = vpop.permute.xlu0 %1374
        %1376 = vrot.lane.b32.xlu0 %v1345, 127
        %v1377 = vpop.permute.xlu0 %1376
        %1378 = vrot.lane.b32.xlu0 %v1346, 127
        %v1379 = vpop.permute.xlu0 %1378
        %1380 = vrot.lane.b32.xlu0 %v1347, 127
        %v1381 = vpop.permute.xlu0 %1380
        %1382 = vrot.lane.b32.xlu0 %v1348, 127
        %v1383 = vpop.permute.xlu0 %1382
        %1384 = vrot.lane.b32.xlu0 %v1349, 127
        %v1385 = vpop.permute.xlu0 %1384
        %1386 = vrot.lane.b32.xlu0 %v1350, 127
        %v1387 = vpop.permute.xlu0 %1386
        %1388 = vrot.lane.b32.xlu0 %v1351, 127
        %v1389 = vpop.permute.xlu0 %1388
        %1390 = vrot.lane.b32.xlu0 %v1352, 127
        %v1391 = vpop.permute.xlu0 %1390
        %s1405 = scalar_lea.vmem [#allocation2], 1976
        %1406 = vst.msk [vmem:[%s1405] sm:$0xff] %vm213, %v1367
        %1407 = vst.msk [vmem:[%s1405 + $0x8] sm:$0xff] %vm213, %v1369
        %1408 = vst.msk [vmem:[%s1405 + $0x10] sm:$0xff] %vm213, %v1371
        %1409 = vst.msk [vmem:[%s1405 + $0x18] sm:$0xff] %vm213, %v1373
        %1410 = vst.msk [vmem:[%s1405 + $0x20] sm:$0xff] %vm213, %v1375
        %1411 = vst.msk [vmem:[%s1405 + $0x28] sm:$0xff] %vm213, %v1377
        %1412 = vst.msk [vmem:[%s1405 + $0x30] sm:$0xff] %vm213, %v1379
        %1413 = vst.msk [vmem:[%s1405 + $0x38] sm:$0xff] %vm213, %v1381
        %1414 = vst.msk [vmem:[%s1405 + $0x40] sm:$0xff] %vm213, %v1383
        %1415 = vst.msk [vmem:[%s1405 + $0x48] sm:$0xff] %vm213, %v1385
        %1416 = vst.msk [vmem:[%s1405 + $0x50] sm:$0xff] %vm213, %v1387
        %1417 = vst.msk [vmem:[%s1405 + $0x58] sm:$0xff] %vm213, %v1389
        %1418 = vst.msk [vmem:[%s1405 + $0x60] sm:$0xf] %vm226, %v1391
        %v1419 = vld [vmem:[%s1312] sm:$0xff]
        %v1420 = vld [vmem:[%s1312 + $0x8] sm:$0xff]
        %v1421 = vld [vmem:[%s1312 + $0x10] sm:$0xff]
        %v1422 = vld [vmem:[%s1312 + $0x18] sm:$0xff]
        %v1423 = vld [vmem:[%s1312 + $0x20] sm:$0xff]
        %v1424 = vld [vmem:[%s1312 + $0x28] sm:$0xff]
        %v1425 = vld [vmem:[%s1312 + $0x30] sm:$0xff]
        %v1426 = vld [vmem:[%s1312 + $0x38] sm:$0xff]
        %v1427 = vld [vmem:[%s1312 + $0x40] sm:$0xff]
        %v1428 = vld [vmem:[%s1312 + $0x48] sm:$0xff]
        %v1429 = vld [vmem:[%s1312 + $0x50] sm:$0xff]
        %v1430 = vld [vmem:[%s1312 + $0x58] sm:$0xff]
        %v1431 = vld [vmem:[%s1312 + $0x60] sm:$0xf]
        %1445 = vrot.lane.b32.xlu0 %v1419, 126
        %v1446 = vpop.permute.xlu0 %1445
        %1447 = vrot.lane.b32.xlu0 %v1420, 126
        %v1448 = vpop.permute.xlu0 %1447
        %1449 = vrot.lane.b32.xlu0 %v1421, 126
        %v1450 = vpop.permute.xlu0 %1449
        %1451 = vrot.lane.b32.xlu0 %v1422, 126
        %v1452 = vpop.permute.xlu0 %1451
        %1453 = vrot.lane.b32.xlu0 %v1423, 126
        %v1454 = vpop.permute.xlu0 %1453
        %1455 = vrot.lane.b32.xlu0 %v1424, 126
        %v1456 = vpop.permute.xlu0 %1455
        %1457 = vrot.lane.b32.xlu0 %v1425, 126
        %v1458 = vpop.permute.xlu0 %1457
        %1459 = vrot.lane.b32.xlu0 %v1426, 126
        %v1460 = vpop.permute.xlu0 %1459
        %1461 = vrot.lane.b32.xlu0 %v1427, 126
        %v1462 = vpop.permute.xlu0 %1461
        %1463 = vrot.lane.b32.xlu0 %v1428, 126
        %v1464 = vpop.permute.xlu0 %1463
        %1465 = vrot.lane.b32.xlu0 %v1429, 126
        %v1466 = vpop.permute.xlu0 %1465
        %1467 = vrot.lane.b32.xlu0 %v1430, 126
        %v1468 = vpop.permute.xlu0 %1467
        %1469 = vrot.lane.b32.xlu0 %v1431, 126
        %v1470 = vpop.permute.xlu0 %1469
        %s1484 = scalar_lea.vmem [#allocation2], 2080
        %1485 = vst.msk [vmem:[%s1484] sm:$0xff] %vm213, %v1446
        %1486 = vst.msk [vmem:[%s1484 + $0x8] sm:$0xff] %vm213, %v1448
        %1487 = vst.msk [vmem:[%s1484 + $0x10] sm:$0xff] %vm213, %v1450
        %1488 = vst.msk [vmem:[%s1484 + $0x18] sm:$0xff] %vm213, %v1452
        %1489 = vst.msk [vmem:[%s1484 + $0x20] sm:$0xff] %vm213, %v1454
        %1490 = vst.msk [vmem:[%s1484 + $0x28] sm:$0xff] %vm213, %v1456
        %1491 = vst.msk [vmem:[%s1484 + $0x30] sm:$0xff] %vm213, %v1458
        %1492 = vst.msk [vmem:[%s1484 + $0x38] sm:$0xff] %vm213, %v1460
        %1493 = vst.msk [vmem:[%s1484 + $0x40] sm:$0xff] %vm213, %v1462
        %1494 = vst.msk [vmem:[%s1484 + $0x48] sm:$0xff] %vm213, %v1464
        %1495 = vst.msk [vmem:[%s1484 + $0x50] sm:$0xff] %vm213, %v1466
        %1496 = vst.msk [vmem:[%s1484 + $0x58] sm:$0xff] %vm213, %v1468
        %1497 = vst.msk [vmem:[%s1484 + $0x60] sm:$0xf] %vm226, %v1470
        %v1498 = vld [vmem:[%s1312 + $0x1] sm:$0xff]
        %v1499 = vld [vmem:[%s1312 + $0x9] sm:$0xff]
        %v1500 = vld [vmem:[%s1312 + $0x11] sm:$0xff]
        %v1501 = vld [vmem:[%s1312 + $0x19] sm:$0xff]
        %v1502 = vld [vmem:[%s1312 + $0x21] sm:$0xff]
        %v1503 = vld [vmem:[%s1312 + $0x29] sm:$0xff]
        %v1504 = vld [vmem:[%s1312 + $0x31] sm:$0xff]
        %v1505 = vld [vmem:[%s1312 + $0x39] sm:$0xff]
        %v1506 = vld [vmem:[%s1312 + $0x41] sm:$0xff]
        %v1507 = vld [vmem:[%s1312 + $0x49] sm:$0xff]
        %v1508 = vld [vmem:[%s1312 + $0x51] sm:$0xff]
        %v1509 = vld [vmem:[%s1312 + $0x59] sm:$0xff]
        %v1510 = vld [vmem:[%s1312 + $0x61] sm:$0xf]
        %s1511 = scalar_lea.vmem [#allocation2], 2184
        %1512 = vst.msk [vmem:[%s1511] sm:$0xff] %vm213, %v1498
        %1513 = vst.msk [vmem:[%s1511 + $0x8] sm:$0xff] %vm213, %v1499
        %1514 = vst.msk [vmem:[%s1511 + $0x10] sm:$0xff] %vm213, %v1500
        %1515 = vst.msk [vmem:[%s1511 + $0x18] sm:$0xff] %vm213, %v1501
        %1516 = vst.msk [vmem:[%s1511 + $0x20] sm:$0xff] %vm213, %v1502
        %1517 = vst.msk [vmem:[%s1511 + $0x28] sm:$0xff] %vm213, %v1503
        %1518 = vst.msk [vmem:[%s1511 + $0x30] sm:$0xff] %vm213, %v1504
        %1519 = vst.msk [vmem:[%s1511 + $0x38] sm:$0xff] %vm213, %v1505
        %1520 = vst.msk [vmem:[%s1511 + $0x40] sm:$0xff] %vm213, %v1506
        %1521 = vst.msk [vmem:[%s1511 + $0x48] sm:$0xff] %vm213, %v1507
        %1522 = vst.msk [vmem:[%s1511 + $0x50] sm:$0xff] %vm213, %v1508
        %1523 = vst.msk [vmem:[%s1511 + $0x58] sm:$0xff] %vm213, %v1509
        %1524 = vst.msk [vmem:[%s1511 + $0x60] sm:$0xf] %vm226, %v1510
        %v1525 = vld [vmem:[%s1312 + $0x1] sm:$0xff]
        %v1526 = vld [vmem:[%s1312 + $0x9] sm:$0xff]
        %v1527 = vld [vmem:[%s1312 + $0x11] sm:$0xff]
        %v1528 = vld [vmem:[%s1312 + $0x19] sm:$0xff]
        %v1529 = vld [vmem:[%s1312 + $0x21] sm:$0xff]
        %v1530 = vld [vmem:[%s1312 + $0x29] sm:$0xff]
        %v1531 = vld [vmem:[%s1312 + $0x31] sm:$0xff]
        %v1532 = vld [vmem:[%s1312 + $0x39] sm:$0xff]
        %v1533 = vld [vmem:[%s1312 + $0x41] sm:$0xff]
        %v1534 = vld [vmem:[%s1312 + $0x49] sm:$0xff]
        %v1535 = vld [vmem:[%s1312 + $0x51] sm:$0xff]
        %v1536 = vld [vmem:[%s1312 + $0x59] sm:$0xff]
        %v1537 = vld [vmem:[%s1312 + $0x61] sm:$0xf]
        %1551 = vrot.lane.b32.xlu0 %v1525, 127
        %v1552 = vpop.permute.xlu0 %1551
        %1553 = vrot.lane.b32.xlu0 %v1526, 127
        %v1554 = vpop.permute.xlu0 %1553
        %1555 = vrot.lane.b32.xlu0 %v1527, 127
        %v1556 = vpop.permute.xlu0 %1555
        %1557 = vrot.lane.b32.xlu0 %v1528, 127
        %v1558 = vpop.permute.xlu0 %1557
        %1559 = vrot.lane.b32.xlu0 %v1529, 127
        %v1560 = vpop.permute.xlu0 %1559
        %1561 = vrot.lane.b32.xlu0 %v1530, 127
        %v1562 = vpop.permute.xlu0 %1561
        %1563 = vrot.lane.b32.xlu0 %v1531, 127
        %v1564 = vpop.permute.xlu0 %1563
        %1565 = vrot.lane.b32.xlu0 %v1532, 127
        %v1566 = vpop.permute.xlu0 %1565
        %1567 = vrot.lane.b32.xlu0 %v1533, 127
        %v1568 = vpop.permute.xlu0 %1567
        %1569 = vrot.lane.b32.xlu0 %v1534, 127
        %v1570 = vpop.permute.xlu0 %1569
        %1571 = vrot.lane.b32.xlu0 %v1535, 127
        %v1572 = vpop.permute.xlu0 %1571
        %1573 = vrot.lane.b32.xlu0 %v1536, 127
        %v1574 = vpop.permute.xlu0 %1573
        %1575 = vrot.lane.b32.xlu0 %v1537, 127
        %v1576 = vpop.permute.xlu0 %1575
        %s1590 = scalar_lea.vmem [#allocation2], 2288
        %1591 = vst.msk [vmem:[%s1590] sm:$0xff] %vm213, %v1552
        %1592 = vst.msk [vmem:[%s1590 + $0x8] sm:$0xff] %vm213, %v1554
        %1593 = vst.msk [vmem:[%s1590 + $0x10] sm:$0xff] %vm213, %v1556
        %1594 = vst.msk [vmem:[%s1590 + $0x18] sm:$0xff] %vm213, %v1558
        %1595 = vst.msk [vmem:[%s1590 + $0x20] sm:$0xff] %vm213, %v1560
        %1596 = vst.msk [vmem:[%s1590 + $0x28] sm:$0xff] %vm213, %v1562
        %1597 = vst.msk [vmem:[%s1590 + $0x30] sm:$0xff] %vm213, %v1564
        %1598 = vst.msk [vmem:[%s1590 + $0x38] sm:$0xff] %vm213, %v1566
        %1599 = vst.msk [vmem:[%s1590 + $0x40] sm:$0xff] %vm213, %v1568
        %1600 = vst.msk [vmem:[%s1590 + $0x48] sm:$0xff] %vm213, %v1570
        %1601 = vst.msk [vmem:[%s1590 + $0x50] sm:$0xff] %vm213, %v1572
        %1602 = vst.msk [vmem:[%s1590 + $0x58] sm:$0xff] %vm213, %v1574
        %1603 = vst.msk [vmem:[%s1590 + $0x60] sm:$0xf] %vm226, %v1576
        %v1604 = vld [vmem:[%s1312 + $0x1] sm:$0xff]
        %v1605 = vld [vmem:[%s1312 + $0x9] sm:$0xff]
        %v1606 = vld [vmem:[%s1312 + $0x11] sm:$0xff]
        %v1607 = vld [vmem:[%s1312 + $0x19] sm:$0xff]
        %v1608 = vld [vmem:[%s1312 + $0x21] sm:$0xff]
        %v1609 = vld [vmem:[%s1312 + $0x29] sm:$0xff]
        %v1610 = vld [vmem:[%s1312 + $0x31] sm:$0xff]
        %v1611 = vld [vmem:[%s1312 + $0x39] sm:$0xff]
        %v1612 = vld [vmem:[%s1312 + $0x41] sm:$0xff]
        %v1613 = vld [vmem:[%s1312 + $0x49] sm:$0xff]
        %v1614 = vld [vmem:[%s1312 + $0x51] sm:$0xff]
        %v1615 = vld [vmem:[%s1312 + $0x59] sm:$0xff]
        %v1616 = vld [vmem:[%s1312 + $0x61] sm:$0xf]
        %1630 = vrot.lane.b32.xlu0 %v1604, 126
        %v1631 = vpop.permute.xlu0 %1630
        %1632 = vrot.lane.b32.xlu0 %v1605, 126
        %v1633 = vpop.permute.xlu0 %1632
        %1634 = vrot.lane.b32.xlu0 %v1606, 126
        %v1635 = vpop.permute.xlu0 %1634
        %1636 = vrot.lane.b32.xlu0 %v1607, 126
        %v1637 = vpop.permute.xlu0 %1636
        %1638 = vrot.lane.b32.xlu0 %v1608, 126
        %v1639 = vpop.permute.xlu0 %1638
        %1640 = vrot.lane.b32.xlu0 %v1609, 126
        %v1641 = vpop.permute.xlu0 %1640
        %1642 = vrot.lane.b32.xlu0 %v1610, 126
        %v1643 = vpop.permute.xlu0 %1642
        %1644 = vrot.lane.b32.xlu0 %v1611, 126
        %v1645 = vpop.permute.xlu0 %1644
        %1646 = vrot.lane.b32.xlu0 %v1612, 126
        %v1647 = vpop.permute.xlu0 %1646
        %1648 = vrot.lane.b32.xlu0 %v1613, 126
        %v1649 = vpop.permute.xlu0 %1648
        %1650 = vrot.lane.b32.xlu0 %v1614, 126
        %v1651 = vpop.permute.xlu0 %1650
        %1652 = vrot.lane.b32.xlu0 %v1615, 126
        %v1653 = vpop.permute.xlu0 %1652
        %1654 = vrot.lane.b32.xlu0 %v1616, 126
        %v1655 = vpop.permute.xlu0 %1654
        %s1669 = scalar_lea.vmem [#allocation2], 2392
        %1670 = vst.msk [vmem:[%s1669] sm:$0xff] %vm213, %v1631
        %1671 = vst.msk [vmem:[%s1669 + $0x8] sm:$0xff] %vm213, %v1633
        %1672 = vst.msk [vmem:[%s1669 + $0x10] sm:$0xff] %vm213, %v1635
        %1673 = vst.msk [vmem:[%s1669 + $0x18] sm:$0xff] %vm213, %v1637
        %1674 = vst.msk [vmem:[%s1669 + $0x20] sm:$0xff] %vm213, %v1639
        %1675 = vst.msk [vmem:[%s1669 + $0x28] sm:$0xff] %vm213, %v1641
        %1676 = vst.msk [vmem:[%s1669 + $0x30] sm:$0xff] %vm213, %v1643
        %1677 = vst.msk [vmem:[%s1669 + $0x38] sm:$0xff] %vm213, %v1645
        %1678 = vst.msk [vmem:[%s1669 + $0x40] sm:$0xff] %vm213, %v1647
        %1679 = vst.msk [vmem:[%s1669 + $0x48] sm:$0xff] %vm213, %v1649
        %1680 = vst.msk [vmem:[%s1669 + $0x50] sm:$0xff] %vm213, %v1651
        %1681 = vst.msk [vmem:[%s1669 + $0x58] sm:$0xff] %vm213, %v1653
        %1682 = vst.msk [vmem:[%s1669 + $0x60] sm:$0xf] %vm226, %v1655
        %v1683 = vld [vmem:[%s1312 + $0x2] sm:$0xff]
        %v1684 = vld [vmem:[%s1312 + $0xa] sm:$0xff]
        %v1685 = vld [vmem:[%s1312 + $0x12] sm:$0xff]
        %v1686 = vld [vmem:[%s1312 + $0x1a] sm:$0xff]
        %v1687 = vld [vmem:[%s1312 + $0x22] sm:$0xff]
        %v1688 = vld [vmem:[%s1312 + $0x2a] sm:$0xff]
        %v1689 = vld [vmem:[%s1312 + $0x32] sm:$0xff]
        %v1690 = vld [vmem:[%s1312 + $0x3a] sm:$0xff]
        %v1691 = vld [vmem:[%s1312 + $0x42] sm:$0xff]
        %v1692 = vld [vmem:[%s1312 + $0x4a] sm:$0xff]
        %v1693 = vld [vmem:[%s1312 + $0x52] sm:$0xff]
        %v1694 = vld [vmem:[%s1312 + $0x5a] sm:$0xff]
        %v1695 = vld [vmem:[%s1312 + $0x62] sm:$0xf]
        %s1696 = scalar_lea.vmem [#allocation2], 2496
        %1697 = vst.msk [vmem:[%s1696] sm:$0xff] %vm213, %v1683
        %1698 = vst.msk [vmem:[%s1696 + $0x8] sm:$0xff] %vm213, %v1684
        %1699 = vst.msk [vmem:[%s1696 + $0x10] sm:$0xff] %vm213, %v1685
        %1700 = vst.msk [vmem:[%s1696 + $0x18] sm:$0xff] %vm213, %v1686
        %1701 = vst.msk [vmem:[%s1696 + $0x20] sm:$0xff] %vm213, %v1687
        %1702 = vst.msk [vmem:[%s1696 + $0x28] sm:$0xff] %vm213, %v1688
        %1703 = vst.msk [vmem:[%s1696 + $0x30] sm:$0xff] %vm213, %v1689
        %1704 = vst.msk [vmem:[%s1696 + $0x38] sm:$0xff] %vm213, %v1690
        %1705 = vst.msk [vmem:[%s1696 + $0x40] sm:$0xff] %vm213, %v1691
        %1706 = vst.msk [vmem:[%s1696 + $0x48] sm:$0xff] %vm213, %v1692
        %1707 = vst.msk [vmem:[%s1696 + $0x50] sm:$0xff] %vm213, %v1693
        %1708 = vst.msk [vmem:[%s1696 + $0x58] sm:$0xff] %vm213, %v1694
        %1709 = vst.msk [vmem:[%s1696 + $0x60] sm:$0xf] %vm226, %v1695
        %v1710 = vld [vmem:[%s1312 + $0x2] sm:$0xff]
        %v1711 = vld [vmem:[%s1312 + $0xa] sm:$0xff]
        %v1712 = vld [vmem:[%s1312 + $0x12] sm:$0xff]
        %v1713 = vld [vmem:[%s1312 + $0x1a] sm:$0xff]
        %v1714 = vld [vmem:[%s1312 + $0x22] sm:$0xff]
        %v1715 = vld [vmem:[%s1312 + $0x2a] sm:$0xff]
        %v1716 = vld [vmem:[%s1312 + $0x32] sm:$0xff]
        %v1717 = vld [vmem:[%s1312 + $0x3a] sm:$0xff]
        %v1718 = vld [vmem:[%s1312 + $0x42] sm:$0xff]
        %v1719 = vld [vmem:[%s1312 + $0x4a] sm:$0xff]
        %v1720 = vld [vmem:[%s1312 + $0x52] sm:$0xff]
        %v1721 = vld [vmem:[%s1312 + $0x5a] sm:$0xff]
        %v1722 = vld [vmem:[%s1312 + $0x62] sm:$0xf]
        %1736 = vrot.lane.b32.xlu0 %v1710, 127
        %v1737 = vpop.permute.xlu0 %1736
        %1738 = vrot.lane.b32.xlu0 %v1711, 127
        %v1739 = vpop.permute.xlu0 %1738
        %1740 = vrot.lane.b32.xlu0 %v1712, 127
        %v1741 = vpop.permute.xlu0 %1740
        %1742 = vrot.lane.b32.xlu0 %v1713, 127
        %v1743 = vpop.permute.xlu0 %1742
        %1744 = vrot.lane.b32.xlu0 %v1714, 127
        %v1745 = vpop.permute.xlu0 %1744
        %1746 = vrot.lane.b32.xlu0 %v1715, 127
        %v1747 = vpop.permute.xlu0 %1746
        %1748 = vrot.lane.b32.xlu0 %v1716, 127
        %v1749 = vpop.permute.xlu0 %1748
        %1750 = vrot.lane.b32.xlu0 %v1717, 127
        %v1751 = vpop.permute.xlu0 %1750
        %1752 = vrot.lane.b32.xlu0 %v1718, 127
        %v1753 = vpop.permute.xlu0 %1752
        %1754 = vrot.lane.b32.xlu0 %v1719, 127
        %v1755 = vpop.permute.xlu0 %1754
        %1756 = vrot.lane.b32.xlu0 %v1720, 127
        %v1757 = vpop.permute.xlu0 %1756
        %1758 = vrot.lane.b32.xlu0 %v1721, 127
        %v1759 = vpop.permute.xlu0 %1758
        %1760 = vrot.lane.b32.xlu0 %v1722, 127
        %v1761 = vpop.permute.xlu0 %1760
        %s1775 = scalar_lea.vmem [#allocation2], 2600
        %1776 = vst.msk [vmem:[%s1775] sm:$0xff] %vm213, %v1737
        %1777 = vst.msk [vmem:[%s1775 + $0x8] sm:$0xff] %vm213, %v1739
        %1778 = vst.msk [vmem:[%s1775 + $0x10] sm:$0xff] %vm213, %v1741
        %1779 = vst.msk [vmem:[%s1775 + $0x18] sm:$0xff] %vm213, %v1743
        %1780 = vst.msk [vmem:[%s1775 + $0x20] sm:$0xff] %vm213, %v1745
        %1781 = vst.msk [vmem:[%s1775 + $0x28] sm:$0xff] %vm213, %v1747
        %1782 = vst.msk [vmem:[%s1775 + $0x30] sm:$0xff] %vm213, %v1749
        %1783 = vst.msk [vmem:[%s1775 + $0x38] sm:$0xff] %vm213, %v1751
        %1784 = vst.msk [vmem:[%s1775 + $0x40] sm:$0xff] %vm213, %v1753
        %1785 = vst.msk [vmem:[%s1775 + $0x48] sm:$0xff] %vm213, %v1755
        %1786 = vst.msk [vmem:[%s1775 + $0x50] sm:$0xff] %vm213, %v1757
        %1787 = vst.msk [vmem:[%s1775 + $0x58] sm:$0xff] %vm213, %v1759
        %1788 = vst.msk [vmem:[%s1775 + $0x60] sm:$0xf] %vm226, %v1761
        %v1789 = vld [vmem:[%s1312 + $0x2] sm:$0xff]
        %v1790 = vld [vmem:[%s1312 + $0xa] sm:$0xff]
        %v1791 = vld [vmem:[%s1312 + $0x12] sm:$0xff]
        %v1792 = vld [vmem:[%s1312 + $0x1a] sm:$0xff]
        %v1793 = vld [vmem:[%s1312 + $0x22] sm:$0xff]
        %v1794 = vld [vmem:[%s1312 + $0x2a] sm:$0xff]
        %v1795 = vld [vmem:[%s1312 + $0x32] sm:$0xff]
        %v1796 = vld [vmem:[%s1312 + $0x3a] sm:$0xff]
        %v1797 = vld [vmem:[%s1312 + $0x42] sm:$0xff]
        %v1798 = vld [vmem:[%s1312 + $0x4a] sm:$0xff]
        %v1799 = vld [vmem:[%s1312 + $0x52] sm:$0xff]
        %v1800 = vld [vmem:[%s1312 + $0x5a] sm:$0xff]
        %v1801 = vld [vmem:[%s1312 + $0x62] sm:$0xf]
        %1815 = vrot.lane.b32.xlu0 %v1789, 126
        %v1816 = vpop.permute.xlu0 %1815
        %1817 = vrot.lane.b32.xlu0 %v1790, 126
        %v1818 = vpop.permute.xlu0 %1817
        %1819 = vrot.lane.b32.xlu0 %v1791, 126
        %v1820 = vpop.permute.xlu0 %1819
        %1821 = vrot.lane.b32.xlu0 %v1792, 126
        %v1822 = vpop.permute.xlu0 %1821
        %1823 = vrot.lane.b32.xlu0 %v1793, 126
        %v1824 = vpop.permute.xlu0 %1823
        %1825 = vrot.lane.b32.xlu0 %v1794, 126
        %v1826 = vpop.permute.xlu0 %1825
        %1827 = vrot.lane.b32.xlu0 %v1795, 126
        %v1828 = vpop.permute.xlu0 %1827
        %1829 = vrot.lane.b32.xlu0 %v1796, 126
        %v1830 = vpop.permute.xlu0 %1829
        %1831 = vrot.lane.b32.xlu0 %v1797, 126
        %v1832 = vpop.permute.xlu0 %1831
        %1833 = vrot.lane.b32.xlu0 %v1798, 126
        %v1834 = vpop.permute.xlu0 %1833
        %1835 = vrot.lane.b32.xlu0 %v1799, 126
        %v1836 = vpop.permute.xlu0 %1835
        %1837 = vrot.lane.b32.xlu0 %v1800, 126
        %v1838 = vpop.permute.xlu0 %1837
        %1839 = vrot.lane.b32.xlu0 %v1801, 126
        %v1840 = vpop.permute.xlu0 %1839
        %s1854 = scalar_lea.vmem [#allocation2], 2704
        %1855 = vst.msk [vmem:[%s1854] sm:$0xff] %vm213, %v1816
        %1856 = vst.msk [vmem:[%s1854 + $0x8] sm:$0xff] %vm213, %v1818
        %1857 = vst.msk [vmem:[%s1854 + $0x10] sm:$0xff] %vm213, %v1820
        %1858 = vst.msk [vmem:[%s1854 + $0x18] sm:$0xff] %vm213, %v1822
        %1859 = vst.msk [vmem:[%s1854 + $0x20] sm:$0xff] %vm213, %v1824
        %1860 = vst.msk [vmem:[%s1854 + $0x28] sm:$0xff] %vm213, %v1826
        %1861 = vst.msk [vmem:[%s1854 + $0x30] sm:$0xff] %vm213, %v1828
        %1862 = vst.msk [vmem:[%s1854 + $0x38] sm:$0xff] %vm213, %v1830
        %1863 = vst.msk [vmem:[%s1854 + $0x40] sm:$0xff] %vm213, %v1832
        %1864 = vst.msk [vmem:[%s1854 + $0x48] sm:$0xff] %vm213, %v1834
        %1865 = vst.msk [vmem:[%s1854 + $0x50] sm:$0xff] %vm213, %v1836
        %1866 = vst.msk [vmem:[%s1854 + $0x58] sm:$0xff] %vm213, %v1838
        %1867 = vst.msk [vmem:[%s1854 + $0x60] sm:$0xf] %vm226, %v1840
        %v1868 = vlaneseq
        %v1869 = vshrl.u32 %v1868, 7
        %v1870 = vadd.s32 %v1869, 8
        %v1871 = vadd.s32 %v1869, 16
        %v1872 = vadd.s32 %v1869, 24
        %v1873 = vadd.s32 %v1869, 32
        %v1874 = vadd.s32 %v1869, 40
        %v1875 = vadd.s32 %v1869, 48
        %v1876 = vadd.s32 %v1869, 56
        %v1877 = vadd.s32 %v1869, 64
        %v1878 = vadd.s32 %v1869, 72
        %v1879 = vadd.s32 %v1869, 80
        %v1880 = vadd.s32 %v1869, 88
        %v1881 = vadd.s32 %v1869, 96
        %v1882 = vlaneseq
        %v1883 = vand.u32 %v1882, 127
        %v1884 = vmul.u32 %v1883, 2
        %vm1885 = vcmp.eq.s32.totalorder %v1869, %v1884
        %vm1886 = vcmp.eq.s32.totalorder %v1870, %v1884
        %vm1887 = vcmp.eq.s32.totalorder %v1871, %v1884
        %vm1888 = vcmp.eq.s32.totalorder %v1872, %v1884
        %vm1889 = vcmp.eq.s32.totalorder %v1873, %v1884
        %vm1890 = vcmp.eq.s32.totalorder %v1874, %v1884
        %vm1891 = vcmp.eq.s32.totalorder %v1875, %v1884
        %vm1892 = vcmp.eq.s32.totalorder %v1876, %v1884
        %vm1893 = vcmp.eq.s32.totalorder %v1877, %v1884
        %vm1894 = vcmp.eq.s32.totalorder %v1878, %v1884
        %vm1895 = vcmp.eq.s32.totalorder %v1879, %v1884
        %vm1896 = vcmp.eq.s32.totalorder %v1880, %v1884
        %vm1897 = vcmp.eq.s32.totalorder %v1881, %v1884
        %v1898 = vsel %vm1885, 1, 0
        %v1899 = vsel %vm1886, 1, 0
        %v1900 = vsel %vm1887, 1, 0
        %v1901 = vsel %vm1888, 1, 0
        %v1902 = vsel %vm1889, 1, 0
        %v1903 = vsel %vm1890, 1, 0
        %v1904 = vsel %vm1891, 1, 0
        %v1905 = vsel %vm1892, 1, 0
        %v1906 = vsel %vm1893, 1, 0
        %v1907 = vsel %vm1894, 1, 0
        %v1908 = vsel %vm1895, 1, 0
        %v1909 = vsel %vm1896, 1, 0
        %v1910 = vsel %vm1897, 1, 0
        %v1911 = vcvt.s32.f32 %v1898
        %v1912 = vcvt.s32.f32 %v1899
        %v1913 = vcvt.s32.f32 %v1900
        %v1914 = vcvt.s32.f32 %v1901
        %v1915 = vcvt.s32.f32 %v1902
        %v1916 = vcvt.s32.f32 %v1903
        %v1917 = vcvt.s32.f32 %v1904
        %v1918 = vcvt.s32.f32 %v1905
        %v1919 = vcvt.s32.f32 %v1906
        %v1920 = vcvt.s32.f32 %v1907
        %v1921 = vcvt.s32.f32 %v1908
        %v1922 = vcvt.s32.f32 %v1909
        %v1923 = vcvt.s32.f32 %v1910
        %v1924 = vadd.s32 %v1884, 1
        %vm1925 = vcmp.eq.s32.totalorder %v1869, %v1924
        %vm1926 = vcmp.eq.s32.totalorder %v1870, %v1924
        %vm1927 = vcmp.eq.s32.totalorder %v1871, %v1924
        %vm1928 = vcmp.eq.s32.totalorder %v1872, %v1924
        %vm1929 = vcmp.eq.s32.totalorder %v1873, %v1924
        %vm1930 = vcmp.eq.s32.totalorder %v1874, %v1924
        %vm1931 = vcmp.eq.s32.totalorder %v1875, %v1924
        %vm1932 = vcmp.eq.s32.totalorder %v1876, %v1924
        %vm1933 = vcmp.eq.s32.totalorder %v1877, %v1924
        %vm1934 = vcmp.eq.s32.totalorder %v1878, %v1924
        %vm1935 = vcmp.eq.s32.totalorder %v1879, %v1924
        %vm1936 = vcmp.eq.s32.totalorder %v1880, %v1924
        %vm1937 = vcmp.eq.s32.totalorder %v1881, %v1924
        %v1938 = vsel %vm1925, 1, 0
        %v1939 = vsel %vm1926, 1, 0
        %v1940 = vsel %vm1927, 1, 0
        %v1941 = vsel %vm1928, 1, 0
        %v1942 = vsel %vm1929, 1, 0
        %v1943 = vsel %vm1930, 1, 0
        %v1944 = vsel %vm1931, 1, 0
        %v1945 = vsel %vm1932, 1, 0
        %v1946 = vsel %vm1933, 1, 0
        %v1947 = vsel %vm1934, 1, 0
        %v1948 = vsel %vm1935, 1, 0
        %v1949 = vsel %vm1936, 1, 0
        %v1950 = vsel %vm1937, 1, 0
        %v1951 = vcvt.s32.f32 %v1938
        %v1952 = vcvt.s32.f32 %v1939
        %v1953 = vcvt.s32.f32 %v1940
        %v1954 = vcvt.s32.f32 %v1941
        %v1955 = vcvt.s32.f32 %v1942
        %v1956 = vcvt.s32.f32 %v1943
        %v1957 = vcvt.s32.f32 %v1944
        %v1958 = vcvt.s32.f32 %v1945
        %v1959 = vcvt.s32.f32 %v1946
        %v1960 = vcvt.s32.f32 %v1947
        %v1961 = vcvt.s32.f32 %v1948
        %v1962 = vcvt.s32.f32 %v1949
        %v1963 = vcvt.s32.f32 %v1950
        %v1964 = vmul.u32 %v1869, 2
        %v1965 = vmul.u32 %v1870, 2
        %v1966 = vmul.u32 %v1871, 2
        %v1967 = vmul.u32 %v1872, 2
        %v1968 = vmul.u32 %v1873, 2
        %v1969 = vmul.u32 %v1874, 2
        %v1970 = vmul.u32 %v1875, 2
        %vm1971 = vcmp.eq.s32.totalorder %v1883, %v1964
        %vm1972 = vcmp.eq.s32.totalorder %v1883, %v1965
        %vm1973 = vcmp.eq.s32.totalorder %v1883, %v1966
        %vm1974 = vcmp.eq.s32.totalorder %v1883, %v1967
        %vm1975 = vcmp.eq.s32.totalorder %v1883, %v1968
        %vm1976 = vcmp.eq.s32.totalorder %v1883, %v1969
        %vm1977 = vcmp.eq.s32.totalorder %v1883, %v1970
        %v1978 = vsel %vm1971, 1, 0
        %v1979 = vsel %vm1972, 1, 0
        %v1980 = vsel %vm1973, 1, 0
        %v1981 = vsel %vm1974, 1, 0
        %v1982 = vsel %vm1975, 1, 0
        %v1983 = vsel %vm1976, 1, 0
        %v1984 = vsel %vm1977, 1, 0
        %v1985 = vcvt.s32.f32 %v1978
        %v1986 = vcvt.s32.f32 %v1979
        %v1987 = vcvt.s32.f32 %v1980
        %v1988 = vcvt.s32.f32 %v1981
        %v1989 = vcvt.s32.f32 %v1982
        %v1990 = vcvt.s32.f32 %v1983
        %v1991 = vcvt.s32.f32 %v1984
        %v1992 = vadd.s32 %v1964, 1
        %v1993 = vadd.s32 %v1965, 1
        %v1994 = vadd.s32 %v1966, 1
        %v1995 = vadd.s32 %v1967, 1
        %v1996 = vadd.s32 %v1968, 1
        %v1997 = vadd.s32 %v1969, 1
        %v1998 = vadd.s32 %v1970, 1
        %vm1999 = vcmp.eq.s32.totalorder %v1883, %v1992
        %vm2000 = vcmp.eq.s32.totalorder %v1883, %v1993
        %vm2001 = vcmp.eq.s32.totalorder %v1883, %v1994
        %vm2002 = vcmp.eq.s32.totalorder %v1883, %v1995
        %vm2003 = vcmp.eq.s32.totalorder %v1883, %v1996
        %vm2004 = vcmp.eq.s32.totalorder %v1883, %v1997
        %vm2005 = vcmp.eq.s32.totalorder %v1883, %v1998
        %v2006 = vsel %vm1999, 1, 0
        %v2007 = vsel %vm2000, 1, 0
        %v2008 = vsel %vm2001, 1, 0
        %v2009 = vsel %vm2002, 1, 0
        %v2010 = vsel %vm2003, 1, 0
        %v2011 = vsel %vm2004, 1, 0
        %v2012 = vsel %vm2005, 1, 0
        %v2013 = vcvt.s32.f32 %v2006
        %v2014 = vcvt.s32.f32 %v2007
        %v2015 = vcvt.s32.f32 %v2008
        %v2016 = vcvt.s32.f32 %v2009
        %v2017 = vcvt.s32.f32 %v2010
        %v2018 = vcvt.s32.f32 %v2011
        %v2019 = vcvt.s32.f32 %v2012
        loop: start=0, step=1, limit=16
        $region41: #{net1_forward.2} parent=31 // loop_pre_header
          _
        $region42: #{net1_forward.2} parent=31 // loop_header
          %s2021 = sphi 0, %s2025
          %p2022 = scmp.ge.s32.totalorder %s2021, 16
        $region43: #{net1_forward.2} parent=31 // loop_header_branch
          %2024 = sbr.rel (%p2022) target = $region47
        $region44: #{net1_forward.2} parent=31 // loop_body
          %s2026 = sld [smem:[#allocation5 + %s2021]]
          %v2027 = vstv %s2026
          %s2028 = smul.u32 %s2021, 128
          %s2029 = sld [smem:[#allocation3 + %s2028]]
          %v2030 = vld [vmem:[#allocation2] sm:$0xff]
          %v2031 = vld [vmem:[#allocation2 + $0x8] sm:$0xff]
          %v2032 = vld [vmem:[#allocation2 + $0x10] sm:$0xff]
          %v2033 = vld [vmem:[#allocation2 + $0x18] sm:$0xff]
          %v2034 = vld [vmem:[#allocation2 + $0x20] sm:$0xff]
          %v2035 = vld [vmem:[#allocation2 + $0x28] sm:$0xff]
          %v2036 = vld [vmem:[#allocation2 + $0x30] sm:$0xff]
          %v2037 = vld [vmem:[#allocation2 + $0x38] sm:$0xff]
          %v2038 = vld [vmem:[#allocation2 + $0x40] sm:$0xff]
          %v2039 = vld [vmem:[#allocation2 + $0x48] sm:$0xff]
          %v2040 = vld [vmem:[#allocation2 + $0x50] sm:$0xff]
          %v2041 = vld [vmem:[#allocation2 + $0x58] sm:$0xff]
          %v2042 = vld [vmem:[#allocation2 + $0x60] sm:$0xf]
          %v2043 = vstv %s2029
          %v2044 = vmul.f32 %v2043, %v2030
          %v2045 = vmul.f32 %v2043, %v2031
          %v2046 = vmul.f32 %v2043, %v2032
          %v2047 = vmul.f32 %v2043, %v2033
          %v2048 = vmul.f32 %v2043, %v2034
          %v2049 = vmul.f32 %v2043, %v2035
          %v2050 = vmul.f32 %v2043, %v2036
          %v2051 = vmul.f32 %v2043, %v2037
          %v2052 = vmul.f32 %v2043, %v2038
          %v2053 = vmul.f32 %v2043, %v2039
          %v2054 = vmul.f32 %v2043, %v2040
          %v2055 = vmul.f32 %v2043, %v2041
          %v2056 = vmul.f32 %v2043, %v2042
          %v2057 = vadd.f32 %v2027, %v2044
          %v2058 = vadd.f32 %v2027, %v2045
          %v2059 = vadd.f32 %v2027, %v2046
          %v2060 = vadd.f32 %v2027, %v2047
          %v2061 = vadd.f32 %v2027, %v2048
          %v2062 = vadd.f32 %v2027, %v2049
          %v2063 = vadd.f32 %v2027, %v2050
          %v2064 = vadd.f32 %v2027, %v2051
          %v2065 = vadd.f32 %v2027, %v2052
          %v2066 = vadd.f32 %v2027, %v2053
          %v2067 = vadd.f32 %v2027, %v2054
          %v2068 = vadd.f32 %v2027, %v2055
          %v2069 = vadd.f32 %v2027, %v2056
          %s2070 = sadd.s32 %s2028, 1
          %s2071 = sld [smem:[#allocation3 + %s2070]]
          %v2072 = vld [vmem:[%s293] sm:$0xff]
          %v2073 = vld [vmem:[%s293 + $0x8] sm:$0xff]
          %v2074 = vld [vmem:[%s293 + $0x10] sm:$0xff]
          %v2075 = vld [vmem:[%s293 + $0x18] sm:$0xff]
          %v2076 = vld [vmem:[%s293 + $0x20] sm:$0xff]
          %v2077 = vld [vmem:[%s293 + $0x28] sm:$0xff]
          %v2078 = vld [vmem:[%s293 + $0x30] sm:$0xff]
          %v2079 = vld [vmem:[%s293 + $0x38] sm:$0xff]
          %v2080 = vld [vmem:[%s293 + $0x40] sm:$0xff]
          %v2081 = vld [vmem:[%s293 + $0x48] sm:$0xff]
          %v2082 = vld [vmem:[%s293 + $0x50] sm:$0xff]
          %v2083 = vld [vmem:[%s293 + $0x58] sm:$0xff]
          %v2084 = vld [vmem:[%s293 + $0x60] sm:$0xf]
          %v2085 = vstv %s2071
          %v2086 = vmul.f32 %v2085, %v2072
          %v2087 = vmul.f32 %v2085, %v2073
          %v2088 = vmul.f32 %v2085, %v2074
          %v2089 = vmul.f32 %v2085, %v2075
          %v2090 = vmul.f32 %v2085, %v2076
          %v2091 = vmul.f32 %v2085, %v2077
          %v2092 = vmul.f32 %v2085, %v2078
          %v2093 = vmul.f32 %v2085, %v2079
          %v2094 = vmul.f32 %v2085, %v2080
          %v2095 = vmul.f32 %v2085, %v2081
          %v2096 = vmul.f32 %v2085, %v2082
          %v2097 = vmul.f32 %v2085, %v2083
          %v2098 = vmul.f32 %v2085, %v2084
          %v2099 = vadd.f32 %v2057, %v2086
          %v2100 = vadd.f32 %v2058, %v2087
          %v2101 = vadd.f32 %v2059, %v2088
          %v2102 = vadd.f32 %v2060, %v2089
          %v2103 = vadd.f32 %v2061, %v2090
          %v2104 = vadd.f32 %v2062, %v2091
          %v2105 = vadd.f32 %v2063, %v2092
          %v2106 = vadd.f32 %v2064, %v2093
          %v2107 = vadd.f32 %v2065, %v2094
          %v2108 = vadd.f32 %v2066, %v2095
          %v2109 = vadd.f32 %v2067, %v2096
          %v2110 = vadd.f32 %v2068, %v2097
          %v2111 = vadd.f32 %v2069, %v2098
          %s2112 = sadd.s32 %s2028, 2
          %s2113 = sld [smem:[#allocation3 + %s2112]]
          %v2114 = vld [vmem:[%s372] sm:$0xff]
          %v2115 = vld [vmem:[%s372 + $0x8] sm:$0xff]
          %v2116 = vld [vmem:[%s372 + $0x10] sm:$0xff]
          %v2117 = vld [vmem:[%s372 + $0x18] sm:$0xff]
          %v2118 = vld [vmem:[%s372 + $0x20] sm:$0xff]
          %v2119 = vld [vmem:[%s372 + $0x28] sm:$0xff]
          %v2120 = vld [vmem:[%s372 + $0x30] sm:$0xff]
          %v2121 = vld [vmem:[%s372 + $0x38] sm:$0xff]
          %v2122 = vld [vmem:[%s372 + $0x40] sm:$0xff]
          %v2123 = vld [vmem:[%s372 + $0x48] sm:$0xff]
          %v2124 = vld [vmem:[%s372 + $0x50] sm:$0xff]
          %v2125 = vld [vmem:[%s372 + $0x58] sm:$0xff]
          %v2126 = vld [vmem:[%s372 + $0x60] sm:$0xf]
          %v2127 = vstv %s2113
          %v2128 = vmul.f32 %v2127, %v2114
          %v2129 = vmul.f32 %v2127, %v2115
          %v2130 = vmul.f32 %v2127, %v2116
          %v2131 = vmul.f32 %v2127, %v2117
          %v2132 = vmul.f32 %v2127, %v2118
          %v2133 = vmul.f32 %v2127, %v2119
          %v2134 = vmul.f32 %v2127, %v2120
          %v2135 = vmul.f32 %v2127, %v2121
          %v2136 = vmul.f32 %v2127, %v2122
          %v2137 = vmul.f32 %v2127, %v2123
          %v2138 = vmul.f32 %v2127, %v2124
          %v2139 = vmul.f32 %v2127, %v2125
          %v2140 = vmul.f32 %v2127, %v2126
          %v2141 = vadd.f32 %v2099, %v2128
          %v2142 = vadd.f32 %v2100, %v2129
          %v2143 = vadd.f32 %v2101, %v2130
          %v2144 = vadd.f32 %v2102, %v2131
          %v2145 = vadd.f32 %v2103, %v2132
          %v2146 = vadd.f32 %v2104, %v2133
          %v2147 = vadd.f32 %v2105, %v2134
          %v2148 = vadd.f32 %v2106, %v2135
          %v2149 = vadd.f32 %v2107, %v2136
          %v2150 = vadd.f32 %v2108, %v2137
          %v2151 = vadd.f32 %v2109, %v2138
          %v2152 = vadd.f32 %v2110, %v2139
          %v2153 = vadd.f32 %v2111, %v2140
          %s2154 = sadd.s32 %s2028, 3
          %s2155 = sld [smem:[#allocation3 + %s2154]]
          %v2156 = vld [vmem:[%s399] sm:$0xff]
          %v2157 = vld [vmem:[%s399 + $0x8] sm:$0xff]
          %v2158 = vld [vmem:[%s399 + $0x10] sm:$0xff]
          %v2159 = vld [vmem:[%s399 + $0x18] sm:$0xff]
          %v2160 = vld [vmem:[%s399 + $0x20] sm:$0xff]
          %v2161 = vld [vmem:[%s399 + $0x28] sm:$0xff]
          %v2162 = vld [vmem:[%s399 + $0x30] sm:$0xff]
          %v2163 = vld [vmem:[%s399 + $0x38] sm:$0xff]
          %v2164 = vld [vmem:[%s399 + $0x40] sm:$0xff]
          %v2165 = vld [vmem:[%s399 + $0x48] sm:$0xff]
          %v2166 = vld [vmem:[%s399 + $0x50] sm:$0xff]
          %v2167 = vld [vmem:[%s399 + $0x58] sm:$0xff]
          %v2168 = vld [vmem:[%s399 + $0x60] sm:$0xf]
          %v2169 = vstv %s2155
          %v2170 = vmul.f32 %v2169, %v2156
          %v2171 = vmul.f32 %v2169, %v2157
          %v2172 = vmul.f32 %v2169, %v2158
          %v2173 = vmul.f32 %v2169, %v2159
          %v2174 = vmul.f32 %v2169, %v2160
          %v2175 = vmul.f32 %v2169, %v2161
          %v2176 = vmul.f32 %v2169, %v2162
          %v2177 = vmul.f32 %v2169, %v2163
          %v2178 = vmul.f32 %v2169, %v2164
          %v2179 = vmul.f32 %v2169, %v2165
          %v2180 = vmul.f32 %v2169, %v2166
          %v2181 = vmul.f32 %v2169, %v2167
          %v2182 = vmul.f32 %v2169, %v2168
          %v2183 = vadd.f32 %v2141, %v2170
          %v2184 = vadd.f32 %v2142, %v2171
          %v2185 = vadd.f32 %v2143, %v2172
          %v2186 = vadd.f32 %v2144, %v2173
          %v2187 = vadd.f32 %v2145, %v2174
          %v2188 = vadd.f32 %v2146, %v2175
          %v2189 = vadd.f32 %v2147, %v2176
          %v2190 = vadd.f32 %v2148, %v2177
          %v2191 = vadd.f32 %v2149, %v2178
          %v2192 = vadd.f32 %v2150, %v2179
          %v2193 = vadd.f32 %v2151, %v2180
          %v2194 = vadd.f32 %v2152, %v2181
          %v2195 = vadd.f32 %v2153, %v2182
          %s2196 = sadd.s32 %s2028, 4
          %s2197 = sld [smem:[#allocation3 + %s2196]]
          %v2198 = vld [vmem:[%s478] sm:$0xff]
          %v2199 = vld [vmem:[%s478 + $0x8] sm:$0xff]
          %v2200 = vld [vmem:[%s478 + $0x10] sm:$0xff]
          %v2201 = vld [vmem:[%s478 + $0x18] sm:$0xff]
          %v2202 = vld [vmem:[%s478 + $0x20] sm:$0xff]
          %v2203 = vld [vmem:[%s478 + $0x28] sm:$0xff]
          %v2204 = vld [vmem:[%s478 + $0x30] sm:$0xff]
          %v2205 = vld [vmem:[%s478 + $0x38] sm:$0xff]
          %v2206 = vld [vmem:[%s478 + $0x40] sm:$0xff]
          %v2207 = vld [vmem:[%s478 + $0x48] sm:$0xff]
          %v2208 = vld [vmem:[%s478 + $0x50] sm:$0xff]
          %v2209 = vld [vmem:[%s478 + $0x58] sm:$0xff]
          %v2210 = vld [vmem:[%s478 + $0x60] sm:$0xf]
          %v2211 = vstv %s2197
          %v2212 = vmul.f32 %v2211, %v2198
          %v2213 = vmul.f32 %v2211, %v2199
          %v2214 = vmul.f32 %v2211, %v2200
          %v2215 = vmul.f32 %v2211, %v2201
          %v2216 = vmul.f32 %v2211, %v2202
          %v2217 = vmul.f32 %v2211, %v2203
          %v2218 = vmul.f32 %v2211, %v2204
          %v2219 = vmul.f32 %v2211, %v2205
          %v2220 = vmul.f32 %v2211, %v2206
          %v2221 = vmul.f32 %v2211, %v2207
          %v2222 = vmul.f32 %v2211, %v2208
          %v2223 = vmul.f32 %v2211, %v2209
          %v2224 = vmul.f32 %v2211, %v2210
          %v2225 = vadd.f32 %v2183, %v2212
          %v2226 = vadd.f32 %v2184, %v2213
          %v2227 = vadd.f32 %v2185, %v2214
          %v2228 = vadd.f32 %v2186, %v2215
          %v2229 = vadd.f32 %v2187, %v2216
          %v2230 = vadd.f32 %v2188, %v2217
          %v2231 = vadd.f32 %v2189, %v2218
          %v2232 = vadd.f32 %v2190, %v2219
          %v2233 = vadd.f32 %v2191, %v2220
          %v2234 = vadd.f32 %v2192, %v2221
          %v2235 = vadd.f32 %v2193, %v2222
          %v2236 = vadd.f32 %v2194, %v2223
          %v2237 = vadd.f32 %v2195, %v2224
          %s2238 = sadd.s32 %s2028, 5
          %s2239 = sld [smem:[#allocation3 + %s2238]]
          %v2240 = vld [vmem:[%s557] sm:$0xff]
          %v2241 = vld [vmem:[%s557 + $0x8] sm:$0xff]
          %v2242 = vld [vmem:[%s557 + $0x10] sm:$0xff]
          %v2243 = vld [vmem:[%s557 + $0x18] sm:$0xff]
          %v2244 = vld [vmem:[%s557 + $0x20] sm:$0xff]
          %v2245 = vld [vmem:[%s557 + $0x28] sm:$0xff]
          %v2246 = vld [vmem:[%s557 + $0x30] sm:$0xff]
          %v2247 = vld [vmem:[%s557 + $0x38] sm:$0xff]
          %v2248 = vld [vmem:[%s557 + $0x40] sm:$0xff]
          %v2249 = vld [vmem:[%s557 + $0x48] sm:$0xff]
          %v2250 = vld [vmem:[%s557 + $0x50] sm:$0xff]
          %v2251 = vld [vmem:[%s557 + $0x58] sm:$0xff]
          %v2252 = vld [vmem:[%s557 + $0x60] sm:$0xf]
          %v2253 = vstv %s2239
          %v2254 = vmul.f32 %v2253, %v2240
          %v2255 = vmul.f32 %v2253, %v2241
          %v2256 = vmul.f32 %v2253, %v2242
          %v2257 = vmul.f32 %v2253, %v2243
          %v2258 = vmul.f32 %v2253, %v2244
          %v2259 = vmul.f32 %v2253, %v2245
          %v2260 = vmul.f32 %v2253, %v2246
          %v2261 = vmul.f32 %v2253, %v2247
          %v2262 = vmul.f32 %v2253, %v2248
          %v2263 = vmul.f32 %v2253, %v2249
          %v2264 = vmul.f32 %v2253, %v2250
          %v2265 = vmul.f32 %v2253, %v2251
          %v2266 = vmul.f32 %v2253, %v2252
          %v2267 = vadd.f32 %v2225, %v2254
          %v2268 = vadd.f32 %v2226, %v2255
          %v2269 = vadd.f32 %v2227, %v2256
          %v2270 = vadd.f32 %v2228, %v2257
          %v2271 = vadd.f32 %v2229, %v2258
          %v2272 = vadd.f32 %v2230, %v2259
          %v2273 = vadd.f32 %v2231, %v2260
          %v2274 = vadd.f32 %v2232, %v2261
          %v2275 = vadd.f32 %v2233, %v2262
          %v2276 = vadd.f32 %v2234, %v2263
          %v2277 = vadd.f32 %v2235, %v2264
          %v2278 = vadd.f32 %v2236, %v2265
          %v2279 = vadd.f32 %v2237, %v2266
          %s2280 = sadd.s32 %s2028, 6
          %s2281 = sld [smem:[#allocation3 + %s2280]]
          %v2282 = vld [vmem:[%s584] sm:$0xff]
          %v2283 = vld [vmem:[%s584 + $0x8] sm:$0xff]
          %v2284 = vld [vmem:[%s584 + $0x10] sm:$0xff]
          %v2285 = vld [vmem:[%s584 + $0x18] sm:$0xff]
          %v2286 = vld [vmem:[%s584 + $0x20] sm:$0xff]
          %v2287 = vld [vmem:[%s584 + $0x28] sm:$0xff]
          %v2288 = vld [vmem:[%s584 + $0x30] sm:$0xff]
          %v2289 = vld [vmem:[%s584 + $0x38] sm:$0xff]
          %v2290 = vld [vmem:[%s584 + $0x40] sm:$0xff]
          %v2291 = vld [vmem:[%s584 + $0x48] sm:$0xff]
          %v2292 = vld [vmem:[%s584 + $0x50] sm:$0xff]
          %v2293 = vld [vmem:[%s584 + $0x58] sm:$0xff]
          %v2294 = vld [vmem:[%s584 + $0x60] sm:$0xf]
          %v2295 = vstv %s2281
          %v2296 = vmul.f32 %v2295, %v2282
          %v2297 = vmul.f32 %v2295, %v2283
          %v2298 = vmul.f32 %v2295, %v2284
          %v2299 = vmul.f32 %v2295, %v2285
          %v2300 = vmul.f32 %v2295, %v2286
          %v2301 = vmul.f32 %v2295, %v2287
          %v2302 = vmul.f32 %v2295, %v2288
          %v2303 = vmul.f32 %v2295, %v2289
          %v2304 = vmul.f32 %v2295, %v2290
          %v2305 = vmul.f32 %v2295, %v2291
          %v2306 = vmul.f32 %v2295, %v2292
          %v2307 = vmul.f32 %v2295, %v2293
          %v2308 = vmul.f32 %v2295, %v2294
          %v2309 = vadd.f32 %v2267, %v2296
          %v2310 = vadd.f32 %v2268, %v2297
          %v2311 = vadd.f32 %v2269, %v2298
          %v2312 = vadd.f32 %v2270, %v2299
          %v2313 = vadd.f32 %v2271, %v2300
          %v2314 = vadd.f32 %v2272, %v2301
          %v2315 = vadd.f32 %v2273, %v2302
          %v2316 = vadd.f32 %v2274, %v2303
          %v2317 = vadd.f32 %v2275, %v2304
          %v2318 = vadd.f32 %v2276, %v2305
          %v2319 = vadd.f32 %v2277, %v2306
          %v2320 = vadd.f32 %v2278, %v2307
          %v2321 = vadd.f32 %v2279, %v2308
          %s2322 = sadd.s32 %s2028, 7
          %s2323 = sld [smem:[#allocation3 + %s2322]]
          %v2324 = vld [vmem:[%s663] sm:$0xff]
          %v2325 = vld [vmem:[%s663 + $0x8] sm:$0xff]
          %v2326 = vld [vmem:[%s663 + $0x10] sm:$0xff]
          %v2327 = vld [vmem:[%s663 + $0x18] sm:$0xff]
          %v2328 = vld [vmem:[%s663 + $0x20] sm:$0xff]
          %v2329 = vld [vmem:[%s663 + $0x28] sm:$0xff]
          %v2330 = vld [vmem:[%s663 + $0x30] sm:$0xff]
          %v2331 = vld [vmem:[%s663 + $0x38] sm:$0xff]
          %v2332 = vld [vmem:[%s663 + $0x40] sm:$0xff]
          %v2333 = vld [vmem:[%s663 + $0x48] sm:$0xff]
          %v2334 = vld [vmem:[%s663 + $0x50] sm:$0xff]
          %v2335 = vld [vmem:[%s663 + $0x58] sm:$0xff]
          %v2336 = vld [vmem:[%s663 + $0x60] sm:$0xf]
          %v2337 = vstv %s2323
          %v2338 = vmul.f32 %v2337, %v2324
          %v2339 = vmul.f32 %v2337, %v2325
          %v2340 = vmul.f32 %v2337, %v2326
          %v2341 = vmul.f32 %v2337, %v2327
          %v2342 = vmul.f32 %v2337, %v2328
          %v2343 = vmul.f32 %v2337, %v2329
          %v2344 = vmul.f32 %v2337, %v2330
          %v2345 = vmul.f32 %v2337, %v2331
          %v2346 = vmul.f32 %v2337, %v2332
          %v2347 = vmul.f32 %v2337, %v2333
          %v2348 = vmul.f32 %v2337, %v2334
          %v2349 = vmul.f32 %v2337, %v2335
          %v2350 = vmul.f32 %v2337, %v2336
          %v2351 = vadd.f32 %v2309, %v2338
          %v2352 = vadd.f32 %v2310, %v2339
          %v2353 = vadd.f32 %v2311, %v2340
          %v2354 = vadd.f32 %v2312, %v2341
          %v2355 = vadd.f32 %v2313, %v2342
          %v2356 = vadd.f32 %v2314, %v2343
          %v2357 = vadd.f32 %v2315, %v2344
          %v2358 = vadd.f32 %v2316, %v2345
          %v2359 = vadd.f32 %v2317, %v2346
          %v2360 = vadd.f32 %v2318, %v2347
          %v2361 = vadd.f32 %v2319, %v2348
          %v2362 = vadd.f32 %v2320, %v2349
          %v2363 = vadd.f32 %v2321, %v2350
          %s2364 = sadd.s32 %s2028, 8
          %s2365 = sld [smem:[#allocation3 + %s2364]]
          %v2366 = vld [vmem:[%s742] sm:$0xff]
          %v2367 = vld [vmem:[%s742 + $0x8] sm:$0xff]
          %v2368 = vld [vmem:[%s742 + $0x10] sm:$0xff]
          %v2369 = vld [vmem:[%s742 + $0x18] sm:$0xff]
          %v2370 = vld [vmem:[%s742 + $0x20] sm:$0xff]
          %v2371 = vld [vmem:[%s742 + $0x28] sm:$0xff]
          %v2372 = vld [vmem:[%s742 + $0x30] sm:$0xff]
          %v2373 = vld [vmem:[%s742 + $0x38] sm:$0xff]
          %v2374 = vld [vmem:[%s742 + $0x40] sm:$0xff]
          %v2375 = vld [vmem:[%s742 + $0x48] sm:$0xff]
          %v2376 = vld [vmem:[%s742 + $0x50] sm:$0xff]
          %v2377 = vld [vmem:[%s742 + $0x58] sm:$0xff]
          %v2378 = vld [vmem:[%s742 + $0x60] sm:$0xf]
          %v2379 = vstv %s2365
          %v2380 = vmul.f32 %v2379, %v2366
          %v2381 = vmul.f32 %v2379, %v2367
          %v2382 = vmul.f32 %v2379, %v2368
          %v2383 = vmul.f32 %v2379, %v2369
          %v2384 = vmul.f32 %v2379, %v2370
          %v2385 = vmul.f32 %v2379, %v2371
          %v2386 = vmul.f32 %v2379, %v2372
          %v2387 = vmul.f32 %v2379, %v2373
          %v2388 = vmul.f32 %v2379, %v2374
          %v2389 = vmul.f32 %v2379, %v2375
          %v2390 = vmul.f32 %v2379, %v2376
          %v2391 = vmul.f32 %v2379, %v2377
          %v2392 = vmul.f32 %v2379, %v2378
          %v2393 = vadd.f32 %v2351, %v2380
          %v2394 = vadd.f32 %v2352, %v2381
          %v2395 = vadd.f32 %v2353, %v2382
          %v2396 = vadd.f32 %v2354, %v2383
          %v2397 = vadd.f32 %v2355, %v2384
          %v2398 = vadd.f32 %v2356, %v2385
          %v2399 = vadd.f32 %v2357, %v2386
          %v2400 = vadd.f32 %v2358, %v2387
          %v2401 = vadd.f32 %v2359, %v2388
          %v2402 = vadd.f32 %v2360, %v2389
          %v2403 = vadd.f32 %v2361, %v2390
          %v2404 = vadd.f32 %v2362, %v2391
          %v2405 = vadd.f32 %v2363, %v2392
          %s2406 = sadd.s32 %s2028, 9
          %s2407 = sld [smem:[#allocation3 + %s2406]]
          %v2408 = vld [vmem:[%s770] sm:$0xff]
          %v2409 = vld [vmem:[%s770 + $0x8] sm:$0xff]
          %v2410 = vld [vmem:[%s770 + $0x10] sm:$0xff]
          %v2411 = vld [vmem:[%s770 + $0x18] sm:$0xff]
          %v2412 = vld [vmem:[%s770 + $0x20] sm:$0xff]
          %v2413 = vld [vmem:[%s770 + $0x28] sm:$0xff]
          %v2414 = vld [vmem:[%s770 + $0x30] sm:$0xff]
          %v2415 = vld [vmem:[%s770 + $0x38] sm:$0xff]
          %v2416 = vld [vmem:[%s770 + $0x40] sm:$0xff]
          %v2417 = vld [vmem:[%s770 + $0x48] sm:$0xff]
          %v2418 = vld [vmem:[%s770 + $0x50] sm:$0xff]
          %v2419 = vld [vmem:[%s770 + $0x58] sm:$0xff]
          %v2420 = vld [vmem:[%s770 + $0x60] sm:$0xf]
          %v2421 = vstv %s2407
          %v2422 = vmul.f32 %v2421, %v2408
          %v2423 = vmul.f32 %v2421, %v2409
          %v2424 = vmul.f32 %v2421, %v2410
          %v2425 = vmul.f32 %v2421, %v2411
          %v2426 = vmul.f32 %v2421, %v2412
          %v2427 = vmul.f32 %v2421, %v2413
          %v2428 = vmul.f32 %v2421, %v2414
          %v2429 = vmul.f32 %v2421, %v2415
          %v2430 = vmul.f32 %v2421, %v2416
          %v2431 = vmul.f32 %v2421, %v2417
          %v2432 = vmul.f32 %v2421, %v2418
          %v2433 = vmul.f32 %v2421, %v2419
          %v2434 = vmul.f32 %v2421, %v2420
          %v2435 = vadd.f32 %v2393, %v2422
          %v2436 = vadd.f32 %v2394, %v2423
          %v2437 = vadd.f32 %v2395, %v2424
          %v2438 = vadd.f32 %v2396, %v2425
          %v2439 = vadd.f32 %v2397, %v2426
          %v2440 = vadd.f32 %v2398, %v2427
          %v2441 = vadd.f32 %v2399, %v2428
          %v2442 = vadd.f32 %v2400, %v2429
          %v2443 = vadd.f32 %v2401, %v2430
          %v2444 = vadd.f32 %v2402, %v2431
          %v2445 = vadd.f32 %v2403, %v2432
          %v2446 = vadd.f32 %v2404, %v2433
          %v2447 = vadd.f32 %v2405, %v2434
          %s2448 = sadd.s32 %s2028, 10
          %s2449 = sld [smem:[#allocation3 + %s2448]]
          %v2450 = vld [vmem:[%s849] sm:$0xff]
          %v2451 = vld [vmem:[%s849 + $0x8] sm:$0xff]
          %v2452 = vld [vmem:[%s849 + $0x10] sm:$0xff]
          %v2453 = vld [vmem:[%s849 + $0x18] sm:$0xff]
          %v2454 = vld [vmem:[%s849 + $0x20] sm:$0xff]
          %v2455 = vld [vmem:[%s849 + $0x28] sm:$0xff]
          %v2456 = vld [vmem:[%s849 + $0x30] sm:$0xff]
          %v2457 = vld [vmem:[%s849 + $0x38] sm:$0xff]
          %v2458 = vld [vmem:[%s849 + $0x40] sm:$0xff]
          %v2459 = vld [vmem:[%s849 + $0x48] sm:$0xff]
          %v2460 = vld [vmem:[%s849 + $0x50] sm:$0xff]
          %v2461 = vld [vmem:[%s849 + $0x58] sm:$0xff]
          %v2462 = vld [vmem:[%s849 + $0x60] sm:$0xf]
          %v2463 = vstv %s2449
          %v2464 = vmul.f32 %v2463, %v2450
          %v2465 = vmul.f32 %v2463, %v2451
          %v2466 = vmul.f32 %v2463, %v2452
          %v2467 = vmul.f32 %v2463, %v2453
          %v2468 = vmul.f32 %v2463, %v2454
          %v2469 = vmul.f32 %v2463, %v2455
          %v2470 = vmul.f32 %v2463, %v2456
          %v2471 = vmul.f32 %v2463, %v2457
          %v2472 = vmul.f32 %v2463, %v2458
          %v2473 = vmul.f32 %v2463, %v2459
          %v2474 = vmul.f32 %v2463, %v2460
          %v2475 = vmul.f32 %v2463, %v2461
          %v2476 = vmul.f32 %v2463, %v2462
          %v2477 = vadd.f32 %v2435, %v2464
          %v2478 = vadd.f32 %v2436, %v2465
          %v2479 = vadd.f32 %v2437, %v2466
          %v2480 = vadd.f32 %v2438, %v2467
          %v2481 = vadd.f32 %v2439, %v2468
          %v2482 = vadd.f32 %v2440, %v2469
          %v2483 = vadd.f32 %v2441, %v2470
          %v2484 = vadd.f32 %v2442, %v2471
          %v2485 = vadd.f32 %v2443, %v2472
          %v2486 = vadd.f32 %v2444, %v2473
          %v2487 = vadd.f32 %v2445, %v2474
          %v2488 = vadd.f32 %v2446, %v2475
          %v2489 = vadd.f32 %v2447, %v2476
          %s2490 = sadd.s32 %s2028, 11
          %s2491 = sld [smem:[#allocation3 + %s2490]]
          %v2492 = vld [vmem:[%s928] sm:$0xff]
          %v2493 = vld [vmem:[%s928 + $0x8] sm:$0xff]
          %v2494 = vld [vmem:[%s928 + $0x10] sm:$0xff]
          %v2495 = vld [vmem:[%s928 + $0x18] sm:$0xff]
          %v2496 = vld [vmem:[%s928 + $0x20] sm:$0xff]
          %v2497 = vld [vmem:[%s928 + $0x28] sm:$0xff]
          %v2498 = vld [vmem:[%s928 + $0x30] sm:$0xff]
          %v2499 = vld [vmem:[%s928 + $0x38] sm:$0xff]
          %v2500 = vld [vmem:[%s928 + $0x40] sm:$0xff]
          %v2501 = vld [vmem:[%s928 + $0x48] sm:$0xff]
          %v2502 = vld [vmem:[%s928 + $0x50] sm:$0xff]
          %v2503 = vld [vmem:[%s928 + $0x58] sm:$0xff]
          %v2504 = vld [vmem:[%s928 + $0x60] sm:$0xf]
          %v2505 = vstv %s2491
          %v2506 = vmul.f32 %v2505, %v2492
          %v2507 = vmul.f32 %v2505, %v2493
          %v2508 = vmul.f32 %v2505, %v2494
          %v2509 = vmul.f32 %v2505, %v2495
          %v2510 = vmul.f32 %v2505, %v2496
          %v2511 = vmul.f32 %v2505, %v2497
          %v2512 = vmul.f32 %v2505, %v2498
          %v2513 = vmul.f32 %v2505, %v2499
          %v2514 = vmul.f32 %v2505, %v2500
          %v2515 = vmul.f32 %v2505, %v2501
          %v2516 = vmul.f32 %v2505, %v2502
          %v2517 = vmul.f32 %v2505, %v2503
          %v2518 = vmul.f32 %v2505, %v2504
          %v2519 = vadd.f32 %v2477, %v2506
          %v2520 = vadd.f32 %v2478, %v2507
          %v2521 = vadd.f32 %v2479, %v2508
          %v2522 = vadd.f32 %v2480, %v2509
          %v2523 = vadd.f32 %v2481, %v2510
          %v2524 = vadd.f32 %v2482, %v2511
          %v2525 = vadd.f32 %v2483, %v2512
          %v2526 = vadd.f32 %v2484, %v2513
          %v2527 = vadd.f32 %v2485, %v2514
          %v2528 = vadd.f32 %v2486, %v2515
          %v2529 = vadd.f32 %v2487, %v2516
          %v2530 = vadd.f32 %v2488, %v2517
          %v2531 = vadd.f32 %v2489, %v2518
          %s2532 = sadd.s32 %s2028, 12
          %s2533 = sld [smem:[#allocation3 + %s2532]]
          %v2534 = vld [vmem:[%s955] sm:$0xff]
          %v2535 = vld [vmem:[%s955 + $0x8] sm:$0xff]
          %v2536 = vld [vmem:[%s955 + $0x10] sm:$0xff]
          %v2537 = vld [vmem:[%s955 + $0x18] sm:$0xff]
          %v2538 = vld [vmem:[%s955 + $0x20] sm:$0xff]
          %v2539 = vld [vmem:[%s955 + $0x28] sm:$0xff]
          %v2540 = vld [vmem:[%s955 + $0x30] sm:$0xff]
          %v2541 = vld [vmem:[%s955 + $0x38] sm:$0xff]
          %v2542 = vld [vmem:[%s955 + $0x40] sm:$0xff]
          %v2543 = vld [vmem:[%s955 + $0x48] sm:$0xff]
          %v2544 = vld [vmem:[%s955 + $0x50] sm:$0xff]
          %v2545 = vld [vmem:[%s955 + $0x58] sm:$0xff]
          %v2546 = vld [vmem:[%s955 + $0x60] sm:$0xf]
          %v2547 = vstv %s2533
          %v2548 = vmul.f32 %v2547, %v2534
          %v2549 = vmul.f32 %v2547, %v2535
          %v2550 = vmul.f32 %v2547, %v2536
          %v2551 = vmul.f32 %v2547, %v2537
          %v2552 = vmul.f32 %v2547, %v2538
          %v2553 = vmul.f32 %v2547, %v2539
          %v2554 = vmul.f32 %v2547, %v2540
          %v2555 = vmul.f32 %v2547, %v2541
          %v2556 = vmul.f32 %v2547, %v2542
          %v2557 = vmul.f32 %v2547, %v2543
          %v2558 = vmul.f32 %v2547, %v2544
          %v2559 = vmul.f32 %v2547, %v2545
          %v2560 = vmul.f32 %v2547, %v2546
          %v2561 = vadd.f32 %v2519, %v2548
          %v2562 = vadd.f32 %v2520, %v2549
          %v2563 = vadd.f32 %v2521, %v2550
          %v2564 = vadd.f32 %v2522, %v2551
          %v2565 = vadd.f32 %v2523, %v2552
          %v2566 = vadd.f32 %v2524, %v2553
          %v2567 = vadd.f32 %v2525, %v2554
          %v2568 = vadd.f32 %v2526, %v2555
          %v2569 = vadd.f32 %v2527, %v2556
          %v2570 = vadd.f32 %v2528, %v2557
          %v2571 = vadd.f32 %v2529, %v2558
          %v2572 = vadd.f32 %v2530, %v2559
          %v2573 = vadd.f32 %v2531, %v2560
          %s2574 = sadd.s32 %s2028, 13
          %s2575 = sld [smem:[#allocation3 + %s2574]]
          %v2576 = vld [vmem:[%s1034] sm:$0xff]
          %v2577 = vld [vmem:[%s1034 + $0x8] sm:$0xff]
          %v2578 = vld [vmem:[%s1034 + $0x10] sm:$0xff]
          %v2579 = vld [vmem:[%s1034 + $0x18] sm:$0xff]
          %v2580 = vld [vmem:[%s1034 + $0x20] sm:$0xff]
          %v2581 = vld [vmem:[%s1034 + $0x28] sm:$0xff]
          %v2582 = vld [vmem:[%s1034 + $0x30] sm:$0xff]
          %v2583 = vld [vmem:[%s1034 + $0x38] sm:$0xff]
          %v2584 = vld [vmem:[%s1034 + $0x40] sm:$0xff]
          %v2585 = vld [vmem:[%s1034 + $0x48] sm:$0xff]
          %v2586 = vld [vmem:[%s1034 + $0x50] sm:$0xff]
          %v2587 = vld [vmem:[%s1034 + $0x58] sm:$0xff]
          %v2588 = vld [vmem:[%s1034 + $0x60] sm:$0xf]
          %v2589 = vstv %s2575
          %v2590 = vmul.f32 %v2589, %v2576
          %v2591 = vmul.f32 %v2589, %v2577
          %v2592 = vmul.f32 %v2589, %v2578
          %v2593 = vmul.f32 %v2589, %v2579
          %v2594 = vmul.f32 %v2589, %v2580
          %v2595 = vmul.f32 %v2589, %v2581
          %v2596 = vmul.f32 %v2589, %v2582
          %v2597 = vmul.f32 %v2589, %v2583
          %v2598 = vmul.f32 %v2589, %v2584
          %v2599 = vmul.f32 %v2589, %v2585
          %v2600 = vmul.f32 %v2589, %v2586
          %v2601 = vmul.f32 %v2589, %v2587
          %v2602 = vmul.f32 %v2589, %v2588
          %v2603 = vadd.f32 %v2561, %v2590
          %v2604 = vadd.f32 %v2562, %v2591
          %v2605 = vadd.f32 %v2563, %v2592
          %v2606 = vadd.f32 %v2564, %v2593
          %v2607 = vadd.f32 %v2565, %v2594
          %v2608 = vadd.f32 %v2566, %v2595
          %v2609 = vadd.f32 %v2567, %v2596
          %v2610 = vadd.f32 %v2568, %v2597
          %v2611 = vadd.f32 %v2569, %v2598
          %v2612 = vadd.f32 %v2570, %v2599
          %v2613 = vadd.f32 %v2571, %v2600
          %v2614 = vadd.f32 %v2572, %v2601
          %v2615 = vadd.f32 %v2573, %v2602
          %s2616 = sadd.s32 %s2028, 14
          %s2617 = sld [smem:[#allocation3 + %s2616]]
          %v2618 = vld [vmem:[%s1113] sm:$0xff]
          %v2619 = vld [vmem:[%s1113 + $0x8] sm:$0xff]
          %v2620 = vld [vmem:[%s1113 + $0x10] sm:$0xff]
          %v2621 = vld [vmem:[%s1113 + $0x18] sm:$0xff]
          %v2622 = vld [vmem:[%s1113 + $0x20] sm:$0xff]
          %v2623 = vld [vmem:[%s1113 + $0x28] sm:$0xff]
          %v2624 = vld [vmem:[%s1113 + $0x30] sm:$0xff]
          %v2625 = vld [vmem:[%s1113 + $0x38] sm:$0xff]
          %v2626 = vld [vmem:[%s1113 + $0x40] sm:$0xff]
          %v2627 = vld [vmem:[%s1113 + $0x48] sm:$0xff]
          %v2628 = vld [vmem:[%s1113 + $0x50] sm:$0xff]
          %v2629 = vld [vmem:[%s1113 + $0x58] sm:$0xff]
          %v2630 = vld [vmem:[%s1113 + $0x60] sm:$0xf]
          %v2631 = vstv %s2617
          %v2632 = vmul.f32 %v2631, %v2618
          %v2633 = vmul.f32 %v2631, %v2619
          %v2634 = vmul.f32 %v2631, %v2620
          %v2635 = vmul.f32 %v2631, %v2621
          %v2636 = vmul.f32 %v2631, %v2622
          %v2637 = vmul.f32 %v2631, %v2623
          %v2638 = vmul.f32 %v2631, %v2624
          %v2639 = vmul.f32 %v2631, %v2625
          %v2640 = vmul.f32 %v2631, %v2626
          %v2641 = vmul.f32 %v2631, %v2627
          %v2642 = vmul.f32 %v2631, %v2628
          %v2643 = vmul.f32 %v2631, %v2629
          %v2644 = vmul.f32 %v2631, %v2630
          %v2645 = vadd.f32 %v2603, %v2632
          %v2646 = vadd.f32 %v2604, %v2633
          %v2647 = vadd.f32 %v2605, %v2634
          %v2648 = vadd.f32 %v2606, %v2635
          %v2649 = vadd.f32 %v2607, %v2636
          %v2650 = vadd.f32 %v2608, %v2637
          %v2651 = vadd.f32 %v2609, %v2638
          %v2652 = vadd.f32 %v2610, %v2639
          %v2653 = vadd.f32 %v2611, %v2640
          %v2654 = vadd.f32 %v2612, %v2641
          %v2655 = vadd.f32 %v2613, %v2642
          %v2656 = vadd.f32 %v2614, %v2643
          %v2657 = vadd.f32 %v2615, %v2644
          %s2658 = sadd.s32 %s2028, 15
          %s2659 = sld [smem:[#allocation3 + %s2658]]
          %v2660 = vld [vmem:[%s1140] sm:$0xff]
          %v2661 = vld [vmem:[%s1140 + $0x8] sm:$0xff]
          %v2662 = vld [vmem:[%s1140 + $0x10] sm:$0xff]
          %v2663 = vld [vmem:[%s1140 + $0x18] sm:$0xff]
          %v2664 = vld [vmem:[%s1140 + $0x20] sm:$0xff]
          %v2665 = vld [vmem:[%s1140 + $0x28] sm:$0xff]
          %v2666 = vld [vmem:[%s1140 + $0x30] sm:$0xff]
          %v2667 = vld [vmem:[%s1140 + $0x38] sm:$0xff]
          %v2668 = vld [vmem:[%s1140 + $0x40] sm:$0xff]
          %v2669 = vld [vmem:[%s1140 + $0x48] sm:$0xff]
          %v2670 = vld [vmem:[%s1140 + $0x50] sm:$0xff]
          %v2671 = vld [vmem:[%s1140 + $0x58] sm:$0xff]
          %v2672 = vld [vmem:[%s1140 + $0x60] sm:$0xf]
          %v2673 = vstv %s2659
          %v2674 = vmul.f32 %v2673, %v2660
          %v2675 = vmul.f32 %v2673, %v2661
          %v2676 = vmul.f32 %v2673, %v2662
          %v2677 = vmul.f32 %v2673, %v2663
          %v2678 = vmul.f32 %v2673, %v2664
          %v2679 = vmul.f32 %v2673, %v2665
          %v2680 = vmul.f32 %v2673, %v2666
          %v2681 = vmul.f32 %v2673, %v2667
          %v2682 = vmul.f32 %v2673, %v2668
          %v2683 = vmul.f32 %v2673, %v2669
          %v2684 = vmul.f32 %v2673, %v2670
          %v2685 = vmul.f32 %v2673, %v2671
          %v2686 = vmul.f32 %v2673, %v2672
          %v2687 = vadd.f32 %v2645, %v2674
          %v2688 = vadd.f32 %v2646, %v2675
          %v2689 = vadd.f32 %v2647, %v2676
          %v2690 = vadd.f32 %v2648, %v2677
          %v2691 = vadd.f32 %v2649, %v2678
          %v2692 = vadd.f32 %v2650, %v2679
          %v2693 = vadd.f32 %v2651, %v2680
          %v2694 = vadd.f32 %v2652, %v2681
          %v2695 = vadd.f32 %v2653, %v2682
          %v2696 = vadd.f32 %v2654, %v2683
          %v2697 = vadd.f32 %v2655, %v2684
          %v2698 = vadd.f32 %v2656, %v2685
          %v2699 = vadd.f32 %v2657, %v2686
          %s2700 = sadd.s32 %s2028, 16
          %s2701 = sld [smem:[#allocation3 + %s2700]]
          %v2702 = vld [vmem:[%s1219] sm:$0xff]
          %v2703 = vld [vmem:[%s1219 + $0x8] sm:$0xff]
          %v2704 = vld [vmem:[%s1219 + $0x10] sm:$0xff]
          %v2705 = vld [vmem:[%s1219 + $0x18] sm:$0xff]
          %v2706 = vld [vmem:[%s1219 + $0x20] sm:$0xff]
          %v2707 = vld [vmem:[%s1219 + $0x28] sm:$0xff]
          %v2708 = vld [vmem:[%s1219 + $0x30] sm:$0xff]
          %v2709 = vld [vmem:[%s1219 + $0x38] sm:$0xff]
          %v2710 = vld [vmem:[%s1219 + $0x40] sm:$0xff]
          %v2711 = vld [vmem:[%s1219 + $0x48] sm:$0xff]
          %v2712 = vld [vmem:[%s1219 + $0x50] sm:$0xff]
          %v2713 = vld [vmem:[%s1219 + $0x58] sm:$0xff]
          %v2714 = vld [vmem:[%s1219 + $0x60] sm:$0xf]
          %v2715 = vstv %s2701
          %v2716 = vmul.f32 %v2715, %v2702
          %v2717 = vmul.f32 %v2715, %v2703
          %v2718 = vmul.f32 %v2715, %v2704
          %v2719 = vmul.f32 %v2715, %v2705
          %v2720 = vmul.f32 %v2715, %v2706
          %v2721 = vmul.f32 %v2715, %v2707
          %v2722 = vmul.f32 %v2715, %v2708
          %v2723 = vmul.f32 %v2715, %v2709
          %v2724 = vmul.f32 %v2715, %v2710
          %v2725 = vmul.f32 %v2715, %v2711
          %v2726 = vmul.f32 %v2715, %v2712
          %v2727 = vmul.f32 %v2715, %v2713
          %v2728 = vmul.f32 %v2715, %v2714
          %v2729 = vadd.f32 %v2687, %v2716
          %v2730 = vadd.f32 %v2688, %v2717
          %v2731 = vadd.f32 %v2689, %v2718
          %v2732 = vadd.f32 %v2690, %v2719
          %v2733 = vadd.f32 %v2691, %v2720
          %v2734 = vadd.f32 %v2692, %v2721
          %v2735 = vadd.f32 %v2693, %v2722
          %v2736 = vadd.f32 %v2694, %v2723
          %v2737 = vadd.f32 %v2695, %v2724
          %v2738 = vadd.f32 %v2696, %v2725
          %v2739 = vadd.f32 %v2697, %v2726
          %v2740 = vadd.f32 %v2698, %v2727
          %v2741 = vadd.f32 %v2699, %v2728
          %s2742 = sadd.s32 %s2028, 17
          %s2743 = sld [smem:[#allocation3 + %s2742]]
          %v2744 = vld [vmem:[%s1298] sm:$0xff]
          %v2745 = vld [vmem:[%s1298 + $0x8] sm:$0xff]
          %v2746 = vld [vmem:[%s1298 + $0x10] sm:$0xff]
          %v2747 = vld [vmem:[%s1298 + $0x18] sm:$0xff]
          %v2748 = vld [vmem:[%s1298 + $0x20] sm:$0xff]
          %v2749 = vld [vmem:[%s1298 + $0x28] sm:$0xff]
          %v2750 = vld [vmem:[%s1298 + $0x30] sm:$0xff]
          %v2751 = vld [vmem:[%s1298 + $0x38] sm:$0xff]
          %v2752 = vld [vmem:[%s1298 + $0x40] sm:$0xff]
          %v2753 = vld [vmem:[%s1298 + $0x48] sm:$0xff]
          %v2754 = vld [vmem:[%s1298 + $0x50] sm:$0xff]
          %v2755 = vld [vmem:[%s1298 + $0x58] sm:$0xff]
          %v2756 = vld [vmem:[%s1298 + $0x60] sm:$0xf]
          %v2757 = vstv %s2743
          %v2758 = vmul.f32 %v2757, %v2744
          %v2759 = vmul.f32 %v2757, %v2745
          %v2760 = vmul.f32 %v2757, %v2746
          %v2761 = vmul.f32 %v2757, %v2747
          %v2762 = vmul.f32 %v2757, %v2748
          %v2763 = vmul.f32 %v2757, %v2749
          %v2764 = vmul.f32 %v2757, %v2750
          %v2765 = vmul.f32 %v2757, %v2751
          %v2766 = vmul.f32 %v2757, %v2752
          %v2767 = vmul.f32 %v2757, %v2753
          %v2768 = vmul.f32 %v2757, %v2754
          %v2769 = vmul.f32 %v2757, %v2755
          %v2770 = vmul.f32 %v2757, %v2756
          %v2771 = vadd.f32 %v2729, %v2758
          %v2772 = vadd.f32 %v2730, %v2759
          %v2773 = vadd.f32 %v2731, %v2760
          %v2774 = vadd.f32 %v2732, %v2761
          %v2775 = vadd.f32 %v2733, %v2762
          %v2776 = vadd.f32 %v2734, %v2763
          %v2777 = vadd.f32 %v2735, %v2764
          %v2778 = vadd.f32 %v2736, %v2765
          %v2779 = vadd.f32 %v2737, %v2766
          %v2780 = vadd.f32 %v2738, %v2767
          %v2781 = vadd.f32 %v2739, %v2768
          %v2782 = vadd.f32 %v2740, %v2769
          %v2783 = vadd.f32 %v2741, %v2770
          %s2784 = sadd.s32 %s2028, 18
          %s2785 = sld [smem:[#allocation3 + %s2784]]
          %v2786 = vld [vmem:[%s1326] sm:$0xff]
          %v2787 = vld [vmem:[%s1326 + $0x8] sm:$0xff]
          %v2788 = vld [vmem:[%s1326 + $0x10] sm:$0xff]
          %v2789 = vld [vmem:[%s1326 + $0x18] sm:$0xff]
          %v2790 = vld [vmem:[%s1326 + $0x20] sm:$0xff]
          %v2791 = vld [vmem:[%s1326 + $0x28] sm:$0xff]
          %v2792 = vld [vmem:[%s1326 + $0x30] sm:$0xff]
          %v2793 = vld [vmem:[%s1326 + $0x38] sm:$0xff]
          %v2794 = vld [vmem:[%s1326 + $0x40] sm:$0xff]
          %v2795 = vld [vmem:[%s1326 + $0x48] sm:$0xff]
          %v2796 = vld [vmem:[%s1326 + $0x50] sm:$0xff]
          %v2797 = vld [vmem:[%s1326 + $0x58] sm:$0xff]
          %v2798 = vld [vmem:[%s1326 + $0x60] sm:$0xf]
          %v2799 = vstv %s2785
          %v2800 = vmul.f32 %v2799, %v2786
          %v2801 = vmul.f32 %v2799, %v2787
          %v2802 = vmul.f32 %v2799, %v2788
          %v2803 = vmul.f32 %v2799, %v2789
          %v2804 = vmul.f32 %v2799, %v2790
          %v2805 = vmul.f32 %v2799, %v2791
          %v2806 = vmul.f32 %v2799, %v2792
          %v2807 = vmul.f32 %v2799, %v2793
          %v2808 = vmul.f32 %v2799, %v2794
          %v2809 = vmul.f32 %v2799, %v2795
          %v2810 = vmul.f32 %v2799, %v2796
          %v2811 = vmul.f32 %v2799, %v2797
          %v2812 = vmul.f32 %v2799, %v2798
          %v2813 = vadd.f32 %v2771, %v2800
          %v2814 = vadd.f32 %v2772, %v2801
          %v2815 = vadd.f32 %v2773, %v2802
          %v2816 = vadd.f32 %v2774, %v2803
          %v2817 = vadd.f32 %v2775, %v2804
          %v2818 = vadd.f32 %v2776, %v2805
          %v2819 = vadd.f32 %v2777, %v2806
          %v2820 = vadd.f32 %v2778, %v2807
          %v2821 = vadd.f32 %v2779, %v2808
          %v2822 = vadd.f32 %v2780, %v2809
          %v2823 = vadd.f32 %v2781, %v2810
          %v2824 = vadd.f32 %v2782, %v2811
          %v2825 = vadd.f32 %v2783, %v2812
          %s2826 = sadd.s32 %s2028, 19
          %s2827 = sld [smem:[#allocation3 + %s2826]]
          %v2828 = vld [vmem:[%s1405] sm:$0xff]
          %v2829 = vld [vmem:[%s1405 + $0x8] sm:$0xff]
          %v2830 = vld [vmem:[%s1405 + $0x10] sm:$0xff]
          %v2831 = vld [vmem:[%s1405 + $0x18] sm:$0xff]
          %v2832 = vld [vmem:[%s1405 + $0x20] sm:$0xff]
          %v2833 = vld [vmem:[%s1405 + $0x28] sm:$0xff]
          %v2834 = vld [vmem:[%s1405 + $0x30] sm:$0xff]
          %v2835 = vld [vmem:[%s1405 + $0x38] sm:$0xff]
          %v2836 = vld [vmem:[%s1405 + $0x40] sm:$0xff]
          %v2837 = vld [vmem:[%s1405 + $0x48] sm:$0xff]
          %v2838 = vld [vmem:[%s1405 + $0x50] sm:$0xff]
          %v2839 = vld [vmem:[%s1405 + $0x58] sm:$0xff]
          %v2840 = vld [vmem:[%s1405 + $0x60] sm:$0xf]
          %v2841 = vstv %s2827
          %v2842 = vmul.f32 %v2841, %v2828
          %v2843 = vmul.f32 %v2841, %v2829
          %v2844 = vmul.f32 %v2841, %v2830
          %v2845 = vmul.f32 %v2841, %v2831
          %v2846 = vmul.f32 %v2841, %v2832
          %v2847 = vmul.f32 %v2841, %v2833
          %v2848 = vmul.f32 %v2841, %v2834
          %v2849 = vmul.f32 %v2841, %v2835
          %v2850 = vmul.f32 %v2841, %v2836
          %v2851 = vmul.f32 %v2841, %v2837
          %v2852 = vmul.f32 %v2841, %v2838
          %v2853 = vmul.f32 %v2841, %v2839
          %v2854 = vmul.f32 %v2841, %v2840
          %v2855 = vadd.f32 %v2813, %v2842
          %v2856 = vadd.f32 %v2814, %v2843
          %v2857 = vadd.f32 %v2815, %v2844
          %v2858 = vadd.f32 %v2816, %v2845
          %v2859 = vadd.f32 %v2817, %v2846
          %v2860 = vadd.f32 %v2818, %v2847
          %v2861 = vadd.f32 %v2819, %v2848
          %v2862 = vadd.f32 %v2820, %v2849
          %v2863 = vadd.f32 %v2821, %v2850
          %v2864 = vadd.f32 %v2822, %v2851
          %v2865 = vadd.f32 %v2823, %v2852
          %v2866 = vadd.f32 %v2824, %v2853
          %v2867 = vadd.f32 %v2825, %v2854
          %s2868 = sadd.s32 %s2028, 20
          %s2869 = sld [smem:[#allocation3 + %s2868]]
          %v2870 = vld [vmem:[%s1484] sm:$0xff]
          %v2871 = vld [vmem:[%s1484 + $0x8] sm:$0xff]
          %v2872 = vld [vmem:[%s1484 + $0x10] sm:$0xff]
          %v2873 = vld [vmem:[%s1484 + $0x18] sm:$0xff]
          %v2874 = vld [vmem:[%s1484 + $0x20] sm:$0xff]
          %v2875 = vld [vmem:[%s1484 + $0x28] sm:$0xff]
          %v2876 = vld [vmem:[%s1484 + $0x30] sm:$0xff]
          %v2877 = vld [vmem:[%s1484 + $0x38] sm:$0xff]
          %v2878 = vld [vmem:[%s1484 + $0x40] sm:$0xff]
          %v2879 = vld [vmem:[%s1484 + $0x48] sm:$0xff]
          %v2880 = vld [vmem:[%s1484 + $0x50] sm:$0xff]
          %v2881 = vld [vmem:[%s1484 + $0x58] sm:$0xff]
          %v2882 = vld [vmem:[%s1484 + $0x60] sm:$0xf]
          %v2883 = vstv %s2869
          %v2884 = vmul.f32 %v2883, %v2870
          %v2885 = vmul.f32 %v2883, %v2871
          %v2886 = vmul.f32 %v2883, %v2872
          %v2887 = vmul.f32 %v2883, %v2873
          %v2888 = vmul.f32 %v2883, %v2874
          %v2889 = vmul.f32 %v2883, %v2875
          %v2890 = vmul.f32 %v2883, %v2876
          %v2891 = vmul.f32 %v2883, %v2877
          %v2892 = vmul.f32 %v2883, %v2878
          %v2893 = vmul.f32 %v2883, %v2879
          %v2894 = vmul.f32 %v2883, %v2880
          %v2895 = vmul.f32 %v2883, %v2881
          %v2896 = vmul.f32 %v2883, %v2882
          %v2897 = vadd.f32 %v2855, %v2884
          %v2898 = vadd.f32 %v2856, %v2885
          %v2899 = vadd.f32 %v2857, %v2886
          %v2900 = vadd.f32 %v2858, %v2887
          %v2901 = vadd.f32 %v2859, %v2888
          %v2902 = vadd.f32 %v2860, %v2889
          %v2903 = vadd.f32 %v2861, %v2890
          %v2904 = vadd.f32 %v2862, %v2891
          %v2905 = vadd.f32 %v2863, %v2892
          %v2906 = vadd.f32 %v2864, %v2893
          %v2907 = vadd.f32 %v2865, %v2894
          %v2908 = vadd.f32 %v2866, %v2895
          %v2909 = vadd.f32 %v2867, %v2896
          %s2910 = sadd.s32 %s2028, 21
          %s2911 = sld [smem:[#allocation3 + %s2910]]
          %v2912 = vld [vmem:[%s1511] sm:$0xff]
          %v2913 = vld [vmem:[%s1511 + $0x8] sm:$0xff]
          %v2914 = vld [vmem:[%s1511 + $0x10] sm:$0xff]
          %v2915 = vld [vmem:[%s1511 + $0x18] sm:$0xff]
          %v2916 = vld [vmem:[%s1511 + $0x20] sm:$0xff]
          %v2917 = vld [vmem:[%s1511 + $0x28] sm:$0xff]
          %v2918 = vld [vmem:[%s1511 + $0x30] sm:$0xff]
          %v2919 = vld [vmem:[%s1511 + $0x38] sm:$0xff]
          %v2920 = vld [vmem:[%s1511 + $0x40] sm:$0xff]
          %v2921 = vld [vmem:[%s1511 + $0x48] sm:$0xff]
          %v2922 = vld [vmem:[%s1511 + $0x50] sm:$0xff]
          %v2923 = vld [vmem:[%s1511 + $0x58] sm:$0xff]
          %v2924 = vld [vmem:[%s1511 + $0x60] sm:$0xf]
          %v2925 = vstv %s2911
          %v2926 = vmul.f32 %v2925, %v2912
          %v2927 = vmul.f32 %v2925, %v2913
          %v2928 = vmul.f32 %v2925, %v2914
          %v2929 = vmul.f32 %v2925, %v2915
          %v2930 = vmul.f32 %v2925, %v2916
          %v2931 = vmul.f32 %v2925, %v2917
          %v2932 = vmul.f32 %v2925, %v2918
          %v2933 = vmul.f32 %v2925, %v2919
          %v2934 = vmul.f32 %v2925, %v2920
          %v2935 = vmul.f32 %v2925, %v2921
          %v2936 = vmul.f32 %v2925, %v2922
          %v2937 = vmul.f32 %v2925, %v2923
          %v2938 = vmul.f32 %v2925, %v2924
          %v2939 = vadd.f32 %v2897, %v2926
          %v2940 = vadd.f32 %v2898, %v2927
          %v2941 = vadd.f32 %v2899, %v2928
          %v2942 = vadd.f32 %v2900, %v2929
          %v2943 = vadd.f32 %v2901, %v2930
          %v2944 = vadd.f32 %v2902, %v2931
          %v2945 = vadd.f32 %v2903, %v2932
          %v2946 = vadd.f32 %v2904, %v2933
          %v2947 = vadd.f32 %v2905, %v2934
          %v2948 = vadd.f32 %v2906, %v2935
          %v2949 = vadd.f32 %v2907, %v2936
          %v2950 = vadd.f32 %v2908, %v2937
          %v2951 = vadd.f32 %v2909, %v2938
          %s2952 = sadd.s32 %s2028, 22
          %s2953 = sld [smem:[#allocation3 + %s2952]]
          %v2954 = vld [vmem:[%s1590] sm:$0xff]
          %v2955 = vld [vmem:[%s1590 + $0x8] sm:$0xff]
          %v2956 = vld [vmem:[%s1590 + $0x10] sm:$0xff]
          %v2957 = vld [vmem:[%s1590 + $0x18] sm:$0xff]
          %v2958 = vld [vmem:[%s1590 + $0x20] sm:$0xff]
          %v2959 = vld [vmem:[%s1590 + $0x28] sm:$0xff]
          %v2960 = vld [vmem:[%s1590 + $0x30] sm:$0xff]
          %v2961 = vld [vmem:[%s1590 + $0x38] sm:$0xff]
          %v2962 = vld [vmem:[%s1590 + $0x40] sm:$0xff]
          %v2963 = vld [vmem:[%s1590 + $0x48] sm:$0xff]
          %v2964 = vld [vmem:[%s1590 + $0x50] sm:$0xff]
          %v2965 = vld [vmem:[%s1590 + $0x58] sm:$0xff]
          %v2966 = vld [vmem:[%s1590 + $0x60] sm:$0xf]
          %v2967 = vstv %s2953
          %v2968 = vmul.f32 %v2967, %v2954
          %v2969 = vmul.f32 %v2967, %v2955
          %v2970 = vmul.f32 %v2967, %v2956
          %v2971 = vmul.f32 %v2967, %v2957
          %v2972 = vmul.f32 %v2967, %v2958
          %v2973 = vmul.f32 %v2967, %v2959
          %v2974 = vmul.f32 %v2967, %v2960
          %v2975 = vmul.f32 %v2967, %v2961
          %v2976 = vmul.f32 %v2967, %v2962
          %v2977 = vmul.f32 %v2967, %v2963
          %v2978 = vmul.f32 %v2967, %v2964
          %v2979 = vmul.f32 %v2967, %v2965
          %v2980 = vmul.f32 %v2967, %v2966
          %v2981 = vadd.f32 %v2939, %v2968
          %v2982 = vadd.f32 %v2940, %v2969
          %v2983 = vadd.f32 %v2941, %v2970
          %v2984 = vadd.f32 %v2942, %v2971
          %v2985 = vadd.f32 %v2943, %v2972
          %v2986 = vadd.f32 %v2944, %v2973
          %v2987 = vadd.f32 %v2945, %v2974
          %v2988 = vadd.f32 %v2946, %v2975
          %v2989 = vadd.f32 %v2947, %v2976
          %v2990 = vadd.f32 %v2948, %v2977
          %v2991 = vadd.f32 %v2949, %v2978
          %v2992 = vadd.f32 %v2950, %v2979
          %v2993 = vadd.f32 %v2951, %v2980
          %s2994 = sadd.s32 %s2028, 23
          %s2995 = sld [smem:[#allocation3 + %s2994]]
          %v2996 = vld [vmem:[%s1669] sm:$0xff]
          %v2997 = vld [vmem:[%s1669 + $0x8] sm:$0xff]
          %v2998 = vld [vmem:[%s1669 + $0x10] sm:$0xff]
          %v2999 = vld [vmem:[%s1669 + $0x18] sm:$0xff]
          %v3000 = vld [vmem:[%s1669 + $0x20] sm:$0xff]
          %v3001 = vld [vmem:[%s1669 + $0x28] sm:$0xff]
          %v3002 = vld [vmem:[%s1669 + $0x30] sm:$0xff]
          %v3003 = vld [vmem:[%s1669 + $0x38] sm:$0xff]
          %v3004 = vld [vmem:[%s1669 + $0x40] sm:$0xff]
          %v3005 = vld [vmem:[%s1669 + $0x48] sm:$0xff]
          %v3006 = vld [vmem:[%s1669 + $0x50] sm:$0xff]
          %v3007 = vld [vmem:[%s1669 + $0x58] sm:$0xff]
          %v3008 = vld [vmem:[%s1669 + $0x60] sm:$0xf]
          %v3009 = vstv %s2995
          %v3010 = vmul.f32 %v3009, %v2996
          %v3011 = vmul.f32 %v3009, %v2997
          %v3012 = vmul.f32 %v3009, %v2998
          %v3013 = vmul.f32 %v3009, %v2999
          %v3014 = vmul.f32 %v3009, %v3000
          %v3015 = vmul.f32 %v3009, %v3001
          %v3016 = vmul.f32 %v3009, %v3002
          %v3017 = vmul.f32 %v3009, %v3003
          %v3018 = vmul.f32 %v3009, %v3004
          %v3019 = vmul.f32 %v3009, %v3005
          %v3020 = vmul.f32 %v3009, %v3006
          %v3021 = vmul.f32 %v3009, %v3007
          %v3022 = vmul.f32 %v3009, %v3008
          %v3023 = vadd.f32 %v2981, %v3010
          %v3024 = vadd.f32 %v2982, %v3011
          %v3025 = vadd.f32 %v2983, %v3012
          %v3026 = vadd.f32 %v2984, %v3013
          %v3027 = vadd.f32 %v2985, %v3014
          %v3028 = vadd.f32 %v2986, %v3015
          %v3029 = vadd.f32 %v2987, %v3016
          %v3030 = vadd.f32 %v2988, %v3017
          %v3031 = vadd.f32 %v2989, %v3018
          %v3032 = vadd.f32 %v2990, %v3019
          %v3033 = vadd.f32 %v2991, %v3020
          %v3034 = vadd.f32 %v2992, %v3021
          %v3035 = vadd.f32 %v2993, %v3022
          %s3036 = sadd.s32 %s2028, 24
          %s3037 = sld [smem:[#allocation3 + %s3036]]
          %v3038 = vld [vmem:[%s1696] sm:$0xff]
          %v3039 = vld [vmem:[%s1696 + $0x8] sm:$0xff]
          %v3040 = vld [vmem:[%s1696 + $0x10] sm:$0xff]
          %v3041 = vld [vmem:[%s1696 + $0x18] sm:$0xff]
          %v3042 = vld [vmem:[%s1696 + $0x20] sm:$0xff]
          %v3043 = vld [vmem:[%s1696 + $0x28] sm:$0xff]
          %v3044 = vld [vmem:[%s1696 + $0x30] sm:$0xff]
          %v3045 = vld [vmem:[%s1696 + $0x38] sm:$0xff]
          %v3046 = vld [vmem:[%s1696 + $0x40] sm:$0xff]
          %v3047 = vld [vmem:[%s1696 + $0x48] sm:$0xff]
          %v3048 = vld [vmem:[%s1696 + $0x50] sm:$0xff]
          %v3049 = vld [vmem:[%s1696 + $0x58] sm:$0xff]
          %v3050 = vld [vmem:[%s1696 + $0x60] sm:$0xf]
          %v3051 = vstv %s3037
          %v3052 = vmul.f32 %v3051, %v3038
          %v3053 = vmul.f32 %v3051, %v3039
          %v3054 = vmul.f32 %v3051, %v3040
          %v3055 = vmul.f32 %v3051, %v3041
          %v3056 = vmul.f32 %v3051, %v3042
          %v3057 = vmul.f32 %v3051, %v3043
          %v3058 = vmul.f32 %v3051, %v3044
          %v3059 = vmul.f32 %v3051, %v3045
          %v3060 = vmul.f32 %v3051, %v3046
          %v3061 = vmul.f32 %v3051, %v3047
          %v3062 = vmul.f32 %v3051, %v3048
          %v3063 = vmul.f32 %v3051, %v3049
          %v3064 = vmul.f32 %v3051, %v3050
          %v3065 = vadd.f32 %v3023, %v3052
          %v3066 = vadd.f32 %v3024, %v3053
          %v3067 = vadd.f32 %v3025, %v3054
          %v3068 = vadd.f32 %v3026, %v3055
          %v3069 = vadd.f32 %v3027, %v3056
          %v3070 = vadd.f32 %v3028, %v3057
          %v3071 = vadd.f32 %v3029, %v3058
          %v3072 = vadd.f32 %v3030, %v3059
          %v3073 = vadd.f32 %v3031, %v3060
          %v3074 = vadd.f32 %v3032, %v3061
          %v3075 = vadd.f32 %v3033, %v3062
          %v3076 = vadd.f32 %v3034, %v3063
          %v3077 = vadd.f32 %v3035, %v3064
          %s3078 = sadd.s32 %s2028, 25
          %s3079 = sld [smem:[#allocation3 + %s3078]]
          %v3080 = vld [vmem:[%s1775] sm:$0xff]
          %v3081 = vld [vmem:[%s1775 + $0x8] sm:$0xff]
          %v3082 = vld [vmem:[%s1775 + $0x10] sm:$0xff]
          %v3083 = vld [vmem:[%s1775 + $0x18] sm:$0xff]
          %v3084 = vld [vmem:[%s1775 + $0x20] sm:$0xff]
          %v3085 = vld [vmem:[%s1775 + $0x28] sm:$0xff]
          %v3086 = vld [vmem:[%s1775 + $0x30] sm:$0xff]
          %v3087 = vld [vmem:[%s1775 + $0x38] sm:$0xff]
          %v3088 = vld [vmem:[%s1775 + $0x40] sm:$0xff]
          %v3089 = vld [vmem:[%s1775 + $0x48] sm:$0xff]
          %v3090 = vld [vmem:[%s1775 + $0x50] sm:$0xff]
          %v3091 = vld [vmem:[%s1775 + $0x58] sm:$0xff]
          %v3092 = vld [vmem:[%s1775 + $0x60] sm:$0xf]
          %v3093 = vstv %s3079
          %v3094 = vmul.f32 %v3093, %v3080
          %v3095 = vmul.f32 %v3093, %v3081
          %v3096 = vmul.f32 %v3093, %v3082
          %v3097 = vmul.f32 %v3093, %v3083
          %v3098 = vmul.f32 %v3093, %v3084
          %v3099 = vmul.f32 %v3093, %v3085
          %v3100 = vmul.f32 %v3093, %v3086
          %v3101 = vmul.f32 %v3093, %v3087
          %v3102 = vmul.f32 %v3093, %v3088
          %v3103 = vmul.f32 %v3093, %v3089
          %v3104 = vmul.f32 %v3093, %v3090
          %v3105 = vmul.f32 %v3093, %v3091
          %v3106 = vmul.f32 %v3093, %v3092
          %v3107 = vadd.f32 %v3065, %v3094
          %v3108 = vadd.f32 %v3066, %v3095
          %v3109 = vadd.f32 %v3067, %v3096
          %v3110 = vadd.f32 %v3068, %v3097
          %v3111 = vadd.f32 %v3069, %v3098
          %v3112 = vadd.f32 %v3070, %v3099
          %v3113 = vadd.f32 %v3071, %v3100
          %v3114 = vadd.f32 %v3072, %v3101
          %v3115 = vadd.f32 %v3073, %v3102
          %v3116 = vadd.f32 %v3074, %v3103
          %v3117 = vadd.f32 %v3075, %v3104
          %v3118 = vadd.f32 %v3076, %v3105
          %v3119 = vadd.f32 %v3077, %v3106
          %s3120 = sadd.s32 %s2028, 26
          %s3121 = sld [smem:[#allocation3 + %s3120]]
          %v3122 = vld [vmem:[%s1854] sm:$0xff]
          %v3123 = vld [vmem:[%s1854 + $0x8] sm:$0xff]
          %v3124 = vld [vmem:[%s1854 + $0x10] sm:$0xff]
          %v3125 = vld [vmem:[%s1854 + $0x18] sm:$0xff]
          %v3126 = vld [vmem:[%s1854 + $0x20] sm:$0xff]
          %v3127 = vld [vmem:[%s1854 + $0x28] sm:$0xff]
          %v3128 = vld [vmem:[%s1854 + $0x30] sm:$0xff]
          %v3129 = vld [vmem:[%s1854 + $0x38] sm:$0xff]
          %v3130 = vld [vmem:[%s1854 + $0x40] sm:$0xff]
          %v3131 = vld [vmem:[%s1854 + $0x48] sm:$0xff]
          %v3132 = vld [vmem:[%s1854 + $0x50] sm:$0xff]
          %v3133 = vld [vmem:[%s1854 + $0x58] sm:$0xff]
          %v3134 = vld [vmem:[%s1854 + $0x60] sm:$0xf]
          %v3135 = vstv %s3121
          %v3136 = vmul.f32 %v3135, %v3122
          %v3137 = vmul.f32 %v3135, %v3123
          %v3138 = vmul.f32 %v3135, %v3124
          %v3139 = vmul.f32 %v3135, %v3125
          %v3140 = vmul.f32 %v3135, %v3126
          %v3141 = vmul.f32 %v3135, %v3127
          %v3142 = vmul.f32 %v3135, %v3128
          %v3143 = vmul.f32 %v3135, %v3129
          %v3144 = vmul.f32 %v3135, %v3130
          %v3145 = vmul.f32 %v3135, %v3131
          %v3146 = vmul.f32 %v3135, %v3132
          %v3147 = vmul.f32 %v3135, %v3133
          %v3148 = vmul.f32 %v3135, %v3134
          %v3149 = vadd.f32 %v3107, %v3136
          %v3150 = vadd.f32 %v3108, %v3137
          %v3151 = vadd.f32 %v3109, %v3138
          %v3152 = vadd.f32 %v3110, %v3139
          %v3153 = vadd.f32 %v3111, %v3140
          %v3154 = vadd.f32 %v3112, %v3141
          %v3155 = vadd.f32 %v3113, %v3142
          %v3156 = vadd.f32 %v3114, %v3143
          %v3157 = vadd.f32 %v3115, %v3144
          %v3158 = vadd.f32 %v3116, %v3145
          %v3159 = vadd.f32 %v3117, %v3146
          %v3160 = vadd.f32 %v3118, %v3147
          %v3161 = vadd.f32 %v3119, %v3148
          %v3162 = vmax.f32 %v3149, 0.0
          %v3163 = vmax.f32 %v3150, 0.0
          %v3164 = vmax.f32 %v3151, 0.0
          %v3165 = vmax.f32 %v3152, 0.0
          %v3166 = vmax.f32 %v3153, 0.0
          %v3167 = vmax.f32 %v3154, 0.0
          %v3168 = vmax.f32 %v3155, 0.0
          %v3169 = vmax.f32 %v3156, 0.0
          %v3170 = vmax.f32 %v3157, 0.0
          %v3171 = vmax.f32 %v3158, 0.0
          %v3172 = vmax.f32 %v3159, 0.0
          %v3173 = vmax.f32 %v3160, 0.0
          %v3174 = vmax.f32 %v3161, 0.0
          %v3176 = vsel %vm213, %v3162, 0
          %v3179 = vsel %vm213, %v3163, 0
          %v3182 = vsel %vm213, %v3164, 0
          %v3185 = vsel %vm213, %v3165, 0
          %v3188 = vsel %vm213, %v3166, 0
          %v3191 = vsel %vm213, %v3167, 0
          %v3194 = vsel %vm213, %v3168, 0
          %v3197 = vsel %vm213, %v3169, 0
          %v3200 = vsel %vm213, %v3170, 0
          %v3203 = vsel %vm213, %v3171, 0
          %v3206 = vsel %vm213, %v3172, 0
          %v3209 = vsel %vm213, %v3173, 0
          %v3212 = vsel %vm213, %v3174, 0
          %vm3214 = vcmask 1043456
          %v3216 = vsel %vm3214, %v1923, 0
          %3218 = vmatpush.msra.mxu0 0.0
          %3219 = vmatpush.msra.mxu0 0.0
          %3220 = vmatpush.msra.mxu0 0.0
          %3221 = vmatpush.msra.mxu0 %v3216
          %3222 = vmatpush.msra.mxu0 %v1922
          %3223 = vmatpush.msra.mxu0 %v1921
          %3224 = vmatpush.msra.mxu0 %v1920
          %3225 = vmatpush.msra.mxu0 %v1919
          %3226 = vmatpush.msra.mxu0 %v1918
          %3227 = vmatpush.msra.mxu0 %v1917
          %3228 = vmatpush.msra.mxu0 %v1916
          %3229 = vmatpush.msra.mxu0 %v1915
          %3230 = vmatpush.msra.mxu0 %v1914
          %3231 = vmatpush.msra.mxu0 %v1913
          %3232 = vmatpush.msra.mxu0 %v1912
          %3233 = vmatpush.msra.mxu0 %v1911
          %3234 = vmatmul.f32.gmra.mxu0 %v3176
          %v3235 = vpop.f32.mrf.mxu0
          %v3236 = vadd.f32 0.0, %v3235
          %3237 = vmatmul.f32.gmra.mxu0 %v3179
          %v3238 = vpop.f32.mrf.mxu0
          %v3239 = vadd.f32 0.0, %v3238
          %3240 = vmatmul.f32.gmra.mxu0 %v3182
          %v3241 = vpop.f32.mrf.mxu0
          %v3242 = vadd.f32 0.0, %v3241
          %3243 = vmatmul.f32.gmra.mxu0 %v3185
          %v3244 = vpop.f32.mrf.mxu0
          %v3245 = vadd.f32 0.0, %v3244
          %3246 = vmatmul.f32.gmra.mxu0 %v3188
          %v3247 = vpop.f32.mrf.mxu0
          %v3248 = vadd.f32 0.0, %v3247
          %3249 = vmatmul.f32.gmra.mxu0 %v3191
          %v3250 = vpop.f32.mrf.mxu0
          %v3251 = vadd.f32 0.0, %v3250
          %3252 = vmatmul.f32.gmra.mxu0 %v3194
          %v3253 = vpop.f32.mrf.mxu0
          %v3254 = vadd.f32 0.0, %v3253
          %3255 = vmatmul.f32.gmra.mxu0 %v3197
          %v3256 = vpop.f32.mrf.mxu0
          %v3257 = vadd.f32 0.0, %v3256
          %3258 = vmatmul.f32.gmra.mxu0 %v3200
          %v3259 = vpop.f32.mrf.mxu0
          %v3260 = vadd.f32 0.0, %v3259
          %3261 = vmatmul.f32.gmra.mxu0 %v3203
          %v3262 = vpop.f32.mrf.mxu0
          %v3263 = vadd.f32 0.0, %v3262
          %3264 = vmatmul.f32.gmra.mxu0 %v3206
          %v3265 = vpop.f32.mrf.mxu0
          %v3266 = vadd.f32 0.0, %v3265
          %3267 = vmatmul.f32.gmra.mxu0 %v3209
          %v3268 = vpop.f32.mrf.mxu0
          %v3269 = vadd.f32 0.0, %v3268
          %3270 = vmatmul.f32.gmra.mxu0 %v3212
          %v3271 = vpop.f32.mrf.mxu0
          %v3272 = vadd.f32 0.0, %v3271
          %3273 = vdwg.mxu0
          %v3275 = vsel %vm3214, %v1963, 0
          %3277 = vmatpush.msra.mxu0 0.0
          %3278 = vmatpush.msra.mxu0 0.0
          %3279 = vmatpush.msra.mxu0 0.0
          %3280 = vmatpush.msra.mxu0 %v3275
          %3281 = vmatpush.msra.mxu0 %v1962
          %3282 = vmatpush.msra.mxu0 %v1961
          %3283 = vmatpush.msra.mxu0 %v1960
          %3284 = vmatpush.msra.mxu0 %v1959
          %3285 = vmatpush.msra.mxu0 %v1958
          %3286 = vmatpush.msra.mxu0 %v1957
          %3287 = vmatpush.msra.mxu0 %v1956
          %3288 = vmatpush.msra.mxu0 %v1955
          %3289 = vmatpush.msra.mxu0 %v1954
          %3290 = vmatpush.msra.mxu0 %v1953
          %3291 = vmatpush.msra.mxu0 %v1952
          %3292 = vmatpush.msra.mxu0 %v1951
          %3293 = vmatmul.f32.gmra.mxu0 %v3176
          %v3294 = vpop.f32.mrf.mxu0
          %v3295 = vadd.f32 0.0, %v3294
          %3296 = vmatmul.f32.gmra.mxu0 %v3179
          %v3297 = vpop.f32.mrf.mxu0
          %v3298 = vadd.f32 0.0, %v3297
          %3299 = vmatmul.f32.gmra.mxu0 %v3182
          %v3300 = vpop.f32.mrf.mxu0
          %v3301 = vadd.f32 0.0, %v3300
          %3302 = vmatmul.f32.gmra.mxu0 %v3185
          %v3303 = vpop.f32.mrf.mxu0
          %v3304 = vadd.f32 0.0, %v3303
          %3305 = vmatmul.f32.gmra.mxu0 %v3188
          %v3306 = vpop.f32.mrf.mxu0
          %v3307 = vadd.f32 0.0, %v3306
          %3308 = vmatmul.f32.gmra.mxu0 %v3191
          %v3309 = vpop.f32.mrf.mxu0
          %v3310 = vadd.f32 0.0, %v3309
          %3311 = vmatmul.f32.gmra.mxu0 %v3194
          %v3312 = vpop.f32.mrf.mxu0
          %v3313 = vadd.f32 0.0, %v3312
          %3314 = vmatmul.f32.gmra.mxu0 %v3197
          %v3315 = vpop.f32.mrf.mxu0
          %v3316 = vadd.f32 0.0, %v3315
          %3317 = vmatmul.f32.gmra.mxu0 %v3200
          %v3318 = vpop.f32.mrf.mxu0
          %v3319 = vadd.f32 0.0, %v3318
          %3320 = vmatmul.f32.gmra.mxu0 %v3203
          %v3321 = vpop.f32.mrf.mxu0
          %v3322 = vadd.f32 0.0, %v3321
          %3323 = vmatmul.f32.gmra.mxu0 %v3206
          %v3324 = vpop.f32.mrf.mxu0
          %v3325 = vadd.f32 0.0, %v3324
          %3326 = vmatmul.f32.gmra.mxu0 %v3209
          %v3327 = vpop.f32.mrf.mxu0
          %v3328 = vadd.f32 0.0, %v3327
          %3329 = vmatmul.f32.gmra.mxu0 %v3212
          %v3330 = vpop.f32.mrf.mxu0
          %v3331 = vadd.f32 0.0, %v3330
          %3332 = vdwg.mxu0
          %v3333 = vmax.f32 %v3236, %v3295
          %v3334 = vmax.f32 %v3239, %v3298
          %v3335 = vmax.f32 %v3242, %v3301
          %v3336 = vmax.f32 %v3245, %v3304
          %v3337 = vmax.f32 %v3248, %v3307
          %v3338 = vmax.f32 %v3251, %v3310
          %v3339 = vmax.f32 %v3254, %v3313
          %v3340 = vmax.f32 %v3257, %v3316
          %v3341 = vmax.f32 %v3260, %v3319
          %v3342 = vmax.f32 %v3263, %v3322
          %v3343 = vmax.f32 %v3266, %v3325
          %v3344 = vmax.f32 %v3269, %v3328
          %v3345 = vmax.f32 %v3272, %v3331
          %v3347 = vsel %vm213, %v1985, 0
          %v3350 = vsel %vm213, %v1986, 0
          %v3353 = vsel %vm213, %v1987, 0
          %v3356 = vsel %vm213, %v1988, 0
          %v3359 = vsel %vm213, %v1989, 0
          %v3362 = vsel %vm213, %v1990, 0
          %v3365 = vsel %vm213, %v1991, 0
          %v3368 = vsel %vm3214, %v3345, 0
          %3370 = vmatpush.msra.mxu0 0.0
          %3371 = vmatpush.msra.mxu0 0.0
          %3372 = vmatpush.msra.mxu0 0.0
          %3373 = vmatpush.msra.mxu0 %v3368
          %3374 = vmatpush.msra.mxu0 %v3344
          %3375 = vmatpush.msra.mxu0 %v3343
          %3376 = vmatpush.msra.mxu0 %v3342
          %3377 = vmatpush.msra.mxu0 %v3341
          %3378 = vmatpush.msra.mxu0 %v3340
          %3379 = vmatpush.msra.mxu0 %v3339
          %3380 = vmatpush.msra.mxu0 %v3338
          %3381 = vmatpush.msra.mxu0 %v3337
          %3382 = vmatpush.msra.mxu0 %v3336
          %3383 = vmatpush.msra.mxu0 %v3335
          %3384 = vmatpush.msra.mxu0 %v3334
          %3385 = vmatpush.msra.mxu0 %v3333
          %3386 = vmatmul.f32.gmra.mxu0 %v3347
          %v3387 = vpop.f32.mrf.mxu0
          %v3388 = vadd.f32 0.0, %v3387
          %3389 = vmatmul.f32.gmra.mxu0 %v3350
          %v3390 = vpop.f32.mrf.mxu0
          %v3391 = vadd.f32 0.0, %v3390
          %3392 = vmatmul.f32.gmra.mxu0 %v3353
          %v3393 = vpop.f32.mrf.mxu0
          %v3394 = vadd.f32 0.0, %v3393
          %3395 = vmatmul.f32.gmra.mxu0 %v3356
          %v3396 = vpop.f32.mrf.mxu0
          %v3397 = vadd.f32 0.0, %v3396
          %3398 = vmatmul.f32.gmra.mxu0 %v3359
          %v3399 = vpop.f32.mrf.mxu0
          %v3400 = vadd.f32 0.0, %v3399
          %3401 = vmatmul.f32.gmra.mxu0 %v3362
          %v3402 = vpop.f32.mrf.mxu0
          %v3403 = vadd.f32 0.0, %v3402
          %3404 = vmatmul.f32.gmra.mxu0 %v3365
          %v3405 = vpop.f32.mrf.mxu0
          %v3406 = vadd.f32 0.0, %v3405
          %3407 = vdwg.mxu0
          %v3409 = vsel %vm213, %v2013, 0
          %v3412 = vsel %vm213, %v2014, 0
          %v3415 = vsel %vm213, %v2015, 0
          %v3418 = vsel %vm213, %v2016, 0
          %v3421 = vsel %vm213, %v2017, 0
          %v3424 = vsel %vm213, %v2018, 0
          %v3427 = vsel %vm213, %v2019, 0
          %3429 = vmatpush.msra.mxu0 0.0
          %3430 = vmatpush.msra.mxu0 0.0
          %3431 = vmatpush.msra.mxu0 0.0
          %3432 = vmatpush.msra.mxu0 %v3368
          %3433 = vmatpush.msra.mxu0 %v3344
          %3434 = vmatpush.msra.mxu0 %v3343
          %3435 = vmatpush.msra.mxu0 %v3342
          %3436 = vmatpush.msra.mxu0 %v3341
          %3437 = vmatpush.msra.mxu0 %v3340
          %3438 = vmatpush.msra.mxu0 %v3339
          %3439 = vmatpush.msra.mxu0 %v3338
          %3440 = vmatpush.msra.mxu0 %v3337
          %3441 = vmatpush.msra.mxu0 %v3336
          %3442 = vmatpush.msra.mxu0 %v3335
          %3443 = vmatpush.msra.mxu0 %v3334
          %3444 = vmatpush.msra.mxu0 %v3333
          %3445 = vmatmul.f32.gmra.mxu0 %v3409
          %v3446 = vpop.f32.mrf.mxu0
          %v3447 = vadd.f32 0.0, %v3446
          %3448 = vmatmul.f32.gmra.mxu0 %v3412
          %v3449 = vpop.f32.mrf.mxu0
          %v3450 = vadd.f32 0.0, %v3449
          %3451 = vmatmul.f32.gmra.mxu0 %v3415
          %v3452 = vpop.f32.mrf.mxu0
          %v3453 = vadd.f32 0.0, %v3452
          %3454 = vmatmul.f32.gmra.mxu0 %v3418
          %v3455 = vpop.f32.mrf.mxu0
          %v3456 = vadd.f32 0.0, %v3455
          %3457 = vmatmul.f32.gmra.mxu0 %v3421
          %v3458 = vpop.f32.mrf.mxu0
          %v3459 = vadd.f32 0.0, %v3458
          %3460 = vmatmul.f32.gmra.mxu0 %v3424
          %v3461 = vpop.f32.mrf.mxu0
          %v3462 = vadd.f32 0.0, %v3461
          %3463 = vmatmul.f32.gmra.mxu0 %v3427
          %v3464 = vpop.f32.mrf.mxu0
          %v3465 = vadd.f32 0.0, %v3464
          %3466 = vdwg.mxu0
          %v3467 = vmax.f32 %v3388, %v3447
          %v3468 = vmax.f32 %v3391, %v3450
          %v3469 = vmax.f32 %v3394, %v3453
          %v3470 = vmax.f32 %v3397, %v3456
          %v3471 = vmax.f32 %v3400, %v3459
          %v3472 = vmax.f32 %v3403, %v3462
          %v3473 = vmax.f32 %v3406, %v3465
          %s3474 = smul.u32 %s2021, 56
          %s3475 = scalar_lea.vmem %s199, %s3474
          %vm3476 = vcmask 408576
          %3477 = vst.msk [vmem:[%s3475] sm:$0xff] %vm3476, %v3467
          %3478 = vst.msk [vmem:[%s3475 + $0x8] sm:$0xff] %vm3476, %v3468
          %3479 = vst.msk [vmem:[%s3475 + $0x10] sm:$0xff] %vm3476, %v3469
          %3480 = vst.msk [vmem:[%s3475 + $0x18] sm:$0xff] %vm3476, %v3470
          %3481 = vst.msk [vmem:[%s3475 + $0x20] sm:$0xff] %vm3476, %v3471
          %3482 = vst.msk [vmem:[%s3475 + $0x28] sm:$0xff] %vm3476, %v3472
          %vm3483 = vcmask 402432
          %3484 = vst.msk [vmem:[%s3475 + $0x30] sm:$0x3] %vm3483, %v3473
        $region45: #{net1_forward.2} parent=31 // loop_footer
          %s2025 = sadd.s32 1, %s2021
        $region46: #{net1_forward.2} parent=31 // loop_footer_branch
          %2020 = sbr.rel target = $region42
        $region47: #{net1_forward.2} parent=31 // loop_exit
          _
        %p3485 = scmp.lt.s32.totalorder %s16, 1
        %s3486 = scalar_select %p3485, %s16, 1
        %s3487 = smul.addr %s3486, 112
        %s3488 = smul.addr %s3487, 8
        %s3489 = scalar_lea.vmem %s3, %s3488
        // Predicated region
        $region48: #{net1_forward.2} parent=31 // pred_check
          %p3490 = pneg %p102
        $region49: #{net1_forward.2} parent=31 // pred_check_branch
          %3492 = sbr.rel (%p3490) target = $region51
        $region50: #{net1_forward.2} parent=31 // pred_region
          _
        $region51: #{net1_forward.2} parent=31 // pred_fallthru
          _
      $region32: #{net1_forward.2} parent=5 // pred_fallthru
        _
      %p3493 = scmp.le.s32.totalorder 2, %s11
      // Predicated region
      $region52: #{net1_forward.2} parent=5 // pred_check
        %p3494 = pneg %p3493
      $region53: #{net1_forward.2} parent=5 // pred_check_branch
        %3496 = sbr.rel (%p3494) target = $region55
      $region54: #{net1_forward.2} parent=5 // pred_region
        %s3497 = ssub.s32 %s11, 2
        // Predicated region
        $region56: #{net1_forward.2} parent=54 // pred_check
          %p3498 = pneg %p108
        $region57: #{net1_forward.2} parent=54 // pred_check_branch
          %3500 = sbr.rel (%p3498) target = $region59
        $region58: #{net1_forward.2} parent=54 // pred_region
          %p3501 = scmp.lt.s32.totalorder %s17, 1
          %s3502 = scalar_select %p3501, %s17, 1
          %s3503 = smul.addr %s3502, 112
          %s3504 = smul.addr %s3503, 8
          %s3505 = scalar_lea.vmem %s3, %s3504
        $region59: #{net1_forward.2} parent=54 // pred_fallthru
          _
      $region55: #{net1_forward.2} parent=5 // pred_fallthru
        _
    $region6: #{net1_forward.2} parent=1 // loop_footer
      %s15 = sadd.s32 1, %s11
    $region7: #{net1_forward.2} parent=1 // loop_footer_branch
      %10 = sbr.rel target = $region3
    $region8: #{net1_forward.2} parent=1 // loop_exit
      _
    %3506 = vsyncpa [#allocation4], 1
    %s3507 = scalar_lea.sflag [#allocation4], 1
    %3508 = vsyncpa %s3507, 1
    %3509 = vsyncpa [#allocation6], 1

// kernel: net1_forward.3
$region0: #{net1_forward.3}
  #allocation0 [shape = 'u32[]', space=smem, size = 0x4, offset = 0x4, fixed_abs, tag = 'smem constant byte address 0x4 - core index']
  #allocation1 [shape = 'u32[72,128]{1,0:T(1,128)}', space=vmem, size = 0x9000, scoped, tag = 'internal scratch']
  #allocation2 [shape = 'f32[2,128]{1,0:T(2,128)}', space=vmem, size = 0x400, scoped, tag = 'scratch operand']
  #allocation3 [shape = 'f32[1,1]{1,0:T(1,128)S(1)}', space=vmem, size = 0x200, scoped, tag = 'scoped memory for net1_forward.3']
  %s0 = inlined_call_operand.vmem [shape: f32[2,40960], index: 0, kind: input, shape index: {}]
  %s1 = inlined_call_operand.hbm [shape: bf16[40960,128], index: 1, kind: input, shape index: {}]
  %s2 = inlined_call_operand.hbm [shape: f32[1,128], index: 2, kind: input, shape index: {}]
  %s3 = inlined_call_operand.hbm [shape: f32[1,128], index: 3, kind: input, shape index: {}]
  %s4 = inlined_call_operand.<no memory space> [shape: f32[1,1], index: 4, kind: input, shape index: {}]
  %s5 = inlined_call_operand.vmem [shape: f32[2,1], index: 5, kind: output, shape index: {}]
  %s6 = sld [smem:[#allocation0]]
  $region73: #{net1_forward.3} parent=0
    _
  %s8 = ssub.s32 1, %s6
  %s9 = scalar_select 0, %s8, %s6
  %v10 = vstv %s4
  %11 = vst [vmem:[#allocation3] sm:$0x1] %v10
  $region1: #{net1_forward.3} parent=0
    #allocation4 [shape = 'u8[4194304]{0}', space=vmem, size = 0x400000, scoped, tag = 'input window, operand 1']
    #allocation5 [shape = 's32[2]{0}', space=sflag, size = 0x8, scoped, tag = 'scoped memory for net1_forward.3']
    #allocation6 [shape = 'u8[512]{0}', space=vmem, size = 0x400, scoped, tag = 'input window, operand 2, single buffered']
    #allocation7 [shape = 's32[1]{0}', space=sflag, size = 0x4, scoped, tag = 'scoped memory for net1_forward.3']
    #allocation8 [shape = 'u8[512]{0}', space=vmem, size = 0x400, scoped, tag = 'input window, operand 3, single buffered']
    %12 = vsyncpa [#allocation5], 0
    %s13 = scalar_lea.sflag [#allocation5], 1
    %14 = vsyncpa %s13, 0
    %15 = vsyncpa [#allocation7], 0
    loop: start=0, step=1, limit=7
    $region2: #{net1_forward.3} parent=1 // loop_pre_header
      _
    $region3: #{net1_forward.3} parent=1 // loop_header
      %s17 = sphi 0, %s21
      %p18 = scmp.ge.s32.totalorder %s17, 7
      %s27 = sphi 0, %s29
      %s30 = sphi 0, %s27
      %s31 = sphi 0, %s30
      %s47 = sphi 0, %s31
      %s53 = sphi 0, %s55
      %s56 = sphi 0, %s53
      %s57 = sphi 0, %s56
      %s73 = sphi 0, %s57
      %s77 = sphi 0, %s77
      %s79 = sphi 0, %s77
      %s80 = sphi 0, %s79
      %s94 = sphi 0, %s80
      %s98 = sphi 0, %s98
      %s100 = sphi 0, %s98
      %s101 = sphi 0, %s100
      %s115 = sphi 0, %s101
      %s119 = sphi 0, %s119
      %s121 = sphi 0, %s119
      %s122 = sphi 0, %s121
      %s136 = sphi 0, %s122
      %s140 = sphi 0, %s140
      %s142 = sphi 0, %s140
      %s143 = sphi 0, %s142
      %s157 = sphi 0, %s143
    $region4: #{net1_forward.3} parent=1 // loop_header_branch
      %20 = sbr.rel (%p18) target = $region8
    $region5: #{net1_forward.3} parent=1 // loop_body
      %s22 = ssub.s32 %s17, 1
      %s23 = ssub.s32 %s17, 2
      %s24 = sadd.s32 %s17, 1
      %s25 = ssub.s32 %s17, %s24
      %p26 = scmp.eq.s32.totalorder %s25, 0
      %s28 = sadd.s32 %s27, 1
      %s29 = scalar_select %p26, %s27, %s28
      %p32 = pneg %p26
      %p33 = scmp.eq.s32.totalorder %s17, 4
      %p34 = por %p32, %p33
      %p35 = scmp.ne.s32.totalorder %s27, %s30
      %p36 = scmp.eq.s32.totalorder %s17, 0
      %p37 = por %p35, %p36
      %p38 = scmp.ne.s32.totalorder %s27, %s30
      %p39 = scmp.eq.s32.totalorder %s22, 4
      %p40 = por %p38, %p39
      %p41 = scmp.ne.s32.totalorder %s30, %s31
      %p42 = scmp.eq.s32.totalorder %s22, 0
      %p43 = por %p41, %p42
      %p44 = scmp.ne.s32.totalorder %s30, %s31
      %p45 = scmp.eq.s32.totalorder %s23, 4
      %p46 = por %p44, %p45
      %p48 = scmp.ne.s32.totalorder %s31, %s47
      %p49 = scmp.eq.s32.totalorder %s23, 0
      %p50 = por %p48, %p49
      %s51 = ssub.s32 %s17, %s24
      %p52 = scmp.eq.s32.totalorder %s51, 0
      %s54 = sadd.s32 %s53, 1
      %s55 = scalar_select %p52, %s53, %s54
      %p58 = pneg %p52
      %p59 = scmp.eq.s32.totalorder %s17, 4
      %p60 = por %p58, %p59
      %p61 = scmp.ne.s32.totalorder %s53, %s56
      %p62 = scmp.eq.s32.totalorder %s17, 0
      %p63 = por %p61, %p62
      %p64 = scmp.ne.s32.totalorder %s53, %s56
      %p65 = scmp.eq.s32.totalorder %s22, 4
      %p66 = por %p64, %p65
      %p67 = scmp.ne.s32.totalorder %s56, %s57
      %p68 = scmp.eq.s32.totalorder %s22, 0
      %p69 = por %p67, %p68
      %p70 = scmp.ne.s32.totalorder %s56, %s57
      %p71 = scmp.eq.s32.totalorder %s23, 4
      %p72 = por %p70, %p71
      %p74 = scmp.ne.s32.totalorder %s57, %s73
      %p75 = scmp.eq.s32.totalorder %s23, 0
      %p76 = por %p74, %p75
      %s78 = sadd.s32 %s77, 1
      %p81 = scmp.eq.s32.totalorder %s17, 4
      %p82 = scmp.ne.s32.totalorder %s77, %s79
      %p83 = scmp.eq.s32.totalorder %s17, 0
      %p84 = por %p82, %p83
      %p85 = scmp.ne.s32.totalorder %s77, %s79
      %p86 = scmp.eq.s32.totalorder %s22, 4
      %p87 = por %p85, %p86
      %p88 = scmp.ne.s32.totalorder %s79, %s80
      %p89 = scmp.eq.s32.totalorder %s22, 0
      %p90 = por %p88, %p89
      %p91 = scmp.ne.s32.totalorder %s79, %s80
      %p92 = scmp.eq.s32.totalorder %s23, 4
      %p93 = por %p91, %p92
      %p95 = scmp.ne.s32.totalorder %s80, %s94
      %p96 = scmp.eq.s32.totalorder %s23, 0
      %p97 = por %p95, %p96
      %s99 = sadd.s32 %s98, 1
      %p102 = scmp.eq.s32.totalorder %s17, 4
      %p103 = scmp.ne.s32.totalorder %s98, %s100
      %p104 = scmp.eq.s32.totalorder %s17, 0
      %p105 = por %p103, %p104
      %p106 = scmp.ne.s32.totalorder %s98, %s100
      %p107 = scmp.eq.s32.totalorder %s22, 4
      %p108 = por %p106, %p107
      %p109 = scmp.ne.s32.totalorder %s100, %s101
      %p110 = scmp.eq.s32.totalorder %s22, 0
      %p111 = por %p109, %p110
      %p112 = scmp.ne.s32.totalorder %s100, %s101
      %p113 = scmp.eq.s32.totalorder %s23, 4
      %p114 = por %p112, %p113
      %p116 = scmp.ne.s32.totalorder %s101, %s115
      %p117 = scmp.eq.s32.totalorder %s23, 0
      %p118 = por %p116, %p117
      %s120 = sadd.s32 %s119, 1
      %p123 = scmp.eq.s32.totalorder %s17, 4
      %p124 = scmp.ne.s32.totalorder %s119, %s121
      %p125 = scmp.eq.s32.totalorder %s17, 0
      %p126 = por %p124, %p125
      %p127 = scmp.ne.s32.totalorder %s119, %s121
      %p128 = scmp.eq.s32.totalorder %s22, 4
      %p129 = por %p127, %p128
      %p130 = scmp.ne.s32.totalorder %s121, %s122
      %p131 = scmp.eq.s32.totalorder %s22, 0
      %p132 = por %p130, %p131
      %p133 = scmp.ne.s32.totalorder %s121, %s122
      %p134 = scmp.eq.s32.totalorder %s23, 4
      %p135 = por %p133, %p134
      %p137 = scmp.ne.s32.totalorder %s122, %s136
      %p138 = scmp.eq.s32.totalorder %s23, 0
      %p139 = por %p137, %p138
      %s141 = sadd.s32 %s140, 1
      %p144 = scmp.eq.s32.totalorder %s17, 4
      %p145 = scmp.ne.s32.totalorder %s140, %s142
      %p146 = scmp.eq.s32.totalorder %s17, 0
      %p147 = por %p145, %p146
      %p148 = scmp.ne.s32.totalorder %s140, %s142
      %p149 = scmp.eq.s32.totalorder %s22, 4
      %p150 = por %p148, %p149
      %p151 = scmp.ne.s32.totalorder %s142, %s143
      %p152 = scmp.eq.s32.totalorder %s22, 0
      %p153 = por %p151, %p152
      %p154 = scmp.ne.s32.totalorder %s142, %s143
      %p155 = scmp.eq.s32.totalorder %s23, 4
      %p156 = por %p154, %p155
      %p158 = scmp.ne.s32.totalorder %s143, %s157
      %p159 = scmp.eq.s32.totalorder %s23, 0
      %p160 = por %p158, %p159
      %p161 = scmp.le.s32.totalorder 1, %s17
      %p162 = scmp.lt.s32.totalorder %s17, 6
      %p163 = pnand %p161, %p162
      %p164 = pneg %p163
      // Predicated region
      $region9: #{net1_forward.3} parent=5 // pred_check
        _
      $region10: #{net1_forward.3} parent=5 // pred_check_branch
        %166 = sbr.rel (%p163) target = $region12
      $region11: #{net1_forward.3} parent=5 // pred_region
        %s167 = ssub.s32 %s17, 1
        // Predicated region
        $region13: #{net1_forward.3} parent=11 // pred_check
          %p168 = pneg %p90
        $region14: #{net1_forward.3} parent=11 // pred_check_branch
          %170 = sbr.rel (%p168) target = $region16
        $region15: #{net1_forward.3} parent=11 // pred_region
          %172 = vsyncadd [#allocation7], 0
          %s174 = sshll.u32 %s2, 4
          %s175 = int_to_ptr.hbm [resolvable:$true] %s174
          %s176 = sshll.u32 [#allocation6], 4
          %s177 = int_to_ptr.vmem [resolvable:$true] %s176
          %179 = dma.hbm_to_vmem [thread:$0]  %s175, 16, %s177, [#allocation7]
        $region16: #{net1_forward.3} parent=11 // pred_fallthru
          _
        // Predicated region
        $region17: #{net1_forward.3} parent=11 // pred_check
          %p180 = pneg %p111
        $region18: #{net1_forward.3} parent=11 // pred_check_branch
          %182 = sbr.rel (%p180) target = $region20
        $region19: #{net1_forward.3} parent=11 // pred_region
          %184 = vsyncadd [#allocation7], 0
          %s186 = sshll.u32 %s3, 4
          %s187 = int_to_ptr.hbm [resolvable:$true] %s186
          %s188 = sshll.u32 [#allocation8], 4
          %s189 = int_to_ptr.vmem [resolvable:$true] %s188
          %191 = dma.hbm_to_vmem [thread:$0]  %s187, 16, %s189, [#allocation7]
        $region20: #{net1_forward.3} parent=11 // pred_fallthru
          _
        // Predicated region
        $region21: #{net1_forward.3} parent=11 // pred_check
          %p192 = pneg %p132
        $region22: #{net1_forward.3} parent=11 // pred_check_branch
          %194 = sbr.rel (%p192) target = $region24
        $region23: #{net1_forward.3} parent=11 // pred_region
          _
        $region24: #{net1_forward.3} parent=11 // pred_fallthru
          _
      $region12: #{net1_forward.3} parent=5 // pred_fallthru
        _
      %p195 = scmp.lt.s32.totalorder %s17, 5
      // Predicated region
      $region25: #{net1_forward.3} parent=5 // pred_check
        %p196 = pneg %p195
      $region26: #{net1_forward.3} parent=5 // pred_check_branch
        %198 = sbr.rel (%p196) target = $region28
      $region27: #{net1_forward.3} parent=5 // pred_region
        // Predicated region
        $region29: #{net1_forward.3} parent=27 // pred_check
          %p199 = pneg %p37
        $region30: #{net1_forward.3} parent=27 // pred_check_branch
          %201 = sbr.rel (%p199) target = $region32
        $region31: #{net1_forward.3} parent=27 // pred_region
          %s202 = smul.u32 64, %s17
          %p203 = scmp.lt.s32.totalorder %s202, 319
          %s204 = scalar_select %p203, %s202, 319
          %s205 = smul.addr %s204, 2
          %s206 = scalar_lea.vmem %s0, %s205
          %s207 = smul.u32 64, %s17
        $region32: #{net1_forward.3} parent=27 // pred_fallthru
          _
        // Predicated region
        $region33: #{net1_forward.3} parent=27 // pred_check
          %p208 = pneg %p63
        $region34: #{net1_forward.3} parent=27 // pred_check_branch
          %210 = sbr.rel (%p208) target = $region36
        $region35: #{net1_forward.3} parent=27 // pred_region
          %s211 = sand.u32 %s53, 1
          %s212 = scalar_lea.sflag [#allocation5], %s211
          %s213 = sand.u32 %s53, 1
          %s214 = smul.addr %s213, 4096
          %s215 = scalar_lea.vmem [#allocation4], %s214
          %s216 = smul.u32 1024, %s17
          %218 = vsyncadd %s212, 0
          %s219 = smul.addr %s216, 4
          %s220 = scalar_lea.hbm %s1, %s219
          %s221 = sshll.u32 %s220, 4
          %s222 = int_to_ptr.hbm [resolvable:$true] %s221
          %s223 = sshll.u32 %s215, 4
          %s224 = int_to_ptr.vmem [resolvable:$true] %s223
          %229 = dma.hbm_to_vmem [thread:$0]  %s222, 65536, %s224, %s212, 64, 64, 4
        $region36: #{net1_forward.3} parent=27 // pred_fallthru
          _
      $region28: #{net1_forward.3} parent=5 // pred_fallthru
        _
      %p230 = scmp.le.s32.totalorder 1, %s17
      %p231 = scmp.lt.s32.totalorder %s17, 6
      %p232 = pnand %p230, %p231
      %p233 = pneg %p232
      // Predicated region
      $region37: #{net1_forward.3} parent=5 // pred_check
        _
      $region38: #{net1_forward.3} parent=5 // pred_check_branch
        %235 = sbr.rel (%p232) target = $region40
      $region39: #{net1_forward.3} parent=5 // pred_region
        %s236 = ssub.s32 %s17, 1
        %s237 = sand.u32 %s56, 1
        %s238 = scalar_lea.sflag [#allocation5], %s237
        %s239 = sand.u32 %s56, 1
        %s240 = smul.addr %s239, 4096
        %s241 = scalar_lea.vmem [#allocation4], %s240
        // Predicated region
        $region41: #{net1_forward.3} parent=39 // pred_check
          %p242 = pneg %p69
        $region42: #{net1_forward.3} parent=39 // pred_check_branch
          %244 = sbr.rel (%p242) target = $region44
        $region43: #{net1_forward.3} parent=39 // pred_region
          %246 = dma.done %s238, 65536
        $region44: #{net1_forward.3} parent=39 // pred_fallthru
          _
        // Predicated region
        $region45: #{net1_forward.3} parent=39 // pred_check
          %p247 = pneg %p90
        $region46: #{net1_forward.3} parent=39 // pred_check_branch
          %249 = sbr.rel (%p247) target = $region48
        $region47: #{net1_forward.3} parent=39 // pred_region
          %251 = dma.done [#allocation7], 16
        $region48: #{net1_forward.3} parent=39 // pred_fallthru
          _
        // Predicated region
        $region49: #{net1_forward.3} parent=39 // pred_check
          %p252 = pneg %p111
        $region50: #{net1_forward.3} parent=39 // pred_check_branch
          %254 = sbr.rel (%p252) target = $region52
        $region51: #{net1_forward.3} parent=39 // pred_region
          %256 = dma.done [#allocation7], 16
        $region52: #{net1_forward.3} parent=39 // pred_fallthru
          _
        %s257 = smul.u32 64, %s22
        %p258 = scmp.lt.s32.totalorder %s257, 319
        %s259 = scalar_select %p258, %s257, 319
        %s260 = smul.addr %s259, 2
        %s261 = scalar_lea.vmem %s0, %s260
        %p262 = pneg %p43
        %p263 = pneg %p40
        %s264 = sand.u32 %s56, 1
        %s265 = scalar_lea.sflag [#allocation5], %s264
        %s266 = sand.u32 %s56, 1
        %s267 = smul.addr %s266, 4096
        %s268 = scalar_lea.vmem [#allocation4], %s267
        %p269 = pneg %p69
        %p270 = pneg %p66
        %p271 = pneg %p90
        %p272 = pneg %p87
        %p273 = pneg %p111
        %p274 = pneg %p108
        %p275 = pneg %p132
        %p276 = pneg %p129
        %p277 = pneg %p153
        %p278 = pneg %p150
        %s279 = smul.u32 64, %s22
        %p280 = scmp.lt.s32.totalorder %s279, 319
        %s281 = scalar_select %p280, %s279, 319
        %s282 = smul.addr %s281, 2
        %s283 = scalar_lea.vmem %s0, %s282
        %s284 = smul.u32 64, %s22
        %s285 = smul.u32 1024, %s22
        %p286 = scmp.eq.s32.totalorder %s22, 0
        // Predicated region
        $region53: #{net1_forward.3} parent=39 // pred_check
          %p287 = pneg %p286
        $region54: #{net1_forward.3} parent=39 // pred_check_branch
          %289 = sbr.rel (%p287) target = $region56
        $region55: #{net1_forward.3} parent=39 // pred_region
          %290 = vst [vmem:[#allocation2] sm:$0x3] 0.0
        $region56: #{net1_forward.3} parent=39 // pred_fallthru
          _
        %v291 = vld [vmem:[#allocation2] sm:$0x3]
        %v292 = vld [vmem:[%s283] sm:$0xff]
        %v293 = vld [vmem:[%s283 + $0x8] sm:$0xff]
        %v294 = vld [vmem:[%s283 + $0x10] sm:$0xff]
        %v295 = vld [vmem:[%s283 + $0x18] sm:$0xff]
        %v296 = vld [vmem:[%s283 + $0x20] sm:$0xff]
        %v297 = vld [vmem:[%s283 + $0x28] sm:$0xff]
        %v298 = vld [vmem:[%s283 + $0x30] sm:$0xff]
        %v299 = vld [vmem:[%s283 + $0x38] sm:$0xff]
        %v300 = vld [vmem:[%s283 + $0x40] sm:$0xff]
        %v301 = vld [vmem:[%s283 + $0x48] sm:$0xff]
        %v302 = vld [vmem:[%s283 + $0x50] sm:$0xff]
        %v303 = vld [vmem:[%s283 + $0x58] sm:$0xff]
        %v304 = vld [vmem:[%s283 + $0x60] sm:$0xff]
        %v305 = vld [vmem:[%s283 + $0x68] sm:$0xff]
        %v306 = vld [vmem:[%s283 + $0x70] sm:$0xff]
        %v307 = vld [vmem:[%s283 + $0x78] sm:$0xff]
        %324 = vst [vmem:[#allocation1] ss:$4 sm:$0xff] %v292
        %s325 = scalar_lea.vmem [#allocation1], 32
        %326 = vst [vmem:[%s325] ss:$4 sm:$0xff] %v293
        %v327 = vld.sshfl [vmem:[#allocation1] sm:$0xff pattern:$0x73625140]
        %v328 = vld.sshfl [vmem:[#allocation1 + $0x8] sm:$0xff pattern:$0x73625140]
        %v329 = vld.sshfl [vmem:[#allocation1 + $0x10] sm:$0xff pattern:$0x73625140]
        %v330 = vld.sshfl [vmem:[#allocation1 + $0x18] sm:$0xff pattern:$0x73625140]
        %v331 = vld.sshfl [vmem:[#allocation1 + $0x20] sm:$0xff pattern:$0x73625140]
        %v332 = vld.sshfl [vmem:[#allocation1 + $0x28] sm:$0xff pattern:$0x73625140]
        %v333 = vld.sshfl [vmem:[#allocation1 + $0x30] sm:$0xff pattern:$0x73625140]
        %v334 = vld.sshfl [vmem:[#allocation1 + $0x38] sm:$0xff pattern:$0x73625140]
        %335 = vst [vmem:[#allocation1] ss:$4 sm:$0xff] %v294
        %336 = vst [vmem:[%s325] ss:$4 sm:$0xff] %v295
        %v337 = vld.sshfl [vmem:[#allocation1] sm:$0xff pattern:$0x73625140]
        %v338 = vld.sshfl [vmem:[#allocation1 + $0x8] sm:$0xff pattern:$0x73625140]
        %v339 = vld.sshfl [vmem:[#allocation1 + $0x10] sm:$0xff pattern:$0x73625140]
        %v340 = vld.sshfl [vmem:[#allocation1 + $0x18] sm:$0xff pattern:$0x73625140]
        %v341 = vld.sshfl [vmem:[#allocation1 + $0x20] sm:$0xff pattern:$0x73625140]
        %v342 = vld.sshfl [vmem:[#allocation1 + $0x28] sm:$0xff pattern:$0x73625140]
        %v343 = vld.sshfl [vmem:[#allocation1 + $0x30] sm:$0xff pattern:$0x73625140]
        %v344 = vld.sshfl [vmem:[#allocation1 + $0x38] sm:$0xff pattern:$0x73625140]
        %345 = vst [vmem:[#allocation1] ss:$4 sm:$0xff] %v296
        %346 = vst [vmem:[%s325] ss:$4 sm:$0xff] %v297
        %v347 = vld.sshfl [vmem:[#allocation1] sm:$0xff pattern:$0x73625140]
        %v348 = vld.sshfl [vmem:[#allocation1 + $0x8] sm:$0xff pattern:$0x73625140]
        %v349 = vld.sshfl [vmem:[#allocation1 + $0x10] sm:$0xff pattern:$0x73625140]
        %v350 = vld.sshfl [vmem:[#allocation1 + $0x18] sm:$0xff pattern:$0x73625140]
        %v351 = vld.sshfl [vmem:[#allocation1 + $0x20] sm:$0xff pattern:$0x73625140]
        %v352 = vld.sshfl [vmem:[#allocation1 + $0x28] sm:$0xff pattern:$0x73625140]
        %v353 = vld.sshfl [vmem:[#allocation1 + $0x30] sm:$0xff pattern:$0x73625140]
        %v354 = vld.sshfl [vmem:[#allocation1 + $0x38] sm:$0xff pattern:$0x73625140]
        %355 = vst [vmem:[#allocation1] ss:$4 sm:$0xff] %v298
        %356 = vst [vmem:[%s325] ss:$4 sm:$0xff] %v299
        %v357 = vld.sshfl [vmem:[#allocation1] sm:$0xff pattern:$0x73625140]
        %v358 = vld.sshfl [vmem:[#allocation1 + $0x8] sm:$0xff pattern:$0x73625140]
        %v359 = vld.sshfl [vmem:[#allocation1 + $0x10] sm:$0xff pattern:$0x73625140]
        %v360 = vld.sshfl [vmem:[#allocation1 + $0x18] sm:$0xff pattern:$0x73625140]
        %v361 = vld.sshfl [vmem:[#allocation1 + $0x20] sm:$0xff pattern:$0x73625140]
        %v362 = vld.sshfl [vmem:[#allocation1 + $0x28] sm:$0xff pattern:$0x73625140]
        %v363 = vld.sshfl [vmem:[#allocation1 + $0x30] sm:$0xff pattern:$0x73625140]
        %v364 = vld.sshfl [vmem:[#allocation1 + $0x38] sm:$0xff pattern:$0x73625140]
        %365 = vst [vmem:[#allocation1] ss:$4 sm:$0xff] %v300
        %366 = vst [vmem:[%s325] ss:$4 sm:$0xff] %v301
        %v367 = vld.sshfl [vmem:[#allocation1] sm:$0xff pattern:$0x73625140]
        %v368 = vld.sshfl [vmem:[#allocation1 + $0x8] sm:$0xff pattern:$0x73625140]
        %v369 = vld.sshfl [vmem:[#allocation1 + $0x10] sm:$0xff pattern:$0x73625140]
        %v370 = vld.sshfl [vmem:[#allocation1 + $0x18] sm:$0xff pattern:$0x73625140]
        %v371 = vld.sshfl [vmem:[#allocation1 + $0x20] sm:$0xff pattern:$0x73625140]
        %v372 = vld.sshfl [vmem:[#allocation1 + $0x28] sm:$0xff pattern:$0x73625140]
        %v373 = vld.sshfl [vmem:[#allocation1 + $0x30] sm:$0xff pattern:$0x73625140]
        %v374 = vld.sshfl [vmem:[#allocation1 + $0x38] sm:$0xff pattern:$0x73625140]
        %375 = vst [vmem:[#allocation1] ss:$4 sm:$0xff] %v302
        %376 = vst [vmem:[%s325] ss:$4 sm:$0xff] %v303
        %v377 = vld.sshfl [vmem:[#allocation1] sm:$0xff pattern:$0x73625140]
        %v378 = vld.sshfl [vmem:[#allocation1 + $0x8] sm:$0xff pattern:$0x73625140]
        %v379 = vld.sshfl [vmem:[#allocation1 + $0x10] sm:$0xff pattern:$0x73625140]
        %v380 = vld.sshfl [vmem:[#allocation1 + $0x18] sm:$0xff pattern:$0x73625140]
        %v381 = vld.sshfl [vmem:[#allocation1 + $0x20] sm:$0xff pattern:$0x73625140]
        %v382 = vld.sshfl [vmem:[#allocation1 + $0x28] sm:$0xff pattern:$0x73625140]
        %v383 = vld.sshfl [vmem:[#allocation1 + $0x30] sm:$0xff pattern:$0x73625140]
        %v384 = vld.sshfl [vmem:[#allocation1 + $0x38] sm:$0xff pattern:$0x73625140]
        %385 = vst [vmem:[#allocation1] ss:$4 sm:$0xff] %v304
        %386 = vst [vmem:[%s325] ss:$4 sm:$0xff] %v305
        %v387 = vld.sshfl [vmem:[#allocation1] sm:$0xff pattern:$0x73625140]
        %v388 = vld.sshfl [vmem:[#allocation1 + $0x8] sm:$0xff pattern:$0x73625140]
        %v389 = vld.sshfl [vmem:[#allocation1 + $0x10] sm:$0xff pattern:$0x73625140]
        %v390 = vld.sshfl [vmem:[#allocation1 + $0x18] sm:$0xff pattern:$0x73625140]
        %v391 = vld.sshfl [vmem:[#allocation1 + $0x20] sm:$0xff pattern:$0x73625140]
        %v392 = vld.sshfl [vmem:[#allocation1 + $0x28] sm:$0xff pattern:$0x73625140]
        %v393 = vld.sshfl [vmem:[#allocation1 + $0x30] sm:$0xff pattern:$0x73625140]
        %v394 = vld.sshfl [vmem:[#allocation1 + $0x38] sm:$0xff pattern:$0x73625140]
        %395 = vst [vmem:[#allocation1] ss:$4 sm:$0xff] %v306
        %396 = vst [vmem:[%s325] ss:$4 sm:$0xff] %v307
        %v397 = vld.sshfl [vmem:[#allocation1] sm:$0xff pattern:$0x73625140]
        %v398 = vld.sshfl [vmem:[#allocation1 + $0x8] sm:$0xff pattern:$0x73625140]
        %v399 = vld.sshfl [vmem:[#allocation1 + $0x10] sm:$0xff pattern:$0x73625140]
        %v400 = vld.sshfl [vmem:[#allocation1 + $0x18] sm:$0xff pattern:$0x73625140]
        %v401 = vld.sshfl [vmem:[#allocation1 + $0x20] sm:$0xff pattern:$0x73625140]
        %v402 = vld.sshfl [vmem:[#allocation1 + $0x28] sm:$0xff pattern:$0x73625140]
        %v403 = vld.sshfl [vmem:[#allocation1 + $0x30] sm:$0xff pattern:$0x73625140]
        %v404 = vld.sshfl [vmem:[#allocation1 + $0x38] sm:$0xff pattern:$0x73625140]
        %v469 = vpack.c.bf16 %v327, %v327
        %v470 = vpack.c.bf16 %v328, %v328
        %v471 = vpack.c.bf16 %v329, %v329
        %v472 = vpack.c.bf16 %v330, %v330
        %v473 = vpack.c.bf16 %v331, %v331
        %v474 = vpack.c.bf16 %v332, %v332
        %v475 = vpack.c.bf16 %v333, %v333
        %v476 = vpack.c.bf16 %v334, %v334
        %v477 = vpack.c.bf16 %v337, %v337
        %v478 = vpack.c.bf16 %v338, %v338
        %v479 = vpack.c.bf16 %v339, %v339
        %v480 = vpack.c.bf16 %v340, %v340
        %v481 = vpack.c.bf16 %v341, %v341
        %v482 = vpack.c.bf16 %v342, %v342
        %v483 = vpack.c.bf16 %v343, %v343
        %v484 = vpack.c.bf16 %v344, %v344
        %v485 = vpack.c.bf16 %v347, %v347
        %v486 = vpack.c.bf16 %v348, %v348
        %v487 = vpack.c.bf16 %v349, %v349
        %v488 = vpack.c.bf16 %v350, %v350
        %v489 = vpack.c.bf16 %v351, %v351
        %v490 = vpack.c.bf16 %v352, %v352
        %v491 = vpack.c.bf16 %v353, %v353
        %v492 = vpack.c.bf16 %v354, %v354
        %v493 = vpack.c.bf16 %v357, %v357
        %v494 = vpack.c.bf16 %v358, %v358
        %v495 = vpack.c.bf16 %v359, %v359
        %v496 = vpack.c.bf16 %v360, %v360
        %v497 = vpack.c.bf16 %v361, %v361
        %v498 = vpack.c.bf16 %v362, %v362
        %v499 = vpack.c.bf16 %v363, %v363
        %v500 = vpack.c.bf16 %v364, %v364
        %v501 = vpack.c.bf16 %v367, %v367
        %v502 = vpack.c.bf16 %v368, %v368
        %v503 = vpack.c.bf16 %v369, %v369
        %v504 = vpack.c.bf16 %v370, %v370
        %v505 = vpack.c.bf16 %v371, %v371
        %v506 = vpack.c.bf16 %v372, %v372
        %v507 = vpack.c.bf16 %v373, %v373
        %v508 = vpack.c.bf16 %v374, %v374
        %v509 = vpack.c.bf16 %v377, %v377
        %v510 = vpack.c.bf16 %v378, %v378
        %v511 = vpack.c.bf16 %v379, %v379
        %v512 = vpack.c.bf16 %v380, %v380
        %v513 = vpack.c.bf16 %v381, %v381
        %v514 = vpack.c.bf16 %v382, %v382
        %v515 = vpack.c.bf16 %v383, %v383
        %v516 = vpack.c.bf16 %v384, %v384
        %v517 = vpack.c.bf16 %v387, %v387
        %v518 = vpack.c.bf16 %v388, %v388
        %v519 = vpack.c.bf16 %v389, %v389
        %v520 = vpack.c.bf16 %v390, %v390
        %v521 = vpack.c.bf16 %v391, %v391
        %v522 = vpack.c.bf16 %v392, %v392
        %v523 = vpack.c.bf16 %v393, %v393
        %v524 = vpack.c.bf16 %v394, %v394
        %v525 = vpack.c.bf16 %v397, %v397
        %v526 = vpack.c.bf16 %v398, %v398
        %v527 = vpack.c.bf16 %v399, %v399
        %v528 = vpack.c.bf16 %v400, %v400
        %v529 = vpack.c.bf16 %v401, %v401
        %v530 = vpack.c.bf16 %v402, %v402
        %v531 = vpack.c.bf16 %v403, %v403
        %v532 = vpack.c.bf16 %v404, %v404
        %v533 = vld [vmem:[%s241] sm:$0xf]
        %v534 = vld [vmem:[%s241 + $0x4] sm:$0xf]
        %v535 = vld [vmem:[%s241 + $0x8] sm:$0xf]
        %v536 = vld [vmem:[%s241 + $0xc] sm:$0xf]
        %v537 = vld [vmem:[%s241 + $0x10] sm:$0xf]
        %v538 = vld [vmem:[%s241 + $0x14] sm:$0xf]
        %v539 = vld [vmem:[%s241 + $0x18] sm:$0xf]
        %v540 = vld [vmem:[%s241 + $0x1c] sm:$0xf]
        %v541 = vld [vmem:[%s241 + $0x20] sm:$0xf]
        %v542 = vld [vmem:[%s241 + $0x24] sm:$0xf]
        %v543 = vld [vmem:[%s241 + $0x28] sm:$0xf]
        %v544 = vld [vmem:[%s241 + $0x2c] sm:$0xf]
        %v545 = vld [vmem:[%s241 + $0x30] sm:$0xf]
        %v546 = vld [vmem:[%s241 + $0x34] sm:$0xf]
        %v547 = vld [vmem:[%s241 + $0x38] sm:$0xf]
        %v548 = vld [vmem:[%s241 + $0x3c] sm:$0xf]
        %v549 = vld [vmem:[%s241 + $0x40] sm:$0xf]
        %v550 = vld [vmem:[%s241 + $0x44] sm:$0xf]
        %v551 = vld [vmem:[%s241 + $0x48] sm:$0xf]
        %v552 = vld [vmem:[%s241 + $0x4c] sm:$0xf]
        %v553 = vld [vmem:[%s241 + $0x50] sm:$0xf]
        %v554 = vld [vmem:[%s241 + $0x54] sm:$0xf]
        %v555 = vld [vmem:[%s241 + $0x58] sm:$0xf]
        %v556 = vld [vmem:[%s241 + $0x5c] sm:$0xf]
        %v557 = vld [vmem:[%s241 + $0x60] sm:$0xf]
        %v558 = vld [vmem:[%s241 + $0x64] sm:$0xf]
        %v559 = vld [vmem:[%s241 + $0x68] sm:$0xf]
        %v560 = vld [vmem:[%s241 + $0x6c] sm:$0xf]
        %v561 = vld [vmem:[%s241 + $0x70] sm:$0xf]
        %v562 = vld [vmem:[%s241 + $0x74] sm:$0xf]
        %v563 = vld [vmem:[%s241 + $0x78] sm:$0xf]
        %v564 = vld [vmem:[%s241 + $0x7c] sm:$0xf]
        %v565 = vld [vmem:[%s241 + $0x80] sm:$0xf]
        %v566 = vld [vmem:[%s241 + $0x84] sm:$0xf]
        %v567 = vld [vmem:[%s241 + $0x88] sm:$0xf]
        %v568 = vld [vmem:[%s241 + $0x8c] sm:$0xf]
        %v569 = vld [vmem:[%s241 + $0x90] sm:$0xf]
        %v570 = vld [vmem:[%s241 + $0x94] sm:$0xf]
        %v571 = vld [vmem:[%s241 + $0x98] sm:$0xf]
        %v572 = vld [vmem:[%s241 + $0x9c] sm:$0xf]
        %v573 = vld [vmem:[%s241 + $0xa0] sm:$0xf]
        %v574 = vld [vmem:[%s241 + $0xa4] sm:$0xf]
        %v575 = vld [vmem:[%s241 + $0xa8] sm:$0xf]
        %v576 = vld [vmem:[%s241 + $0xac] sm:$0xf]
        %v577 = vld [vmem:[%s241 + $0xb0] sm:$0xf]
        %v578 = vld [vmem:[%s241 + $0xb4] sm:$0xf]
        %v579 = vld [vmem:[%s241 + $0xb8] sm:$0xf]
        %v580 = vld [vmem:[%s241 + $0xbc] sm:$0xf]
        %v581 = vld [vmem:[%s241 + $0xc0] sm:$0xf]
        %v582 = vld [vmem:[%s241 + $0xc4] sm:$0xf]
        %v583 = vld [vmem:[%s241 + $0xc8] sm:$0xf]
        %v584 = vld [vmem:[%s241 + $0xcc] sm:$0xf]
        %v585 = vld [vmem:[%s241 + $0xd0] sm:$0xf]
        %v586 = vld [vmem:[%s241 + $0xd4] sm:$0xf]
        %v587 = vld [vmem:[%s241 + $0xd8] sm:$0xf]
        %v588 = vld [vmem:[%s241 + $0xdc] sm:$0xf]
        %v589 = vld [vmem:[%s241 + $0xe0] sm:$0xf]
        %v590 = vld [vmem:[%s241 + $0xe4] sm:$0xf]
        %v591 = vld [vmem:[%s241 + $0xe8] sm:$0xf]
        %v592 = vld [vmem:[%s241 + $0xec] sm:$0xf]
        %v593 = vld [vmem:[%s241 + $0xf0] sm:$0xf]
        %v594 = vld [vmem:[%s241 + $0xf4] sm:$0xf]
        %v595 = vld [vmem:[%s241 + $0xf8] sm:$0xf]
        %v596 = vld [vmem:[%s241 + $0xfc] sm:$0xf]
        %v597 = vld [vmem:[%s241 + $0x100] sm:$0xf]
        %v598 = vld [vmem:[%s241 + $0x104] sm:$0xf]
        %v599 = vld [vmem:[%s241 + $0x108] sm:$0xf]
        %v600 = vld [vmem:[%s241 + $0x10c] sm:$0xf]
        %v601 = vld [vmem:[%s241 + $0x110] sm:$0xf]
        %v602 = vld [vmem:[%s241 + $0x114] sm:$0xf]
        %v603 = vld [vmem:[%s241 + $0x118] sm:$0xf]
        %v604 = vld [vmem:[%s241 + $0x11c] sm:$0xf]
        %v605 = vld [vmem:[%s241 + $0x120] sm:$0xf]
        %v606 = vld [vmem:[%s241 + $0x124] sm:$0xf]
        %v607 = vld [vmem:[%s241 + $0x128] sm:$0xf]
        %v608 = vld [vmem:[%s241 + $0x12c] sm:$0xf]
        %v609 = vld [vmem:[%s241 + $0x130] sm:$0xf]
        %v610 = vld [vmem:[%s241 + $0x134] sm:$0xf]
        %v611 = vld [vmem:[%s241 + $0x138] sm:$0xf]
        %v612 = vld [vmem:[%s241 + $0x13c] sm:$0xf]
        %v613 = vld [vmem:[%s241 + $0x140] sm:$0xf]
        %v614 = vld [vmem:[%s241 + $0x144] sm:$0xf]
        %v615 = vld [vmem:[%s241 + $0x148] sm:$0xf]
        %v616 = vld [vmem:[%s241 + $0x14c] sm:$0xf]
        %v617 = vld [vmem:[%s241 + $0x150] sm:$0xf]
        %v618 = vld [vmem:[%s241 + $0x154] sm:$0xf]
        %v619 = vld [vmem:[%s241 + $0x158] sm:$0xf]
        %v620 = vld [vmem:[%s241 + $0x15c] sm:$0xf]
        %v621 = vld [vmem:[%s241 + $0x160] sm:$0xf]
        %v622 = vld [vmem:[%s241 + $0x164] sm:$0xf]
        %v623 = vld [vmem:[%s241 + $0x168] sm:$0xf]
        %v624 = vld [vmem:[%s241 + $0x16c] sm:$0xf]
        %v625 = vld [vmem:[%s241 + $0x170] sm:$0xf]
        %v626 = vld [vmem:[%s241 + $0x174] sm:$0xf]
        %v627 = vld [vmem:[%s241 + $0x178] sm:$0xf]
        %v628 = vld [vmem:[%s241 + $0x17c] sm:$0xf]
        %v629 = vld [vmem:[%s241 + $0x180] sm:$0xf]
        %v630 = vld [vmem:[%s241 + $0x184] sm:$0xf]
        %v631 = vld [vmem:[%s241 + $0x188] sm:$0xf]
        %v632 = vld [vmem:[%s241 + $0x18c] sm:$0xf]
        %v633 = vld [vmem:[%s241 + $0x190] sm:$0xf]
        %v634 = vld [vmem:[%s241 + $0x194] sm:$0xf]
        %v635 = vld [vmem:[%s241 + $0x198] sm:$0xf]
        %v636 = vld [vmem:[%s241 + $0x19c] sm:$0xf]
        %v637 = vld [vmem:[%s241 + $0x1a0] sm:$0xf]
        %v638 = vld [vmem:[%s241 + $0x1a4] sm:$0xf]
        %v639 = vld [vmem:[%s241 + $0x1a8] sm:$0xf]
        %v640 = vld [vmem:[%s241 + $0x1ac] sm:$0xf]
        %v641 = vld [vmem:[%s241 + $0x1b0] sm:$0xf]
        %v642 = vld [vmem:[%s241 + $0x1b4] sm:$0xf]
        %v643 = vld [vmem:[%s241 + $0x1b8] sm:$0xf]
        %v644 = vld [vmem:[%s241 + $0x1bc] sm:$0xf]
        %v645 = vld [vmem:[%s241 + $0x1c0] sm:$0xf]
        %v646 = vld [vmem:[%s241 + $0x1c4] sm:$0xf]
        %v647 = vld [vmem:[%s241 + $0x1c8] sm:$0xf]
        %v648 = vld [vmem:[%s241 + $0x1cc] sm:$0xf]
        %v649 = vld [vmem:[%s241 + $0x1d0] sm:$0xf]
        %v650 = vld [vmem:[%s241 + $0x1d4] sm:$0xf]
        %v651 = vld [vmem:[%s241 + $0x1d8] sm:$0xf]
        %v652 = vld [vmem:[%s241 + $0x1dc] sm:$0xf]
        %v653 = vld [vmem:[%s241 + $0x1e0] sm:$0xf]
        %v654 = vld [vmem:[%s241 + $0x1e4] sm:$0xf]
        %v655 = vld [vmem:[%s241 + $0x1e8] sm:$0xf]
        %v656 = vld [vmem:[%s241 + $0x1ec] sm:$0xf]
        %v657 = vld [vmem:[%s241 + $0x1f0] sm:$0xf]
        %v658 = vld [vmem:[%s241 + $0x1f4] sm:$0xf]
        %v659 = vld [vmem:[%s241 + $0x1f8] sm:$0xf]
        %v660 = vld [vmem:[%s241 + $0x1fc] sm:$0xf]
        %v661 = vld [vmem:[%s241 + $0x200] sm:$0xf]
        %v662 = vld [vmem:[%s241 + $0x204] sm:$0xf]
        %v663 = vld [vmem:[%s241 + $0x208] sm:$0xf]
        %v664 = vld [vmem:[%s241 + $0x20c] sm:$0xf]
        %v665 = vld [vmem:[%s241 + $0x210] sm:$0xf]
        %v666 = vld [vmem:[%s241 + $0x214] sm:$0xf]
        %v667 = vld [vmem:[%s241 + $0x218] sm:$0xf]
        %v668 = vld [vmem:[%s241 + $0x21c] sm:$0xf]
        %v669 = vld [vmem:[%s241 + $0x220] sm:$0xf]
        %v670 = vld [vmem:[%s241 + $0x224] sm:$0xf]
        %v671 = vld [vmem:[%s241 + $0x228] sm:$0xf]
        %v672 = vld [vmem:[%s241 + $0x22c] sm:$0xf]
        %v673 = vld [vmem:[%s241 + $0x230] sm:$0xf]
        %v674 = vld [vmem:[%s241 + $0x234] sm:$0xf]
        %v675 = vld [vmem:[%s241 + $0x238] sm:$0xf]
        %v676 = vld [vmem:[%s241 + $0x23c] sm:$0xf]
        %v677 = vld [vmem:[%s241 + $0x240] sm:$0xf]
        %v678 = vld [vmem:[%s241 + $0x244] sm:$0xf]
        %v679 = vld [vmem:[%s241 + $0x248] sm:$0xf]
        %v680 = vld [vmem:[%s241 + $0x24c] sm:$0xf]
        %v681 = vld [vmem:[%s241 + $0x250] sm:$0xf]
        %v682 = vld [vmem:[%s241 + $0x254] sm:$0xf]
        %v683 = vld [vmem:[%s241 + $0x258] sm:$0xf]
        %v684 = vld [vmem:[%s241 + $0x25c] sm:$0xf]
        %v685 = vld [vmem:[%s241 + $0x260] sm:$0xf]
        %v686 = vld [vmem:[%s241 + $0x264] sm:$0xf]
        %v687 = vld [vmem:[%s241 + $0x268] sm:$0xf]
        %v688 = vld [vmem:[%s241 + $0x26c] sm:$0xf]
        %v689 = vld [vmem:[%s241 + $0x270] sm:$0xf]
        %v690 = vld [vmem:[%s241 + $0x274] sm:$0xf]
        %v691 = vld [vmem:[%s241 + $0x278] sm:$0xf]
        %v692 = vld [vmem:[%s241 + $0x27c] sm:$0xf]
        %v693 = vld [vmem:[%s241 + $0x280] sm:$0xf]
        %v694 = vld [vmem:[%s241 + $0x284] sm:$0xf]
        %v695 = vld [vmem:[%s241 + $0x288] sm:$0xf]
        %v696 = vld [vmem:[%s241 + $0x28c] sm:$0xf]
        %v697 = vld [vmem:[%s241 + $0x290] sm:$0xf]
        %v698 = vld [vmem:[%s241 + $0x294] sm:$0xf]
        %v699 = vld [vmem:[%s241 + $0x298] sm:$0xf]
        %v700 = vld [vmem:[%s241 + $0x29c] sm:$0xf]
        %v701 = vld [vmem:[%s241 + $0x2a0] sm:$0xf]
        %v702 = vld [vmem:[%s241 + $0x2a4] sm:$0xf]
        %v703 = vld [vmem:[%s241 + $0x2a8] sm:$0xf]
        %v704 = vld [vmem:[%s241 + $0x2ac] sm:$0xf]
        %v705 = vld [vmem:[%s241 + $0x2b0] sm:$0xf]
        %v706 = vld [vmem:[%s241 + $0x2b4] sm:$0xf]
        %v707 = vld [vmem:[%s241 + $0x2b8] sm:$0xf]
        %v708 = vld [vmem:[%s241 + $0x2bc] sm:$0xf]
        %v709 = vld [vmem:[%s241 + $0x2c0] sm:$0xf]
        %v710 = vld [vmem:[%s241 + $0x2c4] sm:$0xf]
        %v711 = vld [vmem:[%s241 + $0x2c8] sm:$0xf]
        %v712 = vld [vmem:[%s241 + $0x2cc] sm:$0xf]
        %v713 = vld [vmem:[%s241 + $0x2d0] sm:$0xf]
        %v714 = vld [vmem:[%s241 + $0x2d4] sm:$0xf]
        %v715 = vld [vmem:[%s241 + $0x2d8] sm:$0xf]
        %v716 = vld [vmem:[%s241 + $0x2dc] sm:$0xf]
        %v717 = vld [vmem:[%s241 + $0x2e0] sm:$0xf]
        %v718 = vld [vmem:[%s241 + $0x2e4] sm:$0xf]
        %v719 = vld [vmem:[%s241 + $0x2e8] sm:$0xf]
        %v720 = vld [vmem:[%s241 + $0x2ec] sm:$0xf]
        %v721 = vld [vmem:[%s241 + $0x2f0] sm:$0xf]
        %v722 = vld [vmem:[%s241 + $0x2f4] sm:$0xf]
        %v723 = vld [vmem:[%s241 + $0x2f8] sm:$0xf]
        %v724 = vld [vmem:[%s241 + $0x2fc] sm:$0xf]
        %v725 = vld [vmem:[%s241 + $0x300] sm:$0xf]
        %v726 = vld [vmem:[%s241 + $0x304] sm:$0xf]
        %v727 = vld [vmem:[%s241 + $0x308] sm:$0xf]
        %v728 = vld [vmem:[%s241 + $0x30c] sm:$0xf]
        %v729 = vld [vmem:[%s241 + $0x310] sm:$0xf]
        %v730 = vld [vmem:[%s241 + $0x314] sm:$0xf]
        %v731 = vld [vmem:[%s241 + $0x318] sm:$0xf]
        %v732 = vld [vmem:[%s241 + $0x31c] sm:$0xf]
        %v733 = vld [vmem:[%s241 + $0x320] sm:$0xf]
        %v734 = vld [vmem:[%s241 + $0x324] sm:$0xf]
        %v735 = vld [vmem:[%s241 + $0x328] sm:$0xf]
        %v736 = vld [vmem:[%s241 + $0x32c] sm:$0xf]
        %v737 = vld [vmem:[%s241 + $0x330] sm:$0xf]
        %v738 = vld [vmem:[%s241 + $0x334] sm:$0xf]
        %v739 = vld [vmem:[%s241 + $0x338] sm:$0xf]
        %v740 = vld [vmem:[%s241 + $0x33c] sm:$0xf]
        %v741 = vld [vmem:[%s241 + $0x340] sm:$0xf]
        %v742 = vld [vmem:[%s241 + $0x344] sm:$0xf]
        %v743 = vld [vmem:[%s241 + $0x348] sm:$0xf]
        %v744 = vld [vmem:[%s241 + $0x34c] sm:$0xf]
        %v745 = vld [vmem:[%s241 + $0x350] sm:$0xf]
        %v746 = vld [vmem:[%s241 + $0x354] sm:$0xf]
        %v747 = vld [vmem:[%s241 + $0x358] sm:$0xf]
        %v748 = vld [vmem:[%s241 + $0x35c] sm:$0xf]
        %v749 = vld [vmem:[%s241 + $0x360] sm:$0xf]
        %v750 = vld [vmem:[%s241 + $0x364] sm:$0xf]
        %v751 = vld [vmem:[%s241 + $0x368] sm:$0xf]
        %v752 = vld [vmem:[%s241 + $0x36c] sm:$0xf]
        %v753 = vld [vmem:[%s241 + $0x370] sm:$0xf]
        %v754 = vld [vmem:[%s241 + $0x374] sm:$0xf]
        %v755 = vld [vmem:[%s241 + $0x378] sm:$0xf]
        %v756 = vld [vmem:[%s241 + $0x37c] sm:$0xf]
        %v757 = vld [vmem:[%s241 + $0x380] sm:$0xf]
        %v758 = vld [vmem:[%s241 + $0x384] sm:$0xf]
        %v759 = vld [vmem:[%s241 + $0x388] sm:$0xf]
        %v760 = vld [vmem:[%s241 + $0x38c] sm:$0xf]
        %v761 = vld [vmem:[%s241 + $0x390] sm:$0xf]
        %v762 = vld [vmem:[%s241 + $0x394] sm:$0xf]
        %v763 = vld [vmem:[%s241 + $0x398] sm:$0xf]
        %v764 = vld [vmem:[%s241 + $0x39c] sm:$0xf]
        %v765 = vld [vmem:[%s241 + $0x3a0] sm:$0xf]
        %v766 = vld [vmem:[%s241 + $0x3a4] sm:$0xf]
        %v767 = vld [vmem:[%s241 + $0x3a8] sm:$0xf]
        %v768 = vld [vmem:[%s241 + $0x3ac] sm:$0xf]
        %v769 = vld [vmem:[%s241 + $0x3b0] sm:$0xf]
        %v770 = vld [vmem:[%s241 + $0x3b4] sm:$0xf]
        %v771 = vld [vmem:[%s241 + $0x3b8] sm:$0xf]
        %v772 = vld [vmem:[%s241 + $0x3bc] sm:$0xf]
        %v773 = vld [vmem:[%s241 + $0x3c0] sm:$0xf]
        %v774 = vld [vmem:[%s241 + $0x3c4] sm:$0xf]
        %v775 = vld [vmem:[%s241 + $0x3c8] sm:$0xf]
        %v776 = vld [vmem:[%s241 + $0x3cc] sm:$0xf]
        %v777 = vld [vmem:[%s241 + $0x3d0] sm:$0xf]
        %v778 = vld [vmem:[%s241 + $0x3d4] sm:$0xf]
        %v779 = vld [vmem:[%s241 + $0x3d8] sm:$0xf]
        %v780 = vld [vmem:[%s241 + $0x3dc] sm:$0xf]
        %v781 = vld [vmem:[%s241 + $0x3e0] sm:$0xf]
        %v782 = vld [vmem:[%s241 + $0x3e4] sm:$0xf]
        %v783 = vld [vmem:[%s241 + $0x3e8] sm:$0xf]
        %v784 = vld [vmem:[%s241 + $0x3ec] sm:$0xf]
        %v785 = vld [vmem:[%s241 + $0x3f0] sm:$0xf]
        %v786 = vld [vmem:[%s241 + $0x3f4] sm:$0xf]
        %v787 = vld [vmem:[%s241 + $0x3f8] sm:$0xf]
        %v788 = vld [vmem:[%s241 + $0x3fc] sm:$0xf]
        %v789 = vld [vmem:[%s241 + $0x400] sm:$0xf]
        %v790 = vld [vmem:[%s241 + $0x404] sm:$0xf]
        %v791 = vld [vmem:[%s241 + $0x408] sm:$0xf]
        %v792 = vld [vmem:[%s241 + $0x40c] sm:$0xf]
        %v793 = vld [vmem:[%s241 + $0x410] sm:$0xf]
        %v794 = vld [vmem:[%s241 + $0x414] sm:$0xf]
        %v795 = vld [vmem:[%s241 + $0x418] sm:$0xf]
        %v796 = vld [vmem:[%s241 + $0x41c] sm:$0xf]
        %v797 = vld [vmem:[%s241 + $0x420] sm:$0xf]
        %v798 = vld [vmem:[%s241 + $0x424] sm:$0xf]
        %v799 = vld [vmem:[%s241 + $0x428] sm:$0xf]
        %v800 = vld [vmem:[%s241 + $0x42c] sm:$0xf]
        %v801 = vld [vmem:[%s241 + $0x430] sm:$0xf]
        %v802 = vld [vmem:[%s241 + $0x434] sm:$0xf]
        %v803 = vld [vmem:[%s241 + $0x438] sm:$0xf]
        %v804 = vld [vmem:[%s241 + $0x43c] sm:$0xf]
        %v805 = vld [vmem:[%s241 + $0x440] sm:$0xf]
        %v806 = vld [vmem:[%s241 + $0x444] sm:$0xf]
        %v807 = vld [vmem:[%s241 + $0x448] sm:$0xf]
        %v808 = vld [vmem:[%s241 + $0x44c] sm:$0xf]
        %v809 = vld [vmem:[%s241 + $0x450] sm:$0xf]
        %v810 = vld [vmem:[%s241 + $0x454] sm:$0xf]
        %v811 = vld [vmem:[%s241 + $0x458] sm:$0xf]
        %v812 = vld [vmem:[%s241 + $0x45c] sm:$0xf]
        %v813 = vld [vmem:[%s241 + $0x460] sm:$0xf]
        %v814 = vld [vmem:[%s241 + $0x464] sm:$0xf]
        %v815 = vld [vmem:[%s241 + $0x468] sm:$0xf]
        %v816 = vld [vmem:[%s241 + $0x46c] sm:$0xf]
        %v817 = vld [vmem:[%s241 + $0x470] sm:$0xf]
        %v818 = vld [vmem:[%s241 + $0x474] sm:$0xf]
        %v819 = vld [vmem:[%s241 + $0x478] sm:$0xf]
        %v820 = vld [vmem:[%s241 + $0x47c] sm:$0xf]
        %v821 = vld [vmem:[%s241 + $0x480] sm:$0xf]
        %v822 = vld [vmem:[%s241 + $0x484] sm:$0xf]
        %v823 = vld [vmem:[%s241 + $0x488] sm:$0xf]
        %v824 = vld [vmem:[%s241 + $0x48c] sm:$0xf]
        %v825 = vld [vmem:[%s241 + $0x490] sm:$0xf]
        %v826 = vld [vmem:[%s241 + $0x494] sm:$0xf]
        %v827 = vld [vmem:[%s241 + $0x498] sm:$0xf]
        %v828 = vld [vmem:[%s241 + $0x49c] sm:$0xf]
        %v829 = vld [vmem:[%s241 + $0x4a0] sm:$0xf]
        %v830 = vld [vmem:[%s241 + $0x4a4] sm:$0xf]
        %v831 = vld [vmem:[%s241 + $0x4a8] sm:$0xf]
        %v832 = vld [vmem:[%s241 + $0x4ac] sm:$0xf]
        %v833 = vld [vmem:[%s241 + $0x4b0] sm:$0xf]
        %v834 = vld [vmem:[%s241 + $0x4b4] sm:$0xf]
        %v835 = vld [vmem:[%s241 + $0x4b8] sm:$0xf]
        %v836 = vld [vmem:[%s241 + $0x4bc] sm:$0xf]
        %v837 = vld [vmem:[%s241 + $0x4c0] sm:$0xf]
        %v838 = vld [vmem:[%s241 + $0x4c4] sm:$0xf]
        %v839 = vld [vmem:[%s241 + $0x4c8] sm:$0xf]
        %v840 = vld [vmem:[%s241 + $0x4cc] sm:$0xf]
        %v841 = vld [vmem:[%s241 + $0x4d0] sm:$0xf]
        %v842 = vld [vmem:[%s241 + $0x4d4] sm:$0xf]
        %v843 = vld [vmem:[%s241 + $0x4d8] sm:$0xf]
        %v844 = vld [vmem:[%s241 + $0x4dc] sm:$0xf]
        %v845 = vld [vmem:[%s241 + $0x4e0] sm:$0xf]
        %v846 = vld [vmem:[%s241 + $0x4e4] sm:$0xf]
        %v847 = vld [vmem:[%s241 + $0x4e8] sm:$0xf]
        %v848 = vld [vmem:[%s241 + $0x4ec] sm:$0xf]
        %v849 = vld [vmem:[%s241 + $0x4f0] sm:$0xf]
        %v850 = vld [vmem:[%s241 + $0x4f4] sm:$0xf]
        %v851 = vld [vmem:[%s241 + $0x4f8] sm:$0xf]
        %v852 = vld [vmem:[%s241 + $0x4fc] sm:$0xf]
        %v853 = vld [vmem:[%s241 + $0x500] sm:$0xf]
        %v854 = vld [vmem:[%s241 + $0x504] sm:$0xf]
        %v855 = vld [vmem:[%s241 + $0x508] sm:$0xf]
        %v856 = vld [vmem:[%s241 + $0x50c] sm:$0xf]
        %v857 = vld [vmem:[%s241 + $0x510] sm:$0xf]
        %v858 = vld [vmem:[%s241 + $0x514] sm:$0xf]
        %v859 = vld [vmem:[%s241 + $0x518] sm:$0xf]
        %v860 = vld [vmem:[%s241 + $0x51c] sm:$0xf]
        %v861 = vld [vmem:[%s241 + $0x520] sm:$0xf]
        %v862 = vld [vmem:[%s241 + $0x524] sm:$0xf]
        %v863 = vld [vmem:[%s241 + $0x528] sm:$0xf]
        %v864 = vld [vmem:[%s241 + $0x52c] sm:$0xf]
        %v865 = vld [vmem:[%s241 + $0x530] sm:$0xf]
        %v866 = vld [vmem:[%s241 + $0x534] sm:$0xf]
        %v867 = vld [vmem:[%s241 + $0x538] sm:$0xf]
        %v868 = vld [vmem:[%s241 + $0x53c] sm:$0xf]
        %v869 = vld [vmem:[%s241 + $0x540] sm:$0xf]
        %v870 = vld [vmem:[%s241 + $0x544] sm:$0xf]
        %v871 = vld [vmem:[%s241 + $0x548] sm:$0xf]
        %v872 = vld [vmem:[%s241 + $0x54c] sm:$0xf]
        %v873 = vld [vmem:[%s241 + $0x550] sm:$0xf]
        %v874 = vld [vmem:[%s241 + $0x554] sm:$0xf]
        %v875 = vld [vmem:[%s241 + $0x558] sm:$0xf]
        %v876 = vld [vmem:[%s241 + $0x55c] sm:$0xf]
        %v877 = vld [vmem:[%s241 + $0x560] sm:$0xf]
        %v878 = vld [vmem:[%s241 + $0x564] sm:$0xf]
        %v879 = vld [vmem:[%s241 + $0x568] sm:$0xf]
        %v880 = vld [vmem:[%s241 + $0x56c] sm:$0xf]
        %v881 = vld [vmem:[%s241 + $0x570] sm:$0xf]
        %v882 = vld [vmem:[%s241 + $0x574] sm:$0xf]
        %v883 = vld [vmem:[%s241 + $0x578] sm:$0xf]
        %v884 = vld [vmem:[%s241 + $0x57c] sm:$0xf]
        %v885 = vld [vmem:[%s241 + $0x580] sm:$0xf]
        %v886 = vld [vmem:[%s241 + $0x584] sm:$0xf]
        %v887 = vld [vmem:[%s241 + $0x588] sm:$0xf]
        %v888 = vld [vmem:[%s241 + $0x58c] sm:$0xf]
        %v889 = vld [vmem:[%s241 + $0x590] sm:$0xf]
        %v890 = vld [vmem:[%s241 + $0x594] sm:$0xf]
        %v891 = vld [vmem:[%s241 + $0x598] sm:$0xf]
        %v892 = vld [vmem:[%s241 + $0x59c] sm:$0xf]
        %v893 = vld [vmem:[%s241 + $0x5a0] sm:$0xf]
        %v894 = vld [vmem:[%s241 + $0x5a4] sm:$0xf]
        %v895 = vld [vmem:[%s241 + $0x5a8] sm:$0xf]
        %v896 = vld [vmem:[%s241 + $0x5ac] sm:$0xf]
        %v897 = vld [vmem:[%s241 + $0x5b0] sm:$0xf]
        %v898 = vld [vmem:[%s241 + $0x5b4] sm:$0xf]
        %v899 = vld [vmem:[%s241 + $0x5b8] sm:$0xf]
        %v900 = vld [vmem:[%s241 + $0x5bc] sm:$0xf]
        %v901 = vld [vmem:[%s241 + $0x5c0] sm:$0xf]
        %v902 = vld [vmem:[%s241 + $0x5c4] sm:$0xf]
        %v903 = vld [vmem:[%s241 + $0x5c8] sm:$0xf]
        %v904 = vld [vmem:[%s241 + $0x5cc] sm:$0xf]
        %v905 = vld [vmem:[%s241 + $0x5d0] sm:$0xf]
        %v906 = vld [vmem:[%s241 + $0x5d4] sm:$0xf]
        %v907 = vld [vmem:[%s241 + $0x5d8] sm:$0xf]
        %v908 = vld [vmem:[%s241 + $0x5dc] sm:$0xf]
        %v909 = vld [vmem:[%s241 + $0x5e0] sm:$0xf]
        %v910 = vld [vmem:[%s241 + $0x5e4] sm:$0xf]
        %v911 = vld [vmem:[%s241 + $0x5e8] sm:$0xf]
        %v912 = vld [vmem:[%s241 + $0x5ec] sm:$0xf]
        %v913 = vld [vmem:[%s241 + $0x5f0] sm:$0xf]
        %v914 = vld [vmem:[%s241 + $0x5f4] sm:$0xf]
        %v915 = vld [vmem:[%s241 + $0x5f8] sm:$0xf]
        %v916 = vld [vmem:[%s241 + $0x5fc] sm:$0xf]
        %v917 = vld [vmem:[%s241 + $0x600] sm:$0xf]
        %v918 = vld [vmem:[%s241 + $0x604] sm:$0xf]
        %v919 = vld [vmem:[%s241 + $0x608] sm:$0xf]
        %v920 = vld [vmem:[%s241 + $0x60c] sm:$0xf]
        %v921 = vld [vmem:[%s241 + $0x610] sm:$0xf]
        %v922 = vld [vmem:[%s241 + $0x614] sm:$0xf]
        %v923 = vld [vmem:[%s241 + $0x618] sm:$0xf]
        %v924 = vld [vmem:[%s241 + $0x61c] sm:$0xf]
        %v925 = vld [vmem:[%s241 + $0x620] sm:$0xf]
        %v926 = vld [vmem:[%s241 + $0x624] sm:$0xf]
        %v927 = vld [vmem:[%s241 + $0x628] sm:$0xf]
        %v928 = vld [vmem:[%s241 + $0x62c] sm:$0xf]
        %v929 = vld [vmem:[%s241 + $0x630] sm:$0xf]
        %v930 = vld [vmem:[%s241 + $0x634] sm:$0xf]
        %v931 = vld [vmem:[%s241 + $0x638] sm:$0xf]
        %v932 = vld [vmem:[%s241 + $0x63c] sm:$0xf]
        %v933 = vld [vmem:[%s241 + $0x640] sm:$0xf]
        %v934 = vld [vmem:[%s241 + $0x644] sm:$0xf]
        %v935 = vld [vmem:[%s241 + $0x648] sm:$0xf]
        %v936 = vld [vmem:[%s241 + $0x64c] sm:$0xf]
        %v937 = vld [vmem:[%s241 + $0x650] sm:$0xf]
        %v938 = vld [vmem:[%s241 + $0x654] sm:$0xf]
        %v939 = vld [vmem:[%s241 + $0x658] sm:$0xf]
        %v940 = vld [vmem:[%s241 + $0x65c] sm:$0xf]
        %v941 = vld [vmem:[%s241 + $0x660] sm:$0xf]
        %v942 = vld [vmem:[%s241 + $0x664] sm:$0xf]
        %v943 = vld [vmem:[%s241 + $0x668] sm:$0xf]
        %v944 = vld [vmem:[%s241 + $0x66c] sm:$0xf]
        %v945 = vld [vmem:[%s241 + $0x670] sm:$0xf]
        %v946 = vld [vmem:[%s241 + $0x674] sm:$0xf]
        %v947 = vld [vmem:[%s241 + $0x678] sm:$0xf]
        %v948 = vld [vmem:[%s241 + $0x67c] sm:$0xf]
        %v949 = vld [vmem:[%s241 + $0x680] sm:$0xf]
        %v950 = vld [vmem:[%s241 + $0x684] sm:$0xf]
        %v951 = vld [vmem:[%s241 + $0x688] sm:$0xf]
        %v952 = vld [vmem:[%s241 + $0x68c] sm:$0xf]
        %v953 = vld [vmem:[%s241 + $0x690] sm:$0xf]
        %v954 = vld [vmem:[%s241 + $0x694] sm:$0xf]
        %v955 = vld [vmem:[%s241 + $0x698] sm:$0xf]
        %v956 = vld [vmem:[%s241 + $0x69c] sm:$0xf]
        %v957 = vld [vmem:[%s241 + $0x6a0] sm:$0xf]
        %v958 = vld [vmem:[%s241 + $0x6a4] sm:$0xf]
        %v959 = vld [vmem:[%s241 + $0x6a8] sm:$0xf]
        %v960 = vld [vmem:[%s241 + $0x6ac] sm:$0xf]
        %v961 = vld [vmem:[%s241 + $0x6b0] sm:$0xf]
        %v962 = vld [vmem:[%s241 + $0x6b4] sm:$0xf]
        %v963 = vld [vmem:[%s241 + $0x6b8] sm:$0xf]
        %v964 = vld [vmem:[%s241 + $0x6bc] sm:$0xf]
        %v965 = vld [vmem:[%s241 + $0x6c0] sm:$0xf]
        %v966 = vld [vmem:[%s241 + $0x6c4] sm:$0xf]
        %v967 = vld [vmem:[%s241 + $0x6c8] sm:$0xf]
        %v968 = vld [vmem:[%s241 + $0x6cc] sm:$0xf]
        %v969 = vld [vmem:[%s241 + $0x6d0] sm:$0xf]
        %v970 = vld [vmem:[%s241 + $0x6d4] sm:$0xf]
        %v971 = vld [vmem:[%s241 + $0x6d8] sm:$0xf]
        %v972 = vld [vmem:[%s241 + $0x6dc] sm:$0xf]
        %v973 = vld [vmem:[%s241 + $0x6e0] sm:$0xf]
        %v974 = vld [vmem:[%s241 + $0x6e4] sm:$0xf]
        %v975 = vld [vmem:[%s241 + $0x6e8] sm:$0xf]
        %v976 = vld [vmem:[%s241 + $0x6ec] sm:$0xf]
        %v977 = vld [vmem:[%s241 + $0x6f0] sm:$0xf]
        %v978 = vld [vmem:[%s241 + $0x6f4] sm:$0xf]
        %v979 = vld [vmem:[%s241 + $0x6f8] sm:$0xf]
        %v980 = vld [vmem:[%s241 + $0x6fc] sm:$0xf]
        %v981 = vld [vmem:[%s241 + $0x700] sm:$0xf]
        %v982 = vld [vmem:[%s241 + $0x704] sm:$0xf]
        %v983 = vld [vmem:[%s241 + $0x708] sm:$0xf]
        %v984 = vld [vmem:[%s241 + $0x70c] sm:$0xf]
        %v985 = vld [vmem:[%s241 + $0x710] sm:$0xf]
        %v986 = vld [vmem:[%s241 + $0x714] sm:$0xf]
        %v987 = vld [vmem:[%s241 + $0x718] sm:$0xf]
        %v988 = vld [vmem:[%s241 + $0x71c] sm:$0xf]
        %v989 = vld [vmem:[%s241 + $0x720] sm:$0xf]
        %v990 = vld [vmem:[%s241 + $0x724] sm:$0xf]
        %v991 = vld [vmem:[%s241 + $0x728] sm:$0xf]
        %v992 = vld [vmem:[%s241 + $0x72c] sm:$0xf]
        %v993 = vld [vmem:[%s241 + $0x730] sm:$0xf]
        %v994 = vld [vmem:[%s241 + $0x734] sm:$0xf]
        %v995 = vld [vmem:[%s241 + $0x738] sm:$0xf]
        %v996 = vld [vmem:[%s241 + $0x73c] sm:$0xf]
        %v997 = vld [vmem:[%s241 + $0x740] sm:$0xf]
        %v998 = vld [vmem:[%s241 + $0x744] sm:$0xf]
        %v999 = vld [vmem:[%s241 + $0x748] sm:$0xf]
        %v1000 = vld [vmem:[%s241 + $0x74c] sm:$0xf]
        %v1001 = vld [vmem:[%s241 + $0x750] sm:$0xf]
        %v1002 = vld [vmem:[%s241 + $0x754] sm:$0xf]
        %v1003 = vld [vmem:[%s241 + $0x758] sm:$0xf]
        %v1004 = vld [vmem:[%s241 + $0x75c] sm:$0xf]
        %v1005 = vld [vmem:[%s241 + $0x760] sm:$0xf]
        %v1006 = vld [vmem:[%s241 + $0x764] sm:$0xf]
        %v1007 = vld [vmem:[%s241 + $0x768] sm:$0xf]
        %v1008 = vld [vmem:[%s241 + $0x76c] sm:$0xf]
        %v1009 = vld [vmem:[%s241 + $0x770] sm:$0xf]
        %v1010 = vld [vmem:[%s241 + $0x774] sm:$0xf]
        %v1011 = vld [vmem:[%s241 + $0x778] sm:$0xf]
        %v1012 = vld [vmem:[%s241 + $0x77c] sm:$0xf]
        %v1013 = vld [vmem:[%s241 + $0x780] sm:$0xf]
        %v1014 = vld [vmem:[%s241 + $0x784] sm:$0xf]
        %v1015 = vld [vmem:[%s241 + $0x788] sm:$0xf]
        %v1016 = vld [vmem:[%s241 + $0x78c] sm:$0xf]
        %v1017 = vld [vmem:[%s241 + $0x790] sm:$0xf]
        %v1018 = vld [vmem:[%s241 + $0x794] sm:$0xf]
        %v1019 = vld [vmem:[%s241 + $0x798] sm:$0xf]
        %v1020 = vld [vmem:[%s241 + $0x79c] sm:$0xf]
        %v1021 = vld [vmem:[%s241 + $0x7a0] sm:$0xf]
        %v1022 = vld [vmem:[%s241 + $0x7a4] sm:$0xf]
        %v1023 = vld [vmem:[%s241 + $0x7a8] sm:$0xf]
        %v1024 = vld [vmem:[%s241 + $0x7ac] sm:$0xf]
        %v1025 = vld [vmem:[%s241 + $0x7b0] sm:$0xf]
        %v1026 = vld [vmem:[%s241 + $0x7b4] sm:$0xf]
        %v1027 = vld [vmem:[%s241 + $0x7b8] sm:$0xf]
        %v1028 = vld [vmem:[%s241 + $0x7bc] sm:$0xf]
        %v1029 = vld [vmem:[%s241 + $0x7c0] sm:$0xf]
        %v1030 = vld [vmem:[%s241 + $0x7c4] sm:$0xf]
        %v1031 = vld [vmem:[%s241 + $0x7c8] sm:$0xf]
        %v1032 = vld [vmem:[%s241 + $0x7cc] sm:$0xf]
        %v1033 = vld [vmem:[%s241 + $0x7d0] sm:$0xf]
        %v1034 = vld [vmem:[%s241 + $0x7d4] sm:$0xf]
        %v1035 = vld [vmem:[%s241 + $0x7d8] sm:$0xf]
        %v1036 = vld [vmem:[%s241 + $0x7dc] sm:$0xf]
        %v1037 = vld [vmem:[%s241 + $0x7e0] sm:$0xf]
        %v1038 = vld [vmem:[%s241 + $0x7e4] sm:$0xf]
        %v1039 = vld [vmem:[%s241 + $0x7e8] sm:$0xf]
        %v1040 = vld [vmem:[%s241 + $0x7ec] sm:$0xf]
        %v1041 = vld [vmem:[%s241 + $0x7f0] sm:$0xf]
        %v1042 = vld [vmem:[%s241 + $0x7f4] sm:$0xf]
        %v1043 = vld [vmem:[%s241 + $0x7f8] sm:$0xf]
        %v1044 = vld [vmem:[%s241 + $0x7fc] sm:$0xf]
        %v1045 = vld [vmem:[%s241 + $0x800] sm:$0xf]
        %v1046 = vld [vmem:[%s241 + $0x804] sm:$0xf]
        %v1047 = vld [vmem:[%s241 + $0x808] sm:$0xf]
        %v1048 = vld [vmem:[%s241 + $0x80c] sm:$0xf]
        %v1049 = vld [vmem:[%s241 + $0x810] sm:$0xf]
        %v1050 = vld [vmem:[%s241 + $0x814] sm:$0xf]
        %v1051 = vld [vmem:[%s241 + $0x818] sm:$0xf]
        %v1052 = vld [vmem:[%s241 + $0x81c] sm:$0xf]
        %v1053 = vld [vmem:[%s241 + $0x820] sm:$0xf]
        %v1054 = vld [vmem:[%s241 + $0x824] sm:$0xf]
        %v1055 = vld [vmem:[%s241 + $0x828] sm:$0xf]
        %v1056 = vld [vmem:[%s241 + $0x82c] sm:$0xf]
        %v1057 = vld [vmem:[%s241 + $0x830] sm:$0xf]
        %v1058 = vld [vmem:[%s241 + $0x834] sm:$0xf]
        %v1059 = vld [vmem:[%s241 + $0x838] sm:$0xf]
        %v1060 = vld [vmem:[%s241 + $0x83c] sm:$0xf]
        %v1061 = vld [vmem:[%s241 + $0x840] sm:$0xf]
        %v1062 = vld [vmem:[%s241 + $0x844] sm:$0xf]
        %v1063 = vld [vmem:[%s241 + $0x848] sm:$0xf]
        %v1064 = vld [vmem:[%s241 + $0x84c] sm:$0xf]
        %v1065 = vld [vmem:[%s241 + $0x850] sm:$0xf]
        %v1066 = vld [vmem:[%s241 + $0x854] sm:$0xf]
        %v1067 = vld [vmem:[%s241 + $0x858] sm:$0xf]
        %v1068 = vld [vmem:[%s241 + $0x85c] sm:$0xf]
        %v1069 = vld [vmem:[%s241 + $0x860] sm:$0xf]
        %v1070 = vld [vmem:[%s241 + $0x864] sm:$0xf]
        %v1071 = vld [vmem:[%s241 + $0x868] sm:$0xf]
        %v1072 = vld [vmem:[%s241 + $0x86c] sm:$0xf]
        %v1073 = vld [vmem:[%s241 + $0x870] sm:$0xf]
        %v1074 = vld [vmem:[%s241 + $0x874] sm:$0xf]
        %v1075 = vld [vmem:[%s241 + $0x878] sm:$0xf]
        %v1076 = vld [vmem:[%s241 + $0x87c] sm:$0xf]
        %v1077 = vld [vmem:[%s241 + $0x880] sm:$0xf]
        %v1078 = vld [vmem:[%s241 + $0x884] sm:$0xf]
        %v1079 = vld [vmem:[%s241 + $0x888] sm:$0xf]
        %v1080 = vld [vmem:[%s241 + $0x88c] sm:$0xf]
        %v1081 = vld [vmem:[%s241 + $0x890] sm:$0xf]
        %v1082 = vld [vmem:[%s241 + $0x894] sm:$0xf]
        %v1083 = vld [vmem:[%s241 + $0x898] sm:$0xf]
        %v1084 = vld [vmem:[%s241 + $0x89c] sm:$0xf]
        %v1085 = vld [vmem:[%s241 + $0x8a0] sm:$0xf]
        %v1086 = vld [vmem:[%s241 + $0x8a4] sm:$0xf]
        %v1087 = vld [vmem:[%s241 + $0x8a8] sm:$0xf]
        %v1088 = vld [vmem:[%s241 + $0x8ac] sm:$0xf]
        %v1089 = vld [vmem:[%s241 + $0x8b0] sm:$0xf]
        %v1090 = vld [vmem:[%s241 + $0x8b4] sm:$0xf]
        %v1091 = vld [vmem:[%s241 + $0x8b8] sm:$0xf]
        %v1092 = vld [vmem:[%s241 + $0x8bc] sm:$0xf]
        %v1093 = vld [vmem:[%s241 + $0x8c0] sm:$0xf]
        %v1094 = vld [vmem:[%s241 + $0x8c4] sm:$0xf]
        %v1095 = vld [vmem:[%s241 + $0x8c8] sm:$0xf]
        %v1096 = vld [vmem:[%s241 + $0x8cc] sm:$0xf]
        %v1097 = vld [vmem:[%s241 + $0x8d0] sm:$0xf]
        %v1098 = vld [vmem:[%s241 + $0x8d4] sm:$0xf]
        %v1099 = vld [vmem:[%s241 + $0x8d8] sm:$0xf]
        %v1100 = vld [vmem:[%s241 + $0x8dc] sm:$0xf]
        %v1101 = vld [vmem:[%s241 + $0x8e0] sm:$0xf]
        %v1102 = vld [vmem:[%s241 + $0x8e4] sm:$0xf]
        %v1103 = vld [vmem:[%s241 + $0x8e8] sm:$0xf]
        %v1104 = vld [vmem:[%s241 + $0x8ec] sm:$0xf]
        %v1105 = vld [vmem:[%s241 + $0x8f0] sm:$0xf]
        %v1106 = vld [vmem:[%s241 + $0x8f4] sm:$0xf]
        %v1107 = vld [vmem:[%s241 + $0x8f8] sm:$0xf]
        %v1108 = vld [vmem:[%s241 + $0x8fc] sm:$0xf]
        %v1109 = vld [vmem:[%s241 + $0x900] sm:$0xf]
        %v1110 = vld [vmem:[%s241 + $0x904] sm:$0xf]
        %v1111 = vld [vmem:[%s241 + $0x908] sm:$0xf]
        %v1112 = vld [vmem:[%s241 + $0x90c] sm:$0xf]
        %v1113 = vld [vmem:[%s241 + $0x910] sm:$0xf]
        %v1114 = vld [vmem:[%s241 + $0x914] sm:$0xf]
        %v1115 = vld [vmem:[%s241 + $0x918] sm:$0xf]
        %v1116 = vld [vmem:[%s241 + $0x91c] sm:$0xf]
        %v1117 = vld [vmem:[%s241 + $0x920] sm:$0xf]
        %v1118 = vld [vmem:[%s241 + $0x924] sm:$0xf]
        %v1119 = vld [vmem:[%s241 + $0x928] sm:$0xf]
        %v1120 = vld [vmem:[%s241 + $0x92c] sm:$0xf]
        %v1121 = vld [vmem:[%s241 + $0x930] sm:$0xf]
        %v1122 = vld [vmem:[%s241 + $0x934] sm:$0xf]
        %v1123 = vld [vmem:[%s241 + $0x938] sm:$0xf]
        %v1124 = vld [vmem:[%s241 + $0x93c] sm:$0xf]
        %v1125 = vld [vmem:[%s241 + $0x940] sm:$0xf]
        %v1126 = vld [vmem:[%s241 + $0x944] sm:$0xf]
        %v1127 = vld [vmem:[%s241 + $0x948] sm:$0xf]
        %v1128 = vld [vmem:[%s241 + $0x94c] sm:$0xf]
        %v1129 = vld [vmem:[%s241 + $0x950] sm:$0xf]
        %v1130 = vld [vmem:[%s241 + $0x954] sm:$0xf]
        %v1131 = vld [vmem:[%s241 + $0x958] sm:$0xf]
        %v1132 = vld [vmem:[%s241 + $0x95c] sm:$0xf]
        %v1133 = vld [vmem:[%s241 + $0x960] sm:$0xf]
        %v1134 = vld [vmem:[%s241 + $0x964] sm:$0xf]
        %v1135 = vld [vmem:[%s241 + $0x968] sm:$0xf]
        %v1136 = vld [vmem:[%s241 + $0x96c] sm:$0xf]
        %v1137 = vld [vmem:[%s241 + $0x970] sm:$0xf]
        %v1138 = vld [vmem:[%s241 + $0x974] sm:$0xf]
        %v1139 = vld [vmem:[%s241 + $0x978] sm:$0xf]
        %v1140 = vld [vmem:[%s241 + $0x97c] sm:$0xf]
        %v1141 = vld [vmem:[%s241 + $0x980] sm:$0xf]
        %v1142 = vld [vmem:[%s241 + $0x984] sm:$0xf]
        %v1143 = vld [vmem:[%s241 + $0x988] sm:$0xf]
        %v1144 = vld [vmem:[%s241 + $0x98c] sm:$0xf]
        %v1145 = vld [vmem:[%s241 + $0x990] sm:$0xf]
        %v1146 = vld [vmem:[%s241 + $0x994] sm:$0xf]
        %v1147 = vld [vmem:[%s241 + $0x998] sm:$0xf]
        %v1148 = vld [vmem:[%s241 + $0x99c] sm:$0xf]
        %v1149 = vld [vmem:[%s241 + $0x9a0] sm:$0xf]
        %v1150 = vld [vmem:[%s241 + $0x9a4] sm:$0xf]
        %v1151 = vld [vmem:[%s241 + $0x9a8] sm:$0xf]
        %v1152 = vld [vmem:[%s241 + $0x9ac] sm:$0xf]
        %v1153 = vld [vmem:[%s241 + $0x9b0] sm:$0xf]
        %v1154 = vld [vmem:[%s241 + $0x9b4] sm:$0xf]
        %v1155 = vld [vmem:[%s241 + $0x9b8] sm:$0xf]
        %v1156 = vld [vmem:[%s241 + $0x9bc] sm:$0xf]
        %v1157 = vld [vmem:[%s241 + $0x9c0] sm:$0xf]
        %v1158 = vld [vmem:[%s241 + $0x9c4] sm:$0xf]
        %v1159 = vld [vmem:[%s241 + $0x9c8] sm:$0xf]
        %v1160 = vld [vmem:[%s241 + $0x9cc] sm:$0xf]
        %v1161 = vld [vmem:[%s241 + $0x9d0] sm:$0xf]
        %v1162 = vld [vmem:[%s241 + $0x9d4] sm:$0xf]
        %v1163 = vld [vmem:[%s241 + $0x9d8] sm:$0xf]
        %v1164 = vld [vmem:[%s241 + $0x9dc] sm:$0xf]
        %v1165 = vld [vmem:[%s241 + $0x9e0] sm:$0xf]
        %v1166 = vld [vmem:[%s241 + $0x9e4] sm:$0xf]
        %v1167 = vld [vmem:[%s241 + $0x9e8] sm:$0xf]
        %v1168 = vld [vmem:[%s241 + $0x9ec] sm:$0xf]
        %v1169 = vld [vmem:[%s241 + $0x9f0] sm:$0xf]
        %v1170 = vld [vmem:[%s241 + $0x9f4] sm:$0xf]
        %v1171 = vld [vmem:[%s241 + $0x9f8] sm:$0xf]
        %v1172 = vld [vmem:[%s241 + $0x9fc] sm:$0xf]
        %v1173 = vld [vmem:[%s241 + $0xa00] sm:$0xf]
        %v1174 = vld [vmem:[%s241 + $0xa04] sm:$0xf]
        %v1175 = vld [vmem:[%s241 + $0xa08] sm:$0xf]
        %v1176 = vld [vmem:[%s241 + $0xa0c] sm:$0xf]
        %v1177 = vld [vmem:[%s241 + $0xa10] sm:$0xf]
        %v1178 = vld [vmem:[%s241 + $0xa14] sm:$0xf]
        %v1179 = vld [vmem:[%s241 + $0xa18] sm:$0xf]
        %v1180 = vld [vmem:[%s241 + $0xa1c] sm:$0xf]
        %v1181 = vld [vmem:[%s241 + $0xa20] sm:$0xf]
        %v1182 = vld [vmem:[%s241 + $0xa24] sm:$0xf]
        %v1183 = vld [vmem:[%s241 + $0xa28] sm:$0xf]
        %v1184 = vld [vmem:[%s241 + $0xa2c] sm:$0xf]
        %v1185 = vld [vmem:[%s241 + $0xa30] sm:$0xf]
        %v1186 = vld [vmem:[%s241 + $0xa34] sm:$0xf]
        %v1187 = vld [vmem:[%s241 + $0xa38] sm:$0xf]
        %v1188 = vld [vmem:[%s241 + $0xa3c] sm:$0xf]
        %v1189 = vld [vmem:[%s241 + $0xa40] sm:$0xf]
        %v1190 = vld [vmem:[%s241 + $0xa44] sm:$0xf]
        %v1191 = vld [vmem:[%s241 + $0xa48] sm:$0xf]
        %v1192 = vld [vmem:[%s241 + $0xa4c] sm:$0xf]
        %v1193 = vld [vmem:[%s241 + $0xa50] sm:$0xf]
        %v1194 = vld [vmem:[%s241 + $0xa54] sm:$0xf]
        %v1195 = vld [vmem:[%s241 + $0xa58] sm:$0xf]
        %v1196 = vld [vmem:[%s241 + $0xa5c] sm:$0xf]
        %v1197 = vld [vmem:[%s241 + $0xa60] sm:$0xf]
        %v1198 = vld [vmem:[%s241 + $0xa64] sm:$0xf]
        %v1199 = vld [vmem:[%s241 + $0xa68] sm:$0xf]
        %v1200 = vld [vmem:[%s241 + $0xa6c] sm:$0xf]
        %v1201 = vld [vmem:[%s241 + $0xa70] sm:$0xf]
        %v1202 = vld [vmem:[%s241 + $0xa74] sm:$0xf]
        %v1203 = vld [vmem:[%s241 + $0xa78] sm:$0xf]
        %v1204 = vld [vmem:[%s241 + $0xa7c] sm:$0xf]
        %v1205 = vld [vmem:[%s241 + $0xa80] sm:$0xf]
        %v1206 = vld [vmem:[%s241 + $0xa84] sm:$0xf]
        %v1207 = vld [vmem:[%s241 + $0xa88] sm:$0xf]
        %v1208 = vld [vmem:[%s241 + $0xa8c] sm:$0xf]
        %v1209 = vld [vmem:[%s241 + $0xa90] sm:$0xf]
        %v1210 = vld [vmem:[%s241 + $0xa94] sm:$0xf]
        %v1211 = vld [vmem:[%s241 + $0xa98] sm:$0xf]
        %v1212 = vld [vmem:[%s241 + $0xa9c] sm:$0xf]
        %v1213 = vld [vmem:[%s241 + $0xaa0] sm:$0xf]
        %v1214 = vld [vmem:[%s241 + $0xaa4] sm:$0xf]
        %v1215 = vld [vmem:[%s241 + $0xaa8] sm:$0xf]
        %v1216 = vld [vmem:[%s241 + $0xaac] sm:$0xf]
        %v1217 = vld [vmem:[%s241 + $0xab0] sm:$0xf]
        %v1218 = vld [vmem:[%s241 + $0xab4] sm:$0xf]
        %v1219 = vld [vmem:[%s241 + $0xab8] sm:$0xf]
        %v1220 = vld [vmem:[%s241 + $0xabc] sm:$0xf]
        %v1221 = vld [vmem:[%s241 + $0xac0] sm:$0xf]
        %v1222 = vld [vmem:[%s241 + $0xac4] sm:$0xf]
        %v1223 = vld [vmem:[%s241 + $0xac8] sm:$0xf]
        %v1224 = vld [vmem:[%s241 + $0xacc] sm:$0xf]
        %v1225 = vld [vmem:[%s241 + $0xad0] sm:$0xf]
        %v1226 = vld [vmem:[%s241 + $0xad4] sm:$0xf]
        %v1227 = vld [vmem:[%s241 + $0xad8] sm:$0xf]
        %v1228 = vld [vmem:[%s241 + $0xadc] sm:$0xf]
        %v1229 = vld [vmem:[%s241 + $0xae0] sm:$0xf]
        %v1230 = vld [vmem:[%s241 + $0xae4] sm:$0xf]
        %v1231 = vld [vmem:[%s241 + $0xae8] sm:$0xf]
        %v1232 = vld [vmem:[%s241 + $0xaec] sm:$0xf]
        %v1233 = vld [vmem:[%s241 + $0xaf0] sm:$0xf]
        %v1234 = vld [vmem:[%s241 + $0xaf4] sm:$0xf]
        %v1235 = vld [vmem:[%s241 + $0xaf8] sm:$0xf]
        %v1236 = vld [vmem:[%s241 + $0xafc] sm:$0xf]
        %v1237 = vld [vmem:[%s241 + $0xb00] sm:$0xf]
        %v1238 = vld [vmem:[%s241 + $0xb04] sm:$0xf]
        %v1239 = vld [vmem:[%s241 + $0xb08] sm:$0xf]
        %v1240 = vld [vmem:[%s241 + $0xb0c] sm:$0xf]
        %v1241 = vld [vmem:[%s241 + $0xb10] sm:$0xf]
        %v1242 = vld [vmem:[%s241 + $0xb14] sm:$0xf]
        %v1243 = vld [vmem:[%s241 + $0xb18] sm:$0xf]
        %v1244 = vld [vmem:[%s241 + $0xb1c] sm:$0xf]
        %v1245 = vld [vmem:[%s241 + $0xb20] sm:$0xf]
        %v1246 = vld [vmem:[%s241 + $0xb24] sm:$0xf]
        %v1247 = vld [vmem:[%s241 + $0xb28] sm:$0xf]
        %v1248 = vld [vmem:[%s241 + $0xb2c] sm:$0xf]
        %v1249 = vld [vmem:[%s241 + $0xb30] sm:$0xf]
        %v1250 = vld [vmem:[%s241 + $0xb34] sm:$0xf]
        %v1251 = vld [vmem:[%s241 + $0xb38] sm:$0xf]
        %v1252 = vld [vmem:[%s241 + $0xb3c] sm:$0xf]
        %v1253 = vld [vmem:[%s241 + $0xb40] sm:$0xf]
        %v1254 = vld [vmem:[%s241 + $0xb44] sm:$0xf]
        %v1255 = vld [vmem:[%s241 + $0xb48] sm:$0xf]
        %v1256 = vld [vmem:[%s241 + $0xb4c] sm:$0xf]
        %v1257 = vld [vmem:[%s241 + $0xb50] sm:$0xf]
        %v1258 = vld [vmem:[%s241 + $0xb54] sm:$0xf]
        %v1259 = vld [vmem:[%s241 + $0xb58] sm:$0xf]
        %v1260 = vld [vmem:[%s241 + $0xb5c] sm:$0xf]
        %v1261 = vld [vmem:[%s241 + $0xb60] sm:$0xf]
        %v1262 = vld [vmem:[%s241 + $0xb64] sm:$0xf]
        %v1263 = vld [vmem:[%s241 + $0xb68] sm:$0xf]
        %v1264 = vld [vmem:[%s241 + $0xb6c] sm:$0xf]
        %v1265 = vld [vmem:[%s241 + $0xb70] sm:$0xf]
        %v1266 = vld [vmem:[%s241 + $0xb74] sm:$0xf]
        %v1267 = vld [vmem:[%s241 + $0xb78] sm:$0xf]
        %v1268 = vld [vmem:[%s241 + $0xb7c] sm:$0xf]
        %v1269 = vld [vmem:[%s241 + $0xb80] sm:$0xf]
        %v1270 = vld [vmem:[%s241 + $0xb84] sm:$0xf]
        %v1271 = vld [vmem:[%s241 + $0xb88] sm:$0xf]
        %v1272 = vld [vmem:[%s241 + $0xb8c] sm:$0xf]
        %v1273 = vld [vmem:[%s241 + $0xb90] sm:$0xf]
        %v1274 = vld [vmem:[%s241 + $0xb94] sm:$0xf]
        %v1275 = vld [vmem:[%s241 + $0xb98] sm:$0xf]
        %v1276 = vld [vmem:[%s241 + $0xb9c] sm:$0xf]
        %v1277 = vld [vmem:[%s241 + $0xba0] sm:$0xf]
        %v1278 = vld [vmem:[%s241 + $0xba4] sm:$0xf]
        %v1279 = vld [vmem:[%s241 + $0xba8] sm:$0xf]
        %v1280 = vld [vmem:[%s241 + $0xbac] sm:$0xf]
        %v1281 = vld [vmem:[%s241 + $0xbb0] sm:$0xf]
        %v1282 = vld [vmem:[%s241 + $0xbb4] sm:$0xf]
        %v1283 = vld [vmem:[%s241 + $0xbb8] sm:$0xf]
        %v1284 = vld [vmem:[%s241 + $0xbbc] sm:$0xf]
        %v1285 = vld [vmem:[%s241 + $0xbc0] sm:$0xf]
        %v1286 = vld [vmem:[%s241 + $0xbc4] sm:$0xf]
        %v1287 = vld [vmem:[%s241 + $0xbc8] sm:$0xf]
        %v1288 = vld [vmem:[%s241 + $0xbcc] sm:$0xf]
        %v1289 = vld [vmem:[%s241 + $0xbd0] sm:$0xf]
        %v1290 = vld [vmem:[%s241 + $0xbd4] sm:$0xf]
        %v1291 = vld [vmem:[%s241 + $0xbd8] sm:$0xf]
        %v1292 = vld [vmem:[%s241 + $0xbdc] sm:$0xf]
        %v1293 = vld [vmem:[%s241 + $0xbe0] sm:$0xf]
        %v1294 = vld [vmem:[%s241 + $0xbe4] sm:$0xf]
        %v1295 = vld [vmem:[%s241 + $0xbe8] sm:$0xf]
        %v1296 = vld [vmem:[%s241 + $0xbec] sm:$0xf]
        %v1297 = vld [vmem:[%s241 + $0xbf0] sm:$0xf]
        %v1298 = vld [vmem:[%s241 + $0xbf4] sm:$0xf]
        %v1299 = vld [vmem:[%s241 + $0xbf8] sm:$0xf]
        %v1300 = vld [vmem:[%s241 + $0xbfc] sm:$0xf]
        %v1301 = vld [vmem:[%s241 + $0xc00] sm:$0xf]
        %v1302 = vld [vmem:[%s241 + $0xc04] sm:$0xf]
        %v1303 = vld [vmem:[%s241 + $0xc08] sm:$0xf]
        %v1304 = vld [vmem:[%s241 + $0xc0c] sm:$0xf]
        %v1305 = vld [vmem:[%s241 + $0xc10] sm:$0xf]
        %v1306 = vld [vmem:[%s241 + $0xc14] sm:$0xf]
        %v1307 = vld [vmem:[%s241 + $0xc18] sm:$0xf]
        %v1308 = vld [vmem:[%s241 + $0xc1c] sm:$0xf]
        %v1309 = vld [vmem:[%s241 + $0xc20] sm:$0xf]
        %v1310 = vld [vmem:[%s241 + $0xc24] sm:$0xf]
        %v1311 = vld [vmem:[%s241 + $0xc28] sm:$0xf]
        %v1312 = vld [vmem:[%s241 + $0xc2c] sm:$0xf]
        %v1313 = vld [vmem:[%s241 + $0xc30] sm:$0xf]
        %v1314 = vld [vmem:[%s241 + $0xc34] sm:$0xf]
        %v1315 = vld [vmem:[%s241 + $0xc38] sm:$0xf]
        %v1316 = vld [vmem:[%s241 + $0xc3c] sm:$0xf]
        %v1317 = vld [vmem:[%s241 + $0xc40] sm:$0xf]
        %v1318 = vld [vmem:[%s241 + $0xc44] sm:$0xf]
        %v1319 = vld [vmem:[%s241 + $0xc48] sm:$0xf]
        %v1320 = vld [vmem:[%s241 + $0xc4c] sm:$0xf]
        %v1321 = vld [vmem:[%s241 + $0xc50] sm:$0xf]
        %v1322 = vld [vmem:[%s241 + $0xc54] sm:$0xf]
        %v1323 = vld [vmem:[%s241 + $0xc58] sm:$0xf]
        %v1324 = vld [vmem:[%s241 + $0xc5c] sm:$0xf]
        %v1325 = vld [vmem:[%s241 + $0xc60] sm:$0xf]
        %v1326 = vld [vmem:[%s241 + $0xc64] sm:$0xf]
        %v1327 = vld [vmem:[%s241 + $0xc68] sm:$0xf]
        %v1328 = vld [vmem:[%s241 + $0xc6c] sm:$0xf]
        %v1329 = vld [vmem:[%s241 + $0xc70] sm:$0xf]
        %v1330 = vld [vmem:[%s241 + $0xc74] sm:$0xf]
        %v1331 = vld [vmem:[%s241 + $0xc78] sm:$0xf]
        %v1332 = vld [vmem:[%s241 + $0xc7c] sm:$0xf]
        %v1333 = vld [vmem:[%s241 + $0xc80] sm:$0xf]
        %v1334 = vld [vmem:[%s241 + $0xc84] sm:$0xf]
        %v1335 = vld [vmem:[%s241 + $0xc88] sm:$0xf]
        %v1336 = vld [vmem:[%s241 + $0xc8c] sm:$0xf]
        %v1337 = vld [vmem:[%s241 + $0xc90] sm:$0xf]
        %v1338 = vld [vmem:[%s241 + $0xc94] sm:$0xf]
        %v1339 = vld [vmem:[%s241 + $0xc98] sm:$0xf]
        %v1340 = vld [vmem:[%s241 + $0xc9c] sm:$0xf]
        %v1341 = vld [vmem:[%s241 + $0xca0] sm:$0xf]
        %v1342 = vld [vmem:[%s241 + $0xca4] sm:$0xf]
        %v1343 = vld [vmem:[%s241 + $0xca8] sm:$0xf]
        %v1344 = vld [vmem:[%s241 + $0xcac] sm:$0xf]
        %v1345 = vld [vmem:[%s241 + $0xcb0] sm:$0xf]
        %v1346 = vld [vmem:[%s241 + $0xcb4] sm:$0xf]
        %v1347 = vld [vmem:[%s241 + $0xcb8] sm:$0xf]
        %v1348 = vld [vmem:[%s241 + $0xcbc] sm:$0xf]
        %v1349 = vld [vmem:[%s241 + $0xcc0] sm:$0xf]
        %v1350 = vld [vmem:[%s241 + $0xcc4] sm:$0xf]
        %v1351 = vld [vmem:[%s241 + $0xcc8] sm:$0xf]
        %v1352 = vld [vmem:[%s241 + $0xccc] sm:$0xf]
        %v1353 = vld [vmem:[%s241 + $0xcd0] sm:$0xf]
        %v1354 = vld [vmem:[%s241 + $0xcd4] sm:$0xf]
        %v1355 = vld [vmem:[%s241 + $0xcd8] sm:$0xf]
        %v1356 = vld [vmem:[%s241 + $0xcdc] sm:$0xf]
        %v1357 = vld [vmem:[%s241 + $0xce0] sm:$0xf]
        %v1358 = vld [vmem:[%s241 + $0xce4] sm:$0xf]
        %v1359 = vld [vmem:[%s241 + $0xce8] sm:$0xf]
        %v1360 = vld [vmem:[%s241 + $0xcec] sm:$0xf]
        %v1361 = vld [vmem:[%s241 + $0xcf0] sm:$0xf]
        %v1362 = vld [vmem:[%s241 + $0xcf4] sm:$0xf]
        %v1363 = vld [vmem:[%s241 + $0xcf8] sm:$0xf]
        %v1364 = vld [vmem:[%s241 + $0xcfc] sm:$0xf]
        %v1365 = vld [vmem:[%s241 + $0xd00] sm:$0xf]
        %v1366 = vld [vmem:[%s241 + $0xd04] sm:$0xf]
        %v1367 = vld [vmem:[%s241 + $0xd08] sm:$0xf]
        %v1368 = vld [vmem:[%s241 + $0xd0c] sm:$0xf]
        %v1369 = vld [vmem:[%s241 + $0xd10] sm:$0xf]
        %v1370 = vld [vmem:[%s241 + $0xd14] sm:$0xf]
        %v1371 = vld [vmem:[%s241 + $0xd18] sm:$0xf]
        %v1372 = vld [vmem:[%s241 + $0xd1c] sm:$0xf]
        %v1373 = vld [vmem:[%s241 + $0xd20] sm:$0xf]
        %v1374 = vld [vmem:[%s241 + $0xd24] sm:$0xf]
        %v1375 = vld [vmem:[%s241 + $0xd28] sm:$0xf]
        %v1376 = vld [vmem:[%s241 + $0xd2c] sm:$0xf]
        %v1377 = vld [vmem:[%s241 + $0xd30] sm:$0xf]
        %v1378 = vld [vmem:[%s241 + $0xd34] sm:$0xf]
        %v1379 = vld [vmem:[%s241 + $0xd38] sm:$0xf]
        %v1380 = vld [vmem:[%s241 + $0xd3c] sm:$0xf]
        %v1381 = vld [vmem:[%s241 + $0xd40] sm:$0xf]
        %v1382 = vld [vmem:[%s241 + $0xd44] sm:$0xf]
        %v1383 = vld [vmem:[%s241 + $0xd48] sm:$0xf]
        %v1384 = vld [vmem:[%s241 + $0xd4c] sm:$0xf]
        %v1385 = vld [vmem:[%s241 + $0xd50] sm:$0xf]
        %v1386 = vld [vmem:[%s241 + $0xd54] sm:$0xf]
        %v1387 = vld [vmem:[%s241 + $0xd58] sm:$0xf]
        %v1388 = vld [vmem:[%s241 + $0xd5c] sm:$0xf]
        %v1389 = vld [vmem:[%s241 + $0xd60] sm:$0xf]
        %v1390 = vld [vmem:[%s241 + $0xd64] sm:$0xf]
        %v1391 = vld [vmem:[%s241 + $0xd68] sm:$0xf]
        %v1392 = vld [vmem:[%s241 + $0xd6c] sm:$0xf]
        %v1393 = vld [vmem:[%s241 + $0xd70] sm:$0xf]
        %v1394 = vld [vmem:[%s241 + $0xd74] sm:$0xf]
        %v1395 = vld [vmem:[%s241 + $0xd78] sm:$0xf]
        %v1396 = vld [vmem:[%s241 + $0xd7c] sm:$0xf]
        %v1397 = vld [vmem:[%s241 + $0xd80] sm:$0xf]
        %v1398 = vld [vmem:[%s241 + $0xd84] sm:$0xf]
        %v1399 = vld [vmem:[%s241 + $0xd88] sm:$0xf]
        %v1400 = vld [vmem:[%s241 + $0xd8c] sm:$0xf]
        %v1401 = vld [vmem:[%s241 + $0xd90] sm:$0xf]
        %v1402 = vld [vmem:[%s241 + $0xd94] sm:$0xf]
        %v1403 = vld [vmem:[%s241 + $0xd98] sm:$0xf]
        %v1404 = vld [vmem:[%s241 + $0xd9c] sm:$0xf]
        %v1405 = vld [vmem:[%s241 + $0xda0] sm:$0xf]
        %v1406 = vld [vmem:[%s241 + $0xda4] sm:$0xf]
        %v1407 = vld [vmem:[%s241 + $0xda8] sm:$0xf]
        %v1408 = vld [vmem:[%s241 + $0xdac] sm:$0xf]
        %v1409 = vld [vmem:[%s241 + $0xdb0] sm:$0xf]
        %v1410 = vld [vmem:[%s241 + $0xdb4] sm:$0xf]
        %v1411 = vld [vmem:[%s241 + $0xdb8] sm:$0xf]
        %v1412 = vld [vmem:[%s241 + $0xdbc] sm:$0xf]
        %v1413 = vld [vmem:[%s241 + $0xdc0] sm:$0xf]
        %v1414 = vld [vmem:[%s241 + $0xdc4] sm:$0xf]
        %v1415 = vld [vmem:[%s241 + $0xdc8] sm:$0xf]
        %v1416 = vld [vmem:[%s241 + $0xdcc] sm:$0xf]
        %v1417 = vld [vmem:[%s241 + $0xdd0] sm:$0xf]
        %v1418 = vld [vmem:[%s241 + $0xdd4] sm:$0xf]
        %v1419 = vld [vmem:[%s241 + $0xdd8] sm:$0xf]
        %v1420 = vld [vmem:[%s241 + $0xddc] sm:$0xf]
        %v1421 = vld [vmem:[%s241 + $0xde0] sm:$0xf]
        %v1422 = vld [vmem:[%s241 + $0xde4] sm:$0xf]
        %v1423 = vld [vmem:[%s241 + $0xde8] sm:$0xf]
        %v1424 = vld [vmem:[%s241 + $0xdec] sm:$0xf]
        %v1425 = vld [vmem:[%s241 + $0xdf0] sm:$0xf]
        %v1426 = vld [vmem:[%s241 + $0xdf4] sm:$0xf]
        %v1427 = vld [vmem:[%s241 + $0xdf8] sm:$0xf]
        %v1428 = vld [vmem:[%s241 + $0xdfc] sm:$0xf]
        %v1429 = vld [vmem:[%s241 + $0xe00] sm:$0xf]
        %v1430 = vld [vmem:[%s241 + $0xe04] sm:$0xf]
        %v1431 = vld [vmem:[%s241 + $0xe08] sm:$0xf]
        %v1432 = vld [vmem:[%s241 + $0xe0c] sm:$0xf]
        %v1433 = vld [vmem:[%s241 + $0xe10] sm:$0xf]
        %v1434 = vld [vmem:[%s241 + $0xe14] sm:$0xf]
        %v1435 = vld [vmem:[%s241 + $0xe18] sm:$0xf]
        %v1436 = vld [vmem:[%s241 + $0xe1c] sm:$0xf]
        %v1437 = vld [vmem:[%s241 + $0xe20] sm:$0xf]
        %v1438 = vld [vmem:[%s241 + $0xe24] sm:$0xf]
        %v1439 = vld [vmem:[%s241 + $0xe28] sm:$0xf]
        %v1440 = vld [vmem:[%s241 + $0xe2c] sm:$0xf]
        %v1441 = vld [vmem:[%s241 + $0xe30] sm:$0xf]
        %v1442 = vld [vmem:[%s241 + $0xe34] sm:$0xf]
        %v1443 = vld [vmem:[%s241 + $0xe38] sm:$0xf]
        %v1444 = vld [vmem:[%s241 + $0xe3c] sm:$0xf]
        %v1445 = vld [vmem:[%s241 + $0xe40] sm:$0xf]
        %v1446 = vld [vmem:[%s241 + $0xe44] sm:$0xf]
        %v1447 = vld [vmem:[%s241 + $0xe48] sm:$0xf]
        %v1448 = vld [vmem:[%s241 + $0xe4c] sm:$0xf]
        %v1449 = vld [vmem:[%s241 + $0xe50] sm:$0xf]
        %v1450 = vld [vmem:[%s241 + $0xe54] sm:$0xf]
        %v1451 = vld [vmem:[%s241 + $0xe58] sm:$0xf]
        %v1452 = vld [vmem:[%s241 + $0xe5c] sm:$0xf]
        %v1453 = vld [vmem:[%s241 + $0xe60] sm:$0xf]
        %v1454 = vld [vmem:[%s241 + $0xe64] sm:$0xf]
        %v1455 = vld [vmem:[%s241 + $0xe68] sm:$0xf]
        %v1456 = vld [vmem:[%s241 + $0xe6c] sm:$0xf]
        %v1457 = vld [vmem:[%s241 + $0xe70] sm:$0xf]
        %v1458 = vld [vmem:[%s241 + $0xe74] sm:$0xf]
        %v1459 = vld [vmem:[%s241 + $0xe78] sm:$0xf]
        %v1460 = vld [vmem:[%s241 + $0xe7c] sm:$0xf]
        %v1461 = vld [vmem:[%s241 + $0xe80] sm:$0xf]
        %v1462 = vld [vmem:[%s241 + $0xe84] sm:$0xf]
        %v1463 = vld [vmem:[%s241 + $0xe88] sm:$0xf]
        %v1464 = vld [vmem:[%s241 + $0xe8c] sm:$0xf]
        %v1465 = vld [vmem:[%s241 + $0xe90] sm:$0xf]
        %v1466 = vld [vmem:[%s241 + $0xe94] sm:$0xf]
        %v1467 = vld [vmem:[%s241 + $0xe98] sm:$0xf]
        %v1468 = vld [vmem:[%s241 + $0xe9c] sm:$0xf]
        %v1469 = vld [vmem:[%s241 + $0xea0] sm:$0xf]
        %v1470 = vld [vmem:[%s241 + $0xea4] sm:$0xf]
        %v1471 = vld [vmem:[%s241 + $0xea8] sm:$0xf]
        %v1472 = vld [vmem:[%s241 + $0xeac] sm:$0xf]
        %v1473 = vld [vmem:[%s241 + $0xeb0] sm:$0xf]
        %v1474 = vld [vmem:[%s241 + $0xeb4] sm:$0xf]
        %v1475 = vld [vmem:[%s241 + $0xeb8] sm:$0xf]
        %v1476 = vld [vmem:[%s241 + $0xebc] sm:$0xf]
        %v1477 = vld [vmem:[%s241 + $0xec0] sm:$0xf]
        %v1478 = vld [vmem:[%s241 + $0xec4] sm:$0xf]
        %v1479 = vld [vmem:[%s241 + $0xec8] sm:$0xf]
        %v1480 = vld [vmem:[%s241 + $0xecc] sm:$0xf]
        %v1481 = vld [vmem:[%s241 + $0xed0] sm:$0xf]
        %v1482 = vld [vmem:[%s241 + $0xed4] sm:$0xf]
        %v1483 = vld [vmem:[%s241 + $0xed8] sm:$0xf]
        %v1484 = vld [vmem:[%s241 + $0xedc] sm:$0xf]
        %v1485 = vld [vmem:[%s241 + $0xee0] sm:$0xf]
        %v1486 = vld [vmem:[%s241 + $0xee4] sm:$0xf]
        %v1487 = vld [vmem:[%s241 + $0xee8] sm:$0xf]
        %v1488 = vld [vmem:[%s241 + $0xeec] sm:$0xf]
        %v1489 = vld [vmem:[%s241 + $0xef0] sm:$0xf]
        %v1490 = vld [vmem:[%s241 + $0xef4] sm:$0xf]
        %v1491 = vld [vmem:[%s241 + $0xef8] sm:$0xf]
        %v1492 = vld [vmem:[%s241 + $0xefc] sm:$0xf]
        %v1493 = vld [vmem:[%s241 + $0xf00] sm:$0xf]
        %v1494 = vld [vmem:[%s241 + $0xf04] sm:$0xf]
        %v1495 = vld [vmem:[%s241 + $0xf08] sm:$0xf]
        %v1496 = vld [vmem:[%s241 + $0xf0c] sm:$0xf]
        %v1497 = vld [vmem:[%s241 + $0xf10] sm:$0xf]
        %v1498 = vld [vmem:[%s241 + $0xf14] sm:$0xf]
        %v1499 = vld [vmem:[%s241 + $0xf18] sm:$0xf]
        %v1500 = vld [vmem:[%s241 + $0xf1c] sm:$0xf]
        %v1501 = vld [vmem:[%s241 + $0xf20] sm:$0xf]
        %v1502 = vld [vmem:[%s241 + $0xf24] sm:$0xf]
        %v1503 = vld [vmem:[%s241 + $0xf28] sm:$0xf]
        %v1504 = vld [vmem:[%s241 + $0xf2c] sm:$0xf]
        %v1505 = vld [vmem:[%s241 + $0xf30] sm:$0xf]
        %v1506 = vld [vmem:[%s241 + $0xf34] sm:$0xf]
        %v1507 = vld [vmem:[%s241 + $0xf38] sm:$0xf]
        %v1508 = vld [vmem:[%s241 + $0xf3c] sm:$0xf]
        %v1509 = vld [vmem:[%s241 + $0xf40] sm:$0xf]
        %v1510 = vld [vmem:[%s241 + $0xf44] sm:$0xf]
        %v1511 = vld [vmem:[%s241 + $0xf48] sm:$0xf]
        %v1512 = vld [vmem:[%s241 + $0xf4c] sm:$0xf]
        %v1513 = vld [vmem:[%s241 + $0xf50] sm:$0xf]
        %v1514 = vld [vmem:[%s241 + $0xf54] sm:$0xf]
        %v1515 = vld [vmem:[%s241 + $0xf58] sm:$0xf]
        %v1516 = vld [vmem:[%s241 + $0xf5c] sm:$0xf]
        %v1517 = vld [vmem:[%s241 + $0xf60] sm:$0xf]
        %v1518 = vld [vmem:[%s241 + $0xf64] sm:$0xf]
        %v1519 = vld [vmem:[%s241 + $0xf68] sm:$0xf]
        %v1520 = vld [vmem:[%s241 + $0xf6c] sm:$0xf]
        %v1521 = vld [vmem:[%s241 + $0xf70] sm:$0xf]
        %v1522 = vld [vmem:[%s241 + $0xf74] sm:$0xf]
        %v1523 = vld [vmem:[%s241 + $0xf78] sm:$0xf]
        %v1524 = vld [vmem:[%s241 + $0xf7c] sm:$0xf]
        %v1525 = vld [vmem:[%s241 + $0xf80] sm:$0xf]
        %v1526 = vld [vmem:[%s241 + $0xf84] sm:$0xf]
        %v1527 = vld [vmem:[%s241 + $0xf88] sm:$0xf]
        %v1528 = vld [vmem:[%s241 + $0xf8c] sm:$0xf]
        %v1529 = vld [vmem:[%s241 + $0xf90] sm:$0xf]
        %v1530 = vld [vmem:[%s241 + $0xf94] sm:$0xf]
        %v1531 = vld [vmem:[%s241 + $0xf98] sm:$0xf]
        %v1532 = vld [vmem:[%s241 + $0xf9c] sm:$0xf]
        %v1533 = vld [vmem:[%s241 + $0xfa0] sm:$0xf]
        %v1534 = vld [vmem:[%s241 + $0xfa4] sm:$0xf]
        %v1535 = vld [vmem:[%s241 + $0xfa8] sm:$0xf]
        %v1536 = vld [vmem:[%s241 + $0xfac] sm:$0xf]
        %v1537 = vld [vmem:[%s241 + $0xfb0] sm:$0xf]
        %v1538 = vld [vmem:[%s241 + $0xfb4] sm:$0xf]
        %v1539 = vld [vmem:[%s241 + $0xfb8] sm:$0xf]
        %v1540 = vld [vmem:[%s241 + $0xfbc] sm:$0xf]
        %v1541 = vld [vmem:[%s241 + $0xfc0] sm:$0xf]
        %v1542 = vld [vmem:[%s241 + $0xfc4] sm:$0xf]
        %v1543 = vld [vmem:[%s241 + $0xfc8] sm:$0xf]
        %v1544 = vld [vmem:[%s241 + $0xfcc] sm:$0xf]
        %v1545 = vld [vmem:[%s241 + $0xfd0] sm:$0xf]
        %v1546 = vld [vmem:[%s241 + $0xfd4] sm:$0xf]
        %v1547 = vld [vmem:[%s241 + $0xfd8] sm:$0xf]
        %v1548 = vld [vmem:[%s241 + $0xfdc] sm:$0xf]
        %v1549 = vld [vmem:[%s241 + $0xfe0] sm:$0xf]
        %v1550 = vld [vmem:[%s241 + $0xfe4] sm:$0xf]
        %v1551 = vld [vmem:[%s241 + $0xfe8] sm:$0xf]
        %v1552 = vld [vmem:[%s241 + $0xfec] sm:$0xf]
        %v1553 = vld [vmem:[%s241 + $0xff0] sm:$0xf]
        %v1554 = vld [vmem:[%s241 + $0xff4] sm:$0xf]
        %v1555 = vld [vmem:[%s241 + $0xff8] sm:$0xf]
        %v1556 = vld [vmem:[%s241 + $0xffc] sm:$0xf]
        %v2581 = vunpack.c.l.b16 %v533
        %v2582 = vunpack.c.l.b16 %v534
        %v2583 = vunpack.c.l.b16 %v535
        %v2584 = vunpack.c.l.b16 %v536
        %v2585 = vunpack.c.l.b16 %v537
        %v2586 = vunpack.c.l.b16 %v538
        %v2587 = vunpack.c.l.b16 %v539
        %v2588 = vunpack.c.l.b16 %v540
        %v2589 = vunpack.c.l.b16 %v541
        %v2590 = vunpack.c.l.b16 %v542
        %v2591 = vunpack.c.l.b16 %v543
        %v2592 = vunpack.c.l.b16 %v544
        %v2593 = vunpack.c.l.b16 %v545
        %v2594 = vunpack.c.l.b16 %v546
        %v2595 = vunpack.c.l.b16 %v547
        %v2596 = vunpack.c.l.b16 %v548
        %v2597 = vunpack.c.l.b16 %v549
        %v2598 = vunpack.c.l.b16 %v550
        %v2599 = vunpack.c.l.b16 %v551
        %v2600 = vunpack.c.l.b16 %v552
        %v2601 = vunpack.c.l.b16 %v553
        %v2602 = vunpack.c.l.b16 %v554
        %v2603 = vunpack.c.l.b16 %v555
        %v2604 = vunpack.c.l.b16 %v556
        %v2605 = vunpack.c.l.b16 %v557
        %v2606 = vunpack.c.l.b16 %v558
        %v2607 = vunpack.c.l.b16 %v559
        %v2608 = vunpack.c.l.b16 %v560
        %v2609 = vunpack.c.l.b16 %v561
        %v2610 = vunpack.c.l.b16 %v562
        %v2611 = vunpack.c.l.b16 %v563
        %v2612 = vunpack.c.l.b16 %v564
        %v2613 = vunpack.c.l.b16 %v565
        %v2614 = vunpack.c.l.b16 %v566
        %v2615 = vunpack.c.l.b16 %v567
        %v2616 = vunpack.c.l.b16 %v568
        %v2617 = vunpack.c.l.b16 %v569
        %v2618 = vunpack.c.l.b16 %v570
        %v2619 = vunpack.c.l.b16 %v571
        %v2620 = vunpack.c.l.b16 %v572
        %v2621 = vunpack.c.l.b16 %v573
        %v2622 = vunpack.c.l.b16 %v574
        %v2623 = vunpack.c.l.b16 %v575
        %v2624 = vunpack.c.l.b16 %v576
        %v2625 = vunpack.c.l.b16 %v577
        %v2626 = vunpack.c.l.b16 %v578
        %v2627 = vunpack.c.l.b16 %v579
        %v2628 = vunpack.c.l.b16 %v580
        %v2629 = vunpack.c.l.b16 %v581
        %v2630 = vunpack.c.l.b16 %v582
        %v2631 = vunpack.c.l.b16 %v583
        %v2632 = vunpack.c.l.b16 %v584
        %v2633 = vunpack.c.l.b16 %v585
        %v2634 = vunpack.c.l.b16 %v586
        %v2635 = vunpack.c.l.b16 %v587
        %v2636 = vunpack.c.l.b16 %v588
        %v2637 = vunpack.c.l.b16 %v589
        %v2638 = vunpack.c.l.b16 %v590
        %v2639 = vunpack.c.l.b16 %v591
        %v2640 = vunpack.c.l.b16 %v592
        %v2641 = vunpack.c.l.b16 %v593
        %v2642 = vunpack.c.l.b16 %v594
        %v2643 = vunpack.c.l.b16 %v595
        %v2644 = vunpack.c.l.b16 %v596
        %v2645 = vunpack.c.l.b16 %v597
        %v2646 = vunpack.c.l.b16 %v598
        %v2647 = vunpack.c.l.b16 %v599
        %v2648 = vunpack.c.l.b16 %v600
        %v2649 = vunpack.c.l.b16 %v601
        %v2650 = vunpack.c.l.b16 %v602
        %v2651 = vunpack.c.l.b16 %v603
        %v2652 = vunpack.c.l.b16 %v604
        %v2653 = vunpack.c.l.b16 %v605
        %v2654 = vunpack.c.l.b16 %v606
        %v2655 = vunpack.c.l.b16 %v607
        %v2656 = vunpack.c.l.b16 %v608
        %v2657 = vunpack.c.l.b16 %v609
        %v2658 = vunpack.c.l.b16 %v610
        %v2659 = vunpack.c.l.b16 %v611
        %v2660 = vunpack.c.l.b16 %v612
        %v2661 = vunpack.c.l.b16 %v613
        %v2662 = vunpack.c.l.b16 %v614
        %v2663 = vunpack.c.l.b16 %v615
        %v2664 = vunpack.c.l.b16 %v616
        %v2665 = vunpack.c.l.b16 %v617
        %v2666 = vunpack.c.l.b16 %v618
        %v2667 = vunpack.c.l.b16 %v619
        %v2668 = vunpack.c.l.b16 %v620
        %v2669 = vunpack.c.l.b16 %v621
        %v2670 = vunpack.c.l.b16 %v622
        %v2671 = vunpack.c.l.b16 %v623
        %v2672 = vunpack.c.l.b16 %v624
        %v2673 = vunpack.c.l.b16 %v625
        %v2674 = vunpack.c.l.b16 %v626
        %v2675 = vunpack.c.l.b16 %v627
        %v2676 = vunpack.c.l.b16 %v628
        %v2677 = vunpack.c.l.b16 %v629
        %v2678 = vunpack.c.l.b16 %v630
        %v2679 = vunpack.c.l.b16 %v631
        %v2680 = vunpack.c.l.b16 %v632
        %v2681 = vunpack.c.l.b16 %v633
        %v2682 = vunpack.c.l.b16 %v634
        %v2683 = vunpack.c.l.b16 %v635
        %v2684 = vunpack.c.l.b16 %v636
        %v2685 = vunpack.c.l.b16 %v637
        %v2686 = vunpack.c.l.b16 %v638
        %v2687 = vunpack.c.l.b16 %v639
        %v2688 = vunpack.c.l.b16 %v640
        %v2689 = vunpack.c.l.b16 %v641
        %v2690 = vunpack.c.l.b16 %v642
        %v2691 = vunpack.c.l.b16 %v643
        %v2692 = vunpack.c.l.b16 %v644
        %v2693 = vunpack.c.l.b16 %v645
        %v2694 = vunpack.c.l.b16 %v646
        %v2695 = vunpack.c.l.b16 %v647
        %v2696 = vunpack.c.l.b16 %v648
        %v2697 = vunpack.c.l.b16 %v649
        %v2698 = vunpack.c.l.b16 %v650
        %v2699 = vunpack.c.l.b16 %v651
        %v2700 = vunpack.c.l.b16 %v652
        %v2701 = vunpack.c.l.b16 %v653
        %v2702 = vunpack.c.l.b16 %v654
        %v2703 = vunpack.c.l.b16 %v655
        %v2704 = vunpack.c.l.b16 %v656
        %v2705 = vunpack.c.l.b16 %v657
        %v2706 = vunpack.c.l.b16 %v658
        %v2707 = vunpack.c.l.b16 %v659
        %v2708 = vunpack.c.l.b16 %v660
        %v2709 = vunpack.c.l.b16 %v661
        %v2710 = vunpack.c.l.b16 %v662
        %v2711 = vunpack.c.l.b16 %v663
        %v2712 = vunpack.c.l.b16 %v664
        %v2713 = vunpack.c.l.b16 %v665
        %v2714 = vunpack.c.l.b16 %v666
        %v2715 = vunpack.c.l.b16 %v667
        %v2716 = vunpack.c.l.b16 %v668
        %v2717 = vunpack.c.l.b16 %v669
        %v2718 = vunpack.c.l.b16 %v670
        %v2719 = vunpack.c.l.b16 %v671
        %v2720 = vunpack.c.l.b16 %v672
        %v2721 = vunpack.c.l.b16 %v673
        %v2722 = vunpack.c.l.b16 %v674
        %v2723 = vunpack.c.l.b16 %v675
        %v2724 = vunpack.c.l.b16 %v676
        %v2725 = vunpack.c.l.b16 %v677
        %v2726 = vunpack.c.l.b16 %v678
        %v2727 = vunpack.c.l.b16 %v679
        %v2728 = vunpack.c.l.b16 %v680
        %v2729 = vunpack.c.l.b16 %v681
        %v2730 = vunpack.c.l.b16 %v682
        %v2731 = vunpack.c.l.b16 %v683
        %v2732 = vunpack.c.l.b16 %v684
        %v2733 = vunpack.c.l.b16 %v685
        %v2734 = vunpack.c.l.b16 %v686
        %v2735 = vunpack.c.l.b16 %v687
        %v2736 = vunpack.c.l.b16 %v688
        %v2737 = vunpack.c.l.b16 %v689
        %v2738 = vunpack.c.l.b16 %v690
        %v2739 = vunpack.c.l.b16 %v691
        %v2740 = vunpack.c.l.b16 %v692
        %v2741 = vunpack.c.l.b16 %v693
        %v2742 = vunpack.c.l.b16 %v694
        %v2743 = vunpack.c.l.b16 %v695
        %v2744 = vunpack.c.l.b16 %v696
        %v2745 = vunpack.c.l.b16 %v697
        %v2746 = vunpack.c.l.b16 %v698
        %v2747 = vunpack.c.l.b16 %v699
        %v2748 = vunpack.c.l.b16 %v700
        %v2749 = vunpack.c.l.b16 %v701
        %v2750 = vunpack.c.l.b16 %v702
        %v2751 = vunpack.c.l.b16 %v703
        %v2752 = vunpack.c.l.b16 %v704
        %v2753 = vunpack.c.l.b16 %v705
        %v2754 = vunpack.c.l.b16 %v706
        %v2755 = vunpack.c.l.b16 %v707
        %v2756 = vunpack.c.l.b16 %v708
        %v2757 = vunpack.c.l.b16 %v709
        %v2758 = vunpack.c.l.b16 %v710
        %v2759 = vunpack.c.l.b16 %v711
        %v2760 = vunpack.c.l.b16 %v712
        %v2761 = vunpack.c.l.b16 %v713
        %v2762 = vunpack.c.l.b16 %v714
        %v2763 = vunpack.c.l.b16 %v715
        %v2764 = vunpack.c.l.b16 %v716
        %v2765 = vunpack.c.l.b16 %v717
        %v2766 = vunpack.c.l.b16 %v718
        %v2767 = vunpack.c.l.b16 %v719
        %v2768 = vunpack.c.l.b16 %v720
        %v2769 = vunpack.c.l.b16 %v721
        %v2770 = vunpack.c.l.b16 %v722
        %v2771 = vunpack.c.l.b16 %v723
        %v2772 = vunpack.c.l.b16 %v724
        %v2773 = vunpack.c.l.b16 %v725
        %v2774 = vunpack.c.l.b16 %v726
        %v2775 = vunpack.c.l.b16 %v727
        %v2776 = vunpack.c.l.b16 %v728
        %v2777 = vunpack.c.l.b16 %v729
        %v2778 = vunpack.c.l.b16 %v730
        %v2779 = vunpack.c.l.b16 %v731
        %v2780 = vunpack.c.l.b16 %v732
        %v2781 = vunpack.c.l.b16 %v733
        %v2782 = vunpack.c.l.b16 %v734
        %v2783 = vunpack.c.l.b16 %v735
        %v2784 = vunpack.c.l.b16 %v736
        %v2785 = vunpack.c.l.b16 %v737
        %v2786 = vunpack.c.l.b16 %v738
        %v2787 = vunpack.c.l.b16 %v739
        %v2788 = vunpack.c.l.b16 %v740
        %v2789 = vunpack.c.l.b16 %v741
        %v2790 = vunpack.c.l.b16 %v742
        %v2791 = vunpack.c.l.b16 %v743
        %v2792 = vunpack.c.l.b16 %v744
        %v2793 = vunpack.c.l.b16 %v745
        %v2794 = vunpack.c.l.b16 %v746
        %v2795 = vunpack.c.l.b16 %v747
        %v2796 = vunpack.c.l.b16 %v748
        %v2797 = vunpack.c.l.b16 %v749
        %v2798 = vunpack.c.l.b16 %v750
        %v2799 = vunpack.c.l.b16 %v751
        %v2800 = vunpack.c.l.b16 %v752
        %v2801 = vunpack.c.l.b16 %v753
        %v2802 = vunpack.c.l.b16 %v754
        %v2803 = vunpack.c.l.b16 %v755
        %v2804 = vunpack.c.l.b16 %v756
        %v2805 = vunpack.c.l.b16 %v757
        %v2806 = vunpack.c.l.b16 %v758
        %v2807 = vunpack.c.l.b16 %v759
        %v2808 = vunpack.c.l.b16 %v760
        %v2809 = vunpack.c.l.b16 %v761
        %v2810 = vunpack.c.l.b16 %v762
        %v2811 = vunpack.c.l.b16 %v763
        %v2812 = vunpack.c.l.b16 %v764
        %v2813 = vunpack.c.l.b16 %v765
        %v2814 = vunpack.c.l.b16 %v766
        %v2815 = vunpack.c.l.b16 %v767
        %v2816 = vunpack.c.l.b16 %v768
        %v2817 = vunpack.c.l.b16 %v769
        %v2818 = vunpack.c.l.b16 %v770
        %v2819 = vunpack.c.l.b16 %v771
        %v2820 = vunpack.c.l.b16 %v772
        %v2821 = vunpack.c.l.b16 %v773
        %v2822 = vunpack.c.l.b16 %v774
        %v2823 = vunpack.c.l.b16 %v775
        %v2824 = vunpack.c.l.b16 %v776
        %v2825 = vunpack.c.l.b16 %v777
        %v2826 = vunpack.c.l.b16 %v778
        %v2827 = vunpack.c.l.b16 %v779
        %v2828 = vunpack.c.l.b16 %v780
        %v2829 = vunpack.c.l.b16 %v781
        %v2830 = vunpack.c.l.b16 %v782
        %v2831 = vunpack.c.l.b16 %v783
        %v2832 = vunpack.c.l.b16 %v784
        %v2833 = vunpack.c.l.b16 %v785
        %v2834 = vunpack.c.l.b16 %v786
        %v2835 = vunpack.c.l.b16 %v787
        %v2836 = vunpack.c.l.b16 %v788
        %v2837 = vunpack.c.l.b16 %v789
        %v2838 = vunpack.c.l.b16 %v790
        %v2839 = vunpack.c.l.b16 %v791
        %v2840 = vunpack.c.l.b16 %v792
        %v2841 = vunpack.c.l.b16 %v793
        %v2842 = vunpack.c.l.b16 %v794
        %v2843 = vunpack.c.l.b16 %v795
        %v2844 = vunpack.c.l.b16 %v796
        %v2845 = vunpack.c.l.b16 %v797
        %v2846 = vunpack.c.l.b16 %v798
        %v2847 = vunpack.c.l.b16 %v799
        %v2848 = vunpack.c.l.b16 %v800
        %v2849 = vunpack.c.l.b16 %v801
        %v2850 = vunpack.c.l.b16 %v802
        %v2851 = vunpack.c.l.b16 %v803
        %v2852 = vunpack.c.l.b16 %v804
        %v2853 = vunpack.c.l.b16 %v805
        %v2854 = vunpack.c.l.b16 %v806
        %v2855 = vunpack.c.l.b16 %v807
        %v2856 = vunpack.c.l.b16 %v808
        %v2857 = vunpack.c.l.b16 %v809
        %v2858 = vunpack.c.l.b16 %v810
        %v2859 = vunpack.c.l.b16 %v811
        %v2860 = vunpack.c.l.b16 %v812
        %v2861 = vunpack.c.l.b16 %v813
        %v2862 = vunpack.c.l.b16 %v814
        %v2863 = vunpack.c.l.b16 %v815
        %v2864 = vunpack.c.l.b16 %v816
        %v2865 = vunpack.c.l.b16 %v817
        %v2866 = vunpack.c.l.b16 %v818
        %v2867 = vunpack.c.l.b16 %v819
        %v2868 = vunpack.c.l.b16 %v820
        %v2869 = vunpack.c.l.b16 %v821
        %v2870 = vunpack.c.l.b16 %v822
        %v2871 = vunpack.c.l.b16 %v823
        %v2872 = vunpack.c.l.b16 %v824
        %v2873 = vunpack.c.l.b16 %v825
        %v2874 = vunpack.c.l.b16 %v826
        %v2875 = vunpack.c.l.b16 %v827
        %v2876 = vunpack.c.l.b16 %v828
        %v2877 = vunpack.c.l.b16 %v829
        %v2878 = vunpack.c.l.b16 %v830
        %v2879 = vunpack.c.l.b16 %v831
        %v2880 = vunpack.c.l.b16 %v832
        %v2881 = vunpack.c.l.b16 %v833
        %v2882 = vunpack.c.l.b16 %v834
        %v2883 = vunpack.c.l.b16 %v835
        %v2884 = vunpack.c.l.b16 %v836
        %v2885 = vunpack.c.l.b16 %v837
        %v2886 = vunpack.c.l.b16 %v838
        %v2887 = vunpack.c.l.b16 %v839
        %v2888 = vunpack.c.l.b16 %v840
        %v2889 = vunpack.c.l.b16 %v841
        %v2890 = vunpack.c.l.b16 %v842
        %v2891 = vunpack.c.l.b16 %v843
        %v2892 = vunpack.c.l.b16 %v844
        %v2893 = vunpack.c.l.b16 %v845
        %v2894 = vunpack.c.l.b16 %v846
        %v2895 = vunpack.c.l.b16 %v847
        %v2896 = vunpack.c.l.b16 %v848
        %v2897 = vunpack.c.l.b16 %v849
        %v2898 = vunpack.c.l.b16 %v850
        %v2899 = vunpack.c.l.b16 %v851
        %v2900 = vunpack.c.l.b16 %v852
        %v2901 = vunpack.c.l.b16 %v853
        %v2902 = vunpack.c.l.b16 %v854
        %v2903 = vunpack.c.l.b16 %v855
        %v2904 = vunpack.c.l.b16 %v856
        %v2905 = vunpack.c.l.b16 %v857
        %v2906 = vunpack.c.l.b16 %v858
        %v2907 = vunpack.c.l.b16 %v859
        %v2908 = vunpack.c.l.b16 %v860
        %v2909 = vunpack.c.l.b16 %v861
        %v2910 = vunpack.c.l.b16 %v862
        %v2911 = vunpack.c.l.b16 %v863
        %v2912 = vunpack.c.l.b16 %v864
        %v2913 = vunpack.c.l.b16 %v865
        %v2914 = vunpack.c.l.b16 %v866
        %v2915 = vunpack.c.l.b16 %v867
        %v2916 = vunpack.c.l.b16 %v868
        %v2917 = vunpack.c.l.b16 %v869
        %v2918 = vunpack.c.l.b16 %v870
        %v2919 = vunpack.c.l.b16 %v871
        %v2920 = vunpack.c.l.b16 %v872
        %v2921 = vunpack.c.l.b16 %v873
        %v2922 = vunpack.c.l.b16 %v874
        %v2923 = vunpack.c.l.b16 %v875
        %v2924 = vunpack.c.l.b16 %v876
        %v2925 = vunpack.c.l.b16 %v877
        %v2926 = vunpack.c.l.b16 %v878
        %v2927 = vunpack.c.l.b16 %v879
        %v2928 = vunpack.c.l.b16 %v880
        %v2929 = vunpack.c.l.b16 %v881
        %v2930 = vunpack.c.l.b16 %v882
        %v2931 = vunpack.c.l.b16 %v883
        %v2932 = vunpack.c.l.b16 %v884
        %v2933 = vunpack.c.l.b16 %v885
        %v2934 = vunpack.c.l.b16 %v886
        %v2935 = vunpack.c.l.b16 %v887
        %v2936 = vunpack.c.l.b16 %v888
        %v2937 = vunpack.c.l.b16 %v889
        %v2938 = vunpack.c.l.b16 %v890
        %v2939 = vunpack.c.l.b16 %v891
        %v2940 = vunpack.c.l.b16 %v892
        %v2941 = vunpack.c.l.b16 %v893
        %v2942 = vunpack.c.l.b16 %v894
        %v2943 = vunpack.c.l.b16 %v895
        %v2944 = vunpack.c.l.b16 %v896
        %v2945 = vunpack.c.l.b16 %v897
        %v2946 = vunpack.c.l.b16 %v898
        %v2947 = vunpack.c.l.b16 %v899
        %v2948 = vunpack.c.l.b16 %v900
        %v2949 = vunpack.c.l.b16 %v901
        %v2950 = vunpack.c.l.b16 %v902
        %v2951 = vunpack.c.l.b16 %v903
        %v2952 = vunpack.c.l.b16 %v904
        %v2953 = vunpack.c.l.b16 %v905
        %v2954 = vunpack.c.l.b16 %v906
        %v2955 = vunpack.c.l.b16 %v907
        %v2956 = vunpack.c.l.b16 %v908
        %v2957 = vunpack.c.l.b16 %v909
        %v2958 = vunpack.c.l.b16 %v910
        %v2959 = vunpack.c.l.b16 %v911
        %v2960 = vunpack.c.l.b16 %v912
        %v2961 = vunpack.c.l.b16 %v913
        %v2962 = vunpack.c.l.b16 %v914
        %v2963 = vunpack.c.l.b16 %v915
        %v2964 = vunpack.c.l.b16 %v916
        %v2965 = vunpack.c.l.b16 %v917
        %v2966 = vunpack.c.l.b16 %v918
        %v2967 = vunpack.c.l.b16 %v919
        %v2968 = vunpack.c.l.b16 %v920
        %v2969 = vunpack.c.l.b16 %v921
        %v2970 = vunpack.c.l.b16 %v922
        %v2971 = vunpack.c.l.b16 %v923
        %v2972 = vunpack.c.l.b16 %v924
        %v2973 = vunpack.c.l.b16 %v925
        %v2974 = vunpack.c.l.b16 %v926
        %v2975 = vunpack.c.l.b16 %v927
        %v2976 = vunpack.c.l.b16 %v928
        %v2977 = vunpack.c.l.b16 %v929
        %v2978 = vunpack.c.l.b16 %v930
        %v2979 = vunpack.c.l.b16 %v931
        %v2980 = vunpack.c.l.b16 %v932
        %v2981 = vunpack.c.l.b16 %v933
        %v2982 = vunpack.c.l.b16 %v934
        %v2983 = vunpack.c.l.b16 %v935
        %v2984 = vunpack.c.l.b16 %v936
        %v2985 = vunpack.c.l.b16 %v937
        %v2986 = vunpack.c.l.b16 %v938
        %v2987 = vunpack.c.l.b16 %v939
        %v2988 = vunpack.c.l.b16 %v940
        %v2989 = vunpack.c.l.b16 %v941
        %v2990 = vunpack.c.l.b16 %v942
        %v2991 = vunpack.c.l.b16 %v943
        %v2992 = vunpack.c.l.b16 %v944
        %v2993 = vunpack.c.l.b16 %v945
        %v2994 = vunpack.c.l.b16 %v946
        %v2995 = vunpack.c.l.b16 %v947
        %v2996 = vunpack.c.l.b16 %v948
        %v2997 = vunpack.c.l.b16 %v949
        %v2998 = vunpack.c.l.b16 %v950
        %v2999 = vunpack.c.l.b16 %v951
        %v3000 = vunpack.c.l.b16 %v952
        %v3001 = vunpack.c.l.b16 %v953
        %v3002 = vunpack.c.l.b16 %v954
        %v3003 = vunpack.c.l.b16 %v955
        %v3004 = vunpack.c.l.b16 %v956
        %v3005 = vunpack.c.l.b16 %v957
        %v3006 = vunpack.c.l.b16 %v958
        %v3007 = vunpack.c.l.b16 %v959
        %v3008 = vunpack.c.l.b16 %v960
        %v3009 = vunpack.c.l.b16 %v961
        %v3010 = vunpack.c.l.b16 %v962
        %v3011 = vunpack.c.l.b16 %v963
        %v3012 = vunpack.c.l.b16 %v964
        %v3013 = vunpack.c.l.b16 %v965
        %v3014 = vunpack.c.l.b16 %v966
        %v3015 = vunpack.c.l.b16 %v967
        %v3016 = vunpack.c.l.b16 %v968
        %v3017 = vunpack.c.l.b16 %v969
        %v3018 = vunpack.c.l.b16 %v970
        %v3019 = vunpack.c.l.b16 %v971
        %v3020 = vunpack.c.l.b16 %v972
        %v3021 = vunpack.c.l.b16 %v973
        %v3022 = vunpack.c.l.b16 %v974
        %v3023 = vunpack.c.l.b16 %v975
        %v3024 = vunpack.c.l.b16 %v976
        %v3025 = vunpack.c.l.b16 %v977
        %v3026 = vunpack.c.l.b16 %v978
        %v3027 = vunpack.c.l.b16 %v979
        %v3028 = vunpack.c.l.b16 %v980
        %v3029 = vunpack.c.l.b16 %v981
        %v3030 = vunpack.c.l.b16 %v982
        %v3031 = vunpack.c.l.b16 %v983
        %v3032 = vunpack.c.l.b16 %v984
        %v3033 = vunpack.c.l.b16 %v985
        %v3034 = vunpack.c.l.b16 %v986
        %v3035 = vunpack.c.l.b16 %v987
        %v3036 = vunpack.c.l.b16 %v988
        %v3037 = vunpack.c.l.b16 %v989
        %v3038 = vunpack.c.l.b16 %v990
        %v3039 = vunpack.c.l.b16 %v991
        %v3040 = vunpack.c.l.b16 %v992
        %v3041 = vunpack.c.l.b16 %v993
        %v3042 = vunpack.c.l.b16 %v994
        %v3043 = vunpack.c.l.b16 %v995
        %v3044 = vunpack.c.l.b16 %v996
        %v3045 = vunpack.c.l.b16 %v997
        %v3046 = vunpack.c.l.b16 %v998
        %v3047 = vunpack.c.l.b16 %v999
        %v3048 = vunpack.c.l.b16 %v1000
        %v3049 = vunpack.c.l.b16 %v1001
        %v3050 = vunpack.c.l.b16 %v1002
        %v3051 = vunpack.c.l.b16 %v1003
        %v3052 = vunpack.c.l.b16 %v1004
        %v3053 = vunpack.c.l.b16 %v1005
        %v3054 = vunpack.c.l.b16 %v1006
        %v3055 = vunpack.c.l.b16 %v1007
        %v3056 = vunpack.c.l.b16 %v1008
        %v3057 = vunpack.c.l.b16 %v1009
        %v3058 = vunpack.c.l.b16 %v1010
        %v3059 = vunpack.c.l.b16 %v1011
        %v3060 = vunpack.c.l.b16 %v1012
        %v3061 = vunpack.c.l.b16 %v1013
        %v3062 = vunpack.c.l.b16 %v1014
        %v3063 = vunpack.c.l.b16 %v1015
        %v3064 = vunpack.c.l.b16 %v1016
        %v3065 = vunpack.c.l.b16 %v1017
        %v3066 = vunpack.c.l.b16 %v1018
        %v3067 = vunpack.c.l.b16 %v1019
        %v3068 = vunpack.c.l.b16 %v1020
        %v3069 = vunpack.c.l.b16 %v1021
        %v3070 = vunpack.c.l.b16 %v1022
        %v3071 = vunpack.c.l.b16 %v1023
        %v3072 = vunpack.c.l.b16 %v1024
        %v3073 = vunpack.c.l.b16 %v1025
        %v3074 = vunpack.c.l.b16 %v1026
        %v3075 = vunpack.c.l.b16 %v1027
        %v3076 = vunpack.c.l.b16 %v1028
        %v3077 = vunpack.c.l.b16 %v1029
        %v3078 = vunpack.c.l.b16 %v1030
        %v3079 = vunpack.c.l.b16 %v1031
        %v3080 = vunpack.c.l.b16 %v1032
        %v3081 = vunpack.c.l.b16 %v1033
        %v3082 = vunpack.c.l.b16 %v1034
        %v3083 = vunpack.c.l.b16 %v1035
        %v3084 = vunpack.c.l.b16 %v1036
        %v3085 = vunpack.c.l.b16 %v1037
        %v3086 = vunpack.c.l.b16 %v1038
        %v3087 = vunpack.c.l.b16 %v1039
        %v3088 = vunpack.c.l.b16 %v1040
        %v3089 = vunpack.c.l.b16 %v1041
        %v3090 = vunpack.c.l.b16 %v1042
        %v3091 = vunpack.c.l.b16 %v1043
        %v3092 = vunpack.c.l.b16 %v1044
        %v3093 = vunpack.c.l.b16 %v1045
        %v3094 = vunpack.c.l.b16 %v1046
        %v3095 = vunpack.c.l.b16 %v1047
        %v3096 = vunpack.c.l.b16 %v1048
        %v3097 = vunpack.c.l.b16 %v1049
        %v3098 = vunpack.c.l.b16 %v1050
        %v3099 = vunpack.c.l.b16 %v1051
        %v3100 = vunpack.c.l.b16 %v1052
        %v3101 = vunpack.c.l.b16 %v1053
        %v3102 = vunpack.c.l.b16 %v1054
        %v3103 = vunpack.c.l.b16 %v1055
        %v3104 = vunpack.c.l.b16 %v1056
        %v3105 = vunpack.c.l.b16 %v1057
        %v3106 = vunpack.c.l.b16 %v1058
        %v3107 = vunpack.c.l.b16 %v1059
        %v3108 = vunpack.c.l.b16 %v1060
        %v3109 = vunpack.c.l.b16 %v1061
        %v3110 = vunpack.c.l.b16 %v1062
        %v3111 = vunpack.c.l.b16 %v1063
        %v3112 = vunpack.c.l.b16 %v1064
        %v3113 = vunpack.c.l.b16 %v1065
        %v3114 = vunpack.c.l.b16 %v1066
        %v3115 = vunpack.c.l.b16 %v1067
        %v3116 = vunpack.c.l.b16 %v1068
        %v3117 = vunpack.c.l.b16 %v1069
        %v3118 = vunpack.c.l.b16 %v1070
        %v3119 = vunpack.c.l.b16 %v1071
        %v3120 = vunpack.c.l.b16 %v1072
        %v3121 = vunpack.c.l.b16 %v1073
        %v3122 = vunpack.c.l.b16 %v1074
        %v3123 = vunpack.c.l.b16 %v1075
        %v3124 = vunpack.c.l.b16 %v1076
        %v3125 = vunpack.c.l.b16 %v1077
        %v3126 = vunpack.c.l.b16 %v1078
        %v3127 = vunpack.c.l.b16 %v1079
        %v3128 = vunpack.c.l.b16 %v1080
        %v3129 = vunpack.c.l.b16 %v1081
        %v3130 = vunpack.c.l.b16 %v1082
        %v3131 = vunpack.c.l.b16 %v1083
        %v3132 = vunpack.c.l.b16 %v1084
        %v3133 = vunpack.c.l.b16 %v1085
        %v3134 = vunpack.c.l.b16 %v1086
        %v3135 = vunpack.c.l.b16 %v1087
        %v3136 = vunpack.c.l.b16 %v1088
        %v3137 = vunpack.c.l.b16 %v1089
        %v3138 = vunpack.c.l.b16 %v1090
        %v3139 = vunpack.c.l.b16 %v1091
        %v3140 = vunpack.c.l.b16 %v1092
        %v3141 = vunpack.c.l.b16 %v1093
        %v3142 = vunpack.c.l.b16 %v1094
        %v3143 = vunpack.c.l.b16 %v1095
        %v3144 = vunpack.c.l.b16 %v1096
        %v3145 = vunpack.c.l.b16 %v1097
        %v3146 = vunpack.c.l.b16 %v1098
        %v3147 = vunpack.c.l.b16 %v1099
        %v3148 = vunpack.c.l.b16 %v1100
        %v3149 = vunpack.c.l.b16 %v1101
        %v3150 = vunpack.c.l.b16 %v1102
        %v3151 = vunpack.c.l.b16 %v1103
        %v3152 = vunpack.c.l.b16 %v1104
        %v3153 = vunpack.c.l.b16 %v1105
        %v3154 = vunpack.c.l.b16 %v1106
        %v3155 = vunpack.c.l.b16 %v1107
        %v3156 = vunpack.c.l.b16 %v1108
        %v3157 = vunpack.c.l.b16 %v1109
        %v3158 = vunpack.c.l.b16 %v1110
        %v3159 = vunpack.c.l.b16 %v1111
        %v3160 = vunpack.c.l.b16 %v1112
        %v3161 = vunpack.c.l.b16 %v1113
        %v3162 = vunpack.c.l.b16 %v1114
        %v3163 = vunpack.c.l.b16 %v1115
        %v3164 = vunpack.c.l.b16 %v1116
        %v3165 = vunpack.c.l.b16 %v1117
        %v3166 = vunpack.c.l.b16 %v1118
        %v3167 = vunpack.c.l.b16 %v1119
        %v3168 = vunpack.c.l.b16 %v1120
        %v3169 = vunpack.c.l.b16 %v1121
        %v3170 = vunpack.c.l.b16 %v1122
        %v3171 = vunpack.c.l.b16 %v1123
        %v3172 = vunpack.c.l.b16 %v1124
        %v3173 = vunpack.c.l.b16 %v1125
        %v3174 = vunpack.c.l.b16 %v1126
        %v3175 = vunpack.c.l.b16 %v1127
        %v3176 = vunpack.c.l.b16 %v1128
        %v3177 = vunpack.c.l.b16 %v1129
        %v3178 = vunpack.c.l.b16 %v1130
        %v3179 = vunpack.c.l.b16 %v1131
        %v3180 = vunpack.c.l.b16 %v1132
        %v3181 = vunpack.c.l.b16 %v1133
        %v3182 = vunpack.c.l.b16 %v1134
        %v3183 = vunpack.c.l.b16 %v1135
        %v3184 = vunpack.c.l.b16 %v1136
        %v3185 = vunpack.c.l.b16 %v1137
        %v3186 = vunpack.c.l.b16 %v1138
        %v3187 = vunpack.c.l.b16 %v1139
        %v3188 = vunpack.c.l.b16 %v1140
        %v3189 = vunpack.c.l.b16 %v1141
        %v3190 = vunpack.c.l.b16 %v1142
        %v3191 = vunpack.c.l.b16 %v1143
        %v3192 = vunpack.c.l.b16 %v1144
        %v3193 = vunpack.c.l.b16 %v1145
        %v3194 = vunpack.c.l.b16 %v1146
        %v3195 = vunpack.c.l.b16 %v1147
        %v3196 = vunpack.c.l.b16 %v1148
        %v3197 = vunpack.c.l.b16 %v1149
        %v3198 = vunpack.c.l.b16 %v1150
        %v3199 = vunpack.c.l.b16 %v1151
        %v3200 = vunpack.c.l.b16 %v1152
        %v3201 = vunpack.c.l.b16 %v1153
        %v3202 = vunpack.c.l.b16 %v1154
        %v3203 = vunpack.c.l.b16 %v1155
        %v3204 = vunpack.c.l.b16 %v1156
        %v3205 = vunpack.c.l.b16 %v1157
        %v3206 = vunpack.c.l.b16 %v1158
        %v3207 = vunpack.c.l.b16 %v1159
        %v3208 = vunpack.c.l.b16 %v1160
        %v3209 = vunpack.c.l.b16 %v1161
        %v3210 = vunpack.c.l.b16 %v1162
        %v3211 = vunpack.c.l.b16 %v1163
        %v3212 = vunpack.c.l.b16 %v1164
        %v3213 = vunpack.c.l.b16 %v1165
        %v3214 = vunpack.c.l.b16 %v1166
        %v3215 = vunpack.c.l.b16 %v1167
        %v3216 = vunpack.c.l.b16 %v1168
        %v3217 = vunpack.c.l.b16 %v1169
        %v3218 = vunpack.c.l.b16 %v1170
        %v3219 = vunpack.c.l.b16 %v1171
        %v3220 = vunpack.c.l.b16 %v1172
        %v3221 = vunpack.c.l.b16 %v1173
        %v3222 = vunpack.c.l.b16 %v1174
        %v3223 = vunpack.c.l.b16 %v1175
        %v3224 = vunpack.c.l.b16 %v1176
        %v3225 = vunpack.c.l.b16 %v1177
        %v3226 = vunpack.c.l.b16 %v1178
        %v3227 = vunpack.c.l.b16 %v1179
        %v3228 = vunpack.c.l.b16 %v1180
        %v3229 = vunpack.c.l.b16 %v1181
        %v3230 = vunpack.c.l.b16 %v1182
        %v3231 = vunpack.c.l.b16 %v1183
        %v3232 = vunpack.c.l.b16 %v1184
        %v3233 = vunpack.c.l.b16 %v1185
        %v3234 = vunpack.c.l.b16 %v1186
        %v3235 = vunpack.c.l.b16 %v1187
        %v3236 = vunpack.c.l.b16 %v1188
        %v3237 = vunpack.c.l.b16 %v1189
        %v3238 = vunpack.c.l.b16 %v1190
        %v3239 = vunpack.c.l.b16 %v1191
        %v3240 = vunpack.c.l.b16 %v1192
        %v3241 = vunpack.c.l.b16 %v1193
        %v3242 = vunpack.c.l.b16 %v1194
        %v3243 = vunpack.c.l.b16 %v1195
        %v3244 = vunpack.c.l.b16 %v1196
        %v3245 = vunpack.c.l.b16 %v1197
        %v3246 = vunpack.c.l.b16 %v1198
        %v3247 = vunpack.c.l.b16 %v1199
        %v3248 = vunpack.c.l.b16 %v1200
        %v3249 = vunpack.c.l.b16 %v1201
        %v3250 = vunpack.c.l.b16 %v1202
        %v3251 = vunpack.c.l.b16 %v1203
        %v3252 = vunpack.c.l.b16 %v1204
        %v3253 = vunpack.c.l.b16 %v1205
        %v3254 = vunpack.c.l.b16 %v1206
        %v3255 = vunpack.c.l.b16 %v1207
        %v3256 = vunpack.c.l.b16 %v1208
        %v3257 = vunpack.c.l.b16 %v1209
        %v3258 = vunpack.c.l.b16 %v1210
        %v3259 = vunpack.c.l.b16 %v1211
        %v3260 = vunpack.c.l.b16 %v1212
        %v3261 = vunpack.c.l.b16 %v1213
        %v3262 = vunpack.c.l.b16 %v1214
        %v3263 = vunpack.c.l.b16 %v1215
        %v3264 = vunpack.c.l.b16 %v1216
        %v3265 = vunpack.c.l.b16 %v1217
        %v3266 = vunpack.c.l.b16 %v1218
        %v3267 = vunpack.c.l.b16 %v1219
        %v3268 = vunpack.c.l.b16 %v1220
        %v3269 = vunpack.c.l.b16 %v1221
        %v3270 = vunpack.c.l.b16 %v1222
        %v3271 = vunpack.c.l.b16 %v1223
        %v3272 = vunpack.c.l.b16 %v1224
        %v3273 = vunpack.c.l.b16 %v1225
        %v3274 = vunpack.c.l.b16 %v1226
        %v3275 = vunpack.c.l.b16 %v1227
        %v3276 = vunpack.c.l.b16 %v1228
        %v3277 = vunpack.c.l.b16 %v1229
        %v3278 = vunpack.c.l.b16 %v1230
        %v3279 = vunpack.c.l.b16 %v1231
        %v3280 = vunpack.c.l.b16 %v1232
        %v3281 = vunpack.c.l.b16 %v1233
        %v3282 = vunpack.c.l.b16 %v1234
        %v3283 = vunpack.c.l.b16 %v1235
        %v3284 = vunpack.c.l.b16 %v1236
        %v3285 = vunpack.c.l.b16 %v1237
        %v3286 = vunpack.c.l.b16 %v1238
        %v3287 = vunpack.c.l.b16 %v1239
        %v3288 = vunpack.c.l.b16 %v1240
        %v3289 = vunpack.c.l.b16 %v1241
        %v3290 = vunpack.c.l.b16 %v1242
        %v3291 = vunpack.c.l.b16 %v1243
        %v3292 = vunpack.c.l.b16 %v1244
        %v3293 = vunpack.c.l.b16 %v1245
        %v3294 = vunpack.c.l.b16 %v1246
        %v3295 = vunpack.c.l.b16 %v1247
        %v3296 = vunpack.c.l.b16 %v1248
        %v3297 = vunpack.c.l.b16 %v1249
        %v3298 = vunpack.c.l.b16 %v1250
        %v3299 = vunpack.c.l.b16 %v1251
        %v3300 = vunpack.c.l.b16 %v1252
        %v3301 = vunpack.c.l.b16 %v1253
        %v3302 = vunpack.c.l.b16 %v1254
        %v3303 = vunpack.c.l.b16 %v1255
        %v3304 = vunpack.c.l.b16 %v1256
        %v3305 = vunpack.c.l.b16 %v1257
        %v3306 = vunpack.c.l.b16 %v1258
        %v3307 = vunpack.c.l.b16 %v1259
        %v3308 = vunpack.c.l.b16 %v1260
        %v3309 = vunpack.c.l.b16 %v1261
        %v3310 = vunpack.c.l.b16 %v1262
        %v3311 = vunpack.c.l.b16 %v1263
        %v3312 = vunpack.c.l.b16 %v1264
        %v3313 = vunpack.c.l.b16 %v1265
        %v3314 = vunpack.c.l.b16 %v1266
        %v3315 = vunpack.c.l.b16 %v1267
        %v3316 = vunpack.c.l.b16 %v1268
        %v3317 = vunpack.c.l.b16 %v1269
        %v3318 = vunpack.c.l.b16 %v1270
        %v3319 = vunpack.c.l.b16 %v1271
        %v3320 = vunpack.c.l.b16 %v1272
        %v3321 = vunpack.c.l.b16 %v1273
        %v3322 = vunpack.c.l.b16 %v1274
        %v3323 = vunpack.c.l.b16 %v1275
        %v3324 = vunpack.c.l.b16 %v1276
        %v3325 = vunpack.c.l.b16 %v1277
        %v3326 = vunpack.c.l.b16 %v1278
        %v3327 = vunpack.c.l.b16 %v1279
        %v3328 = vunpack.c.l.b16 %v1280
        %v3329 = vunpack.c.l.b16 %v1281
        %v3330 = vunpack.c.l.b16 %v1282
        %v3331 = vunpack.c.l.b16 %v1283
        %v3332 = vunpack.c.l.b16 %v1284
        %v3333 = vunpack.c.l.b16 %v1285
        %v3334 = vunpack.c.l.b16 %v1286
        %v3335 = vunpack.c.l.b16 %v1287
        %v3336 = vunpack.c.l.b16 %v1288
        %v3337 = vunpack.c.l.b16 %v1289
        %v3338 = vunpack.c.l.b16 %v1290
        %v3339 = vunpack.c.l.b16 %v1291
        %v3340 = vunpack.c.l.b16 %v1292
        %v3341 = vunpack.c.l.b16 %v1293
        %v3342 = vunpack.c.l.b16 %v1294
        %v3343 = vunpack.c.l.b16 %v1295
        %v3344 = vunpack.c.l.b16 %v1296
        %v3345 = vunpack.c.l.b16 %v1297
        %v3346 = vunpack.c.l.b16 %v1298
        %v3347 = vunpack.c.l.b16 %v1299
        %v3348 = vunpack.c.l.b16 %v1300
        %v3349 = vunpack.c.l.b16 %v1301
        %v3350 = vunpack.c.l.b16 %v1302
        %v3351 = vunpack.c.l.b16 %v1303
        %v3352 = vunpack.c.l.b16 %v1304
        %v3353 = vunpack.c.l.b16 %v1305
        %v3354 = vunpack.c.l.b16 %v1306
        %v3355 = vunpack.c.l.b16 %v1307
        %v3356 = vunpack.c.l.b16 %v1308
        %v3357 = vunpack.c.l.b16 %v1309
        %v3358 = vunpack.c.l.b16 %v1310
        %v3359 = vunpack.c.l.b16 %v1311
        %v3360 = vunpack.c.l.b16 %v1312
        %v3361 = vunpack.c.l.b16 %v1313
        %v3362 = vunpack.c.l.b16 %v1314
        %v3363 = vunpack.c.l.b16 %v1315
        %v3364 = vunpack.c.l.b16 %v1316
        %v3365 = vunpack.c.l.b16 %v1317
        %v3366 = vunpack.c.l.b16 %v1318
        %v3367 = vunpack.c.l.b16 %v1319
        %v3368 = vunpack.c.l.b16 %v1320
        %v3369 = vunpack.c.l.b16 %v1321
        %v3370 = vunpack.c.l.b16 %v1322
        %v3371 = vunpack.c.l.b16 %v1323
        %v3372 = vunpack.c.l.b16 %v1324
        %v3373 = vunpack.c.l.b16 %v1325
        %v3374 = vunpack.c.l.b16 %v1326
        %v3375 = vunpack.c.l.b16 %v1327
        %v3376 = vunpack.c.l.b16 %v1328
        %v3377 = vunpack.c.l.b16 %v1329
        %v3378 = vunpack.c.l.b16 %v1330
        %v3379 = vunpack.c.l.b16 %v1331
        %v3380 = vunpack.c.l.b16 %v1332
        %v3381 = vunpack.c.l.b16 %v1333
        %v3382 = vunpack.c.l.b16 %v1334
        %v3383 = vunpack.c.l.b16 %v1335
        %v3384 = vunpack.c.l.b16 %v1336
        %v3385 = vunpack.c.l.b16 %v1337
        %v3386 = vunpack.c.l.b16 %v1338
        %v3387 = vunpack.c.l.b16 %v1339
        %v3388 = vunpack.c.l.b16 %v1340
        %v3389 = vunpack.c.l.b16 %v1341
        %v3390 = vunpack.c.l.b16 %v1342
        %v3391 = vunpack.c.l.b16 %v1343
        %v3392 = vunpack.c.l.b16 %v1344
        %v3393 = vunpack.c.l.b16 %v1345
        %v3394 = vunpack.c.l.b16 %v1346
        %v3395 = vunpack.c.l.b16 %v1347
        %v3396 = vunpack.c.l.b16 %v1348
        %v3397 = vunpack.c.l.b16 %v1349
        %v3398 = vunpack.c.l.b16 %v1350
        %v3399 = vunpack.c.l.b16 %v1351
        %v3400 = vunpack.c.l.b16 %v1352
        %v3401 = vunpack.c.l.b16 %v1353
        %v3402 = vunpack.c.l.b16 %v1354
        %v3403 = vunpack.c.l.b16 %v1355
        %v3404 = vunpack.c.l.b16 %v1356
        %v3405 = vunpack.c.l.b16 %v1357
        %v3406 = vunpack.c.l.b16 %v1358
        %v3407 = vunpack.c.l.b16 %v1359
        %v3408 = vunpack.c.l.b16 %v1360
        %v3409 = vunpack.c.l.b16 %v1361
        %v3410 = vunpack.c.l.b16 %v1362
        %v3411 = vunpack.c.l.b16 %v1363
        %v3412 = vunpack.c.l.b16 %v1364
        %v3413 = vunpack.c.l.b16 %v1365
        %v3414 = vunpack.c.l.b16 %v1366
        %v3415 = vunpack.c.l.b16 %v1367
        %v3416 = vunpack.c.l.b16 %v1368
        %v3417 = vunpack.c.l.b16 %v1369
        %v3418 = vunpack.c.l.b16 %v1370
        %v3419 = vunpack.c.l.b16 %v1371
        %v3420 = vunpack.c.l.b16 %v1372
        %v3421 = vunpack.c.l.b16 %v1373
        %v3422 = vunpack.c.l.b16 %v1374
        %v3423 = vunpack.c.l.b16 %v1375
        %v3424 = vunpack.c.l.b16 %v1376
        %v3425 = vunpack.c.l.b16 %v1377
        %v3426 = vunpack.c.l.b16 %v1378
        %v3427 = vunpack.c.l.b16 %v1379
        %v3428 = vunpack.c.l.b16 %v1380
        %v3429 = vunpack.c.l.b16 %v1381
        %v3430 = vunpack.c.l.b16 %v1382
        %v3431 = vunpack.c.l.b16 %v1383
        %v3432 = vunpack.c.l.b16 %v1384
        %v3433 = vunpack.c.l.b16 %v1385
        %v3434 = vunpack.c.l.b16 %v1386
        %v3435 = vunpack.c.l.b16 %v1387
        %v3436 = vunpack.c.l.b16 %v1388
        %v3437 = vunpack.c.l.b16 %v1389
        %v3438 = vunpack.c.l.b16 %v1390
        %v3439 = vunpack.c.l.b16 %v1391
        %v3440 = vunpack.c.l.b16 %v1392
        %v3441 = vunpack.c.l.b16 %v1393
        %v3442 = vunpack.c.l.b16 %v1394
        %v3443 = vunpack.c.l.b16 %v1395
        %v3444 = vunpack.c.l.b16 %v1396
        %v3445 = vunpack.c.l.b16 %v1397
        %v3446 = vunpack.c.l.b16 %v1398
        %v3447 = vunpack.c.l.b16 %v1399
        %v3448 = vunpack.c.l.b16 %v1400
        %v3449 = vunpack.c.l.b16 %v1401
        %v3450 = vunpack.c.l.b16 %v1402
        %v3451 = vunpack.c.l.b16 %v1403
        %v3452 = vunpack.c.l.b16 %v1404
        %v3453 = vunpack.c.l.b16 %v1405
        %v3454 = vunpack.c.l.b16 %v1406
        %v3455 = vunpack.c.l.b16 %v1407
        %v3456 = vunpack.c.l.b16 %v1408
        %v3457 = vunpack.c.l.b16 %v1409
        %v3458 = vunpack.c.l.b16 %v1410
        %v3459 = vunpack.c.l.b16 %v1411
        %v3460 = vunpack.c.l.b16 %v1412
        %v3461 = vunpack.c.l.b16 %v1413
        %v3462 = vunpack.c.l.b16 %v1414
        %v3463 = vunpack.c.l.b16 %v1415
        %v3464 = vunpack.c.l.b16 %v1416
        %v3465 = vunpack.c.l.b16 %v1417
        %v3466 = vunpack.c.l.b16 %v1418
        %v3467 = vunpack.c.l.b16 %v1419
        %v3468 = vunpack.c.l.b16 %v1420
        %v3469 = vunpack.c.l.b16 %v1421
        %v3470 = vunpack.c.l.b16 %v1422
        %v3471 = vunpack.c.l.b16 %v1423
        %v3472 = vunpack.c.l.b16 %v1424
        %v3473 = vunpack.c.l.b16 %v1425
        %v3474 = vunpack.c.l.b16 %v1426
        %v3475 = vunpack.c.l.b16 %v1427
        %v3476 = vunpack.c.l.b16 %v1428
        %v3477 = vunpack.c.l.b16 %v1429
        %v3478 = vunpack.c.l.b16 %v1430
        %v3479 = vunpack.c.l.b16 %v1431
        %v3480 = vunpack.c.l.b16 %v1432
        %v3481 = vunpack.c.l.b16 %v1433
        %v3482 = vunpack.c.l.b16 %v1434
        %v3483 = vunpack.c.l.b16 %v1435
        %v3484 = vunpack.c.l.b16 %v1436
        %v3485 = vunpack.c.l.b16 %v1437
        %v3486 = vunpack.c.l.b16 %v1438
        %v3487 = vunpack.c.l.b16 %v1439
        %v3488 = vunpack.c.l.b16 %v1440
        %v3489 = vunpack.c.l.b16 %v1441
        %v3490 = vunpack.c.l.b16 %v1442
        %v3491 = vunpack.c.l.b16 %v1443
        %v3492 = vunpack.c.l.b16 %v1444
        %v3493 = vunpack.c.l.b16 %v1445
        %v3494 = vunpack.c.l.b16 %v1446
        %v3495 = vunpack.c.l.b16 %v1447
        %v3496 = vunpack.c.l.b16 %v1448
        %v3497 = vunpack.c.l.b16 %v1449
        %v3498 = vunpack.c.l.b16 %v1450
        %v3499 = vunpack.c.l.b16 %v1451
        %v3500 = vunpack.c.l.b16 %v1452
        %v3501 = vunpack.c.l.b16 %v1453
        %v3502 = vunpack.c.l.b16 %v1454
        %v3503 = vunpack.c.l.b16 %v1455
        %v3504 = vunpack.c.l.b16 %v1456
        %v3505 = vunpack.c.l.b16 %v1457
        %v3506 = vunpack.c.l.b16 %v1458
        %v3507 = vunpack.c.l.b16 %v1459
        %v3508 = vunpack.c.l.b16 %v1460
        %v3509 = vunpack.c.l.b16 %v1461
        %v3510 = vunpack.c.l.b16 %v1462
        %v3511 = vunpack.c.l.b16 %v1463
        %v3512 = vunpack.c.l.b16 %v1464
        %v3513 = vunpack.c.l.b16 %v1465
        %v3514 = vunpack.c.l.b16 %v1466
        %v3515 = vunpack.c.l.b16 %v1467
        %v3516 = vunpack.c.l.b16 %v1468
        %v3517 = vunpack.c.l.b16 %v1469
        %v3518 = vunpack.c.l.b16 %v1470
        %v3519 = vunpack.c.l.b16 %v1471
        %v3520 = vunpack.c.l.b16 %v1472
        %v3521 = vunpack.c.l.b16 %v1473
        %v3522 = vunpack.c.l.b16 %v1474
        %v3523 = vunpack.c.l.b16 %v1475
        %v3524 = vunpack.c.l.b16 %v1476
        %v3525 = vunpack.c.l.b16 %v1477
        %v3526 = vunpack.c.l.b16 %v1478
        %v3527 = vunpack.c.l.b16 %v1479
        %v3528 = vunpack.c.l.b16 %v1480
        %v3529 = vunpack.c.l.b16 %v1481
        %v3530 = vunpack.c.l.b16 %v1482
        %v3531 = vunpack.c.l.b16 %v1483
        %v3532 = vunpack.c.l.b16 %v1484
        %v3533 = vunpack.c.l.b16 %v1485
        %v3534 = vunpack.c.l.b16 %v1486
        %v3535 = vunpack.c.l.b16 %v1487
        %v3536 = vunpack.c.l.b16 %v1488
        %v3537 = vunpack.c.l.b16 %v1489
        %v3538 = vunpack.c.l.b16 %v1490
        %v3539 = vunpack.c.l.b16 %v1491
        %v3540 = vunpack.c.l.b16 %v1492
        %v3541 = vunpack.c.l.b16 %v1493
        %v3542 = vunpack.c.l.b16 %v1494
        %v3543 = vunpack.c.l.b16 %v1495
        %v3544 = vunpack.c.l.b16 %v1496
        %v3545 = vunpack.c.l.b16 %v1497
        %v3546 = vunpack.c.l.b16 %v1498
        %v3547 = vunpack.c.l.b16 %v1499
        %v3548 = vunpack.c.l.b16 %v1500
        %v3549 = vunpack.c.l.b16 %v1501
        %v3550 = vunpack.c.l.b16 %v1502
        %v3551 = vunpack.c.l.b16 %v1503
        %v3552 = vunpack.c.l.b16 %v1504
        %v3553 = vunpack.c.l.b16 %v1505
        %v3554 = vunpack.c.l.b16 %v1506
        %v3555 = vunpack.c.l.b16 %v1507
        %v3556 = vunpack.c.l.b16 %v1508
        %v3557 = vunpack.c.l.b16 %v1509
        %v3558 = vunpack.c.l.b16 %v1510
        %v3559 = vunpack.c.l.b16 %v1511
        %v3560 = vunpack.c.l.b16 %v1512
        %v3561 = vunpack.c.l.b16 %v1513
        %v3562 = vunpack.c.l.b16 %v1514
        %v3563 = vunpack.c.l.b16 %v1515
        %v3564 = vunpack.c.l.b16 %v1516
        %v3565 = vunpack.c.l.b16 %v1517
        %v3566 = vunpack.c.l.b16 %v1518
        %v3567 = vunpack.c.l.b16 %v1519
        %v3568 = vunpack.c.l.b16 %v1520
        %v3569 = vunpack.c.l.b16 %v1521
        %v3570 = vunpack.c.l.b16 %v1522
        %v3571 = vunpack.c.l.b16 %v1523
        %v3572 = vunpack.c.l.b16 %v1524
        %v3573 = vunpack.c.l.b16 %v1525
        %v3574 = vunpack.c.l.b16 %v1526
        %v3575 = vunpack.c.l.b16 %v1527
        %v3576 = vunpack.c.l.b16 %v1528
        %v3577 = vunpack.c.l.b16 %v1529
        %v3578 = vunpack.c.l.b16 %v1530
        %v3579 = vunpack.c.l.b16 %v1531
        %v3580 = vunpack.c.l.b16 %v1532
        %v3581 = vunpack.c.l.b16 %v1533
        %v3582 = vunpack.c.l.b16 %v1534
        %v3583 = vunpack.c.l.b16 %v1535
        %v3584 = vunpack.c.l.b16 %v1536
        %v3585 = vunpack.c.l.b16 %v1537
        %v3586 = vunpack.c.l.b16 %v1538
        %v3587 = vunpack.c.l.b16 %v1539
        %v3588 = vunpack.c.l.b16 %v1540
        %v3589 = vunpack.c.l.b16 %v1541
        %v3590 = vunpack.c.l.b16 %v1542
        %v3591 = vunpack.c.l.b16 %v1543
        %v3592 = vunpack.c.l.b16 %v1544
        %v3593 = vunpack.c.l.b16 %v1545
        %v3594 = vunpack.c.l.b16 %v1546
        %v3595 = vunpack.c.l.b16 %v1547
        %v3596 = vunpack.c.l.b16 %v1548
        %v3597 = vunpack.c.l.b16 %v1549
        %v3598 = vunpack.c.l.b16 %v1550
        %v3599 = vunpack.c.l.b16 %v1551
        %v3600 = vunpack.c.l.b16 %v1552
        %v3601 = vunpack.c.l.b16 %v1553
        %v3602 = vunpack.c.l.b16 %v1554
        %v3603 = vunpack.c.l.b16 %v1555
        %v3604 = vunpack.c.l.b16 %v1556
        %v3605 = vpack.c.b16 %v2582, %v2581
        %v3606 = vpack.c.b16 %v2584, %v2583
        %v3607 = vpack.c.b16 %v2586, %v2585
        %v3608 = vpack.c.b16 %v2588, %v2587
        %v3609 = vpack.c.b16 %v2590, %v2589
        %v3610 = vpack.c.b16 %v2592, %v2591
        %v3611 = vpack.c.b16 %v2594, %v2593
        %v3612 = vpack.c.b16 %v2596, %v2595
        %v3613 = vpack.c.b16 %v2598, %v2597
        %v3614 = vpack.c.b16 %v2600, %v2599
        %v3615 = vpack.c.b16 %v2602, %v2601
        %v3616 = vpack.c.b16 %v2604, %v2603
        %v3617 = vpack.c.b16 %v2606, %v2605
        %v3618 = vpack.c.b16 %v2608, %v2607
        %v3619 = vpack.c.b16 %v2610, %v2609
        %v3620 = vpack.c.b16 %v2612, %v2611
        %v3621 = vpack.c.b16 %v2614, %v2613
        %v3622 = vpack.c.b16 %v2616, %v2615
        %v3623 = vpack.c.b16 %v2618, %v2617
        %v3624 = vpack.c.b16 %v2620, %v2619
        %v3625 = vpack.c.b16 %v2622, %v2621
        %v3626 = vpack.c.b16 %v2624, %v2623
        %v3627 = vpack.c.b16 %v2626, %v2625
        %v3628 = vpack.c.b16 %v2628, %v2627
        %v3629 = vpack.c.b16 %v2630, %v2629
        %v3630 = vpack.c.b16 %v2632, %v2631
        %v3631 = vpack.c.b16 %v2634, %v2633
        %v3632 = vpack.c.b16 %v2636, %v2635
        %v3633 = vpack.c.b16 %v2638, %v2637
        %v3634 = vpack.c.b16 %v2640, %v2639
        %v3635 = vpack.c.b16 %v2642, %v2641
        %v3636 = vpack.c.b16 %v2644, %v2643
        %v3637 = vpack.c.b16 %v2646, %v2645
        %v3638 = vpack.c.b16 %v2648, %v2647
        %v3639 = vpack.c.b16 %v2650, %v2649
        %v3640 = vpack.c.b16 %v2652, %v2651
        %v3641 = vpack.c.b16 %v2654, %v2653
        %v3642 = vpack.c.b16 %v2656, %v2655
        %v3643 = vpack.c.b16 %v2658, %v2657
        %v3644 = vpack.c.b16 %v2660, %v2659
        %v3645 = vpack.c.b16 %v2662, %v2661
        %v3646 = vpack.c.b16 %v2664, %v2663
        %v3647 = vpack.c.b16 %v2666, %v2665
        %v3648 = vpack.c.b16 %v2668, %v2667
        %v3649 = vpack.c.b16 %v2670, %v2669
        %v3650 = vpack.c.b16 %v2672, %v2671
        %v3651 = vpack.c.b16 %v2674, %v2673
        %v3652 = vpack.c.b16 %v2676, %v2675
        %v3653 = vpack.c.b16 %v2678, %v2677
        %v3654 = vpack.c.b16 %v2680, %v2679
        %v3655 = vpack.c.b16 %v2682, %v2681
        %v3656 = vpack.c.b16 %v2684, %v2683
        %v3657 = vpack.c.b16 %v2686, %v2685
        %v3658 = vpack.c.b16 %v2688, %v2687
        %v3659 = vpack.c.b16 %v2690, %v2689
        %v3660 = vpack.c.b16 %v2692, %v2691
        %v3661 = vpack.c.b16 %v2694, %v2693
        %v3662 = vpack.c.b16 %v2696, %v2695
        %v3663 = vpack.c.b16 %v2698, %v2697
        %v3664 = vpack.c.b16 %v2700, %v2699
        %v3665 = vpack.c.b16 %v2702, %v2701
        %v3666 = vpack.c.b16 %v2704, %v2703
        %v3667 = vpack.c.b16 %v2706, %v2705
        %v3668 = vpack.c.b16 %v2708, %v2707
        %v3669 = vpack.c.b16 %v2710, %v2709
        %v3670 = vpack.c.b16 %v2712, %v2711
        %v3671 = vpack.c.b16 %v2714, %v2713
        %v3672 = vpack.c.b16 %v2716, %v2715
        %v3673 = vpack.c.b16 %v2718, %v2717
        %v3674 = vpack.c.b16 %v2720, %v2719
        %v3675 = vpack.c.b16 %v2722, %v2721
        %v3676 = vpack.c.b16 %v2724, %v2723
        %v3677 = vpack.c.b16 %v2726, %v2725
        %v3678 = vpack.c.b16 %v2728, %v2727
        %v3679 = vpack.c.b16 %v2730, %v2729
        %v3680 = vpack.c.b16 %v2732, %v2731
        %v3681 = vpack.c.b16 %v2734, %v2733
        %v3682 = vpack.c.b16 %v2736, %v2735
        %v3683 = vpack.c.b16 %v2738, %v2737
        %v3684 = vpack.c.b16 %v2740, %v2739
        %v3685 = vpack.c.b16 %v2742, %v2741
        %v3686 = vpack.c.b16 %v2744, %v2743
        %v3687 = vpack.c.b16 %v2746, %v2745
        %v3688 = vpack.c.b16 %v2748, %v2747
        %v3689 = vpack.c.b16 %v2750, %v2749
        %v3690 = vpack.c.b16 %v2752, %v2751
        %v3691 = vpack.c.b16 %v2754, %v2753
        %v3692 = vpack.c.b16 %v2756, %v2755
        %v3693 = vpack.c.b16 %v2758, %v2757
        %v3694 = vpack.c.b16 %v2760, %v2759
        %v3695 = vpack.c.b16 %v2762, %v2761
        %v3696 = vpack.c.b16 %v2764, %v2763
        %v3697 = vpack.c.b16 %v2766, %v2765
        %v3698 = vpack.c.b16 %v2768, %v2767
        %v3699 = vpack.c.b16 %v2770, %v2769
        %v3700 = vpack.c.b16 %v2772, %v2771
        %v3701 = vpack.c.b16 %v2774, %v2773
        %v3702 = vpack.c.b16 %v2776, %v2775
        %v3703 = vpack.c.b16 %v2778, %v2777
        %v3704 = vpack.c.b16 %v2780, %v2779
        %v3705 = vpack.c.b16 %v2782, %v2781
        %v3706 = vpack.c.b16 %v2784, %v2783
        %v3707 = vpack.c.b16 %v2786, %v2785
        %v3708 = vpack.c.b16 %v2788, %v2787
        %v3709 = vpack.c.b16 %v2790, %v2789
        %v3710 = vpack.c.b16 %v2792, %v2791
        %v3711 = vpack.c.b16 %v2794, %v2793
        %v3712 = vpack.c.b16 %v2796, %v2795
        %v3713 = vpack.c.b16 %v2798, %v2797
        %v3714 = vpack.c.b16 %v2800, %v2799
        %v3715 = vpack.c.b16 %v2802, %v2801
        %v3716 = vpack.c.b16 %v2804, %v2803
        %v3717 = vpack.c.b16 %v2806, %v2805
        %v3718 = vpack.c.b16 %v2808, %v2807
        %v3719 = vpack.c.b16 %v2810, %v2809
        %v3720 = vpack.c.b16 %v2812, %v2811
        %v3721 = vpack.c.b16 %v2814, %v2813
        %v3722 = vpack.c.b16 %v2816, %v2815
        %v3723 = vpack.c.b16 %v2818, %v2817
        %v3724 = vpack.c.b16 %v2820, %v2819
        %v3725 = vpack.c.b16 %v2822, %v2821
        %v3726 = vpack.c.b16 %v2824, %v2823
        %v3727 = vpack.c.b16 %v2826, %v2825
        %v3728 = vpack.c.b16 %v2828, %v2827
        %v3729 = vpack.c.b16 %v2830, %v2829
        %v3730 = vpack.c.b16 %v2832, %v2831
        %v3731 = vpack.c.b16 %v2834, %v2833
        %v3732 = vpack.c.b16 %v2836, %v2835
        %v3733 = vpack.c.b16 %v2838, %v2837
        %v3734 = vpack.c.b16 %v2840, %v2839
        %v3735 = vpack.c.b16 %v2842, %v2841
        %v3736 = vpack.c.b16 %v2844, %v2843
        %v3737 = vpack.c.b16 %v2846, %v2845
        %v3738 = vpack.c.b16 %v2848, %v2847
        %v3739 = vpack.c.b16 %v2850, %v2849
        %v3740 = vpack.c.b16 %v2852, %v2851
        %v3741 = vpack.c.b16 %v2854, %v2853
        %v3742 = vpack.c.b16 %v2856, %v2855
        %v3743 = vpack.c.b16 %v2858, %v2857
        %v3744 = vpack.c.b16 %v2860, %v2859
        %v3745 = vpack.c.b16 %v2862, %v2861
        %v3746 = vpack.c.b16 %v2864, %v2863
        %v3747 = vpack.c.b16 %v2866, %v2865
        %v3748 = vpack.c.b16 %v2868, %v2867
        %v3749 = vpack.c.b16 %v2870, %v2869
        %v3750 = vpack.c.b16 %v2872, %v2871
        %v3751 = vpack.c.b16 %v2874, %v2873
        %v3752 = vpack.c.b16 %v2876, %v2875
        %v3753 = vpack.c.b16 %v2878, %v2877
        %v3754 = vpack.c.b16 %v2880, %v2879
        %v3755 = vpack.c.b16 %v2882, %v2881
        %v3756 = vpack.c.b16 %v2884, %v2883
        %v3757 = vpack.c.b16 %v2886, %v2885
        %v3758 = vpack.c.b16 %v2888, %v2887
        %v3759 = vpack.c.b16 %v2890, %v2889
        %v3760 = vpack.c.b16 %v2892, %v2891
        %v3761 = vpack.c.b16 %v2894, %v2893
        %v3762 = vpack.c.b16 %v2896, %v2895
        %v3763 = vpack.c.b16 %v2898, %v2897
        %v3764 = vpack.c.b16 %v2900, %v2899
        %v3765 = vpack.c.b16 %v2902, %v2901
        %v3766 = vpack.c.b16 %v2904, %v2903
        %v3767 = vpack.c.b16 %v2906, %v2905
        %v3768 = vpack.c.b16 %v2908, %v2907
        %v3769 = vpack.c.b16 %v2910, %v2909
        %v3770 = vpack.c.b16 %v2912, %v2911
        %v3771 = vpack.c.b16 %v2914, %v2913
        %v3772 = vpack.c.b16 %v2916, %v2915
        %v3773 = vpack.c.b16 %v2918, %v2917
        %v3774 = vpack.c.b16 %v2920, %v2919
        %v3775 = vpack.c.b16 %v2922, %v2921
        %v3776 = vpack.c.b16 %v2924, %v2923
        %v3777 = vpack.c.b16 %v2926, %v2925
        %v3778 = vpack.c.b16 %v2928, %v2927
        %v3779 = vpack.c.b16 %v2930, %v2929
        %v3780 = vpack.c.b16 %v2932, %v2931
        %v3781 = vpack.c.b16 %v2934, %v2933
        %v3782 = vpack.c.b16 %v2936, %v2935
        %v3783 = vpack.c.b16 %v2938, %v2937
        %v3784 = vpack.c.b16 %v2940, %v2939
        %v3785 = vpack.c.b16 %v2942, %v2941
        %v3786 = vpack.c.b16 %v2944, %v2943
        %v3787 = vpack.c.b16 %v2946, %v2945
        %v3788 = vpack.c.b16 %v2948, %v2947
        %v3789 = vpack.c.b16 %v2950, %v2949
        %v3790 = vpack.c.b16 %v2952, %v2951
        %v3791 = vpack.c.b16 %v2954, %v2953
        %v3792 = vpack.c.b16 %v2956, %v2955
        %v3793 = vpack.c.b16 %v2958, %v2957
        %v3794 = vpack.c.b16 %v2960, %v2959
        %v3795 = vpack.c.b16 %v2962, %v2961
        %v3796 = vpack.c.b16 %v2964, %v2963
        %v3797 = vpack.c.b16 %v2966, %v2965
        %v3798 = vpack.c.b16 %v2968, %v2967
        %v3799 = vpack.c.b16 %v2970, %v2969
        %v3800 = vpack.c.b16 %v2972, %v2971
        %v3801 = vpack.c.b16 %v2974, %v2973
        %v3802 = vpack.c.b16 %v2976, %v2975
        %v3803 = vpack.c.b16 %v2978, %v2977
        %v3804 = vpack.c.b16 %v2980, %v2979
        %v3805 = vpack.c.b16 %v2982, %v2981
        %v3806 = vpack.c.b16 %v2984, %v2983
        %v3807 = vpack.c.b16 %v2986, %v2985
        %v3808 = vpack.c.b16 %v2988, %v2987
        %v3809 = vpack.c.b16 %v2990, %v2989
        %v3810 = vpack.c.b16 %v2992, %v2991
        %v3811 = vpack.c.b16 %v2994, %v2993
        %v3812 = vpack.c.b16 %v2996, %v2995
        %v3813 = vpack.c.b16 %v2998, %v2997
        %v3814 = vpack.c.b16 %v3000, %v2999
        %v3815 = vpack.c.b16 %v3002, %v3001
        %v3816 = vpack.c.b16 %v3004, %v3003
        %v3817 = vpack.c.b16 %v3006, %v3005
        %v3818 = vpack.c.b16 %v3008, %v3007
        %v3819 = vpack.c.b16 %v3010, %v3009
        %v3820 = vpack.c.b16 %v3012, %v3011
        %v3821 = vpack.c.b16 %v3014, %v3013
        %v3822 = vpack.c.b16 %v3016, %v3015
        %v3823 = vpack.c.b16 %v3018, %v3017
        %v3824 = vpack.c.b16 %v3020, %v3019
        %v3825 = vpack.c.b16 %v3022, %v3021
        %v3826 = vpack.c.b16 %v3024, %v3023
        %v3827 = vpack.c.b16 %v3026, %v3025
        %v3828 = vpack.c.b16 %v3028, %v3027
        %v3829 = vpack.c.b16 %v3030, %v3029
        %v3830 = vpack.c.b16 %v3032, %v3031
        %v3831 = vpack.c.b16 %v3034, %v3033
        %v3832 = vpack.c.b16 %v3036, %v3035
        %v3833 = vpack.c.b16 %v3038, %v3037
        %v3834 = vpack.c.b16 %v3040, %v3039
        %v3835 = vpack.c.b16 %v3042, %v3041
        %v3836 = vpack.c.b16 %v3044, %v3043
        %v3837 = vpack.c.b16 %v3046, %v3045
        %v3838 = vpack.c.b16 %v3048, %v3047
        %v3839 = vpack.c.b16 %v3050, %v3049
        %v3840 = vpack.c.b16 %v3052, %v3051
        %v3841 = vpack.c.b16 %v3054, %v3053
        %v3842 = vpack.c.b16 %v3056, %v3055
        %v3843 = vpack.c.b16 %v3058, %v3057
        %v3844 = vpack.c.b16 %v3060, %v3059
        %v3845 = vpack.c.b16 %v3062, %v3061
        %v3846 = vpack.c.b16 %v3064, %v3063
        %v3847 = vpack.c.b16 %v3066, %v3065
        %v3848 = vpack.c.b16 %v3068, %v3067
        %v3849 = vpack.c.b16 %v3070, %v3069
        %v3850 = vpack.c.b16 %v3072, %v3071
        %v3851 = vpack.c.b16 %v3074, %v3073
        %v3852 = vpack.c.b16 %v3076, %v3075
        %v3853 = vpack.c.b16 %v3078, %v3077
        %v3854 = vpack.c.b16 %v3080, %v3079
        %v3855 = vpack.c.b16 %v3082, %v3081
        %v3856 = vpack.c.b16 %v3084, %v3083
        %v3857 = vpack.c.b16 %v3086, %v3085
        %v3858 = vpack.c.b16 %v3088, %v3087
        %v3859 = vpack.c.b16 %v3090, %v3089
        %v3860 = vpack.c.b16 %v3092, %v3091
        %v3861 = vpack.c.b16 %v3094, %v3093
        %v3862 = vpack.c.b16 %v3096, %v3095
        %v3863 = vpack.c.b16 %v3098, %v3097
        %v3864 = vpack.c.b16 %v3100, %v3099
        %v3865 = vpack.c.b16 %v3102, %v3101
        %v3866 = vpack.c.b16 %v3104, %v3103
        %v3867 = vpack.c.b16 %v3106, %v3105
        %v3868 = vpack.c.b16 %v3108, %v3107
        %v3869 = vpack.c.b16 %v3110, %v3109
        %v3870 = vpack.c.b16 %v3112, %v3111
        %v3871 = vpack.c.b16 %v3114, %v3113
        %v3872 = vpack.c.b16 %v3116, %v3115
        %v3873 = vpack.c.b16 %v3118, %v3117
        %v3874 = vpack.c.b16 %v3120, %v3119
        %v3875 = vpack.c.b16 %v3122, %v3121
        %v3876 = vpack.c.b16 %v3124, %v3123
        %v3877 = vpack.c.b16 %v3126, %v3125
        %v3878 = vpack.c.b16 %v3128, %v3127
        %v3879 = vpack.c.b16 %v3130, %v3129
        %v3880 = vpack.c.b16 %v3132, %v3131
        %v3881 = vpack.c.b16 %v3134, %v3133
        %v3882 = vpack.c.b16 %v3136, %v3135
        %v3883 = vpack.c.b16 %v3138, %v3137
        %v3884 = vpack.c.b16 %v3140, %v3139
        %v3885 = vpack.c.b16 %v3142, %v3141
        %v3886 = vpack.c.b16 %v3144, %v3143
        %v3887 = vpack.c.b16 %v3146, %v3145
        %v3888 = vpack.c.b16 %v3148, %v3147
        %v3889 = vpack.c.b16 %v3150, %v3149
        %v3890 = vpack.c.b16 %v3152, %v3151
        %v3891 = vpack.c.b16 %v3154, %v3153
        %v3892 = vpack.c.b16 %v3156, %v3155
        %v3893 = vpack.c.b16 %v3158, %v3157
        %v3894 = vpack.c.b16 %v3160, %v3159
        %v3895 = vpack.c.b16 %v3162, %v3161
        %v3896 = vpack.c.b16 %v3164, %v3163
        %v3897 = vpack.c.b16 %v3166, %v3165
        %v3898 = vpack.c.b16 %v3168, %v3167
        %v3899 = vpack.c.b16 %v3170, %v3169
        %v3900 = vpack.c.b16 %v3172, %v3171
        %v3901 = vpack.c.b16 %v3174, %v3173
        %v3902 = vpack.c.b16 %v3176, %v3175
        %v3903 = vpack.c.b16 %v3178, %v3177
        %v3904 = vpack.c.b16 %v3180, %v3179
        %v3905 = vpack.c.b16 %v3182, %v3181
        %v3906 = vpack.c.b16 %v3184, %v3183
        %v3907 = vpack.c.b16 %v3186, %v3185
        %v3908 = vpack.c.b16 %v3188, %v3187
        %v3909 = vpack.c.b16 %v3190, %v3189
        %v3910 = vpack.c.b16 %v3192, %v3191
        %v3911 = vpack.c.b16 %v3194, %v3193
        %v3912 = vpack.c.b16 %v3196, %v3195
        %v3913 = vpack.c.b16 %v3198, %v3197
        %v3914 = vpack.c.b16 %v3200, %v3199
        %v3915 = vpack.c.b16 %v3202, %v3201
        %v3916 = vpack.c.b16 %v3204, %v3203
        %v3917 = vpack.c.b16 %v3206, %v3205
        %v3918 = vpack.c.b16 %v3208, %v3207
        %v3919 = vpack.c.b16 %v3210, %v3209
        %v3920 = vpack.c.b16 %v3212, %v3211
        %v3921 = vpack.c.b16 %v3214, %v3213
        %v3922 = vpack.c.b16 %v3216, %v3215
        %v3923 = vpack.c.b16 %v3218, %v3217
        %v3924 = vpack.c.b16 %v3220, %v3219
        %v3925 = vpack.c.b16 %v3222, %v3221
        %v3926 = vpack.c.b16 %v3224, %v3223
        %v3927 = vpack.c.b16 %v3226, %v3225
        %v3928 = vpack.c.b16 %v3228, %v3227
        %v3929 = vpack.c.b16 %v3230, %v3229
        %v3930 = vpack.c.b16 %v3232, %v3231
        %v3931 = vpack.c.b16 %v3234, %v3233
        %v3932 = vpack.c.b16 %v3236, %v3235
        %v3933 = vpack.c.b16 %v3238, %v3237
        %v3934 = vpack.c.b16 %v3240, %v3239
        %v3935 = vpack.c.b16 %v3242, %v3241
        %v3936 = vpack.c.b16 %v3244, %v3243
        %v3937 = vpack.c.b16 %v3246, %v3245
        %v3938 = vpack.c.b16 %v3248, %v3247
        %v3939 = vpack.c.b16 %v3250, %v3249
        %v3940 = vpack.c.b16 %v3252, %v3251
        %v3941 = vpack.c.b16 %v3254, %v3253
        %v3942 = vpack.c.b16 %v3256, %v3255
        %v3943 = vpack.c.b16 %v3258, %v3257
        %v3944 = vpack.c.b16 %v3260, %v3259
        %v3945 = vpack.c.b16 %v3262, %v3261
        %v3946 = vpack.c.b16 %v3264, %v3263
        %v3947 = vpack.c.b16 %v3266, %v3265
        %v3948 = vpack.c.b16 %v3268, %v3267
        %v3949 = vpack.c.b16 %v3270, %v3269
        %v3950 = vpack.c.b16 %v3272, %v3271
        %v3951 = vpack.c.b16 %v3274, %v3273
        %v3952 = vpack.c.b16 %v3276, %v3275
        %v3953 = vpack.c.b16 %v3278, %v3277
        %v3954 = vpack.c.b16 %v3280, %v3279
        %v3955 = vpack.c.b16 %v3282, %v3281
        %v3956 = vpack.c.b16 %v3284, %v3283
        %v3957 = vpack.c.b16 %v3286, %v3285
        %v3958 = vpack.c.b16 %v3288, %v3287
        %v3959 = vpack.c.b16 %v3290, %v3289
        %v3960 = vpack.c.b16 %v3292, %v3291
        %v3961 = vpack.c.b16 %v3294, %v3293
        %v3962 = vpack.c.b16 %v3296, %v3295
        %v3963 = vpack.c.b16 %v3298, %v3297
        %v3964 = vpack.c.b16 %v3300, %v3299
        %v3965 = vpack.c.b16 %v3302, %v3301
        %v3966 = vpack.c.b16 %v3304, %v3303
        %v3967 = vpack.c.b16 %v3306, %v3305
        %v3968 = vpack.c.b16 %v3308, %v3307
        %v3969 = vpack.c.b16 %v3310, %v3309
        %v3970 = vpack.c.b16 %v3312, %v3311
        %v3971 = vpack.c.b16 %v3314, %v3313
        %v3972 = vpack.c.b16 %v3316, %v3315
        %v3973 = vpack.c.b16 %v3318, %v3317
        %v3974 = vpack.c.b16 %v3320, %v3319
        %v3975 = vpack.c.b16 %v3322, %v3321
        %v3976 = vpack.c.b16 %v3324, %v3323
        %v3977 = vpack.c.b16 %v3326, %v3325
        %v3978 = vpack.c.b16 %v3328, %v3327
        %v3979 = vpack.c.b16 %v3330, %v3329
        %v3980 = vpack.c.b16 %v3332, %v3331
        %v3981 = vpack.c.b16 %v3334, %v3333
        %v3982 = vpack.c.b16 %v3336, %v3335
        %v3983 = vpack.c.b16 %v3338, %v3337
        %v3984 = vpack.c.b16 %v3340, %v3339
        %v3985 = vpack.c.b16 %v3342, %v3341
        %v3986 = vpack.c.b16 %v3344, %v3343
        %v3987 = vpack.c.b16 %v3346, %v3345
        %v3988 = vpack.c.b16 %v3348, %v3347
        %v3989 = vpack.c.b16 %v3350, %v3349
        %v3990 = vpack.c.b16 %v3352, %v3351
        %v3991 = vpack.c.b16 %v3354, %v3353
        %v3992 = vpack.c.b16 %v3356, %v3355
        %v3993 = vpack.c.b16 %v3358, %v3357
        %v3994 = vpack.c.b16 %v3360, %v3359
        %v3995 = vpack.c.b16 %v3362, %v3361
        %v3996 = vpack.c.b16 %v3364, %v3363
        %v3997 = vpack.c.b16 %v3366, %v3365
        %v3998 = vpack.c.b16 %v3368, %v3367
        %v3999 = vpack.c.b16 %v3370, %v3369
        %v4000 = vpack.c.b16 %v3372, %v3371
        %v4001 = vpack.c.b16 %v3374, %v3373
        %v4002 = vpack.c.b16 %v3376, %v3375
        %v4003 = vpack.c.b16 %v3378, %v3377
        %v4004 = vpack.c.b16 %v3380, %v3379
        %v4005 = vpack.c.b16 %v3382, %v3381
        %v4006 = vpack.c.b16 %v3384, %v3383
        %v4007 = vpack.c.b16 %v3386, %v3385
        %v4008 = vpack.c.b16 %v3388, %v3387
        %v4009 = vpack.c.b16 %v3390, %v3389
        %v4010 = vpack.c.b16 %v3392, %v3391
        %v4011 = vpack.c.b16 %v3394, %v3393
        %v4012 = vpack.c.b16 %v3396, %v3395
        %v4013 = vpack.c.b16 %v3398, %v3397
        %v4014 = vpack.c.b16 %v3400, %v3399
        %v4015 = vpack.c.b16 %v3402, %v3401
        %v4016 = vpack.c.b16 %v3404, %v3403
        %v4017 = vpack.c.b16 %v3406, %v3405
        %v4018 = vpack.c.b16 %v3408, %v3407
        %v4019 = vpack.c.b16 %v3410, %v3409
        %v4020 = vpack.c.b16 %v3412, %v3411
        %v4021 = vpack.c.b16 %v3414, %v3413
        %v4022 = vpack.c.b16 %v3416, %v3415
        %v4023 = vpack.c.b16 %v3418, %v3417
        %v4024 = vpack.c.b16 %v3420, %v3419
        %v4025 = vpack.c.b16 %v3422, %v3421
        %v4026 = vpack.c.b16 %v3424, %v3423
        %v4027 = vpack.c.b16 %v3426, %v3425
        %v4028 = vpack.c.b16 %v3428, %v3427
        %v4029 = vpack.c.b16 %v3430, %v3429
        %v4030 = vpack.c.b16 %v3432, %v3431
        %v4031 = vpack.c.b16 %v3434, %v3433
        %v4032 = vpack.c.b16 %v3436, %v3435
        %v4033 = vpack.c.b16 %v3438, %v3437
        %v4034 = vpack.c.b16 %v3440, %v3439
        %v4035 = vpack.c.b16 %v3442, %v3441
        %v4036 = vpack.c.b16 %v3444, %v3443
        %v4037 = vpack.c.b16 %v3446, %v3445
        %v4038 = vpack.c.b16 %v3448, %v3447
        %v4039 = vpack.c.b16 %v3450, %v3449
        %v4040 = vpack.c.b16 %v3452, %v3451
        %v4041 = vpack.c.b16 %v3454, %v3453
        %v4042 = vpack.c.b16 %v3456, %v3455
        %v4043 = vpack.c.b16 %v3458, %v3457
        %v4044 = vpack.c.b16 %v3460, %v3459
        %v4045 = vpack.c.b16 %v3462, %v3461
        %v4046 = vpack.c.b16 %v3464, %v3463
        %v4047 = vpack.c.b16 %v3466, %v3465
        %v4048 = vpack.c.b16 %v3468, %v3467
        %v4049 = vpack.c.b16 %v3470, %v3469
        %v4050 = vpack.c.b16 %v3472, %v3471
        %v4051 = vpack.c.b16 %v3474, %v3473
        %v4052 = vpack.c.b16 %v3476, %v3475
        %v4053 = vpack.c.b16 %v3478, %v3477
        %v4054 = vpack.c.b16 %v3480, %v3479
        %v4055 = vpack.c.b16 %v3482, %v3481
        %v4056 = vpack.c.b16 %v3484, %v3483
        %v4057 = vpack.c.b16 %v3486, %v3485
        %v4058 = vpack.c.b16 %v3488, %v3487
        %v4059 = vpack.c.b16 %v3490, %v3489
        %v4060 = vpack.c.b16 %v3492, %v3491
        %v4061 = vpack.c.b16 %v3494, %v3493
        %v4062 = vpack.c.b16 %v3496, %v3495
        %v4063 = vpack.c.b16 %v3498, %v3497
        %v4064 = vpack.c.b16 %v3500, %v3499
        %v4065 = vpack.c.b16 %v3502, %v3501
        %v4066 = vpack.c.b16 %v3504, %v3503
        %v4067 = vpack.c.b16 %v3506, %v3505
        %v4068 = vpack.c.b16 %v3508, %v3507
        %v4069 = vpack.c.b16 %v3510, %v3509
        %v4070 = vpack.c.b16 %v3512, %v3511
        %v4071 = vpack.c.b16 %v3514, %v3513
        %v4072 = vpack.c.b16 %v3516, %v3515
        %v4073 = vpack.c.b16 %v3518, %v3517
        %v4074 = vpack.c.b16 %v3520, %v3519
        %v4075 = vpack.c.b16 %v3522, %v3521
        %v4076 = vpack.c.b16 %v3524, %v3523
        %v4077 = vpack.c.b16 %v3526, %v3525
        %v4078 = vpack.c.b16 %v3528, %v3527
        %v4079 = vpack.c.b16 %v3530, %v3529
        %v4080 = vpack.c.b16 %v3532, %v3531
        %v4081 = vpack.c.b16 %v3534, %v3533
        %v4082 = vpack.c.b16 %v3536, %v3535
        %v4083 = vpack.c.b16 %v3538, %v3537
        %v4084 = vpack.c.b16 %v3540, %v3539
        %v4085 = vpack.c.b16 %v3542, %v3541
        %v4086 = vpack.c.b16 %v3544, %v3543
        %v4087 = vpack.c.b16 %v3546, %v3545
        %v4088 = vpack.c.b16 %v3548, %v3547
        %v4089 = vpack.c.b16 %v3550, %v3549
        %v4090 = vpack.c.b16 %v3552, %v3551
        %v4091 = vpack.c.b16 %v3554, %v3553
        %v4092 = vpack.c.b16 %v3556, %v3555
        %v4093 = vpack.c.b16 %v3558, %v3557
        %v4094 = vpack.c.b16 %v3560, %v3559
        %v4095 = vpack.c.b16 %v3562, %v3561
        %v4096 = vpack.c.b16 %v3564, %v3563
        %v4097 = vpack.c.b16 %v3566, %v3565
        %v4098 = vpack.c.b16 %v3568, %v3567
        %v4099 = vpack.c.b16 %v3570, %v3569
        %v4100 = vpack.c.b16 %v3572, %v3571
        %v4101 = vpack.c.b16 %v3574, %v3573
        %v4102 = vpack.c.b16 %v3576, %v3575
        %v4103 = vpack.c.b16 %v3578, %v3577
        %v4104 = vpack.c.b16 %v3580, %v3579
        %v4105 = vpack.c.b16 %v3582, %v3581
        %v4106 = vpack.c.b16 %v3584, %v3583
        %v4107 = vpack.c.b16 %v3586, %v3585
        %v4108 = vpack.c.b16 %v3588, %v3587
        %v4109 = vpack.c.b16 %v3590, %v3589
        %v4110 = vpack.c.b16 %v3592, %v3591
        %v4111 = vpack.c.b16 %v3594, %v3593
        %v4112 = vpack.c.b16 %v3596, %v3595
        %v4113 = vpack.c.b16 %v3598, %v3597
        %v4114 = vpack.c.b16 %v3600, %v3599
        %v4115 = vpack.c.b16 %v3602, %v3601
        %v4116 = vpack.c.b16 %v3604, %v3603
        %4629 = vmatpush.bf16.msra.mxu0 %v3612
        %4630 = vmatpush.bf16.msra.mxu0 %v3611
        %4631 = vmatpush.bf16.msra.mxu0 %v3610
        %4632 = vmatpush.bf16.msra.mxu0 %v3609
        %4633 = vmatpush.bf16.msra.mxu0 %v3608
        %4634 = vmatpush.bf16.msra.mxu0 %v3607
        %4635 = vmatpush.bf16.msra.mxu0 %v3606
        %4636 = vmatpush.bf16.msra.mxu0 %v3605
        %4637 = vmatmul.bf16.gmra.mxu0 %v469
        %v4638 = vpop.f32.mrf.mxu0
        %v4639 = vadd.f32 0.0, %v4638
        %v4640 = vpop.f32.mrf.mxu0
        %4641 = vdwg.mxu0
        %4642 = vmatpush.bf16.msra.mxu0 %v3620
        %4643 = vmatpush.bf16.msra.mxu0 %v3619
        %4644 = vmatpush.bf16.msra.mxu0 %v3618
        %4645 = vmatpush.bf16.msra.mxu0 %v3617
        %4646 = vmatpush.bf16.msra.mxu0 %v3616
        %4647 = vmatpush.bf16.msra.mxu0 %v3615
        %4648 = vmatpush.bf16.msra.mxu0 %v3614
        %4649 = vmatpush.bf16.msra.mxu0 %v3613
        %4650 = vmatmul.bf16.gmra.mxu0 %v470
        %v4651 = vpop.f32.mrf.mxu0
        %v4652 = vadd.f32 %v4639, %v4651
        %v4653 = vpop.f32.mrf.mxu0
        %4654 = vdwg.mxu0
        %4655 = vmatpush.bf16.msra.mxu0 %v3628
        %4656 = vmatpush.bf16.msra.mxu0 %v3627
        %4657 = vmatpush.bf16.msra.mxu0 %v3626
        %4658 = vmatpush.bf16.msra.mxu0 %v3625
        %4659 = vmatpush.bf16.msra.mxu0 %v3624
        %4660 = vmatpush.bf16.msra.mxu0 %v3623
        %4661 = vmatpush.bf16.msra.mxu0 %v3622
        %4662 = vmatpush.bf16.msra.mxu0 %v3621
        %4663 = vmatmul.bf16.gmra.mxu0 %v471
        %v4664 = vpop.f32.mrf.mxu0
        %v4665 = vadd.f32 %v4652, %v4664
        %v4666 = vpop.f32.mrf.mxu0
        %4667 = vdwg.mxu0
        %4668 = vmatpush.bf16.msra.mxu0 %v3636
        %4669 = vmatpush.bf16.msra.mxu0 %v3635
        %4670 = vmatpush.bf16.msra.mxu0 %v3634
        %4671 = vmatpush.bf16.msra.mxu0 %v3633
        %4672 = vmatpush.bf16.msra.mxu0 %v3632
        %4673 = vmatpush.bf16.msra.mxu0 %v3631
        %4674 = vmatpush.bf16.msra.mxu0 %v3630
        %4675 = vmatpush.bf16.msra.mxu0 %v3629
        %4676 = vmatmul.bf16.gmra.mxu0 %v472
        %v4677 = vpop.f32.mrf.mxu0
        %v4678 = vadd.f32 %v4665, %v4677
        %v4679 = vpop.f32.mrf.mxu0
        %4680 = vdwg.mxu0
        %4681 = vmatpush.bf16.msra.mxu0 %v3644
        %4682 = vmatpush.bf16.msra.mxu0 %v3643
        %4683 = vmatpush.bf16.msra.mxu0 %v3642
        %4684 = vmatpush.bf16.msra.mxu0 %v3641
        %4685 = vmatpush.bf16.msra.mxu0 %v3640
        %4686 = vmatpush.bf16.msra.mxu0 %v3639
        %4687 = vmatpush.bf16.msra.mxu0 %v3638
        %4688 = vmatpush.bf16.msra.mxu0 %v3637
        %4689 = vmatmul.bf16.gmra.mxu0 %v473
        %v4690 = vpop.f32.mrf.mxu0
        %v4691 = vadd.f32 %v4678, %v4690
        %v4692 = vpop.f32.mrf.mxu0
        %4693 = vdwg.mxu0
        %4694 = vmatpush.bf16.msra.mxu0 %v3652
        %4695 = vmatpush.bf16.msra.mxu0 %v3651
        %4696 = vmatpush.bf16.msra.mxu0 %v3650
        %4697 = vmatpush.bf16.msra.mxu0 %v3649
        %4698 = vmatpush.bf16.msra.mxu0 %v3648
        %4699 = vmatpush.bf16.msra.mxu0 %v3647
        %4700 = vmatpush.bf16.msra.mxu0 %v3646
        %4701 = vmatpush.bf16.msra.mxu0 %v3645
        %4702 = vmatmul.bf16.gmra.mxu0 %v474
        %v4703 = vpop.f32.mrf.mxu0
        %v4704 = vadd.f32 %v4691, %v4703
        %v4705 = vpop.f32.mrf.mxu0
        %4706 = vdwg.mxu0
        %4707 = vmatpush.bf16.msra.mxu0 %v3660
        %4708 = vmatpush.bf16.msra.mxu0 %v3659
        %4709 = vmatpush.bf16.msra.mxu0 %v3658
        %4710 = vmatpush.bf16.msra.mxu0 %v3657
        %4711 = vmatpush.bf16.msra.mxu0 %v3656
        %4712 = vmatpush.bf16.msra.mxu0 %v3655
        %4713 = vmatpush.bf16.msra.mxu0 %v3654
        %4714 = vmatpush.bf16.msra.mxu0 %v3653
        %4715 = vmatmul.bf16.gmra.mxu0 %v475
        %v4716 = vpop.f32.mrf.mxu0
        %v4717 = vadd.f32 %v4704, %v4716
        %v4718 = vpop.f32.mrf.mxu0
        %4719 = vdwg.mxu0
        %4720 = vmatpush.bf16.msra.mxu0 %v3668
        %4721 = vmatpush.bf16.msra.mxu0 %v3667
        %4722 = vmatpush.bf16.msra.mxu0 %v3666
        %4723 = vmatpush.bf16.msra.mxu0 %v3665
        %4724 = vmatpush.bf16.msra.mxu0 %v3664
        %4725 = vmatpush.bf16.msra.mxu0 %v3663
        %4726 = vmatpush.bf16.msra.mxu0 %v3662
        %4727 = vmatpush.bf16.msra.mxu0 %v3661
        %4728 = vmatmul.bf16.gmra.mxu0 %v476
        %v4729 = vpop.f32.mrf.mxu0
        %v4730 = vadd.f32 %v4717, %v4729
        %v4731 = vpop.f32.mrf.mxu0
        %4732 = vdwg.mxu0
        %4733 = vmatpush.bf16.msra.mxu0 %v3676
        %4734 = vmatpush.bf16.msra.mxu0 %v3675
        %4735 = vmatpush.bf16.msra.mxu0 %v3674
        %4736 = vmatpush.bf16.msra.mxu0 %v3673
        %4737 = vmatpush.bf16.msra.mxu0 %v3672
        %4738 = vmatpush.bf16.msra.mxu0 %v3671
        %4739 = vmatpush.bf16.msra.mxu0 %v3670
        %4740 = vmatpush.bf16.msra.mxu0 %v3669
        %4741 = vmatmul.bf16.gmra.mxu0 %v477
        %v4742 = vpop.f32.mrf.mxu0
        %v4743 = vadd.f32 %v4730, %v4742
        %v4744 = vpop.f32.mrf.mxu0
        %4745 = vdwg.mxu0
        %4746 = vmatpush.bf16.msra.mxu0 %v3684
        %4747 = vmatpush.bf16.msra.mxu0 %v3683
        %4748 = vmatpush.bf16.msra.mxu0 %v3682
        %4749 = vmatpush.bf16.msra.mxu0 %v3681
        %4750 = vmatpush.bf16.msra.mxu0 %v3680
        %4751 = vmatpush.bf16.msra.mxu0 %v3679
        %4752 = vmatpush.bf16.msra.mxu0 %v3678
        %4753 = vmatpush.bf16.msra.mxu0 %v3677
        %4754 = vmatmul.bf16.gmra.mxu0 %v478
        %v4755 = vpop.f32.mrf.mxu0
        %v4756 = vadd.f32 %v4743, %v4755
        %v4757 = vpop.f32.mrf.mxu0
        %4758 = vdwg.mxu0
        %4759 = vmatpush.bf16.msra.mxu0 %v3692
        %4760 = vmatpush.bf16.msra.mxu0 %v3691
        %4761 = vmatpush.bf16.msra.mxu0 %v3690
        %4762 = vmatpush.bf16.msra.mxu0 %v3689
        %4763 = vmatpush.bf16.msra.mxu0 %v3688
        %4764 = vmatpush.bf16.msra.mxu0 %v3687
        %4765 = vmatpush.bf16.msra.mxu0 %v3686
        %4766 = vmatpush.bf16.msra.mxu0 %v3685
        %4767 = vmatmul.bf16.gmra.mxu0 %v479
        %v4768 = vpop.f32.mrf.mxu0
        %v4769 = vadd.f32 %v4756, %v4768
        %v4770 = vpop.f32.mrf.mxu0
        %4771 = vdwg.mxu0
        %4772 = vmatpush.bf16.msra.mxu0 %v3700
        %4773 = vmatpush.bf16.msra.mxu0 %v3699
        %4774 = vmatpush.bf16.msra.mxu0 %v3698
        %4775 = vmatpush.bf16.msra.mxu0 %v3697
        %4776 = vmatpush.bf16.msra.mxu0 %v3696
        %4777 = vmatpush.bf16.msra.mxu0 %v3695
        %4778 = vmatpush.bf16.msra.mxu0 %v3694
        %4779 = vmatpush.bf16.msra.mxu0 %v3693
        %4780 = vmatmul.bf16.gmra.mxu0 %v480
        %v4781 = vpop.f32.mrf.mxu0
        %v4782 = vadd.f32 %v4769, %v4781
        %v4783 = vpop.f32.mrf.mxu0
        %4784 = vdwg.mxu0
        %4785 = vmatpush.bf16.msra.mxu0 %v3708
        %4786 = vmatpush.bf16.msra.mxu0 %v3707
        %4787 = vmatpush.bf16.msra.mxu0 %v3706
        %4788 = vmatpush.bf16.msra.mxu0 %v3705
        %4789 = vmatpush.bf16.msra.mxu0 %v3704
        %4790 = vmatpush.bf16.msra.mxu0 %v3703
        %4791 = vmatpush.bf16.msra.mxu0 %v3702
        %4792 = vmatpush.bf16.msra.mxu0 %v3701
        %4793 = vmatmul.bf16.gmra.mxu0 %v481
        %v4794 = vpop.f32.mrf.mxu0
        %v4795 = vadd.f32 %v4782, %v4794
        %v4796 = vpop.f32.mrf.mxu0
        %4797 = vdwg.mxu0
        %4798 = vmatpush.bf16.msra.mxu0 %v3716
        %4799 = vmatpush.bf16.msra.mxu0 %v3715
        %4800 = vmatpush.bf16.msra.mxu0 %v3714
        %4801 = vmatpush.bf16.msra.mxu0 %v3713
        %4802 = vmatpush.bf16.msra.mxu0 %v3712
        %4803 = vmatpush.bf16.msra.mxu0 %v3711
        %4804 = vmatpush.bf16.msra.mxu0 %v3710
        %4805 = vmatpush.bf16.msra.mxu0 %v3709
        %4806 = vmatmul.bf16.gmra.mxu0 %v482
        %v4807 = vpop.f32.mrf.mxu0
        %v4808 = vadd.f32 %v4795, %v4807
        %v4809 = vpop.f32.mrf.mxu0
        %4810 = vdwg.mxu0
        %4811 = vmatpush.bf16.msra.mxu0 %v3724
        %4812 = vmatpush.bf16.msra.mxu0 %v3723
        %4813 = vmatpush.bf16.msra.mxu0 %v3722
        %4814 = vmatpush.bf16.msra.mxu0 %v3721
        %4815 = vmatpush.bf16.msra.mxu0 %v3720
        %4816 = vmatpush.bf16.msra.mxu0 %v3719
        %4817 = vmatpush.bf16.msra.mxu0 %v3718
        %4818 = vmatpush.bf16.msra.mxu0 %v3717
        %4819 = vmatmul.bf16.gmra.mxu0 %v483
        %v4820 = vpop.f32.mrf.mxu0
        %v4821 = vadd.f32 %v4808, %v4820
        %v4822 = vpop.f32.mrf.mxu0
        %4823 = vdwg.mxu0
        %4824 = vmatpush.bf16.msra.mxu0 %v3732
        %4825 = vmatpush.bf16.msra.mxu0 %v3731
        %4826 = vmatpush.bf16.msra.mxu0 %v3730
        %4827 = vmatpush.bf16.msra.mxu0 %v3729
        %4828 = vmatpush.bf16.msra.mxu0 %v3728
        %4829 = vmatpush.bf16.msra.mxu0 %v3727
        %4830 = vmatpush.bf16.msra.mxu0 %v3726
        %4831 = vmatpush.bf16.msra.mxu0 %v3725
        %4832 = vmatmul.bf16.gmra.mxu0 %v484
        %v4833 = vpop.f32.mrf.mxu0
        %v4834 = vadd.f32 %v4821, %v4833
        %v4835 = vpop.f32.mrf.mxu0
        %4836 = vdwg.mxu0
        %4837 = vmatpush.bf16.msra.mxu0 %v3740
        %4838 = vmatpush.bf16.msra.mxu0 %v3739
        %4839 = vmatpush.bf16.msra.mxu0 %v3738
        %4840 = vmatpush.bf16.msra.mxu0 %v3737
        %4841 = vmatpush.bf16.msra.mxu0 %v3736
        %4842 = vmatpush.bf16.msra.mxu0 %v3735
        %4843 = vmatpush.bf16.msra.mxu0 %v3734
        %4844 = vmatpush.bf16.msra.mxu0 %v3733
        %4845 = vmatmul.bf16.gmra.mxu0 %v485
        %v4846 = vpop.f32.mrf.mxu0
        %v4847 = vadd.f32 %v4834, %v4846
        %v4848 = vpop.f32.mrf.mxu0
        %4849 = vdwg.mxu0
        %4850 = vmatpush.bf16.msra.mxu0 %v3748
        %4851 = vmatpush.bf16.msra.mxu0 %v3747
        %4852 = vmatpush.bf16.msra.mxu0 %v3746
        %4853 = vmatpush.bf16.msra.mxu0 %v3745
        %4854 = vmatpush.bf16.msra.mxu0 %v3744
        %4855 = vmatpush.bf16.msra.mxu0 %v3743
        %4856 = vmatpush.bf16.msra.mxu0 %v3742
        %4857 = vmatpush.bf16.msra.mxu0 %v3741
        %4858 = vmatmul.bf16.gmra.mxu0 %v486
        %v4859 = vpop.f32.mrf.mxu0
        %v4860 = vadd.f32 %v4847, %v4859
        %v4861 = vpop.f32.mrf.mxu0
        %4862 = vdwg.mxu0
        %4863 = vmatpush.bf16.msra.mxu0 %v3756
        %4864 = vmatpush.bf16.msra.mxu0 %v3755
        %4865 = vmatpush.bf16.msra.mxu0 %v3754
        %4866 = vmatpush.bf16.msra.mxu0 %v3753
        %4867 = vmatpush.bf16.msra.mxu0 %v3752
        %4868 = vmatpush.bf16.msra.mxu0 %v3751
        %4869 = vmatpush.bf16.msra.mxu0 %v3750
        %4870 = vmatpush.bf16.msra.mxu0 %v3749
        %4871 = vmatmul.bf16.gmra.mxu0 %v487
        %v4872 = vpop.f32.mrf.mxu0
        %v4873 = vadd.f32 %v4860, %v4872
        %v4874 = vpop.f32.mrf.mxu0
        %4875 = vdwg.mxu0
        %4876 = vmatpush.bf16.msra.mxu0 %v3764
        %4877 = vmatpush.bf16.msra.mxu0 %v3763
        %4878 = vmatpush.bf16.msra.mxu0 %v3762
        %4879 = vmatpush.bf16.msra.mxu0 %v3761
        %4880 = vmatpush.bf16.msra.mxu0 %v3760
        %4881 = vmatpush.bf16.msra.mxu0 %v3759
        %4882 = vmatpush.bf16.msra.mxu0 %v3758
        %4883 = vmatpush.bf16.msra.mxu0 %v3757
        %4884 = vmatmul.bf16.gmra.mxu0 %v488
        %v4885 = vpop.f32.mrf.mxu0
        %v4886 = vadd.f32 %v4873, %v4885
        %v4887 = vpop.f32.mrf.mxu0
        %4888 = vdwg.mxu0
        %4889 = vmatpush.bf16.msra.mxu0 %v3772
        %4890 = vmatpush.bf16.msra.mxu0 %v3771
        %4891 = vmatpush.bf16.msra.mxu0 %v3770
        %4892 = vmatpush.bf16.msra.mxu0 %v3769
        %4893 = vmatpush.bf16.msra.mxu0 %v3768
        %4894 = vmatpush.bf16.msra.mxu0 %v3767
        %4895 = vmatpush.bf16.msra.mxu0 %v3766
        %4896 = vmatpush.bf16.msra.mxu0 %v3765
        %4897 = vmatmul.bf16.gmra.mxu0 %v489
        %v4898 = vpop.f32.mrf.mxu0
        %v4899 = vadd.f32 %v4886, %v4898
        %v4900 = vpop.f32.mrf.mxu0
        %4901 = vdwg.mxu0
        %4902 = vmatpush.bf16.msra.mxu0 %v3780
        %4903 = vmatpush.bf16.msra.mxu0 %v3779
        %4904 = vmatpush.bf16.msra.mxu0 %v3778
        %4905 = vmatpush.bf16.msra.mxu0 %v3777
        %4906 = vmatpush.bf16.msra.mxu0 %v3776
        %4907 = vmatpush.bf16.msra.mxu0 %v3775
        %4908 = vmatpush.bf16.msra.mxu0 %v3774
        %4909 = vmatpush.bf16.msra.mxu0 %v3773
        %4910 = vmatmul.bf16.gmra.mxu0 %v490
        %v4911 = vpop.f32.mrf.mxu0
        %v4912 = vadd.f32 %v4899, %v4911
        %v4913 = vpop.f32.mrf.mxu0
        %4914 = vdwg.mxu0
        %4915 = vmatpush.bf16.msra.mxu0 %v3788
        %4916 = vmatpush.bf16.msra.mxu0 %v3787
        %4917 = vmatpush.bf16.msra.mxu0 %v3786
        %4918 = vmatpush.bf16.msra.mxu0 %v3785
        %4919 = vmatpush.bf16.msra.mxu0 %v3784
        %4920 = vmatpush.bf16.msra.mxu0 %v3783
        %4921 = vmatpush.bf16.msra.mxu0 %v3782
        %4922 = vmatpush.bf16.msra.mxu0 %v3781
        %4923 = vmatmul.bf16.gmra.mxu0 %v491
        %v4924 = vpop.f32.mrf.mxu0
        %v4925 = vadd.f32 %v4912, %v4924
        %v4926 = vpop.f32.mrf.mxu0
        %4927 = vdwg.mxu0
        %4928 = vmatpush.bf16.msra.mxu0 %v3796
        %4929 = vmatpush.bf16.msra.mxu0 %v3795
        %4930 = vmatpush.bf16.msra.mxu0 %v3794
        %4931 = vmatpush.bf16.msra.mxu0 %v3793
        %4932 = vmatpush.bf16.msra.mxu0 %v3792
        %4933 = vmatpush.bf16.msra.mxu0 %v3791
        %4934 = vmatpush.bf16.msra.mxu0 %v3790
        %4935 = vmatpush.bf16.msra.mxu0 %v3789
        %4936 = vmatmul.bf16.gmra.mxu0 %v492
        %v4937 = vpop.f32.mrf.mxu0
        %v4938 = vadd.f32 %v4925, %v4937
        %v4939 = vpop.f32.mrf.mxu0
        %4940 = vdwg.mxu0
        %4941 = vmatpush.bf16.msra.mxu0 %v3804
        %4942 = vmatpush.bf16.msra.mxu0 %v3803
        %4943 = vmatpush.bf16.msra.mxu0 %v3802
        %4944 = vmatpush.bf16.msra.mxu0 %v3801
        %4945 = vmatpush.bf16.msra.mxu0 %v3800
        %4946 = vmatpush.bf16.msra.mxu0 %v3799
        %4947 = vmatpush.bf16.msra.mxu0 %v3798
        %4948 = vmatpush.bf16.msra.mxu0 %v3797
        %4949 = vmatmul.bf16.gmra.mxu0 %v493
        %v4950 = vpop.f32.mrf.mxu0
        %v4951 = vadd.f32 %v4938, %v4950
        %v4952 = vpop.f32.mrf.mxu0
        %4953 = vdwg.mxu0
        %4954 = vmatpush.bf16.msra.mxu0 %v3812
        %4955 = vmatpush.bf16.msra.mxu0 %v3811
        %4956 = vmatpush.bf16.msra.mxu0 %v3810
        %4957 = vmatpush.bf16.msra.mxu0 %v3809
        %4958 = vmatpush.bf16.msra.mxu0 %v3808
        %4959 = vmatpush.bf16.msra.mxu0 %v3807
        %4960 = vmatpush.bf16.msra.mxu0 %v3806
        %4961 = vmatpush.bf16.msra.mxu0 %v3805
        %4962 = vmatmul.bf16.gmra.mxu0 %v494
        %v4963 = vpop.f32.mrf.mxu0
        %v4964 = vadd.f32 %v4951, %v4963
        %v4965 = vpop.f32.mrf.mxu0
        %4966 = vdwg.mxu0
        %4967 = vmatpush.bf16.msra.mxu0 %v3820
        %4968 = vmatpush.bf16.msra.mxu0 %v3819
        %4969 = vmatpush.bf16.msra.mxu0 %v3818
        %4970 = vmatpush.bf16.msra.mxu0 %v3817
        %4971 = vmatpush.bf16.msra.mxu0 %v3816
        %4972 = vmatpush.bf16.msra.mxu0 %v3815
        %4973 = vmatpush.bf16.msra.mxu0 %v3814
        %4974 = vmatpush.bf16.msra.mxu0 %v3813
        %4975 = vmatmul.bf16.gmra.mxu0 %v495
        %v4976 = vpop.f32.mrf.mxu0
        %v4977 = vadd.f32 %v4964, %v4976
        %v4978 = vpop.f32.mrf.mxu0
        %4979 = vdwg.mxu0
        %4980 = vmatpush.bf16.msra.mxu0 %v3828
        %4981 = vmatpush.bf16.msra.mxu0 %v3827
        %4982 = vmatpush.bf16.msra.mxu0 %v3826
        %4983 = vmatpush.bf16.msra.mxu0 %v3825
        %4984 = vmatpush.bf16.msra.mxu0 %v3824
        %4985 = vmatpush.bf16.msra.mxu0 %v3823
        %4986 = vmatpush.bf16.msra.mxu0 %v3822
        %4987 = vmatpush.bf16.msra.mxu0 %v3821
        %4988 = vmatmul.bf16.gmra.mxu0 %v496
        %v4989 = vpop.f32.mrf.mxu0
        %v4990 = vadd.f32 %v4977, %v4989
        %v4991 = vpop.f32.mrf.mxu0
        %4992 = vdwg.mxu0
        %4993 = vmatpush.bf16.msra.mxu0 %v3836
        %4994 = vmatpush.bf16.msra.mxu0 %v3835
        %4995 = vmatpush.bf16.msra.mxu0 %v3834
        %4996 = vmatpush.bf16.msra.mxu0 %v3833
        %4997 = vmatpush.bf16.msra.mxu0 %v3832
        %4998 = vmatpush.bf16.msra.mxu0 %v3831
        %4999 = vmatpush.bf16.msra.mxu0 %v3830
        %5000 = vmatpush.bf16.msra.mxu0 %v3829
        %5001 = vmatmul.bf16.gmra.mxu0 %v497
        %v5002 = vpop.f32.mrf.mxu0
        %v5003 = vadd.f32 %v4990, %v5002
        %v5004 = vpop.f32.mrf.mxu0
        %5005 = vdwg.mxu0
        %5006 = vmatpush.bf16.msra.mxu0 %v3844
        %5007 = vmatpush.bf16.msra.mxu0 %v3843
        %5008 = vmatpush.bf16.msra.mxu0 %v3842
        %5009 = vmatpush.bf16.msra.mxu0 %v3841
        %5010 = vmatpush.bf16.msra.mxu0 %v3840
        %5011 = vmatpush.bf16.msra.mxu0 %v3839
        %5012 = vmatpush.bf16.msra.mxu0 %v3838
        %5013 = vmatpush.bf16.msra.mxu0 %v3837
        %5014 = vmatmul.bf16.gmra.mxu0 %v498
        %v5015 = vpop.f32.mrf.mxu0
        %v5016 = vadd.f32 %v5003, %v5015
        %v5017 = vpop.f32.mrf.mxu0
        %5018 = vdwg.mxu0
        %5019 = vmatpush.bf16.msra.mxu0 %v3852
        %5020 = vmatpush.bf16.msra.mxu0 %v3851
        %5021 = vmatpush.bf16.msra.mxu0 %v3850
        %5022 = vmatpush.bf16.msra.mxu0 %v3849
        %5023 = vmatpush.bf16.msra.mxu0 %v3848
        %5024 = vmatpush.bf16.msra.mxu0 %v3847
        %5025 = vmatpush.bf16.msra.mxu0 %v3846
        %5026 = vmatpush.bf16.msra.mxu0 %v3845
        %5027 = vmatmul.bf16.gmra.mxu0 %v499
        %v5028 = vpop.f32.mrf.mxu0
        %v5029 = vadd.f32 %v5016, %v5028
        %v5030 = vpop.f32.mrf.mxu0
        %5031 = vdwg.mxu0
        %5032 = vmatpush.bf16.msra.mxu0 %v3860
        %5033 = vmatpush.bf16.msra.mxu0 %v3859
        %5034 = vmatpush.bf16.msra.mxu0 %v3858
        %5035 = vmatpush.bf16.msra.mxu0 %v3857
        %5036 = vmatpush.bf16.msra.mxu0 %v3856
        %5037 = vmatpush.bf16.msra.mxu0 %v3855
        %5038 = vmatpush.bf16.msra.mxu0 %v3854
        %5039 = vmatpush.bf16.msra.mxu0 %v3853
        %5040 = vmatmul.bf16.gmra.mxu0 %v500
        %v5041 = vpop.f32.mrf.mxu0
        %v5042 = vadd.f32 %v5029, %v5041
        %v5043 = vpop.f32.mrf.mxu0
        %5044 = vdwg.mxu0
        %5045 = vmatpush.bf16.msra.mxu0 %v3868
        %5046 = vmatpush.bf16.msra.mxu0 %v3867
        %5047 = vmatpush.bf16.msra.mxu0 %v3866
        %5048 = vmatpush.bf16.msra.mxu0 %v3865
        %5049 = vmatpush.bf16.msra.mxu0 %v3864
        %5050 = vmatpush.bf16.msra.mxu0 %v3863
        %5051 = vmatpush.bf16.msra.mxu0 %v3862
        %5052 = vmatpush.bf16.msra.mxu0 %v3861
        %5053 = vmatmul.bf16.gmra.mxu0 %v501
        %v5054 = vpop.f32.mrf.mxu0
        %v5055 = vadd.f32 %v5042, %v5054
        %v5056 = vpop.f32.mrf.mxu0
        %5057 = vdwg.mxu0
        %5058 = vmatpush.bf16.msra.mxu0 %v3876
        %5059 = vmatpush.bf16.msra.mxu0 %v3875
        %5060 = vmatpush.bf16.msra.mxu0 %v3874
        %5061 = vmatpush.bf16.msra.mxu0 %v3873
        %5062 = vmatpush.bf16.msra.mxu0 %v3872
        %5063 = vmatpush.bf16.msra.mxu0 %v3871
        %5064 = vmatpush.bf16.msra.mxu0 %v3870
        %5065 = vmatpush.bf16.msra.mxu0 %v3869
        %5066 = vmatmul.bf16.gmra.mxu0 %v502
        %v5067 = vpop.f32.mrf.mxu0
        %v5068 = vadd.f32 %v5055, %v5067
        %v5069 = vpop.f32.mrf.mxu0
        %5070 = vdwg.mxu0
        %5071 = vmatpush.bf16.msra.mxu0 %v3884
        %5072 = vmatpush.bf16.msra.mxu0 %v3883
        %5073 = vmatpush.bf16.msra.mxu0 %v3882
        %5074 = vmatpush.bf16.msra.mxu0 %v3881
        %5075 = vmatpush.bf16.msra.mxu0 %v3880
        %5076 = vmatpush.bf16.msra.mxu0 %v3879
        %5077 = vmatpush.bf16.msra.mxu0 %v3878
        %5078 = vmatpush.bf16.msra.mxu0 %v3877
        %5079 = vmatmul.bf16.gmra.mxu0 %v503
        %v5080 = vpop.f32.mrf.mxu0
        %v5081 = vadd.f32 %v5068, %v5080
        %v5082 = vpop.f32.mrf.mxu0
        %5083 = vdwg.mxu0
        %5084 = vmatpush.bf16.msra.mxu0 %v3892
        %5085 = vmatpush.bf16.msra.mxu0 %v3891
        %5086 = vmatpush.bf16.msra.mxu0 %v3890
        %5087 = vmatpush.bf16.msra.mxu0 %v3889
        %5088 = vmatpush.bf16.msra.mxu0 %v3888
        %5089 = vmatpush.bf16.msra.mxu0 %v3887
        %5090 = vmatpush.bf16.msra.mxu0 %v3886
        %5091 = vmatpush.bf16.msra.mxu0 %v3885
        %5092 = vmatmul.bf16.gmra.mxu0 %v504
        %v5093 = vpop.f32.mrf.mxu0
        %v5094 = vadd.f32 %v5081, %v5093
        %v5095 = vpop.f32.mrf.mxu0
        %5096 = vdwg.mxu0
        %5097 = vmatpush.bf16.msra.mxu0 %v3900
        %5098 = vmatpush.bf16.msra.mxu0 %v3899
        %5099 = vmatpush.bf16.msra.mxu0 %v3898
        %5100 = vmatpush.bf16.msra.mxu0 %v3897
        %5101 = vmatpush.bf16.msra.mxu0 %v3896
        %5102 = vmatpush.bf16.msra.mxu0 %v3895
        %5103 = vmatpush.bf16.msra.mxu0 %v3894
        %5104 = vmatpush.bf16.msra.mxu0 %v3893
        %5105 = vmatmul.bf16.gmra.mxu0 %v505
        %v5106 = vpop.f32.mrf.mxu0
        %v5107 = vadd.f32 %v5094, %v5106
        %v5108 = vpop.f32.mrf.mxu0
        %5109 = vdwg.mxu0
        %5110 = vmatpush.bf16.msra.mxu0 %v3908
        %5111 = vmatpush.bf16.msra.mxu0 %v3907
        %5112 = vmatpush.bf16.msra.mxu0 %v3906
        %5113 = vmatpush.bf16.msra.mxu0 %v3905
        %5114 = vmatpush.bf16.msra.mxu0 %v3904
        %5115 = vmatpush.bf16.msra.mxu0 %v3903
        %5116 = vmatpush.bf16.msra.mxu0 %v3902
        %5117 = vmatpush.bf16.msra.mxu0 %v3901
        %5118 = vmatmul.bf16.gmra.mxu0 %v506
        %v5119 = vpop.f32.mrf.mxu0
        %v5120 = vadd.f32 %v5107, %v5119
        %v5121 = vpop.f32.mrf.mxu0
        %5122 = vdwg.mxu0
        %5123 = vmatpush.bf16.msra.mxu0 %v3916
        %5124 = vmatpush.bf16.msra.mxu0 %v3915
        %5125 = vmatpush.bf16.msra.mxu0 %v3914
        %5126 = vmatpush.bf16.msra.mxu0 %v3913
        %5127 = vmatpush.bf16.msra.mxu0 %v3912
        %5128 = vmatpush.bf16.msra.mxu0 %v3911
        %5129 = vmatpush.bf16.msra.mxu0 %v3910
        %5130 = vmatpush.bf16.msra.mxu0 %v3909
        %5131 = vmatmul.bf16.gmra.mxu0 %v507
        %v5132 = vpop.f32.mrf.mxu0
        %v5133 = vadd.f32 %v5120, %v5132
        %v5134 = vpop.f32.mrf.mxu0
        %5135 = vdwg.mxu0
        %5136 = vmatpush.bf16.msra.mxu0 %v3924
        %5137 = vmatpush.bf16.msra.mxu0 %v3923
        %5138 = vmatpush.bf16.msra.mxu0 %v3922
        %5139 = vmatpush.bf16.msra.mxu0 %v3921
        %5140 = vmatpush.bf16.msra.mxu0 %v3920
        %5141 = vmatpush.bf16.msra.mxu0 %v3919
        %5142 = vmatpush.bf16.msra.mxu0 %v3918
        %5143 = vmatpush.bf16.msra.mxu0 %v3917
        %5144 = vmatmul.bf16.gmra.mxu0 %v508
        %v5145 = vpop.f32.mrf.mxu0
        %v5146 = vadd.f32 %v5133, %v5145
        %v5147 = vpop.f32.mrf.mxu0
        %5148 = vdwg.mxu0
        %5149 = vmatpush.bf16.msra.mxu0 %v3932
        %5150 = vmatpush.bf16.msra.mxu0 %v3931
        %5151 = vmatpush.bf16.msra.mxu0 %v3930
        %5152 = vmatpush.bf16.msra.mxu0 %v3929
        %5153 = vmatpush.bf16.msra.mxu0 %v3928
        %5154 = vmatpush.bf16.msra.mxu0 %v3927
        %5155 = vmatpush.bf16.msra.mxu0 %v3926
        %5156 = vmatpush.bf16.msra.mxu0 %v3925
        %5157 = vmatmul.bf16.gmra.mxu0 %v509
        %v5158 = vpop.f32.mrf.mxu0
        %v5159 = vadd.f32 %v5146, %v5158
        %v5160 = vpop.f32.mrf.mxu0
        %5161 = vdwg.mxu0
        %5162 = vmatpush.bf16.msra.mxu0 %v3940
        %5163 = vmatpush.bf16.msra.mxu0 %v3939
        %5164 = vmatpush.bf16.msra.mxu0 %v3938
        %5165 = vmatpush.bf16.msra.mxu0 %v3937
        %5166 = vmatpush.bf16.msra.mxu0 %v3936
        %5167 = vmatpush.bf16.msra.mxu0 %v3935
        %5168 = vmatpush.bf16.msra.mxu0 %v3934
        %5169 = vmatpush.bf16.msra.mxu0 %v3933
        %5170 = vmatmul.bf16.gmra.mxu0 %v510
        %v5171 = vpop.f32.mrf.mxu0
        %v5172 = vadd.f32 %v5159, %v5171
        %v5173 = vpop.f32.mrf.mxu0
        %5174 = vdwg.mxu0
        %5175 = vmatpush.bf16.msra.mxu0 %v3948
        %5176 = vmatpush.bf16.msra.mxu0 %v3947
        %5177 = vmatpush.bf16.msra.mxu0 %v3946
        %5178 = vmatpush.bf16.msra.mxu0 %v3945
        %5179 = vmatpush.bf16.msra.mxu0 %v3944
        %5180 = vmatpush.bf16.msra.mxu0 %v3943
        %5181 = vmatpush.bf16.msra.mxu0 %v3942
        %5182 = vmatpush.bf16.msra.mxu0 %v3941
        %5183 = vmatmul.bf16.gmra.mxu0 %v511
        %v5184 = vpop.f32.mrf.mxu0
        %v5185 = vadd.f32 %v5172, %v5184
        %v5186 = vpop.f32.mrf.mxu0
        %5187 = vdwg.mxu0
        %5188 = vmatpush.bf16.msra.mxu0 %v3956
        %5189 = vmatpush.bf16.msra.mxu0 %v3955
        %5190 = vmatpush.bf16.msra.mxu0 %v3954
        %5191 = vmatpush.bf16.msra.mxu0 %v3953
        %5192 = vmatpush.bf16.msra.mxu0 %v3952
        %5193 = vmatpush.bf16.msra.mxu0 %v3951
        %5194 = vmatpush.bf16.msra.mxu0 %v3950
        %5195 = vmatpush.bf16.msra.mxu0 %v3949
        %5196 = vmatmul.bf16.gmra.mxu0 %v512
        %v5197 = vpop.f32.mrf.mxu0
        %v5198 = vadd.f32 %v5185, %v5197
        %v5199 = vpop.f32.mrf.mxu0
        %5200 = vdwg.mxu0
        %5201 = vmatpush.bf16.msra.mxu0 %v3964
        %5202 = vmatpush.bf16.msra.mxu0 %v3963
        %5203 = vmatpush.bf16.msra.mxu0 %v3962
        %5204 = vmatpush.bf16.msra.mxu0 %v3961
        %5205 = vmatpush.bf16.msra.mxu0 %v3960
        %5206 = vmatpush.bf16.msra.mxu0 %v3959
        %5207 = vmatpush.bf16.msra.mxu0 %v3958
        %5208 = vmatpush.bf16.msra.mxu0 %v3957
        %5209 = vmatmul.bf16.gmra.mxu0 %v513
        %v5210 = vpop.f32.mrf.mxu0
        %v5211 = vadd.f32 %v5198, %v5210
        %v5212 = vpop.f32.mrf.mxu0
        %5213 = vdwg.mxu0
        %5214 = vmatpush.bf16.msra.mxu0 %v3972
        %5215 = vmatpush.bf16.msra.mxu0 %v3971
        %5216 = vmatpush.bf16.msra.mxu0 %v3970
        %5217 = vmatpush.bf16.msra.mxu0 %v3969
        %5218 = vmatpush.bf16.msra.mxu0 %v3968
        %5219 = vmatpush.bf16.msra.mxu0 %v3967
        %5220 = vmatpush.bf16.msra.mxu0 %v3966
        %5221 = vmatpush.bf16.msra.mxu0 %v3965
        %5222 = vmatmul.bf16.gmra.mxu0 %v514
        %v5223 = vpop.f32.mrf.mxu0
        %v5224 = vadd.f32 %v5211, %v5223
        %v5225 = vpop.f32.mrf.mxu0
        %5226 = vdwg.mxu0
        %5227 = vmatpush.bf16.msra.mxu0 %v3980
        %5228 = vmatpush.bf16.msra.mxu0 %v3979
        %5229 = vmatpush.bf16.msra.mxu0 %v3978
        %5230 = vmatpush.bf16.msra.mxu0 %v3977
        %5231 = vmatpush.bf16.msra.mxu0 %v3976
        %5232 = vmatpush.bf16.msra.mxu0 %v3975
        %5233 = vmatpush.bf16.msra.mxu0 %v3974
        %5234 = vmatpush.bf16.msra.mxu0 %v3973
        %5235 = vmatmul.bf16.gmra.mxu0 %v515
        %v5236 = vpop.f32.mrf.mxu0
        %v5237 = vadd.f32 %v5224, %v5236
        %v5238 = vpop.f32.mrf.mxu0
        %5239 = vdwg.mxu0
        %5240 = vmatpush.bf16.msra.mxu0 %v3988
        %5241 = vmatpush.bf16.msra.mxu0 %v3987
        %5242 = vmatpush.bf16.msra.mxu0 %v3986
        %5243 = vmatpush.bf16.msra.mxu0 %v3985
        %5244 = vmatpush.bf16.msra.mxu0 %v3984
        %5245 = vmatpush.bf16.msra.mxu0 %v3983
        %5246 = vmatpush.bf16.msra.mxu0 %v3982
        %5247 = vmatpush.bf16.msra.mxu0 %v3981
        %5248 = vmatmul.bf16.gmra.mxu0 %v516
        %v5249 = vpop.f32.mrf.mxu0
        %v5250 = vadd.f32 %v5237, %v5249
        %v5251 = vpop.f32.mrf.mxu0
        %5252 = vdwg.mxu0
        %5253 = vmatpush.bf16.msra.mxu0 %v3996
        %5254 = vmatpush.bf16.msra.mxu0 %v3995
        %5255 = vmatpush.bf16.msra.mxu0 %v3994
        %5256 = vmatpush.bf16.msra.mxu0 %v3993
        %5257 = vmatpush.bf16.msra.mxu0 %v3992
        %5258 = vmatpush.bf16.msra.mxu0 %v3991
        %5259 = vmatpush.bf16.msra.mxu0 %v3990
        %5260 = vmatpush.bf16.msra.mxu0 %v3989
        %5261 = vmatmul.bf16.gmra.mxu0 %v517
        %v5262 = vpop.f32.mrf.mxu0
        %v5263 = vadd.f32 %v5250, %v5262
        %v5264 = vpop.f32.mrf.mxu0
        %5265 = vdwg.mxu0
        %5266 = vmatpush.bf16.msra.mxu0 %v4004
        %5267 = vmatpush.bf16.msra.mxu0 %v4003
        %5268 = vmatpush.bf16.msra.mxu0 %v4002
        %5269 = vmatpush.bf16.msra.mxu0 %v4001
        %5270 = vmatpush.bf16.msra.mxu0 %v4000
        %5271 = vmatpush.bf16.msra.mxu0 %v3999
        %5272 = vmatpush.bf16.msra.mxu0 %v3998
        %5273 = vmatpush.bf16.msra.mxu0 %v3997
        %5274 = vmatmul.bf16.gmra.mxu0 %v518
        %v5275 = vpop.f32.mrf.mxu0
        %v5276 = vadd.f32 %v5263, %v5275
        %v5277 = vpop.f32.mrf.mxu0
        %5278 = vdwg.mxu0
        %5279 = vmatpush.bf16.msra.mxu0 %v4012
        %5280 = vmatpush.bf16.msra.mxu0 %v4011
        %5281 = vmatpush.bf16.msra.mxu0 %v4010
        %5282 = vmatpush.bf16.msra.mxu0 %v4009
        %5283 = vmatpush.bf16.msra.mxu0 %v4008
        %5284 = vmatpush.bf16.msra.mxu0 %v4007
        %5285 = vmatpush.bf16.msra.mxu0 %v4006
        %5286 = vmatpush.bf16.msra.mxu0 %v4005
        %5287 = vmatmul.bf16.gmra.mxu0 %v519
        %v5288 = vpop.f32.mrf.mxu0
        %v5289 = vadd.f32 %v5276, %v5288
        %v5290 = vpop.f32.mrf.mxu0
        %5291 = vdwg.mxu0
        %5292 = vmatpush.bf16.msra.mxu0 %v4020
        %5293 = vmatpush.bf16.msra.mxu0 %v4019
        %5294 = vmatpush.bf16.msra.mxu0 %v4018
        %5295 = vmatpush.bf16.msra.mxu0 %v4017
        %5296 = vmatpush.bf16.msra.mxu0 %v4016
        %5297 = vmatpush.bf16.msra.mxu0 %v4015
        %5298 = vmatpush.bf16.msra.mxu0 %v4014
        %5299 = vmatpush.bf16.msra.mxu0 %v4013
        %5300 = vmatmul.bf16.gmra.mxu0 %v520
        %v5301 = vpop.f32.mrf.mxu0
        %v5302 = vadd.f32 %v5289, %v5301
        %v5303 = vpop.f32.mrf.mxu0
        %5304 = vdwg.mxu0
        %5305 = vmatpush.bf16.msra.mxu0 %v4028
        %5306 = vmatpush.bf16.msra.mxu0 %v4027
        %5307 = vmatpush.bf16.msra.mxu0 %v4026
        %5308 = vmatpush.bf16.msra.mxu0 %v4025
        %5309 = vmatpush.bf16.msra.mxu0 %v4024
        %5310 = vmatpush.bf16.msra.mxu0 %v4023
        %5311 = vmatpush.bf16.msra.mxu0 %v4022
        %5312 = vmatpush.bf16.msra.mxu0 %v4021
        %5313 = vmatmul.bf16.gmra.mxu0 %v521
        %v5314 = vpop.f32.mrf.mxu0
        %v5315 = vadd.f32 %v5302, %v5314
        %v5316 = vpop.f32.mrf.mxu0
        %5317 = vdwg.mxu0
        %5318 = vmatpush.bf16.msra.mxu0 %v4036
        %5319 = vmatpush.bf16.msra.mxu0 %v4035
        %5320 = vmatpush.bf16.msra.mxu0 %v4034
        %5321 = vmatpush.bf16.msra.mxu0 %v4033
        %5322 = vmatpush.bf16.msra.mxu0 %v4032
        %5323 = vmatpush.bf16.msra.mxu0 %v4031
        %5324 = vmatpush.bf16.msra.mxu0 %v4030
        %5325 = vmatpush.bf16.msra.mxu0 %v4029
        %5326 = vmatmul.bf16.gmra.mxu0 %v522
        %v5327 = vpop.f32.mrf.mxu0
        %v5328 = vadd.f32 %v5315, %v5327
        %v5329 = vpop.f32.mrf.mxu0
        %5330 = vdwg.mxu0
        %5331 = vmatpush.bf16.msra.mxu0 %v4044
        %5332 = vmatpush.bf16.msra.mxu0 %v4043
        %5333 = vmatpush.bf16.msra.mxu0 %v4042
        %5334 = vmatpush.bf16.msra.mxu0 %v4041
        %5335 = vmatpush.bf16.msra.mxu0 %v4040
        %5336 = vmatpush.bf16.msra.mxu0 %v4039
        %5337 = vmatpush.bf16.msra.mxu0 %v4038
        %5338 = vmatpush.bf16.msra.mxu0 %v4037
        %5339 = vmatmul.bf16.gmra.mxu0 %v523
        %v5340 = vpop.f32.mrf.mxu0
        %v5341 = vadd.f32 %v5328, %v5340
        %v5342 = vpop.f32.mrf.mxu0
        %5343 = vdwg.mxu0
        %5344 = vmatpush.bf16.msra.mxu0 %v4052
        %5345 = vmatpush.bf16.msra.mxu0 %v4051
        %5346 = vmatpush.bf16.msra.mxu0 %v4050
        %5347 = vmatpush.bf16.msra.mxu0 %v4049
        %5348 = vmatpush.bf16.msra.mxu0 %v4048
        %5349 = vmatpush.bf16.msra.mxu0 %v4047
        %5350 = vmatpush.bf16.msra.mxu0 %v4046
        %5351 = vmatpush.bf16.msra.mxu0 %v4045
        %5352 = vmatmul.bf16.gmra.mxu0 %v524
        %v5353 = vpop.f32.mrf.mxu0
        %v5354 = vadd.f32 %v5341, %v5353
        %v5355 = vpop.f32.mrf.mxu0
        %5356 = vdwg.mxu0
        %5357 = vmatpush.bf16.msra.mxu0 %v4060
        %5358 = vmatpush.bf16.msra.mxu0 %v4059
        %5359 = vmatpush.bf16.msra.mxu0 %v4058
        %5360 = vmatpush.bf16.msra.mxu0 %v4057
        %5361 = vmatpush.bf16.msra.mxu0 %v4056
        %5362 = vmatpush.bf16.msra.mxu0 %v4055
        %5363 = vmatpush.bf16.msra.mxu0 %v4054
        %5364 = vmatpush.bf16.msra.mxu0 %v4053
        %5365 = vmatmul.bf16.gmra.mxu0 %v525
        %v5366 = vpop.f32.mrf.mxu0
        %v5367 = vadd.f32 %v5354, %v5366
        %v5368 = vpop.f32.mrf.mxu0
        %5369 = vdwg.mxu0
        %5370 = vmatpush.bf16.msra.mxu0 %v4068
        %5371 = vmatpush.bf16.msra.mxu0 %v4067
        %5372 = vmatpush.bf16.msra.mxu0 %v4066
        %5373 = vmatpush.bf16.msra.mxu0 %v4065
        %5374 = vmatpush.bf16.msra.mxu0 %v4064
        %5375 = vmatpush.bf16.msra.mxu0 %v4063
        %5376 = vmatpush.bf16.msra.mxu0 %v4062
        %5377 = vmatpush.bf16.msra.mxu0 %v4061
        %5378 = vmatmul.bf16.gmra.mxu0 %v526
        %v5379 = vpop.f32.mrf.mxu0
        %v5380 = vadd.f32 %v5367, %v5379
        %v5381 = vpop.f32.mrf.mxu0
        %5382 = vdwg.mxu0
        %5383 = vmatpush.bf16.msra.mxu0 %v4076
        %5384 = vmatpush.bf16.msra.mxu0 %v4075
        %5385 = vmatpush.bf16.msra.mxu0 %v4074
        %5386 = vmatpush.bf16.msra.mxu0 %v4073
        %5387 = vmatpush.bf16.msra.mxu0 %v4072
        %5388 = vmatpush.bf16.msra.mxu0 %v4071
        %5389 = vmatpush.bf16.msra.mxu0 %v4070
        %5390 = vmatpush.bf16.msra.mxu0 %v4069
        %5391 = vmatmul.bf16.gmra.mxu0 %v527
        %v5392 = vpop.f32.mrf.mxu0
        %v5393 = vadd.f32 %v5380, %v5392
        %v5394 = vpop.f32.mrf.mxu0
        %5395 = vdwg.mxu0
        %5396 = vmatpush.bf16.msra.mxu0 %v4084
        %5397 = vmatpush.bf16.msra.mxu0 %v4083
        %5398 = vmatpush.bf16.msra.mxu0 %v4082
        %5399 = vmatpush.bf16.msra.mxu0 %v4081
        %5400 = vmatpush.bf16.msra.mxu0 %v4080
        %5401 = vmatpush.bf16.msra.mxu0 %v4079
        %5402 = vmatpush.bf16.msra.mxu0 %v4078
        %5403 = vmatpush.bf16.msra.mxu0 %v4077
        %5404 = vmatmul.bf16.gmra.mxu0 %v528
        %v5405 = vpop.f32.mrf.mxu0
        %v5406 = vadd.f32 %v5393, %v5405
        %v5407 = vpop.f32.mrf.mxu0
        %5408 = vdwg.mxu0
        %5409 = vmatpush.bf16.msra.mxu0 %v4092
        %5410 = vmatpush.bf16.msra.mxu0 %v4091
        %5411 = vmatpush.bf16.msra.mxu0 %v4090
        %5412 = vmatpush.bf16.msra.mxu0 %v4089
        %5413 = vmatpush.bf16.msra.mxu0 %v4088
        %5414 = vmatpush.bf16.msra.mxu0 %v4087
        %5415 = vmatpush.bf16.msra.mxu0 %v4086
        %5416 = vmatpush.bf16.msra.mxu0 %v4085
        %5417 = vmatmul.bf16.gmra.mxu0 %v529
        %v5418 = vpop.f32.mrf.mxu0
        %v5419 = vadd.f32 %v5406, %v5418
        %v5420 = vpop.f32.mrf.mxu0
        %5421 = vdwg.mxu0
        %5422 = vmatpush.bf16.msra.mxu0 %v4100
        %5423 = vmatpush.bf16.msra.mxu0 %v4099
        %5424 = vmatpush.bf16.msra.mxu0 %v4098
        %5425 = vmatpush.bf16.msra.mxu0 %v4097
        %5426 = vmatpush.bf16.msra.mxu0 %v4096
        %5427 = vmatpush.bf16.msra.mxu0 %v4095
        %5428 = vmatpush.bf16.msra.mxu0 %v4094
        %5429 = vmatpush.bf16.msra.mxu0 %v4093
        %5430 = vmatmul.bf16.gmra.mxu0 %v530
        %v5431 = vpop.f32.mrf.mxu0
        %v5432 = vadd.f32 %v5419, %v5431
        %v5433 = vpop.f32.mrf.mxu0
        %5434 = vdwg.mxu0
        %5435 = vmatpush.bf16.msra.mxu0 %v4108
        %5436 = vmatpush.bf16.msra.mxu0 %v4107
        %5437 = vmatpush.bf16.msra.mxu0 %v4106
        %5438 = vmatpush.bf16.msra.mxu0 %v4105
        %5439 = vmatpush.bf16.msra.mxu0 %v4104
        %5440 = vmatpush.bf16.msra.mxu0 %v4103
        %5441 = vmatpush.bf16.msra.mxu0 %v4102
        %5442 = vmatpush.bf16.msra.mxu0 %v4101
        %5443 = vmatmul.bf16.gmra.mxu0 %v531
        %v5444 = vpop.f32.mrf.mxu0
        %v5445 = vadd.f32 %v5432, %v5444
        %v5446 = vpop.f32.mrf.mxu0
        %5447 = vdwg.mxu0
        %5448 = vmatpush.bf16.msra.mxu0 %v4116
        %5449 = vmatpush.bf16.msra.mxu0 %v4115
        %5450 = vmatpush.bf16.msra.mxu0 %v4114
        %5451 = vmatpush.bf16.msra.mxu0 %v4113
        %5452 = vmatpush.bf16.msra.mxu0 %v4112
        %5453 = vmatpush.bf16.msra.mxu0 %v4111
        %5454 = vmatpush.bf16.msra.mxu0 %v4110
        %5455 = vmatpush.bf16.msra.mxu0 %v4109
        %5456 = vmatmul.bf16.gmra.mxu0 %v532
        %v5457 = vpop.f32.mrf.mxu0
        %v5458 = vadd.f32 %v5445, %v5457
        %v5459 = vpop.f32.mrf.mxu0
        %5460 = vdwg.mxu0
        %v5461 = vadd.f32 %v291, %v5458
        %5462 = vst [vmem:[#allocation2] sm:$0x3] %v5461
        %p5463 = scmp.eq.s32.totalorder %s22, 4
        // Predicated region
        $region57: #{net1_forward.3} parent=39 // pred_check
          %p5464 = pneg %p5463
        $region58: #{net1_forward.3} parent=39 // pred_check_branch
          %5466 = sbr.rel (%p5464) target = $region60
        $region59: #{net1_forward.3} parent=39 // pred_region
          %v5467 = vld [vmem:[#allocation2] sm:$0x3]
          %v5468 = vld [vmem:[#allocation6] sm:$0x1]
          %v5470 = vperm.slane %v5468, 0
          %v5472 = vadd.f32 %v5467, %v5470
          %v5473 = vmax.f32 %v5472, 0.0
          %v5474 = vld [vmem:[#allocation8] sm:$0x1]
          %v5476 = vperm.slane %v5474, 0
          %v5478 = vmul.f32 %v5473, %v5476
          %vm5479 = vcmask 1041408
          %v5480 = vsel %vm5479, %v5478, 0.0
          %5481 = vadd.xlane.f32.xlu0 %v5480
          %v5482 = vpop.xlane.xlu0 %5481
          %v5483 = vld [vmem:[#allocation3] sm:$0x1]
          %v5485 = vperm.slane %v5483, 0
          %v5487 = vadd.f32 %v5482, %v5485
          %v5488 = vxor.u32 %v5487, 2147483648
          %v5489 = vmul.f32 %v5488, 1.442695
          %v5490 = vpow.pop %v5489
          %v5491 = vadd.f32 %v5490, 1.0
          %v5492 = vrcp.pop %v5491
          %v5493 = vmul.f32 %v5491, %v5492
          %v5494 = vsub.f32 1.0, %v5493
          %v5495 = vmul.f32 %v5492, %v5494
          %v5496 = vadd.f32 %v5492, %v5495
          %vm5497 = vweird.f32 %v5491
          %vm5498 = vweird.f32 %v5492
          %vm5499 = vmor %vm5497, %vm5498
          %v5500 = vsel %vm5499, %v5492, %v5496
          %v5501 = vand.u32 2147483647, %v5491
          %vm5502 = vcmp.eq.f32.partialorder %v5501, 8.507059e+37
          %v5503 = vand.u32 %v5491, 2147483648
          %v5504 = vor.u32 1.1754944e-38, %v5503
          %v5505 = vsel %vm5502, %v5504, %v5500
          %v5506 = vmul.f32 1.0, %v5505
          %vm5507 = vcmask 1024
          %5508 = vst.msk [vmem:[%s5] sm:$0x3] %vm5507, %v5506
        $region60: #{net1_forward.3} parent=39 // pred_fallthru
          _
        // Predicated region
        $region61: #{net1_forward.3} parent=39 // pred_check
          %p5509 = pneg %p150
        $region62: #{net1_forward.3} parent=39 // pred_check_branch
          %5511 = sbr.rel (%p5509) target = $region64
        $region63: #{net1_forward.3} parent=39 // pred_region
          _
        $region64: #{net1_forward.3} parent=39 // pred_fallthru
          _
        // Predicated region
        $region65: #{net1_forward.3} parent=39 // pred_check
          %p5512 = pneg %p150
        $region66: #{net1_forward.3} parent=39 // pred_check_branch
          %5514 = sbr.rel (%p5512) target = $region68
        $region67: #{net1_forward.3} parent=39 // pred_region
          _
        $region68: #{net1_forward.3} parent=39 // pred_fallthru
          _
      $region40: #{net1_forward.3} parent=5 // pred_fallthru
        _
      %p5515 = scmp.le.s32.totalorder 2, %s17
      // Predicated region
      $region69: #{net1_forward.3} parent=5 // pred_check
        %p5516 = pneg %p5515
      $region70: #{net1_forward.3} parent=5 // pred_check_branch
        %5518 = sbr.rel (%p5516) target = $region72
      $region71: #{net1_forward.3} parent=5 // pred_region
        %s5519 = ssub.s32 %s17, 2
      $region72: #{net1_forward.3} parent=5 // pred_fallthru
        _
    $region6: #{net1_forward.3} parent=1 // loop_footer
      %s21 = sadd.s32 1, %s17
    $region7: #{net1_forward.3} parent=1 // loop_footer_branch
      %16 = sbr.rel target = $region3
    $region8: #{net1_forward.3} parent=1 // loop_exit
      _
    %5520 = vsyncpa [#allocation5], 1
    %s5521 = scalar_lea.sflag [#allocation5], 1
    %5522 = vsyncpa %s5521, 1
    %5523 = vsyncpa [#allocation7], 1

</llo_original>
